<compile_context>
chip_gen: v6e
topology: v6e:2x2x1
jax: 0.10.0
libtpu: 0.0.40
codegen_flags: <defaults>
</compile_context>

<pallas_src>
import functools

import jax
import jax.numpy as jnp
from jax import lax
from jax.experimental import pallas as pl
from jax.experimental.pallas import tpu as pltpu

N_SUB = 4      # fixed Euler substeps per ODE interval
LANE = 128     # TPU lane width
SUBLANE = 8    # TPU sublane count


def _round_up(n, m):
    return ((n + m - 1) // m) * m


def node_kernel(t_ref, z0_ref, x_ref,
                w1z_ref, w1x_ref, w1t_ref, b1_ref, w2_ref, b2_ref,
                out_ref, z_cur,
                *, tt_block, t_total, n_sub, matmul_dtype, full_sequence):
    """One grid step == one (batch-block, time-block) tile.

    t_ref   : (T_pad,)       f32 SMEM, flattened time grid
    z0_ref  : (BB, Dzp)      initial state, batch block, lane-padded
    x_ref   : (TT, BB, Dxp)  x[i-1] for the TT output indices of this tile
    w*_ref  : lane-padded dynamics parameters (VMEM resident, constant index)
    out_ref : (TT, BB, Dzp)  if full_sequence else (BB, Dzp)
    z_cur   : (BB, Dzp) f32 VMEM scratch carrying the ODE state across
              time blocks (time axis MUST stay "arbitrary"/sequential).
    """
    tb = pl.program_id(1)  # time-block index

    @pl.when(tb == 0)
    def _():
        z_cur[...] = z0_ref[...].astype(jnp.float32)

    # Weights have constant index maps -> stay resident; load once per step.
    w1z = w1z_ref[...]
    w1x = w1x_ref[...]
    w1t = w1t_ref[...]
    b1 = b1_ref[...]
    w2 = w2_ref[...]
    b2 = b2_ref[...]

    # Fully unrolled static time loop (tt_block is small) -> the scheduler can
    # overlap substeps across consecutive time indices.
    for j in range(tt_block):
        i = tb * tt_block + j  # global output time index (traced scalar)

        @pl.when((i > 0) & (i < t_total))
        def _step(i=i, j=j):
            t0 = t_ref[i - 1]
            t1 = t_ref[i]
            # x contribution and b1 are substep-invariant -> hoist (review #6).
            x_j = x_ref[j].astype(matmul_dtype)                       # (BB, Dxp)
            xwb = jnp.dot(x_j, w1x, preferred_element_type=jnp.float32) + b1
            dt = (t1 - t0) / n_sub

            def substep(k, z):
                tt = t0 + k.astype(jnp.float32) * dt
                h = jnp.tanh(
                    jnp.dot(z.astype(matmul_dtype), w1z,
                            preferred_element_type=jnp.float32)
                    + xwb + tt * w1t)
                dz = jnp.dot(h.astype(matmul_dtype), w2,
                             preferred_element_type=jnp.float32) + b2
                return z + dt * dz

            z_cur[...] = lax.fori_loop(0, n_sub, substep, z_cur[...],
                                       unroll=True)

        if full_sequence:
            out_ref[j] = z_cur[...].astype(out_ref.dtype)

    if not full_sequence:
        # Constant out block index across the time axis -> block stays VMEM
        # resident; only the final state is written back to HBM (review #7).
        out_ref[...] = z_cur[...].astype(out_ref.dtype)


def neural_ode_forward(z0, t, x, params, full_sequence=False, *,
                       time_block=8, n_sub=N_SUB,
                       matmul_dtype=jnp.bfloat16):
    """Pallas implementation of NeuralODE.forward (inference path).

    z0: (B, Dz), t: (T, 1, 1), x: (T, B, Dx) -> (T, B, Dz) or (B, Dz).
    """
    T = t.shape[0]
    B, Dz = z0.shape
    Dx = x.shape[-1]
    H = params["w1z"].shape[1]

    # ---- lane / sublane padding (review #2) ----
    Dzp = _round_up(Dz, LANE)
    Dxp = _round_up(Dx, LANE)
    Hp = _round_up(H, LANE)

    # Batch block: multiple of 8 sublanes, or the full batch (review #4).
    BB = SUBLANE if (B % SUBLANE == 0 and B > SUBLANE) else B

    # Time block (reviews #1, #5): TT steps per grid iteration. At these demo
    # shapes everything fits trivially; for large T/B pick TT so that the
    # double-buffered (TT,BB,Dxp)+(TT,BB,Dzp) blocks stay well under ~64 MiB
    # (v7x VMEM; v5e/v6e have 128 MiB).
    TT = max(1, min(time_block, T))
    NT = pl.cdiv(T, TT)
    Tp = NT * TT

    t_flat = jnp.pad(t.reshape(T).astype(jnp.float32), (0, Tp - T), mode="edge")

    # Shift x by one step (x_sh[i] == x[i-1]; row 0 is unused) so the x DMA
    # stream is strictly monotone with index_map (tb, b, 0)  (review #8).
    x_sh = jnp.concatenate([x[:1], x[:-1]], axis=0)
    x_p = jnp.pad(x_sh, ((0, Tp - T), (0, 0), (0, Dxp - Dx))).astype(matmul_dtype)

    z0_p = jnp.pad(z0.astype(jnp.float32), ((0, 0), (0, Dzp - Dz)))

    # Zero-padding weights/biases keeps the padded z/h lanes identically zero,
    # so the padded computation is exactly equivalent to the unpadded one.
    w1z_p = jnp.pad(params["w1z"], ((0, Dzp - Dz), (0, Hp - H))).astype(matmul_dtype)
    w1x_p = jnp.pad(params["w1x"], ((0, Dxp - Dx), (0, Hp - H))).astype(matmul_dtype)
    w1t_p = jnp.pad(params["w1t"], ((0, 0), (0, Hp - H))).astype(jnp.float32)
    b1_p = jnp.pad(params["b1"], ((0, 0), (0, Hp - H))).astype(jnp.float32)
    w2_p = jnp.pad(params["w2"], ((0, Hp - H), (0, Dzp - Dz))).astype(matmul_dtype)
    b2_p = jnp.pad(params["b2"], ((0, 0), (0, Dzp - Dz))).astype(jnp.float32)

    kernel = functools.partial(
        node_kernel, tt_block=TT, t_total=T, n_sub=n_sub,
        matmul_dtype=matmul_dtype, full_sequence=full_sequence)

    in_specs = [
        pl.BlockSpec(memory_space=pltpu.MemorySpace.SMEM),          # t_flat
        pl.BlockSpec((BB, Dzp), lambda b, tb: (b, 0)),              # z0
        pl.BlockSpec((TT, BB, Dxp), lambda b, tb: (tb, b, 0)),      # x (shifted)
        pl.BlockSpec((Dzp, Hp), lambda b, tb: (0, 0)),              # w1z
        pl.BlockSpec((Dxp, Hp), lambda b, tb: (0, 0)),              # w1x
        pl.BlockSpec((1, Hp), lambda b, tb: (0, 0)),                # w1t
        pl.BlockSpec((1, Hp), lambda b, tb: (0, 0)),                # b1
        pl.BlockSpec((Hp, Dzp), lambda b, tb: (0, 0)),              # w2
        pl.BlockSpec((1, Dzp), lambda b, tb: (0, 0)),               # b2
    ]

    if full_sequence:
        out_shape = jax.ShapeDtypeStruct((Tp, B, Dzp), z0.dtype)
        out_specs = pl.BlockSpec((TT, BB, Dzp), lambda b, tb: (tb, b, 0))
    else:
        out_shape = jax.ShapeDtypeStruct((B, Dzp), z0.dtype)
        out_specs = pl.BlockSpec((BB, Dzp), lambda b, tb: (b, 0))

    zs = pl.pallas_call(
        kernel,
        out_shape=out_shape,
        grid_spec=pltpu.PrefetchScalarGridSpec(
            num_scalar_prefetch=0,
            grid=(B // BB, NT),
            in_specs=in_specs,
            out_specs=out_specs,
            scratch_shapes=[pltpu.VMEM((BB, Dzp), jnp.float32)]),
        compiler_params=pltpu.CompilerParams(
            # Batch blocks are independent -> "parallel" (v7x megacore).
            # Time axis carries z_cur -> MUST stay "arbitrary" (sequential).
            dimension_semantics=("parallel", "arbitrary")),
    )(t_flat, z0_p, x_p, w1z_p, w1x_p, w1t_p, b1_p, w2_p, b2_p)

    if full_sequence:
        return zs[:T, :, :Dz]
    return zs[:, :Dz]


def neural_ode_reference(z0, t, x, params, full_sequence=False, n_sub=N_SUB):
    """Pure-JAX f32 reference for correctness checking."""
    T = t.shape[0]
    t_flat = t.reshape(T).astype(jnp.float32)

    def f(z, tt, x_i):
        h = jnp.tanh(z @ params["w1z"] + x_i @ params["w1x"]
                     + tt * params["w1t"] + params["b1"])
        return h @ params["w2"] + params["b2"]

    zs = [z0]
    z = z0
    for i in range(T - 1):
        t0, t1 = t_flat[i], t_flat[i + 1]
        dt = (t1 - t0) / n_sub
        for k in range(n_sub):
            tt = t0 + k * dt
            z = z + dt * f(z, tt, x[i])
        zs.append(z)
    zs = jnp.stack(zs)
    return zs if full_sequence else zs[-1]


if __name__ == "__main__":
    # Small, module-consistent shapes.
    B, Dz, Dx, H, T = 8, 32, 16, 64, 8

    key = jax.random.PRNGKey(0)
    kz, kx, k1, k2, k3, k4, k5, k6 = jax.random.split(key, 8)

    params = {
        "w1z": jax.random.normal(k1, (Dz, H), jnp.float32) * 0.1,
        "w1x": jax.random.normal(k2, (Dx, H), jnp.float32) * 0.1,
        "w1t": jax.random.normal(k3, (1, H), jnp.float32) * 0.1,
        "b1":  jax.random.normal(k4, (1, H), jnp.float32) * 0.1,
        "w2":  jax.random.normal(k5, (H, Dz), jnp.float32) * 0.1,
        "b2":  jax.random.normal(k6, (1, Dz), jnp.float32) * 0.1,
    }

    z0 = jax.random.normal(kz, (B, Dz), jnp.float32)
    t = jnp.linspace(0.0, 1.0, T, dtype=jnp.float32).reshape(T, 1, 1)
    x = jax.random.normal(kx, (T, B, Dx), jnp.float32) * 0.5

    zs_ref = neural_ode_reference(z0, t, x, params, full_sequence=True)

    # 1) Exact-semantics check: f32 matmul path, tight tolerance.
    run_f32 = jax.jit(functools.partial(neural_ode_forward, full_sequence=True,
                                        matmul_dtype=jnp.float32))
    zs_f32 = run_f32(z0, t, x, params)
    jax.block_until_ready(zs_f32)
    assert zs_f32.shape == (T, B, Dz)
    assert jnp.allclose(zs_f32, zs_ref, rtol=1e-4, atol=1e-4), \
        "f32 kernel mismatch vs reference"

    # 2) Performance path: bf16 matmul operands (MXU-native on v5e/v6e/v7x),
    #    f32 accumulate/state. bf16 operand rounding accumulates over T*N_SUB
    #    Euler steps -> looser tolerance.
    run_bf16 = jax.jit(functools.partial(neural_ode_forward, full_sequence=True,
                                         matmul_dtype=jnp.bfloat16))
    zs_bf16 = run_bf16(z0, t, x, params)
    jax.block_until_ready(zs_bf16)
    assert zs_bf16.shape == (T, B, Dz)
    assert jnp.allclose(zs_bf16, zs_ref, rtol=5e-2, atol=5e-2), \
        "bf16 kernel mismatch vs reference"

    # 3) Default NeuralODE.forward returns the last state only; the kernel only
    #    emits a (B, Dz) final state in that case.
    z_last = jax.jit(neural_ode_forward)(z0, t, x, params)
    jax.block_until_ready(z_last)
    assert z_last.shape == (B, Dz)
    assert jnp.allclose(z_last, zs_ref[-1], rtol=5e-2, atol=5e-2), \
        "last-state kernel mismatch vs reference"

    print("KERNEL_OK")
</pallas_src>

<mosaic_0001>
module attributes {stable_mosaic.version = 11 : i64} {
  func.func @node_kernel(%arg0: i32, %arg1: i32, %arg2: memref<8xf32, #tpu.memory_space<smem>>, %arg3: memref<8x128xf32, #tpu.memory_space<vmem>>, %arg4: memref<8x8x128xf32, #tpu.memory_space<vmem>>, %arg5: memref<128x128xf32, #tpu.memory_space<vmem>>, %arg6: memref<128x128xf32, #tpu.memory_space<vmem>>, %arg7: memref<1x128xf32, #tpu.memory_space<vmem>>, %arg8: memref<1x128xf32, #tpu.memory_space<vmem>>, %arg9: memref<128x128xf32, #tpu.memory_space<vmem>>, %arg10: memref<1x128xf32, #tpu.memory_space<vmem>>, %arg11: memref<8x8x128xf32, #tpu.memory_space<vmem>>, %arg12: memref<8x128xf32, #tpu.memory_space<vmem>>) attributes {dimension_semantics = [#tpu.dimension_semantics<parallel>, #tpu.dimension_semantics<arbitrary>], iteration_bounds = array<i64: 1, 1>, scalar_prefetch = 0 : i64, scratch_operands = 1 : i64, tpu.core_type = #tpu.core_type<tc>, window_params = [{transform_indices = @transform_0, window_bounds = array<i64: 8>}, {transform_indices = @transform_1, window_bounds = array<i64: 8, 128>}, {transform_indices = @transform_2, window_bounds = array<i64: 8, 8, 128>}, {pipeline_mode = #tpu.pipeline_mode<synchronous>, transform_indices = @transform_3, window_bounds = array<i64: 128, 128>}, {pipeline_mode = #tpu.pipeline_mode<synchronous>, transform_indices = @transform_4, window_bounds = array<i64: 128, 128>}, {pipeline_mode = #tpu.pipeline_mode<synchronous>, transform_indices = @transform_5, window_bounds = array<i64: 1, 128>}, {pipeline_mode = #tpu.pipeline_mode<synchronous>, transform_indices = @transform_6, window_bounds = array<i64: 1, 128>}, {pipeline_mode = #tpu.pipeline_mode<synchronous>, transform_indices = @transform_7, window_bounds = array<i64: 128, 128>}, {pipeline_mode = #tpu.pipeline_mode<synchronous>, transform_indices = @transform_8, window_bounds = array<i64: 1, 128>}, {transform_indices = @transform_9, window_bounds = array<i64: 8, 8, 128>}]} {
    %c0_i32 = arith.constant 0 : i32
    %0 = arith.cmpi eq, %arg1, %c0_i32 : i32
    %1 = arith.extui %0 : i1 to i32
    %c0_i32_0 = arith.constant 0 : i32
    %2 = arith.cmpi ne, %1, %c0_i32_0 : i32
    scf.if %2 {
      %c0_77 = arith.constant 0 : index
      %c0_78 = arith.constant 0 : index
      %97 = vector.load %arg3[%c0_77, %c0_78] : memref<8x128xf32, #tpu.memory_space<vmem>>, vector<8x128xf32>
      %c0_79 = arith.constant 0 : index
      %c0_80 = arith.constant 0 : index
      %98 = vector.load %arg12[%c0_79, %c0_80] : memref<8x128xf32, #tpu.memory_space<vmem>>, vector<8x128xf32>
      tpu.vector_store %arg12[%c0_79, %c0_80], %97 {strides = array<i32>} : memref<8x128xf32, #tpu.memory_space<vmem>>, vector<8x128xf32>,
    } else {
    }
    %c0 = arith.constant 0 : index
    %c0_1 = arith.constant 0 : index
    %3 = vector.load %arg5[%c0, %c0_1] : memref<128x128xf32, #tpu.memory_space<vmem>>, vector<128x128xf32>
    %c0_2 = arith.constant 0 : index
    %c0_3 = arith.constant 0 : index
    %4 = vector.load %arg6[%c0_2, %c0_3] : memref<128x128xf32, #tpu.memory_space<vmem>>, vector<128x128xf32>
    %c0_4 = arith.constant 0 : index
    %c0_5 = arith.constant 0 : index
    %5 = vector.load %arg7[%c0_4, %c0_5] : memref<1x128xf32, #tpu.memory_space<vmem>>, vector<1x128xf32>
    %c0_6 = arith.constant 0 : index
    %c0_7 = arith.constant 0 : index
    %6 = vector.load %arg8[%c0_6, %c0_7] : memref<1x128xf32, #tpu.memory_space<vmem>>, vector<1x128xf32>
    %c0_8 = arith.constant 0 : index
    %c0_9 = arith.constant 0 : index
    %7 = vector.load %arg9[%c0_8, %c0_9] : memref<128x128xf32, #tpu.memory_space<vmem>>, vector<128x128xf32>
    %c0_10 = arith.constant 0 : index
    %c0_11 = arith.constant 0 : index
    %8 = vector.load %arg10[%c0_10, %c0_11] : memref<1x128xf32, #tpu.memory_space<vmem>>, vector<1x128xf32>
    %c8_i32 = arith.constant 8 : i32
    %9 = arith.muli %arg1, %c8_i32 : i32
    %c0_i32_12 = arith.constant 0 : i32
    %10 = arith.addi %9, %c0_i32_12 : i32
    %c0_i32_13 = arith.constant 0 : i32
    %11 = arith.cmpi sgt, %10, %c0_i32_13 : i32
    %c8_i32_14 = arith.constant 8 : i32
    %12 = arith.cmpi slt, %10, %c8_i32_14 : i32
    %13 = arith.andi %11, %12 : i1
    %14 = arith.extui %13 : i1 to i32
    %c0_i32_15 = arith.constant 0 : i32
    %15 = arith.cmpi ne, %14, %c0_i32_15 : i32
    scf.if %15 {
      %c1_i32_77 = arith.constant 1 : i32
      %97 = arith.subi %10, %c1_i32_77 : i32
      %98 = arith.index_cast %97 : i32 to index
      %99 = memref.load %arg2[%98] : memref<8xf32, #tpu.memory_space<smem>>
      %100 = arith.index_cast %10 : i32 to index
      %101 = memref.load %arg2[%100] : memref<8xf32, #tpu.memory_space<smem>>
      %c0_78 = arith.constant 0 : index
      %c0_79 = arith.constant 0 : index
      %c0_80 = arith.constant 0 : index
      %102 = vector.load %arg4[%c0_78, %c0_79, %c0_80] : memref<8x8x128xf32, #tpu.memory_space<vmem>>, vector<1x8x128xf32>
      %103 = vector.shape_cast %102 : vector<1x8x128xf32> to vector<8x128xf32>
      %cst = arith.constant dense<0.000000e+00> : vector<8x128xf32>
      %104 = tpu.matmul %103, %4, %cst {dimension_numbers = #tpu.dot_dimension_numbers<[1], [0], [0], [1], [0, 0, 1, 1], [], []>} : vector<8x128xf32>, vector<128x128xf32>, vector<8x128xf32> -> vector<8x128xf32>
      %105 = vector.broadcast %6 : vector<1x128xf32> to vector<8x128xf32>
      %106 = arith.addf %104, %105 : vector<8x128xf32>
      %107 = arith.subf %101, %99 : f32
      %cst_81 = arith.constant 4.000000e+00 : f32
      %108 = arith.divf %107, %cst_81 : f32
      %c0_82 = arith.constant 0 : index
      %c0_83 = arith.constant 0 : index
      %109 = vector.load %arg12[%c0_82, %c0_83] : memref<8x128xf32, #tpu.memory_space<vmem>>, vector<8x128xf32>
      %c0_i32_84 = arith.constant 0 : i32
      %110 = arith.sitofp %c0_i32_84 : i32 to f32
      %111 = arith.mulf %110, %108 : f32
      %112 = arith.addf %99, %111 : f32
      %cst_85 = arith.constant dense<0.000000e+00> : vector<8x128xf32>
      %113 = tpu.matmul %109, %3, %cst_85 {dimension_numbers = #tpu.dot_dimension_numbers<[1], [0], [0], [1], [0, 0, 1, 1], [], []>} : vector<8x128xf32>, vector<128x128xf32>, vector<8x128xf32> -> vector<8x128xf32>
      %114 = arith.addf %113, %106 : vector<8x128xf32>
      %115 = vector.broadcast %112 : f32 to vector<1x128xf32>
      %116 = arith.mulf %115, %5 : vector<1x128xf32>
      %117 = vector.broadcast %116 : vector<1x128xf32> to vector<8x128xf32>
      %118 = arith.addf %114, %117 : vector<8x128xf32>
      %119 = math.tanh %118 : vector<8x128xf32>
      %cst_86 = arith.constant dense<0.000000e+00> : vector<8x128xf32>
      %120 = tpu.matmul %119, %7, %cst_86 {dimension_numbers = #tpu.dot_dimension_numbers<[1], [0], [0], [1], [0, 0, 1, 1], [], []>} : vector<8x128xf32>, vector<128x128xf32>, vector<8x128xf32> -> vector<8x128xf32>
      %121 = vector.broadcast %8 : vector<1x128xf32> to vector<8x128xf32>
      %122 = arith.addf %120, %121 : vector<8x128xf32>
      %123 = vector.broadcast %108 : f32 to vector<8x128xf32>
      %124 = arith.mulf %123, %122 : vector<8x128xf32>
      %125 = arith.addf %109, %124 : vector<8x128xf32>
      %c1_i32_87 = arith.constant 1 : i32
      %126 = arith.sitofp %c1_i32_87 : i32 to f32
      %127 = arith.mulf %126, %108 : f32
      %128 = arith.addf %99, %127 : f32
      %cst_88 = arith.constant dense<0.000000e+00> : vector<8x128xf32>
      %129 = tpu.matmul %125, %3, %cst_88 {dimension_numbers = #tpu.dot_dimension_numbers<[1], [0], [0], [1], [0, 0, 1, 1], [], []>} : vector<8x128xf32>, vector<128x128xf32>, vector<8x128xf32> -> vector<8x128xf32>
      %130 = arith.addf %129, %106 : vector<8x128xf32>
      %131 = vector.broadcast %128 : f32 to vector<1x128xf32>
      %132 = arith.mulf %131, %5 : vector<1x128xf32>
      %133 = vector.broadcast %132 : vector<1x128xf32> to vector<8x128xf32>
      %134 = arith.addf %130, %133 : vector<8x128xf32>
      %135 = math.tanh %134 : vector<8x128xf32>
      %cst_89 = arith.constant dense<0.000000e+00> : vector<8x128xf32>
      %136 = tpu.matmul %135, %7, %cst_89 {dimension_numbers = #tpu.dot_dimension_numbers<[1], [0], [0], [1], [0, 0, 1, 1], [], []>} : vector<8x128xf32>, vector<128x128xf32>, vector<8x128xf32> -> vector<8x128xf32>
      %137 = vector.broadcast %8 : vector<1x128xf32> to vector<8x128xf32>
      %138 = arith.addf %136, %137 : vector<8x128xf32>
      %139 = vector.broadcast %108 : f32 to vector<8x128xf32>
      %140 = arith.mulf %139, %138 : vector<8x128xf32>
      %141 = arith.addf %125, %140 : vector<8x128xf32>
      %c2_i32_90 = arith.constant 2 : i32
      %142 = arith.sitofp %c2_i32_90 : i32 to f32
      %143 = arith.mulf %142, %108 : f32
      %144 = arith.addf %99, %143 : f32
      %cst_91 = arith.constant dense<0.000000e+00> : vector<8x128xf32>
      %145 = tpu.matmul %141, %3, %cst_91 {dimension_numbers = #tpu.dot_dimension_numbers<[1], [0], [0], [1], [0, 0, 1, 1], [], []>} : vector<8x128xf32>, vector<128x128xf32>, vector<8x128xf32> -> vector<8x128xf32>
      %146 = arith.addf %145, %106 : vector<8x128xf32>
      %147 = vector.broadcast %144 : f32 to vector<1x128xf32>
      %148 = arith.mulf %147, %5 : vector<1x128xf32>
      %149 = vector.broadcast %148 : vector<1x128xf32> to vector<8x128xf32>
      %150 = arith.addf %146, %149 : vector<8x128xf32>
      %151 = math.tanh %150 : vector<8x128xf32>
      %cst_92 = arith.constant dense<0.000000e+00> : vector<8x128xf32>
      %152 = tpu.matmul %151, %7, %cst_92 {dimension_numbers = #tpu.dot_dimension_numbers<[1], [0], [0], [1], [0, 0, 1, 1], [], []>} : vector<8x128xf32>, vector<128x128xf32>, vector<8x128xf32> -> vector<8x128xf32>
      %153 = vector.broadcast %8 : vector<1x128xf32> to vector<8x128xf32>
      %154 = arith.addf %152, %153 : vector<8x128xf32>
      %155 = vector.broadcast %108 : f32 to vector<8x128xf32>
      %156 = arith.mulf %155, %154 : vector<8x128xf32>
      %157 = arith.addf %141, %156 : vector<8x128xf32>
      %c3_i32_93 = arith.constant 3 : i32
      %158 = arith.sitofp %c3_i32_93 : i32 to f32
      %159 = arith.mulf %158, %108 : f32
      %160 = arith.addf %99, %159 : f32
      %cst_94 = arith.constant dense<0.000000e+00> : vector<8x128xf32>
      %161 = tpu.matmul %157, %3, %cst_94 {dimension_numbers = #tpu.dot_dimension_numbers<[1], [0], [0], [1], [0, 0, 1, 1], [], []>} : vector<8x128xf32>, vector<128x128xf32>, vector<8x128xf32> -> vector<8x128xf32>
      %162 = arith.addf %161, %106 : vector<8x128xf32>
      %163 = vector.broadcast %160 : f32 to vector<1x128xf32>
      %164 = arith.mulf %163, %5 : vector<1x128xf32>
      %165 = vector.broadcast %164 : vector<1x128xf32> to vector<8x128xf32>
      %166 = arith.addf %162, %165 : vector<8x128xf32>
      %167 = math.tanh %166 : vector<8x128xf32>
      %cst_95 = arith.constant dense<0.000000e+00> : vector<8x128xf32>
      %168 = tpu.matmul %167, %7, %cst_95 {dimension_numbers = #tpu.dot_dimension_numbers<[1], [0], [0], [1], [0, 0, 1, 1], [], []>} : vector<8x128xf32>, vector<128x128xf32>, vector<8x128xf32> -> vector<8x128xf32>
      %169 = vector.broadcast %8 : vector<1x128xf32> to vector<8x128xf32>
      %170 = arith.addf %168, %169 : vector<8x128xf32>
      %171 = vector.broadcast %108 : f32 to vector<8x128xf32>
      %172 = arith.mulf %171, %170 : vector<8x128xf32>
      %173 = arith.addf %157, %172 : vector<8x128xf32>
      %c4_i32_96 = arith.constant 4 : i32
      %c0_97 = arith.constant 0 : index
      %c0_98 = arith.constant 0 : index
      %174 = vector.load %arg12[%c0_97, %c0_98] : memref<8x128xf32, #tpu.memory_space<vmem>>, vector<8x128xf32>
      tpu.vector_store %arg12[%c0_97, %c0_98], %173 {strides = array<i32>} : memref<8x128xf32, #tpu.memory_space<vmem>>, vector<8x128xf32>,
    } else {
    }
    %c0_16 = arith.constant 0 : index
    %c0_17 = arith.constant 0 : index
    %16 = vector.load %arg12[%c0_16, %c0_17] : memref<8x128xf32, #tpu.memory_space<vmem>>, vector<8x128xf32>
    %c0_18 = arith.constant 0 : index
    %c0_19 = arith.constant 0 : index
    %c0_20 = arith.constant 0 : index
    %17 = vector.load %arg11[%c0_18, %c0_19, %c0_20] : memref<8x8x128xf32, #tpu.memory_space<vmem>>, vector<1x8x128xf32>
    %18 = vector.shape_cast %17 : vector<1x8x128xf32> to vector<8x128xf32>
    %19 = vector.shape_cast %16 : vector<8x128xf32> to vector<1x8x128xf32>
    tpu.vector_store %arg11[%c0_18, %c0_19, %c0_20], %19 {strides = array<i32>} : memref<8x8x128xf32, #tpu.memory_space<vmem>>, vector<1x8x128xf32>,
    %c8_i32_21 = arith.constant 8 : i32
    %20 = arith.muli %arg1, %c8_i32_21 : i32
    %c1_i32 = arith.constant 1 : i32
    %21 = arith.addi %20, %c1_i32 : i32
    %c0_i32_22 = arith.constant 0 : i32
    %22 = arith.cmpi sgt, %21, %c0_i32_22 : i32
    %c8_i32_23 = arith.constant 8 : i32
    %23 = arith.cmpi slt, %21, %c8_i32_23 : i32
    %24 = arith.andi %22, %23 : i1
    %25 = arith.extui %24 : i1 to i32
    %c0_i32_24 = arith.constant 0 : i32
    %26 = arith.cmpi ne, %25, %c0_i32_24 : i32
    scf.if %26 {
      %c1_i32_77 = arith.constant 1 : i32
      %97 = arith.subi %21, %c1_i32_77 : i32
      %98 = arith.index_cast %97 : i32 to index
      %99 = memref.load %arg2[%98] : memref<8xf32, #tpu.memory_space<smem>>
      %100 = arith.index_cast %21 : i32 to index
      %101 = memref.load %arg2[%100] : memref<8xf32, #tpu.memory_space<smem>>
      %c1_78 = arith.constant 1 : index
      %c0_79 = arith.constant 0 : index
      %c0_80 = arith.constant 0 : index
      %102 = vector.load %arg4[%c1_78, %c0_79, %c0_80] : memref<8x8x128xf32, #tpu.memory_space<vmem>>, vector<1x8x128xf32>
      %103 = vector.shape_cast %102 : vector<1x8x128xf32> to vector<8x128xf32>
      %cst = arith.constant dense<0.000000e+00> : vector<8x128xf32>
      %104 = tpu.matmul %103, %4, %cst {dimension_numbers = #tpu.dot_dimension_numbers<[1], [0], [0], [1], [0, 0, 1, 1], [], []>} : vector<8x128xf32>, vector<128x128xf32>, vector<8x128xf32> -> vector<8x128xf32>
      %105 = vector.broadcast %6 : vector<1x128xf32> to vector<8x128xf32>
      %106 = arith.addf %104, %105 : vector<8x128xf32>
      %107 = arith.subf %101, %99 : f32
      %cst_81 = arith.constant 4.000000e+00 : f32
      %108 = arith.divf %107, %cst_81 : f32
      %c0_82 = arith.constant 0 : index
      %c0_83 = arith.constant 0 : index
      %109 = vector.load %arg12[%c0_82, %c0_83] : memref<8x128xf32, #tpu.memory_space<vmem>>, vector<8x128xf32>
      %c0_i32_84 = arith.constant 0 : i32
      %110 = arith.sitofp %c0_i32_84 : i32 to f32
      %111 = arith.mulf %110, %108 : f32
      %112 = arith.addf %99, %111 : f32
      %cst_85 = arith.constant dense<0.000000e+00> : vector<8x128xf32>
      %113 = tpu.matmul %109, %3, %cst_85 {dimension_numbers = #tpu.dot_dimension_numbers<[1], [0], [0], [1], [0, 0, 1, 1], [], []>} : vector<8x128xf32>, vector<128x128xf32>, vector<8x128xf32> -> vector<8x128xf32>
      %114 = arith.addf %113, %106 : vector<8x128xf32>
      %115 = vector.broadcast %112 : f32 to vector<1x128xf32>
      %116 = arith.mulf %115, %5 : vector<1x128xf32>
      %117 = vector.broadcast %116 : vector<1x128xf32> to vector<8x128xf32>
      %118 = arith.addf %114, %117 : vector<8x128xf32>
      %119 = math.tanh %118 : vector<8x128xf32>
      %cst_86 = arith.constant dense<0.000000e+00> : vector<8x128xf32>
      %120 = tpu.matmul %119, %7, %cst_86 {dimension_numbers = #tpu.dot_dimension_numbers<[1], [0], [0], [1], [0, 0, 1, 1], [], []>} : vector<8x128xf32>, vector<128x128xf32>, vector<8x128xf32> -> vector<8x128xf32>
      %121 = vector.broadcast %8 : vector<1x128xf32> to vector<8x128xf32>
      %122 = arith.addf %120, %121 : vector<8x128xf32>
      %123 = vector.broadcast %108 : f32 to vector<8x128xf32>
      %124 = arith.mulf %123, %122 : vector<8x128xf32>
      %125 = arith.addf %109, %124 : vector<8x128xf32>
      %c1_i32_87 = arith.constant 1 : i32
      %126 = arith.sitofp %c1_i32_87 : i32 to f32
      %127 = arith.mulf %126, %108 : f32
      %128 = arith.addf %99, %127 : f32
      %cst_88 = arith.constant dense<0.000000e+00> : vector<8x128xf32>
      %129 = tpu.matmul %125, %3, %cst_88 {dimension_numbers = #tpu.dot_dimension_numbers<[1], [0], [0], [1], [0, 0, 1, 1], [], []>} : vector<8x128xf32>, vector<128x128xf32>, vector<8x128xf32> -> vector<8x128xf32>
      %130 = arith.addf %129, %106 : vector<8x128xf32>
      %131 = vector.broadcast %128 : f32 to vector<1x128xf32>
      %132 = arith.mulf %131, %5 : vector<1x128xf32>
      %133 = vector.broadcast %132 : vector<1x128xf32> to vector<8x128xf32>
      %134 = arith.addf %130, %133 : vector<8x128xf32>
      %135 = math.tanh %134 : vector<8x128xf32>
      %cst_89 = arith.constant dense<0.000000e+00> : vector<8x128xf32>
      %136 = tpu.matmul %135, %7, %cst_89 {dimension_numbers = #tpu.dot_dimension_numbers<[1], [0], [0], [1], [0, 0, 1, 1], [], []>} : vector<8x128xf32>, vector<128x128xf32>, vector<8x128xf32> -> vector<8x128xf32>
      %137 = vector.broadcast %8 : vector<1x128xf32> to vector<8x128xf32>
      %138 = arith.addf %136, %137 : vector<8x128xf32>
      %139 = vector.broadcast %108 : f32 to vector<8x128xf32>
      %140 = arith.mulf %139, %138 : vector<8x128xf32>
      %141 = arith.addf %125, %140 : vector<8x128xf32>
      %c2_i32_90 = arith.constant 2 : i32
      %142 = arith.sitofp %c2_i32_90 : i32 to f32
      %143 = arith.mulf %142, %108 : f32
      %144 = arith.addf %99, %143 : f32
      %cst_91 = arith.constant dense<0.000000e+00> : vector<8x128xf32>
      %145 = tpu.matmul %141, %3, %cst_91 {dimension_numbers = #tpu.dot_dimension_numbers<[1], [0], [0], [1], [0, 0, 1, 1], [], []>} : vector<8x128xf32>, vector<128x128xf32>, vector<8x128xf32> -> vector<8x128xf32>
      %146 = arith.addf %145, %106 : vector<8x128xf32>
      %147 = vector.broadcast %144 : f32 to vector<1x128xf32>
      %148 = arith.mulf %147, %5 : vector<1x128xf32>
      %149 = vector.broadcast %148 : vector<1x128xf32> to vector<8x128xf32>
      %150 = arith.addf %146, %149 : vector<8x128xf32>
      %151 = math.tanh %150 : vector<8x128xf32>
      %cst_92 = arith.constant dense<0.000000e+00> : vector<8x128xf32>
      %152 = tpu.matmul %151, %7, %cst_92 {dimension_numbers = #tpu.dot_dimension_numbers<[1], [0], [0], [1], [0, 0, 1, 1], [], []>} : vector<8x128xf32>, vector<128x128xf32>, vector<8x128xf32> -> vector<8x128xf32>
      %153 = vector.broadcast %8 : vector<1x128xf32> to vector<8x128xf32>
      %154 = arith.addf %152, %153 : vector<8x128xf32>
      %155 = vector.broadcast %108 : f32 to vector<8x128xf32>
      %156 = arith.mulf %155, %154 : vector<8x128xf32>
      %157 = arith.addf %141, %156 : vector<8x128xf32>
      %c3_i32_93 = arith.constant 3 : i32
      %158 = arith.sitofp %c3_i32_93 : i32 to f32
      %159 = arith.mulf %158, %108 : f32
      %160 = arith.addf %99, %159 : f32
      %cst_94 = arith.constant dense<0.000000e+00> : vector<8x128xf32>
      %161 = tpu.matmul %157, %3, %cst_94 {dimension_numbers = #tpu.dot_dimension_numbers<[1], [0], [0], [1], [0, 0, 1, 1], [], []>} : vector<8x128xf32>, vector<128x128xf32>, vector<8x128xf32> -> vector<8x128xf32>
      %162 = arith.addf %161, %106 : vector<8x128xf32>
      %163 = vector.broadcast %160 : f32 to vector<1x128xf32>
      %164 = arith.mulf %163, %5 : vector<1x128xf32>
      %165 = vector.broadcast %164 : vector<1x128xf32> to vector<8x128xf32>
      %166 = arith.addf %162, %165 : vector<8x128xf32>
      %167 = math.tanh %166 : vector<8x128xf32>
      %cst_95 = arith.constant dense<0.000000e+00> : vector<8x128xf32>
      %168 = tpu.matmul %167, %7, %cst_95 {dimension_numbers = #tpu.dot_dimension_numbers<[1], [0], [0], [1], [0, 0, 1, 1], [], []>} : vector<8x128xf32>, vector<128x128xf32>, vector<8x128xf32> -> vector<8x128xf32>
      %169 = vector.broadcast %8 : vector<1x128xf32> to vector<8x128xf32>
      %170 = arith.addf %168, %169 : vector<8x128xf32>
      %171 = vector.broadcast %108 : f32 to vector<8x128xf32>
      %172 = arith.mulf %171, %170 : vector<8x128xf32>
      %173 = arith.addf %157, %172 : vector<8x128xf32>
      %c4_i32_96 = arith.constant 4 : i32
      %c0_97 = arith.constant 0 : index
      %c0_98 = arith.constant 0 : index
      %174 = vector.load %arg12[%c0_97, %c0_98] : memref<8x128xf32, #tpu.memory_space<vmem>>, vector<8x128xf32>
      tpu.vector_store %arg12[%c0_97, %c0_98], %173 {strides = array<i32>} : memref<8x128xf32, #tpu.memory_space<vmem>>, vector<8x128xf32>,
    } else {
    }
    %c0_25 = arith.constant 0 : index
    %c0_26 = arith.constant 0 : index
    %27 = vector.load %arg12[%c0_25, %c0_26] : memref<8x128xf32, #tpu.memory_space<vmem>>, vector<8x128xf32>
    %c1 = arith.constant 1 : index
    %c0_27 = arith.constant 0 : index
    %c0_28 = arith.constant 0 : index
    %28 = vector.load %arg11[%c1, %c0_27, %c0_28] : memref<8x8x128xf32, #tpu.memory_space<vmem>>, vector<1x8x128xf32>
    %29 = vector.shape_cast %28 : vector<1x8x128xf32> to vector<8x128xf32>
    %30 = vector.shape_cast %27 : vector<8x128xf32> to vector<1x8x128xf32>
    tpu.vector_store %arg11[%c1, %c0_27, %c0_28], %30 {strides = array<i32>} : memref<8x8x128xf32, #tpu.memory_space<vmem>>, vector<1x8x128xf32>,
    %c8_i32_29 = arith.constant 8 : i32
    %31 = arith.muli %arg1, %c8_i32_29 : i32
    %c2_i32 = arith.constant 2 : i32
    %32 = arith.addi %31, %c2_i32 : i32
    %c0_i32_30 = arith.constant 0 : i32
    %33 = arith.cmpi sgt, %32, %c0_i32_30 : i32
    %c8_i32_31 = arith.constant 8 : i32
    %34 = arith.cmpi slt, %32, %c8_i32_31 : i32
    %35 = arith.andi %33, %34 : i1
    %36 = arith.extui %35 : i1 to i32
    %c0_i32_32 = arith.constant 0 : i32
    %37 = arith.cmpi ne, %36, %c0_i32_32 : i32
    scf.if %37 {
      %c1_i32_77 = arith.constant 1 : i32
      %97 = arith.subi %32, %c1_i32_77 : i32
      %98 = arith.index_cast %97 : i32 to index
      %99 = memref.load %arg2[%98] : memref<8xf32, #tpu.memory_space<smem>>
      %100 = arith.index_cast %32 : i32 to index
      %101 = memref.load %arg2[%100] : memref<8xf32, #tpu.memory_space<smem>>
      %c2_78 = arith.constant 2 : index
      %c0_79 = arith.constant 0 : index
      %c0_80 = arith.constant 0 : index
      %102 = vector.load %arg4[%c2_78, %c0_79, %c0_80] : memref<8x8x128xf32, #tpu.memory_space<vmem>>, vector<1x8x128xf32>
      %103 = vector.shape_cast %102 : vector<1x8x128xf32> to vector<8x128xf32>
      %cst = arith.constant dense<0.000000e+00> : vector<8x128xf32>
      %104 = tpu.matmul %103, %4, %cst {dimension_numbers = #tpu.dot_dimension_numbers<[1], [0], [0], [1], [0, 0, 1, 1], [], []>} : vector<8x128xf32>, vector<128x128xf32>, vector<8x128xf32> -> vector<8x128xf32>
      %105 = vector.broadcast %6 : vector<1x128xf32> to vector<8x128xf32>
      %106 = arith.addf %104, %105 : vector<8x128xf32>
      %107 = arith.subf %101, %99 : f32
      %cst_81 = arith.constant 4.000000e+00 : f32
      %108 = arith.divf %107, %cst_81 : f32
      %c0_82 = arith.constant 0 : index
      %c0_83 = arith.constant 0 : index
      %109 = vector.load %arg12[%c0_82, %c0_83] : memref<8x128xf32, #tpu.memory_space<vmem>>, vector<8x128xf32>
      %c0_i32_84 = arith.constant 0 : i32
      %110 = arith.sitofp %c0_i32_84 : i32 to f32
      %111 = arith.mulf %110, %108 : f32
      %112 = arith.addf %99, %111 : f32
      %cst_85 = arith.constant dense<0.000000e+00> : vector<8x128xf32>
      %113 = tpu.matmul %109, %3, %cst_85 {dimension_numbers = #tpu.dot_dimension_numbers<[1], [0], [0], [1], [0, 0, 1, 1], [], []>} : vector<8x128xf32>, vector<128x128xf32>, vector<8x128xf32> -> vector<8x128xf32>
      %114 = arith.addf %113, %106 : vector<8x128xf32>
      %115 = vector.broadcast %112 : f32 to vector<1x128xf32>
      %116 = arith.mulf %115, %5 : vector<1x128xf32>
      %117 = vector.broadcast %116 : vector<1x128xf32> to vector<8x128xf32>
      %118 = arith.addf %114, %117 : vector<8x128xf32>
      %119 = math.tanh %118 : vector<8x128xf32>
      %cst_86 = arith.constant dense<0.000000e+00> : vector<8x128xf32>
      %120 = tpu.matmul %119, %7, %cst_86 {dimension_numbers = #tpu.dot_dimension_numbers<[1], [0], [0], [1], [0, 0, 1, 1], [], []>} : vector<8x128xf32>, vector<128x128xf32>, vector<8x128xf32> -> vector<8x128xf32>
      %121 = vector.broadcast %8 : vector<1x128xf32> to vector<8x128xf32>
      %122 = arith.addf %120, %121 : vector<8x128xf32>
      %123 = vector.broadcast %108 : f32 to vector<8x128xf32>
      %124 = arith.mulf %123, %122 : vector<8x128xf32>
      %125 = arith.addf %109, %124 : vector<8x128xf32>
      %c1_i32_87 = arith.constant 1 : i32
      %126 = arith.sitofp %c1_i32_87 : i32 to f32
      %127 = arith.mulf %126, %108 : f32
      %128 = arith.addf %99, %127 : f32
      %cst_88 = arith.constant dense<0.000000e+00> : vector<8x128xf32>
      %129 = tpu.matmul %125, %3, %cst_88 {dimension_numbers = #tpu.dot_dimension_numbers<[1], [0], [0], [1], [0, 0, 1, 1], [], []>} : vector<8x128xf32>, vector<128x128xf32>, vector<8x128xf32> -> vector<8x128xf32>
      %130 = arith.addf %129, %106 : vector<8x128xf32>
      %131 = vector.broadcast %128 : f32 to vector<1x128xf32>
      %132 = arith.mulf %131, %5 : vector<1x128xf32>
      %133 = vector.broadcast %132 : vector<1x128xf32> to vector<8x128xf32>
      %134 = arith.addf %130, %133 : vector<8x128xf32>
      %135 = math.tanh %134 : vector<8x128xf32>
      %cst_89 = arith.constant dense<0.000000e+00> : vector<8x128xf32>
      %136 = tpu.matmul %135, %7, %cst_89 {dimension_numbers = #tpu.dot_dimension_numbers<[1], [0], [0], [1], [0, 0, 1, 1], [], []>} : vector<8x128xf32>, vector<128x128xf32>, vector<8x128xf32> -> vector<8x128xf32>
      %137 = vector.broadcast %8 : vector<1x128xf32> to vector<8x128xf32>
      %138 = arith.addf %136, %137 : vector<8x128xf32>
      %139 = vector.broadcast %108 : f32 to vector<8x128xf32>
      %140 = arith.mulf %139, %138 : vector<8x128xf32>
      %141 = arith.addf %125, %140 : vector<8x128xf32>
      %c2_i32_90 = arith.constant 2 : i32
      %142 = arith.sitofp %c2_i32_90 : i32 to f32
      %143 = arith.mulf %142, %108 : f32
      %144 = arith.addf %99, %143 : f32
      %cst_91 = arith.constant dense<0.000000e+00> : vector<8x128xf32>
      %145 = tpu.matmul %141, %3, %cst_91 {dimension_numbers = #tpu.dot_dimension_numbers<[1], [0], [0], [1], [0, 0, 1, 1], [], []>} : vector<8x128xf32>, vector<128x128xf32>, vector<8x128xf32> -> vector<8x128xf32>
      %146 = arith.addf %145, %106 : vector<8x128xf32>
      %147 = vector.broadcast %144 : f32 to vector<1x128xf32>
      %148 = arith.mulf %147, %5 : vector<1x128xf32>
      %149 = vector.broadcast %148 : vector<1x128xf32> to vector<8x128xf32>
      %150 = arith.addf %146, %149 : vector<8x128xf32>
      %151 = math.tanh %150 : vector<8x128xf32>
      %cst_92 = arith.constant dense<0.000000e+00> : vector<8x128xf32>
      %152 = tpu.matmul %151, %7, %cst_92 {dimension_numbers = #tpu.dot_dimension_numbers<[1], [0], [0], [1], [0, 0, 1, 1], [], []>} : vector<8x128xf32>, vector<128x128xf32>, vector<8x128xf32> -> vector<8x128xf32>
      %153 = vector.broadcast %8 : vector<1x128xf32> to vector<8x128xf32>
      %154 = arith.addf %152, %153 : vector<8x128xf32>
      %155 = vector.broadcast %108 : f32 to vector<8x128xf32>
      %156 = arith.mulf %155, %154 : vector<8x128xf32>
      %157 = arith.addf %141, %156 : vector<8x128xf32>
      %c3_i32_93 = arith.constant 3 : i32
      %158 = arith.sitofp %c3_i32_93 : i32 to f32
      %159 = arith.mulf %158, %108 : f32
      %160 = arith.addf %99, %159 : f32
      %cst_94 = arith.constant dense<0.000000e+00> : vector<8x128xf32>
      %161 = tpu.matmul %157, %3, %cst_94 {dimension_numbers = #tpu.dot_dimension_numbers<[1], [0], [0], [1], [0, 0, 1, 1], [], []>} : vector<8x128xf32>, vector<128x128xf32>, vector<8x128xf32> -> vector<8x128xf32>
      %162 = arith.addf %161, %106 : vector<8x128xf32>
      %163 = vector.broadcast %160 : f32 to vector<1x128xf32>
      %164 = arith.mulf %163, %5 : vector<1x128xf32>
      %165 = vector.broadcast %164 : vector<1x128xf32> to vector<8x128xf32>
      %166 = arith.addf %162, %165 : vector<8x128xf32>
      %167 = math.tanh %166 : vector<8x128xf32>
      %cst_95 = arith.constant dense<0.000000e+00> : vector<8x128xf32>
      %168 = tpu.matmul %167, %7, %cst_95 {dimension_numbers = #tpu.dot_dimension_numbers<[1], [0], [0], [1], [0, 0, 1, 1], [], []>} : vector<8x128xf32>, vector<128x128xf32>, vector<8x128xf32> -> vector<8x128xf32>
      %169 = vector.broadcast %8 : vector<1x128xf32> to vector<8x128xf32>
      %170 = arith.addf %168, %169 : vector<8x128xf32>
      %171 = vector.broadcast %108 : f32 to vector<8x128xf32>
      %172 = arith.mulf %171, %170 : vector<8x128xf32>
      %173 = arith.addf %157, %172 : vector<8x128xf32>
      %c4_i32_96 = arith.constant 4 : i32
      %c0_97 = arith.constant 0 : index
      %c0_98 = arith.constant 0 : index
      %174 = vector.load %arg12[%c0_97, %c0_98] : memref<8x128xf32, #tpu.memory_space<vmem>>, vector<8x128xf32>
      tpu.vector_store %arg12[%c0_97, %c0_98], %173 {strides = array<i32>} : memref<8x128xf32, #tpu.memory_space<vmem>>, vector<8x128xf32>,
    } else {
    }
    %c0_33 = arith.constant 0 : index
    %c0_34 = arith.constant 0 : index
    %38 = vector.load %arg12[%c0_33, %c0_34] : memref<8x128xf32, #tpu.memory_space<vmem>>, vector<8x128xf32>
    %c2 = arith.constant 2 : index
    %c0_35 = arith.constant 0 : index
    %c0_36 = arith.constant 0 : index
    %39 = vector.load %arg11[%c2, %c0_35, %c0_36] : memref<8x8x128xf32, #tpu.memory_space<vmem>>, vector<1x8x128xf32>
    %40 = vector.shape_cast %39 : vector<1x8x128xf32> to vector<8x128xf32>
    %41 = vector.shape_cast %38 : vector<8x128xf32> to vector<1x8x128xf32>
    tpu.vector_store %arg11[%c2, %c0_35, %c0_36], %41 {strides = array<i32>} : memref<8x8x128xf32, #tpu.memory_space<vmem>>, vector<1x8x128xf32>,
    %c8_i32_37 = arith.constant 8 : i32
    %42 = arith.muli %arg1, %c8_i32_37 : i32
    %c3_i32 = arith.constant 3 : i32
    %43 = arith.addi %42, %c3_i32 : i32
    %c0_i32_38 = arith.constant 0 : i32
    %44 = arith.cmpi sgt, %43, %c0_i32_38 : i32
    %c8_i32_39 = arith.constant 8 : i32
    %45 = arith.cmpi slt, %43, %c8_i32_39 : i32
    %46 = arith.andi %44, %45 : i1
    %47 = arith.extui %46 : i1 to i32
    %c0_i32_40 = arith.constant 0 : i32
    %48 = arith.cmpi ne, %47, %c0_i32_40 : i32
    scf.if %48 {
      %c1_i32_77 = arith.constant 1 : i32
      %97 = arith.subi %43, %c1_i32_77 : i32
      %98 = arith.index_cast %97 : i32 to index
      %99 = memref.load %arg2[%98] : memref<8xf32, #tpu.memory_space<smem>>
      %100 = arith.index_cast %43 : i32 to index
      %101 = memref.load %arg2[%100] : memref<8xf32, #tpu.memory_space<smem>>
      %c3_78 = arith.constant 3 : index
      %c0_79 = arith.constant 0 : index
      %c0_80 = arith.constant 0 : index
      %102 = vector.load %arg4[%c3_78, %c0_79, %c0_80] : memref<8x8x128xf32, #tpu.memory_space<vmem>>, vector<1x8x128xf32>
      %103 = vector.shape_cast %102 : vector<1x8x128xf32> to vector<8x128xf32>
      %cst = arith.constant dense<0.000000e+00> : vector<8x128xf32>
      %104 = tpu.matmul %103, %4, %cst {dimension_numbers = #tpu.dot_dimension_numbers<[1], [0], [0], [1], [0, 0, 1, 1], [], []>} : vector<8x128xf32>, vector<128x128xf32>, vector<8x128xf32> -> vector<8x128xf32>
      %105 = vector.broadcast %6 : vector<1x128xf32> to vector<8x128xf32>
      %106 = arith.addf %104, %105 : vector<8x128xf32>
      %107 = arith.subf %101, %99 : f32
      %cst_81 = arith.constant 4.000000e+00 : f32
      %108 = arith.divf %107, %cst_81 : f32
      %c0_82 = arith.constant 0 : index
      %c0_83 = arith.constant 0 : index
      %109 = vector.load %arg12[%c0_82, %c0_83] : memref<8x128xf32, #tpu.memory_space<vmem>>, vector<8x128xf32>
      %c0_i32_84 = arith.constant 0 : i32
      %110 = arith.sitofp %c0_i32_84 : i32 to f32
      %111 = arith.mulf %110, %108 : f32
      %112 = arith.addf %99, %111 : f32
      %cst_85 = arith.constant dense<0.000000e+00> : vector<8x128xf32>
      %113 = tpu.matmul %109, %3, %cst_85 {dimension_numbers = #tpu.dot_dimension_numbers<[1], [0], [0], [1], [0, 0, 1, 1], [], []>} : vector<8x128xf32>, vector<128x128xf32>, vector<8x128xf32> -> vector<8x128xf32>
      %114 = arith.addf %113, %106 : vector<8x128xf32>
      %115 = vector.broadcast %112 : f32 to vector<1x128xf32>
      %116 = arith.mulf %115, %5 : vector<1x128xf32>
      %117 = vector.broadcast %116 : vector<1x128xf32> to vector<8x128xf32>
      %118 = arith.addf %114, %117 : vector<8x128xf32>
      %119 = math.tanh %118 : vector<8x128xf32>
      %cst_86 = arith.constant dense<0.000000e+00> : vector<8x128xf32>
      %120 = tpu.matmul %119, %7, %cst_86 {dimension_numbers = #tpu.dot_dimension_numbers<[1], [0], [0], [1], [0, 0, 1, 1], [], []>} : vector<8x128xf32>, vector<128x128xf32>, vector<8x128xf32> -> vector<8x128xf32>
      %121 = vector.broadcast %8 : vector<1x128xf32> to vector<8x128xf32>
      %122 = arith.addf %120, %121 : vector<8x128xf32>
      %123 = vector.broadcast %108 : f32 to vector<8x128xf32>
      %124 = arith.mulf %123, %122 : vector<8x128xf32>
      %125 = arith.addf %109, %124 : vector<8x128xf32>
      %c1_i32_87 = arith.constant 1 : i32
      %126 = arith.sitofp %c1_i32_87 : i32 to f32
      %127 = arith.mulf %126, %108 : f32
      %128 = arith.addf %99, %127 : f32
      %cst_88 = arith.constant dense<0.000000e+00> : vector<8x128xf32>
      %129 = tpu.matmul %125, %3, %cst_88 {dimension_numbers = #tpu.dot_dimension_numbers<[1], [0], [0], [1], [0, 0, 1, 1], [], []>} : vector<8x128xf32>, vector<128x128xf32>, vector<8x128xf32> -> vector<8x128xf32>
      %130 = arith.addf %129, %106 : vector<8x128xf32>
      %131 = vector.broadcast %128 : f32 to vector<1x128xf32>
      %132 = arith.mulf %131, %5 : vector<1x128xf32>
      %133 = vector.broadcast %132 : vector<1x128xf32> to vector<8x128xf32>
      %134 = arith.addf %130, %133 : vector<8x128xf32>
      %135 = math.tanh %134 : vector<8x128xf32>
      %cst_89 = arith.constant dense<0.000000e+00> : vector<8x128xf32>
      %136 = tpu.matmul %135, %7, %cst_89 {dimension_numbers = #tpu.dot_dimension_numbers<[1], [0], [0], [1], [0, 0, 1, 1], [], []>} : vector<8x128xf32>, vector<128x128xf32>, vector<8x128xf32> -> vector<8x128xf32>
      %137 = vector.broadcast %8 : vector<1x128xf32> to vector<8x128xf32>
      %138 = arith.addf %136, %137 : vector<8x128xf32>
      %139 = vector.broadcast %108 : f32 to vector<8x128xf32>
      %140 = arith.mulf %139, %138 : vector<8x128xf32>
      %141 = arith.addf %125, %140 : vector<8x128xf32>
      %c2_i32_90 = arith.constant 2 : i32
      %142 = arith.sitofp %c2_i32_90 : i32 to f32
      %143 = arith.mulf %142, %108 : f32
      %144 = arith.addf %99, %143 : f32
      %cst_91 = arith.constant dense<0.000000e+00> : vector<8x128xf32>
      %145 = tpu.matmul %141, %3, %cst_91 {dimension_numbers = #tpu.dot_dimension_numbers<[1], [0], [0], [1], [0, 0, 1, 1], [], []>} : vector<8x128xf32>, vector<128x128xf32>, vector<8x128xf32> -> vector<8x128xf32>
      %146 = arith.addf %145, %106 : vector<8x128xf32>
      %147 = vector.broadcast %144 : f32 to vector<1x128xf32>
      %148 = arith.mulf %147, %5 : vector<1x128xf32>
      %149 = vector.broadcast %148 : vector<1x128xf32> to vector<8x128xf32>
      %150 = arith.addf %146, %149 : vector<8x128xf32>
      %151 = math.tanh %150 : vector<8x128xf32>
      %cst_92 = arith.constant dense<0.000000e+00> : vector<8x128xf32>
      %152 = tpu.matmul %151, %7, %cst_92 {dimension_numbers = #tpu.dot_dimension_numbers<[1], [0], [0], [1], [0, 0, 1, 1], [], []>} : vector<8x128xf32>, vector<128x128xf32>, vector<8x128xf32> -> vector<8x128xf32>
      %153 = vector.broadcast %8 : vector<1x128xf32> to vector<8x128xf32>
      %154 = arith.addf %152, %153 : vector<8x128xf32>
      %155 = vector.broadcast %108 : f32 to vector<8x128xf32>
      %156 = arith.mulf %155, %154 : vector<8x128xf32>
      %157 = arith.addf %141, %156 : vector<8x128xf32>
      %c3_i32_93 = arith.constant 3 : i32
      %158 = arith.sitofp %c3_i32_93 : i32 to f32
      %159 = arith.mulf %158, %108 : f32
      %160 = arith.addf %99, %159 : f32
      %cst_94 = arith.constant dense<0.000000e+00> : vector<8x128xf32>
      %161 = tpu.matmul %157, %3, %cst_94 {dimension_numbers = #tpu.dot_dimension_numbers<[1], [0], [0], [1], [0, 0, 1, 1], [], []>} : vector<8x128xf32>, vector<128x128xf32>, vector<8x128xf32> -> vector<8x128xf32>
      %162 = arith.addf %161, %106 : vector<8x128xf32>
      %163 = vector.broadcast %160 : f32 to vector<1x128xf32>
      %164 = arith.mulf %163, %5 : vector<1x128xf32>
      %165 = vector.broadcast %164 : vector<1x128xf32> to vector<8x128xf32>
      %166 = arith.addf %162, %165 : vector<8x128xf32>
      %167 = math.tanh %166 : vector<8x128xf32>
      %cst_95 = arith.constant dense<0.000000e+00> : vector<8x128xf32>
      %168 = tpu.matmul %167, %7, %cst_95 {dimension_numbers = #tpu.dot_dimension_numbers<[1], [0], [0], [1], [0, 0, 1, 1], [], []>} : vector<8x128xf32>, vector<128x128xf32>, vector<8x128xf32> -> vector<8x128xf32>
      %169 = vector.broadcast %8 : vector<1x128xf32> to vector<8x128xf32>
      %170 = arith.addf %168, %169 : vector<8x128xf32>
      %171 = vector.broadcast %108 : f32 to vector<8x128xf32>
      %172 = arith.mulf %171, %170 : vector<8x128xf32>
      %173 = arith.addf %157, %172 : vector<8x128xf32>
      %c4_i32_96 = arith.constant 4 : i32
      %c0_97 = arith.constant 0 : index
      %c0_98 = arith.constant 0 : index
      %174 = vector.load %arg12[%c0_97, %c0_98] : memref<8x128xf32, #tpu.memory_space<vmem>>, vector<8x128xf32>
      tpu.vector_store %arg12[%c0_97, %c0_98], %173 {strides = array<i32>} : memref<8x128xf32, #tpu.memory_space<vmem>>, vector<8x128xf32>,
    } else {
    }
    %c0_41 = arith.constant 0 : index
    %c0_42 = arith.constant 0 : index
    %49 = vector.load %arg12[%c0_41, %c0_42] : memref<8x128xf32, #tpu.memory_space<vmem>>, vector<8x128xf32>
    %c3 = arith.constant 3 : index
    %c0_43 = arith.constant 0 : index
    %c0_44 = arith.constant 0 : index
    %50 = vector.load %arg11[%c3, %c0_43, %c0_44] : memref<8x8x128xf32, #tpu.memory_space<vmem>>, vector<1x8x128xf32>
    %51 = vector.shape_cast %50 : vector<1x8x128xf32> to vector<8x128xf32>
    %52 = vector.shape_cast %49 : vector<8x128xf32> to vector<1x8x128xf32>
    tpu.vector_store %arg11[%c3, %c0_43, %c0_44], %52 {strides = array<i32>} : memref<8x8x128xf32, #tpu.memory_space<vmem>>, vector<1x8x128xf32>,
    %c8_i32_45 = arith.constant 8 : i32
    %53 = arith.muli %arg1, %c8_i32_45 : i32
    %c4_i32 = arith.constant 4 : i32
    %54 = arith.addi %53, %c4_i32 : i32
    %c0_i32_46 = arith.constant 0 : i32
    %55 = arith.cmpi sgt, %54, %c0_i32_46 : i32
    %c8_i32_47 = arith.constant 8 : i32
    %56 = arith.cmpi slt, %54, %c8_i32_47 : i32
    %57 = arith.andi %55, %56 : i1
    %58 = arith.extui %57 : i1 to i32
    %c0_i32_48 = arith.constant 0 : i32
    %59 = arith.cmpi ne, %58, %c0_i32_48 : i32
    scf.if %59 {
      %c1_i32_77 = arith.constant 1 : i32
      %97 = arith.subi %54, %c1_i32_77 : i32
      %98 = arith.index_cast %97 : i32 to index
      %99 = memref.load %arg2[%98] : memref<8xf32, #tpu.memory_space<smem>>
      %100 = arith.index_cast %54 : i32 to index
      %101 = memref.load %arg2[%100] : memref<8xf32, #tpu.memory_space<smem>>
      %c4_78 = arith.constant 4 : index
      %c0_79 = arith.constant 0 : index
      %c0_80 = arith.constant 0 : index
      %102 = vector.load %arg4[%c4_78, %c0_79, %c0_80] : memref<8x8x128xf32, #tpu.memory_space<vmem>>, vector<1x8x128xf32>
      %103 = vector.shape_cast %102 : vector<1x8x128xf32> to vector<8x128xf32>
      %cst = arith.constant dense<0.000000e+00> : vector<8x128xf32>
      %104 = tpu.matmul %103, %4, %cst {dimension_numbers = #tpu.dot_dimension_numbers<[1], [0], [0], [1], [0, 0, 1, 1], [], []>} : vector<8x128xf32>, vector<128x128xf32>, vector<8x128xf32> -> vector<8x128xf32>
      %105 = vector.broadcast %6 : vector<1x128xf32> to vector<8x128xf32>
      %106 = arith.addf %104, %105 : vector<8x128xf32>
      %107 = arith.subf %101, %99 : f32
      %cst_81 = arith.constant 4.000000e+00 : f32
      %108 = arith.divf %107, %cst_81 : f32
      %c0_82 = arith.constant 0 : index
      %c0_83 = arith.constant 0 : index
      %109 = vector.load %arg12[%c0_82, %c0_83] : memref<8x128xf32, #tpu.memory_space<vmem>>, vector<8x128xf32>
      %c0_i32_84 = arith.constant 0 : i32
      %110 = arith.sitofp %c0_i32_84 : i32 to f32
      %111 = arith.mulf %110, %108 : f32
      %112 = arith.addf %99, %111 : f32
      %cst_85 = arith.constant dense<0.000000e+00> : vector<8x128xf32>
      %113 = tpu.matmul %109, %3, %cst_85 {dimension_numbers = #tpu.dot_dimension_numbers<[1], [0], [0], [1], [0, 0, 1, 1], [], []>} : vector<8x128xf32>, vector<128x128xf32>, vector<8x128xf32> -> vector<8x128xf32>
      %114 = arith.addf %113, %106 : vector<8x128xf32>
      %115 = vector.broadcast %112 : f32 to vector<1x128xf32>
      %116 = arith.mulf %115, %5 : vector<1x128xf32>
      %117 = vector.broadcast %116 : vector<1x128xf32> to vector<8x128xf32>
      %118 = arith.addf %114, %117 : vector<8x128xf32>
      %119 = math.tanh %118 : vector<8x128xf32>
      %cst_86 = arith.constant dense<0.000000e+00> : vector<8x128xf32>
      %120 = tpu.matmul %119, %7, %cst_86 {dimension_numbers = #tpu.dot_dimension_numbers<[1], [0], [0], [1], [0, 0, 1, 1], [], []>} : vector<8x128xf32>, vector<128x128xf32>, vector<8x128xf32> -> vector<8x128xf32>
      %121 = vector.broadcast %8 : vector<1x128xf32> to vector<8x128xf32>
      %122 = arith.addf %120, %121 : vector<8x128xf32>
      %123 = vector.broadcast %108 : f32 to vector<8x128xf32>
      %124 = arith.mulf %123, %122 : vector<8x128xf32>
      %125 = arith.addf %109, %124 : vector<8x128xf32>
      %c1_i32_87 = arith.constant 1 : i32
      %126 = arith.sitofp %c1_i32_87 : i32 to f32
      %127 = arith.mulf %126, %108 : f32
      %128 = arith.addf %99, %127 : f32
      %cst_88 = arith.constant dense<0.000000e+00> : vector<8x128xf32>
      %129 = tpu.matmul %125, %3, %cst_88 {dimension_numbers = #tpu.dot_dimension_numbers<[1], [0], [0], [1], [0, 0, 1, 1], [], []>} : vector<8x128xf32>, vector<128x128xf32>, vector<8x128xf32> -> vector<8x128xf32>
      %130 = arith.addf %129, %106 : vector<8x128xf32>
      %131 = vector.broadcast %128 : f32 to vector<1x128xf32>
      %132 = arith.mulf %131, %5 : vector<1x128xf32>
      %133 = vector.broadcast %132 : vector<1x128xf32> to vector<8x128xf32>
      %134 = arith.addf %130, %133 : vector<8x128xf32>
      %135 = math.tanh %134 : vector<8x128xf32>
      %cst_89 = arith.constant dense<0.000000e+00> : vector<8x128xf32>
      %136 = tpu.matmul %135, %7, %cst_89 {dimension_numbers = #tpu.dot_dimension_numbers<[1], [0], [0], [1], [0, 0, 1, 1], [], []>} : vector<8x128xf32>, vector<128x128xf32>, vector<8x128xf32> -> vector<8x128xf32>
      %137 = vector.broadcast %8 : vector<1x128xf32> to vector<8x128xf32>
      %138 = arith.addf %136, %137 : vector<8x128xf32>
      %139 = vector.broadcast %108 : f32 to vector<8x128xf32>
      %140 = arith.mulf %139, %138 : vector<8x128xf32>
      %141 = arith.addf %125, %140 : vector<8x128xf32>
      %c2_i32_90 = arith.constant 2 : i32
      %142 = arith.sitofp %c2_i32_90 : i32 to f32
      %143 = arith.mulf %142, %108 : f32
      %144 = arith.addf %99, %143 : f32
      %cst_91 = arith.constant dense<0.000000e+00> : vector<8x128xf32>
      %145 = tpu.matmul %141, %3, %cst_91 {dimension_numbers = #tpu.dot_dimension_numbers<[1], [0], [0], [1], [0, 0, 1, 1], [], []>} : vector<8x128xf32>, vector<128x128xf32>, vector<8x128xf32> -> vector<8x128xf32>
      %146 = arith.addf %145, %106 : vector<8x128xf32>
      %147 = vector.broadcast %144 : f32 to vector<1x128xf32>
      %148 = arith.mulf %147, %5 : vector<1x128xf32>
      %149 = vector.broadcast %148 : vector<1x128xf32> to vector<8x128xf32>
      %150 = arith.addf %146, %149 : vector<8x128xf32>
      %151 = math.tanh %150 : vector<8x128xf32>
      %cst_92 = arith.constant dense<0.000000e+00> : vector<8x128xf32>
      %152 = tpu.matmul %151, %7, %cst_92 {dimension_numbers = #tpu.dot_dimension_numbers<[1], [0], [0], [1], [0, 0, 1, 1], [], []>} : vector<8x128xf32>, vector<128x128xf32>, vector<8x128xf32> -> vector<8x128xf32>
      %153 = vector.broadcast %8 : vector<1x128xf32> to vector<8x128xf32>
      %154 = arith.addf %152, %153 : vector<8x128xf32>
      %155 = vector.broadcast %108 : f32 to vector<8x128xf32>
      %156 = arith.mulf %155, %154 : vector<8x128xf32>
      %157 = arith.addf %141, %156 : vector<8x128xf32>
      %c3_i32_93 = arith.constant 3 : i32
      %158 = arith.sitofp %c3_i32_93 : i32 to f32
      %159 = arith.mulf %158, %108 : f32
      %160 = arith.addf %99, %159 : f32
      %cst_94 = arith.constant dense<0.000000e+00> : vector<8x128xf32>
      %161 = tpu.matmul %157, %3, %cst_94 {dimension_numbers = #tpu.dot_dimension_numbers<[1], [0], [0], [1], [0, 0, 1, 1], [], []>} : vector<8x128xf32>, vector<128x128xf32>, vector<8x128xf32> -> vector<8x128xf32>
      %162 = arith.addf %161, %106 : vector<8x128xf32>
      %163 = vector.broadcast %160 : f32 to vector<1x128xf32>
      %164 = arith.mulf %163, %5 : vector<1x128xf32>
      %165 = vector.broadcast %164 : vector<1x128xf32> to vector<8x128xf32>
      %166 = arith.addf %162, %165 : vector<8x128xf32>
      %167 = math.tanh %166 : vector<8x128xf32>
      %cst_95 = arith.constant dense<0.000000e+00> : vector<8x128xf32>
      %168 = tpu.matmul %167, %7, %cst_95 {dimension_numbers = #tpu.dot_dimension_numbers<[1], [0], [0], [1], [0, 0, 1, 1], [], []>} : vector<8x128xf32>, vector<128x128xf32>, vector<8x128xf32> -> vector<8x128xf32>
      %169 = vector.broadcast %8 : vector<1x128xf32> to vector<8x128xf32>
      %170 = arith.addf %168, %169 : vector<8x128xf32>
      %171 = vector.broadcast %108 : f32 to vector<8x128xf32>
      %172 = arith.mulf %171, %170 : vector<8x128xf32>
      %173 = arith.addf %157, %172 : vector<8x128xf32>
      %c4_i32_96 = arith.constant 4 : i32
      %c0_97 = arith.constant 0 : index
      %c0_98 = arith.constant 0 : index
      %174 = vector.load %arg12[%c0_97, %c0_98] : memref<8x128xf32, #tpu.memory_space<vmem>>, vector<8x128xf32>
      tpu.vector_store %arg12[%c0_97, %c0_98], %173 {strides = array<i32>} : memref<8x128xf32, #tpu.memory_space<vmem>>, vector<8x128xf32>,
    } else {
    }
    %c0_49 = arith.constant 0 : index
    %c0_50 = arith.constant 0 : index
    %60 = vector.load %arg12[%c0_49, %c0_50] : memref<8x128xf32, #tpu.memory_space<vmem>>, vector<8x128xf32>
    %c4 = arith.constant 4 : index
    %c0_51 = arith.constant 0 : index
    %c0_52 = arith.constant 0 : index
    %61 = vector.load %arg11[%c4, %c0_51, %c0_52] : memref<8x8x128xf32, #tpu.memory_space<vmem>>, vector<1x8x128xf32>
    %62 = vector.shape_cast %61 : vector<1x8x128xf32> to vector<8x128xf32>
    %63 = vector.shape_cast %60 : vector<8x128xf32> to vector<1x8x128xf32>
    tpu.vector_store %arg11[%c4, %c0_51, %c0_52], %63 {strides = array<i32>} : memref<8x8x128xf32, #tpu.memory_space<vmem>>, vector<1x8x128xf32>,
    %c8_i32_53 = arith.constant 8 : i32
    %64 = arith.muli %arg1, %c8_i32_53 : i32
    %c5_i32 = arith.constant 5 : i32
    %65 = arith.addi %64, %c5_i32 : i32
    %c0_i32_54 = arith.constant 0 : i32
    %66 = arith.cmpi sgt, %65, %c0_i32_54 : i32
    %c8_i32_55 = arith.constant 8 : i32
    %67 = arith.cmpi slt, %65, %c8_i32_55 : i32
    %68 = arith.andi %66, %67 : i1
    %69 = arith.extui %68 : i1 to i32
    %c0_i32_56 = arith.constant 0 : i32
    %70 = arith.cmpi ne, %69, %c0_i32_56 : i32
    scf.if %70 {
      %c1_i32_77 = arith.constant 1 : i32
      %97 = arith.subi %65, %c1_i32_77 : i32
      %98 = arith.index_cast %97 : i32 to index
      %99 = memref.load %arg2[%98] : memref<8xf32, #tpu.memory_space<smem>>
      %100 = arith.index_cast %65 : i32 to index
      %101 = memref.load %arg2[%100] : memref<8xf32, #tpu.memory_space<smem>>
      %c5_78 = arith.constant 5 : index
      %c0_79 = arith.constant 0 : index
      %c0_80 = arith.constant 0 : index
      %102 = vector.load %arg4[%c5_78, %c0_79, %c0_80] : memref<8x8x128xf32, #tpu.memory_space<vmem>>, vector<1x8x128xf32>
      %103 = vector.shape_cast %102 : vector<1x8x128xf32> to vector<8x128xf32>
      %cst = arith.constant dense<0.000000e+00> : vector<8x128xf32>
      %104 = tpu.matmul %103, %4, %cst {dimension_numbers = #tpu.dot_dimension_numbers<[1], [0], [0], [1], [0, 0, 1, 1], [], []>} : vector<8x128xf32>, vector<128x128xf32>, vector<8x128xf32> -> vector<8x128xf32>
      %105 = vector.broadcast %6 : vector<1x128xf32> to vector<8x128xf32>
      %106 = arith.addf %104, %105 : vector<8x128xf32>
      %107 = arith.subf %101, %99 : f32
      %cst_81 = arith.constant 4.000000e+00 : f32
      %108 = arith.divf %107, %cst_81 : f32
      %c0_82 = arith.constant 0 : index
      %c0_83 = arith.constant 0 : index
      %109 = vector.load %arg12[%c0_82, %c0_83] : memref<8x128xf32, #tpu.memory_space<vmem>>, vector<8x128xf32>
      %c0_i32_84 = arith.constant 0 : i32
      %110 = arith.sitofp %c0_i32_84 : i32 to f32
      %111 = arith.mulf %110, %108 : f32
      %112 = arith.addf %99, %111 : f32
      %cst_85 = arith.constant dense<0.000000e+00> : vector<8x128xf32>
      %113 = tpu.matmul %109, %3, %cst_85 {dimension_numbers = #tpu.dot_dimension_numbers<[1], [0], [0], [1], [0, 0, 1, 1], [], []>} : vector<8x128xf32>, vector<128x128xf32>, vector<8x128xf32> -> vector<8x128xf32>
      %114 = arith.addf %113, %106 : vector<8x128xf32>
      %115 = vector.broadcast %112 : f32 to vector<1x128xf32>
      %116 = arith.mulf %115, %5 : vector<1x128xf32>
      %117 = vector.broadcast %116 : vector<1x128xf32> to vector<8x128xf32>
      %118 = arith.addf %114, %117 : vector<8x128xf32>
      %119 = math.tanh %118 : vector<8x128xf32>
      %cst_86 = arith.constant dense<0.000000e+00> : vector<8x128xf32>
      %120 = tpu.matmul %119, %7, %cst_86 {dimension_numbers = #tpu.dot_dimension_numbers<[1], [0], [0], [1], [0, 0, 1, 1], [], []>} : vector<8x128xf32>, vector<128x128xf32>, vector<8x128xf32> -> vector<8x128xf32>
      %121 = vector.broadcast %8 : vector<1x128xf32> to vector<8x128xf32>
      %122 = arith.addf %120, %121 : vector<8x128xf32>
      %123 = vector.broadcast %108 : f32 to vector<8x128xf32>
      %124 = arith.mulf %123, %122 : vector<8x128xf32>
      %125 = arith.addf %109, %124 : vector<8x128xf32>
      %c1_i32_87 = arith.constant 1 : i32
      %126 = arith.sitofp %c1_i32_87 : i32 to f32
      %127 = arith.mulf %126, %108 : f32
      %128 = arith.addf %99, %127 : f32
      %cst_88 = arith.constant dense<0.000000e+00> : vector<8x128xf32>
      %129 = tpu.matmul %125, %3, %cst_88 {dimension_numbers = #tpu.dot_dimension_numbers<[1], [0], [0], [1], [0, 0, 1, 1], [], []>} : vector<8x128xf32>, vector<128x128xf32>, vector<8x128xf32> -> vector<8x128xf32>
      %130 = arith.addf %129, %106 : vector<8x128xf32>
      %131 = vector.broadcast %128 : f32 to vector<1x128xf32>
      %132 = arith.mulf %131, %5 : vector<1x128xf32>
      %133 = vector.broadcast %132 : vector<1x128xf32> to vector<8x128xf32>
      %134 = arith.addf %130, %133 : vector<8x128xf32>
      %135 = math.tanh %134 : vector<8x128xf32>
      %cst_89 = arith.constant dense<0.000000e+00> : vector<8x128xf32>
      %136 = tpu.matmul %135, %7, %cst_89 {dimension_numbers = #tpu.dot_dimension_numbers<[1], [0], [0], [1], [0, 0, 1, 1], [], []>} : vector<8x128xf32>, vector<128x128xf32>, vector<8x128xf32> -> vector<8x128xf32>
      %137 = vector.broadcast %8 : vector<1x128xf32> to vector<8x128xf32>
      %138 = arith.addf %136, %137 : vector<8x128xf32>
      %139 = vector.broadcast %108 : f32 to vector<8x128xf32>
      %140 = arith.mulf %139, %138 : vector<8x128xf32>
      %141 = arith.addf %125, %140 : vector<8x128xf32>
      %c2_i32_90 = arith.constant 2 : i32
      %142 = arith.sitofp %c2_i32_90 : i32 to f32
      %143 = arith.mulf %142, %108 : f32
      %144 = arith.addf %99, %143 : f32
      %cst_91 = arith.constant dense<0.000000e+00> : vector<8x128xf32>
      %145 = tpu.matmul %141, %3, %cst_91 {dimension_numbers = #tpu.dot_dimension_numbers<[1], [0], [0], [1], [0, 0, 1, 1], [], []>} : vector<8x128xf32>, vector<128x128xf32>, vector<8x128xf32> -> vector<8x128xf32>
      %146 = arith.addf %145, %106 : vector<8x128xf32>
      %147 = vector.broadcast %144 : f32 to vector<1x128xf32>
      %148 = arith.mulf %147, %5 : vector<1x128xf32>
      %149 = vector.broadcast %148 : vector<1x128xf32> to vector<8x128xf32>
      %150 = arith.addf %146, %149 : vector<8x128xf32>
      %151 = math.tanh %150 : vector<8x128xf32>
      %cst_92 = arith.constant dense<0.000000e+00> : vector<8x128xf32>
      %152 = tpu.matmul %151, %7, %cst_92 {dimension_numbers = #tpu.dot_dimension_numbers<[1], [0], [0], [1], [0, 0, 1, 1], [], []>} : vector<8x128xf32>, vector<128x128xf32>, vector<8x128xf32> -> vector<8x128xf32>
      %153 = vector.broadcast %8 : vector<1x128xf32> to vector<8x128xf32>
      %154 = arith.addf %152, %153 : vector<8x128xf32>
      %155 = vector.broadcast %108 : f32 to vector<8x128xf32>
      %156 = arith.mulf %155, %154 : vector<8x128xf32>
      %157 = arith.addf %141, %156 : vector<8x128xf32>
      %c3_i32_93 = arith.constant 3 : i32
      %158 = arith.sitofp %c3_i32_93 : i32 to f32
      %159 = arith.mulf %158, %108 : f32
      %160 = arith.addf %99, %159 : f32
      %cst_94 = arith.constant dense<0.000000e+00> : vector<8x128xf32>
      %161 = tpu.matmul %157, %3, %cst_94 {dimension_numbers = #tpu.dot_dimension_numbers<[1], [0], [0], [1], [0, 0, 1, 1], [], []>} : vector<8x128xf32>, vector<128x128xf32>, vector<8x128xf32> -> vector<8x128xf32>
      %162 = arith.addf %161, %106 : vector<8x128xf32>
      %163 = vector.broadcast %160 : f32 to vector<1x128xf32>
      %164 = arith.mulf %163, %5 : vector<1x128xf32>
      %165 = vector.broadcast %164 : vector<1x128xf32> to vector<8x128xf32>
      %166 = arith.addf %162, %165 : vector<8x128xf32>
      %167 = math.tanh %166 : vector<8x128xf32>
      %cst_95 = arith.constant dense<0.000000e+00> : vector<8x128xf32>
      %168 = tpu.matmul %167, %7, %cst_95 {dimension_numbers = #tpu.dot_dimension_numbers<[1], [0], [0], [1], [0, 0, 1, 1], [], []>} : vector<8x128xf32>, vector<128x128xf32>, vector<8x128xf32> -> vector<8x128xf32>
      %169 = vector.broadcast %8 : vector<1x128xf32> to vector<8x128xf32>
      %170 = arith.addf %168, %169 : vector<8x128xf32>
      %171 = vector.broadcast %108 : f32 to vector<8x128xf32>
      %172 = arith.mulf %171, %170 : vector<8x128xf32>
      %173 = arith.addf %157, %172 : vector<8x128xf32>
      %c4_i32_96 = arith.constant 4 : i32
      %c0_97 = arith.constant 0 : index
      %c0_98 = arith.constant 0 : index
      %174 = vector.load %arg12[%c0_97, %c0_98] : memref<8x128xf32, #tpu.memory_space<vmem>>, vector<8x128xf32>
      tpu.vector_store %arg12[%c0_97, %c0_98], %173 {strides = array<i32>} : memref<8x128xf32, #tpu.memory_space<vmem>>, vector<8x128xf32>,
    } else {
    }
    %c0_57 = arith.constant 0 : index
    %c0_58 = arith.constant 0 : index
    %71 = vector.load %arg12[%c0_57, %c0_58] : memref<8x128xf32, #tpu.memory_space<vmem>>, vector<8x128xf32>
    %c5 = arith.constant 5 : index
    %c0_59 = arith.constant 0 : index
    %c0_60 = arith.constant 0 : index
    %72 = vector.load %arg11[%c5, %c0_59, %c0_60] : memref<8x8x128xf32, #tpu.memory_space<vmem>>, vector<1x8x128xf32>
    %73 = vector.shape_cast %72 : vector<1x8x128xf32> to vector<8x128xf32>
    %74 = vector.shape_cast %71 : vector<8x128xf32> to vector<1x8x128xf32>
    tpu.vector_store %arg11[%c5, %c0_59, %c0_60], %74 {strides = array<i32>} : memref<8x8x128xf32, #tpu.memory_space<vmem>>, vector<1x8x128xf32>,
    %c8_i32_61 = arith.constant 8 : i32
    %75 = arith.muli %arg1, %c8_i32_61 : i32
    %c6_i32 = arith.constant 6 : i32
    %76 = arith.addi %75, %c6_i32 : i32
    %c0_i32_62 = arith.constant 0 : i32
    %77 = arith.cmpi sgt, %76, %c0_i32_62 : i32
    %c8_i32_63 = arith.constant 8 : i32
    %78 = arith.cmpi slt, %76, %c8_i32_63 : i32
    %79 = arith.andi %77, %78 : i1
    %80 = arith.extui %79 : i1 to i32
    %c0_i32_64 = arith.constant 0 : i32
    %81 = arith.cmpi ne, %80, %c0_i32_64 : i32
    scf.if %81 {
      %c1_i32_77 = arith.constant 1 : i32
      %97 = arith.subi %76, %c1_i32_77 : i32
      %98 = arith.index_cast %97 : i32 to index
      %99 = memref.load %arg2[%98] : memref<8xf32, #tpu.memory_space<smem>>
      %100 = arith.index_cast %76 : i32 to index
      %101 = memref.load %arg2[%100] : memref<8xf32, #tpu.memory_space<smem>>
      %c6_78 = arith.constant 6 : index
      %c0_79 = arith.constant 0 : index
      %c0_80 = arith.constant 0 : index
      %102 = vector.load %arg4[%c6_78, %c0_79, %c0_80] : memref<8x8x128xf32, #tpu.memory_space<vmem>>, vector<1x8x128xf32>
      %103 = vector.shape_cast %102 : vector<1x8x128xf32> to vector<8x128xf32>
      %cst = arith.constant dense<0.000000e+00> : vector<8x128xf32>
      %104 = tpu.matmul %103, %4, %cst {dimension_numbers = #tpu.dot_dimension_numbers<[1], [0], [0], [1], [0, 0, 1, 1], [], []>} : vector<8x128xf32>, vector<128x128xf32>, vector<8x128xf32> -> vector<8x128xf32>
      %105 = vector.broadcast %6 : vector<1x128xf32> to vector<8x128xf32>
      %106 = arith.addf %104, %105 : vector<8x128xf32>
      %107 = arith.subf %101, %99 : f32
      %cst_81 = arith.constant 4.000000e+00 : f32
      %108 = arith.divf %107, %cst_81 : f32
      %c0_82 = arith.constant 0 : index
      %c0_83 = arith.constant 0 : index
      %109 = vector.load %arg12[%c0_82, %c0_83] : memref<8x128xf32, #tpu.memory_space<vmem>>, vector<8x128xf32>
      %c0_i32_84 = arith.constant 0 : i32
      %110 = arith.sitofp %c0_i32_84 : i32 to f32
      %111 = arith.mulf %110, %108 : f32
      %112 = arith.addf %99, %111 : f32
      %cst_85 = arith.constant dense<0.000000e+00> : vector<8x128xf32>
      %113 = tpu.matmul %109, %3, %cst_85 {dimension_numbers = #tpu.dot_dimension_numbers<[1], [0], [0], [1], [0, 0, 1, 1], [], []>} : vector<8x128xf32>, vector<128x128xf32>, vector<8x128xf32> -> vector<8x128xf32>
      %114 = arith.addf %113, %106 : vector<8x128xf32>
      %115 = vector.broadcast %112 : f32 to vector<1x128xf32>
      %116 = arith.mulf %115, %5 : vector<1x128xf32>
      %117 = vector.broadcast %116 : vector<1x128xf32> to vector<8x128xf32>
      %118 = arith.addf %114, %117 : vector<8x128xf32>
      %119 = math.tanh %118 : vector<8x128xf32>
      %cst_86 = arith.constant dense<0.000000e+00> : vector<8x128xf32>
      %120 = tpu.matmul %119, %7, %cst_86 {dimension_numbers = #tpu.dot_dimension_numbers<[1], [0], [0], [1], [0, 0, 1, 1], [], []>} : vector<8x128xf32>, vector<128x128xf32>, vector<8x128xf32> -> vector<8x128xf32>
      %121 = vector.broadcast %8 : vector<1x128xf32> to vector<8x128xf32>
      %122 = arith.addf %120, %121 : vector<8x128xf32>
      %123 = vector.broadcast %108 : f32 to vector<8x128xf32>
      %124 = arith.mulf %123, %122 : vector<8x128xf32>
      %125 = arith.addf %109, %124 : vector<8x128xf32>
      %c1_i32_87 = arith.constant 1 : i32
      %126 = arith.sitofp %c1_i32_87 : i32 to f32
      %127 = arith.mulf %126, %108 : f32
      %128 = arith.addf %99, %127 : f32
      %cst_88 = arith.constant dense<0.000000e+00> : vector<8x128xf32>
      %129 = tpu.matmul %125, %3, %cst_88 {dimension_numbers = #tpu.dot_dimension_numbers<[1], [0], [0], [1], [0, 0, 1, 1], [], []>} : vector<8x128xf32>, vector<128x128xf32>, vector<8x128xf32> -> vector<8x128xf32>
      %130 = arith.addf %129, %106 : vector<8x128xf32>
      %131 = vector.broadcast %128 : f32 to vector<1x128xf32>
      %132 = arith.mulf %131, %5 : vector<1x128xf32>
      %133 = vector.broadcast %132 : vector<1x128xf32> to vector<8x128xf32>
      %134 = arith.addf %130, %133 : vector<8x128xf32>
      %135 = math.tanh %134 : vector<8x128xf32>
      %cst_89 = arith.constant dense<0.000000e+00> : vector<8x128xf32>
      %136 = tpu.matmul %135, %7, %cst_89 {dimension_numbers = #tpu.dot_dimension_numbers<[1], [0], [0], [1], [0, 0, 1, 1], [], []>} : vector<8x128xf32>, vector<128x128xf32>, vector<8x128xf32> -> vector<8x128xf32>
      %137 = vector.broadcast %8 : vector<1x128xf32> to vector<8x128xf32>
      %138 = arith.addf %136, %137 : vector<8x128xf32>
      %139 = vector.broadcast %108 : f32 to vector<8x128xf32>
      %140 = arith.mulf %139, %138 : vector<8x128xf32>
      %141 = arith.addf %125, %140 : vector<8x128xf32>
      %c2_i32_90 = arith.constant 2 : i32
      %142 = arith.sitofp %c2_i32_90 : i32 to f32
      %143 = arith.mulf %142, %108 : f32
      %144 = arith.addf %99, %143 : f32
      %cst_91 = arith.constant dense<0.000000e+00> : vector<8x128xf32>
      %145 = tpu.matmul %141, %3, %cst_91 {dimension_numbers = #tpu.dot_dimension_numbers<[1], [0], [0], [1], [0, 0, 1, 1], [], []>} : vector<8x128xf32>, vector<128x128xf32>, vector<8x128xf32> -> vector<8x128xf32>
      %146 = arith.addf %145, %106 : vector<8x128xf32>
      %147 = vector.broadcast %144 : f32 to vector<1x128xf32>
      %148 = arith.mulf %147, %5 : vector<1x128xf32>
      %149 = vector.broadcast %148 : vector<1x128xf32> to vector<8x128xf32>
      %150 = arith.addf %146, %149 : vector<8x128xf32>
      %151 = math.tanh %150 : vector<8x128xf32>
      %cst_92 = arith.constant dense<0.000000e+00> : vector<8x128xf32>
      %152 = tpu.matmul %151, %7, %cst_92 {dimension_numbers = #tpu.dot_dimension_numbers<[1], [0], [0], [1], [0, 0, 1, 1], [], []>} : vector<8x128xf32>, vector<128x128xf32>, vector<8x128xf32> -> vector<8x128xf32>
      %153 = vector.broadcast %8 : vector<1x128xf32> to vector<8x128xf32>
      %154 = arith.addf %152, %153 : vector<8x128xf32>
      %155 = vector.broadcast %108 : f32 to vector<8x128xf32>
      %156 = arith.mulf %155, %154 : vector<8x128xf32>
      %157 = arith.addf %141, %156 : vector<8x128xf32>
      %c3_i32_93 = arith.constant 3 : i32
      %158 = arith.sitofp %c3_i32_93 : i32 to f32
      %159 = arith.mulf %158, %108 : f32
      %160 = arith.addf %99, %159 : f32
      %cst_94 = arith.constant dense<0.000000e+00> : vector<8x128xf32>
      %161 = tpu.matmul %157, %3, %cst_94 {dimension_numbers = #tpu.dot_dimension_numbers<[1], [0], [0], [1], [0, 0, 1, 1], [], []>} : vector<8x128xf32>, vector<128x128xf32>, vector<8x128xf32> -> vector<8x128xf32>
      %162 = arith.addf %161, %106 : vector<8x128xf32>
      %163 = vector.broadcast %160 : f32 to vector<1x128xf32>
      %164 = arith.mulf %163, %5 : vector<1x128xf32>
      %165 = vector.broadcast %164 : vector<1x128xf32> to vector<8x128xf32>
      %166 = arith.addf %162, %165 : vector<8x128xf32>
      %167 = math.tanh %166 : vector<8x128xf32>
      %cst_95 = arith.constant dense<0.000000e+00> : vector<8x128xf32>
      %168 = tpu.matmul %167, %7, %cst_95 {dimension_numbers = #tpu.dot_dimension_numbers<[1], [0], [0], [1], [0, 0, 1, 1], [], []>} : vector<8x128xf32>, vector<128x128xf32>, vector<8x128xf32> -> vector<8x128xf32>
      %169 = vector.broadcast %8 : vector<1x128xf32> to vector<8x128xf32>
      %170 = arith.addf %168, %169 : vector<8x128xf32>
      %171 = vector.broadcast %108 : f32 to vector<8x128xf32>
      %172 = arith.mulf %171, %170 : vector<8x128xf32>
      %173 = arith.addf %157, %172 : vector<8x128xf32>
      %c4_i32_96 = arith.constant 4 : i32
      %c0_97 = arith.constant 0 : index
      %c0_98 = arith.constant 0 : index
      %174 = vector.load %arg12[%c0_97, %c0_98] : memref<8x128xf32, #tpu.memory_space<vmem>>, vector<8x128xf32>
      tpu.vector_store %arg12[%c0_97, %c0_98], %173 {strides = array<i32>} : memref<8x128xf32, #tpu.memory_space<vmem>>, vector<8x128xf32>,
    } else {
    }
    %c0_65 = arith.constant 0 : index
    %c0_66 = arith.constant 0 : index
    %82 = vector.load %arg12[%c0_65, %c0_66] : memref<8x128xf32, #tpu.memory_space<vmem>>, vector<8x128xf32>
    %c6 = arith.constant 6 : index
    %c0_67 = arith.constant 0 : index
    %c0_68 = arith.constant 0 : index
    %83 = vector.load %arg11[%c6, %c0_67, %c0_68] : memref<8x8x128xf32, #tpu.memory_space<vmem>>, vector<1x8x128xf32>
    %84 = vector.shape_cast %83 : vector<1x8x128xf32> to vector<8x128xf32>
    %85 = vector.shape_cast %82 : vector<8x128xf32> to vector<1x8x128xf32>
    tpu.vector_store %arg11[%c6, %c0_67, %c0_68], %85 {strides = array<i32>} : memref<8x8x128xf32, #tpu.memory_space<vmem>>, vector<1x8x128xf32>,
    %c8_i32_69 = arith.constant 8 : i32
    %86 = arith.muli %arg1, %c8_i32_69 : i32
    %c7_i32 = arith.constant 7 : i32
    %87 = arith.addi %86, %c7_i32 : i32
    %c0_i32_70 = arith.constant 0 : i32
    %88 = arith.cmpi sgt, %87, %c0_i32_70 : i32
    %c8_i32_71 = arith.constant 8 : i32
    %89 = arith.cmpi slt, %87, %c8_i32_71 : i32
    %90 = arith.andi %88, %89 : i1
    %91 = arith.extui %90 : i1 to i32
    %c0_i32_72 = arith.constant 0 : i32
    %92 = arith.cmpi ne, %91, %c0_i32_72 : i32
    scf.if %92 {
      %c1_i32_77 = arith.constant 1 : i32
      %97 = arith.subi %87, %c1_i32_77 : i32
      %98 = arith.index_cast %97 : i32 to index
      %99 = memref.load %arg2[%98] : memref<8xf32, #tpu.memory_space<smem>>
      %100 = arith.index_cast %87 : i32 to index
      %101 = memref.load %arg2[%100] : memref<8xf32, #tpu.memory_space<smem>>
      %c7_78 = arith.constant 7 : index
      %c0_79 = arith.constant 0 : index
      %c0_80 = arith.constant 0 : index
      %102 = vector.load %arg4[%c7_78, %c0_79, %c0_80] : memref<8x8x128xf32, #tpu.memory_space<vmem>>, vector<1x8x128xf32>
      %103 = vector.shape_cast %102 : vector<1x8x128xf32> to vector<8x128xf32>
      %cst = arith.constant dense<0.000000e+00> : vector<8x128xf32>
      %104 = tpu.matmul %103, %4, %cst {dimension_numbers = #tpu.dot_dimension_numbers<[1], [0], [0], [1], [0, 0, 1, 1], [], []>} : vector<8x128xf32>, vector<128x128xf32>, vector<8x128xf32> -> vector<8x128xf32>
      %105 = vector.broadcast %6 : vector<1x128xf32> to vector<8x128xf32>
      %106 = arith.addf %104, %105 : vector<8x128xf32>
      %107 = arith.subf %101, %99 : f32
      %cst_81 = arith.constant 4.000000e+00 : f32
      %108 = arith.divf %107, %cst_81 : f32
      %c0_82 = arith.constant 0 : index
      %c0_83 = arith.constant 0 : index
      %109 = vector.load %arg12[%c0_82, %c0_83] : memref<8x128xf32, #tpu.memory_space<vmem>>, vector<8x128xf32>
      %c0_i32_84 = arith.constant 0 : i32
      %110 = arith.sitofp %c0_i32_84 : i32 to f32
      %111 = arith.mulf %110, %108 : f32
      %112 = arith.addf %99, %111 : f32
      %cst_85 = arith.constant dense<0.000000e+00> : vector<8x128xf32>
      %113 = tpu.matmul %109, %3, %cst_85 {dimension_numbers = #tpu.dot_dimension_numbers<[1], [0], [0], [1], [0, 0, 1, 1], [], []>} : vector<8x128xf32>, vector<128x128xf32>, vector<8x128xf32> -> vector<8x128xf32>
      %114 = arith.addf %113, %106 : vector<8x128xf32>
      %115 = vector.broadcast %112 : f32 to vector<1x128xf32>
      %116 = arith.mulf %115, %5 : vector<1x128xf32>
      %117 = vector.broadcast %116 : vector<1x128xf32> to vector<8x128xf32>
      %118 = arith.addf %114, %117 : vector<8x128xf32>
      %119 = math.tanh %118 : vector<8x128xf32>
      %cst_86 = arith.constant dense<0.000000e+00> : vector<8x128xf32>
      %120 = tpu.matmul %119, %7, %cst_86 {dimension_numbers = #tpu.dot_dimension_numbers<[1], [0], [0], [1], [0, 0, 1, 1], [], []>} : vector<8x128xf32>, vector<128x128xf32>, vector<8x128xf32> -> vector<8x128xf32>
      %121 = vector.broadcast %8 : vector<1x128xf32> to vector<8x128xf32>
      %122 = arith.addf %120, %121 : vector<8x128xf32>
      %123 = vector.broadcast %108 : f32 to vector<8x128xf32>
      %124 = arith.mulf %123, %122 : vector<8x128xf32>
      %125 = arith.addf %109, %124 : vector<8x128xf32>
      %c1_i32_87 = arith.constant 1 : i32
      %126 = arith.sitofp %c1_i32_87 : i32 to f32
      %127 = arith.mulf %126, %108 : f32
      %128 = arith.addf %99, %127 : f32
      %cst_88 = arith.constant dense<0.000000e+00> : vector<8x128xf32>
      %129 = tpu.matmul %125, %3, %cst_88 {dimension_numbers = #tpu.dot_dimension_numbers<[1], [0], [0], [1], [0, 0, 1, 1], [], []>} : vector<8x128xf32>, vector<128x128xf32>, vector<8x128xf32> -> vector<8x128xf32>
      %130 = arith.addf %129, %106 : vector<8x128xf32>
      %131 = vector.broadcast %128 : f32 to vector<1x128xf32>
      %132 = arith.mulf %131, %5 : vector<1x128xf32>
      %133 = vector.broadcast %132 : vector<1x128xf32> to vector<8x128xf32>
      %134 = arith.addf %130, %133 : vector<8x128xf32>
      %135 = math.tanh %134 : vector<8x128xf32>
      %cst_89 = arith.constant dense<0.000000e+00> : vector<8x128xf32>
      %136 = tpu.matmul %135, %7, %cst_89 {dimension_numbers = #tpu.dot_dimension_numbers<[1], [0], [0], [1], [0, 0, 1, 1], [], []>} : vector<8x128xf32>, vector<128x128xf32>, vector<8x128xf32> -> vector<8x128xf32>
      %137 = vector.broadcast %8 : vector<1x128xf32> to vector<8x128xf32>
      %138 = arith.addf %136, %137 : vector<8x128xf32>
      %139 = vector.broadcast %108 : f32 to vector<8x128xf32>
      %140 = arith.mulf %139, %138 : vector<8x128xf32>
      %141 = arith.addf %125, %140 : vector<8x128xf32>
      %c2_i32_90 = arith.constant 2 : i32
      %142 = arith.sitofp %c2_i32_90 : i32 to f32
      %143 = arith.mulf %142, %108 : f32
      %144 = arith.addf %99, %143 : f32
      %cst_91 = arith.constant dense<0.000000e+00> : vector<8x128xf32>
      %145 = tpu.matmul %141, %3, %cst_91 {dimension_numbers = #tpu.dot_dimension_numbers<[1], [0], [0], [1], [0, 0, 1, 1], [], []>} : vector<8x128xf32>, vector<128x128xf32>, vector<8x128xf32> -> vector<8x128xf32>
      %146 = arith.addf %145, %106 : vector<8x128xf32>
      %147 = vector.broadcast %144 : f32 to vector<1x128xf32>
      %148 = arith.mulf %147, %5 : vector<1x128xf32>
      %149 = vector.broadcast %148 : vector<1x128xf32> to vector<8x128xf32>
      %150 = arith.addf %146, %149 : vector<8x128xf32>
      %151 = math.tanh %150 : vector<8x128xf32>
      %cst_92 = arith.constant dense<0.000000e+00> : vector<8x128xf32>
      %152 = tpu.matmul %151, %7, %cst_92 {dimension_numbers = #tpu.dot_dimension_numbers<[1], [0], [0], [1], [0, 0, 1, 1], [], []>} : vector<8x128xf32>, vector<128x128xf32>, vector<8x128xf32> -> vector<8x128xf32>
      %153 = vector.broadcast %8 : vector<1x128xf32> to vector<8x128xf32>
      %154 = arith.addf %152, %153 : vector<8x128xf32>
      %155 = vector.broadcast %108 : f32 to vector<8x128xf32>
      %156 = arith.mulf %155, %154 : vector<8x128xf32>
      %157 = arith.addf %141, %156 : vector<8x128xf32>
      %c3_i32_93 = arith.constant 3 : i32
      %158 = arith.sitofp %c3_i32_93 : i32 to f32
      %159 = arith.mulf %158, %108 : f32
      %160 = arith.addf %99, %159 : f32
      %cst_94 = arith.constant dense<0.000000e+00> : vector<8x128xf32>
      %161 = tpu.matmul %157, %3, %cst_94 {dimension_numbers = #tpu.dot_dimension_numbers<[1], [0], [0], [1], [0, 0, 1, 1], [], []>} : vector<8x128xf32>, vector<128x128xf32>, vector<8x128xf32> -> vector<8x128xf32>
      %162 = arith.addf %161, %106 : vector<8x128xf32>
      %163 = vector.broadcast %160 : f32 to vector<1x128xf32>
      %164 = arith.mulf %163, %5 : vector<1x128xf32>
      %165 = vector.broadcast %164 : vector<1x128xf32> to vector<8x128xf32>
      %166 = arith.addf %162, %165 : vector<8x128xf32>
      %167 = math.tanh %166 : vector<8x128xf32>
      %cst_95 = arith.constant dense<0.000000e+00> : vector<8x128xf32>
      %168 = tpu.matmul %167, %7, %cst_95 {dimension_numbers = #tpu.dot_dimension_numbers<[1], [0], [0], [1], [0, 0, 1, 1], [], []>} : vector<8x128xf32>, vector<128x128xf32>, vector<8x128xf32> -> vector<8x128xf32>
      %169 = vector.broadcast %8 : vector<1x128xf32> to vector<8x128xf32>
      %170 = arith.addf %168, %169 : vector<8x128xf32>
      %171 = vector.broadcast %108 : f32 to vector<8x128xf32>
      %172 = arith.mulf %171, %170 : vector<8x128xf32>
      %173 = arith.addf %157, %172 : vector<8x128xf32>
      %c4_i32_96 = arith.constant 4 : i32
      %c0_97 = arith.constant 0 : index
      %c0_98 = arith.constant 0 : index
      %174 = vector.load %arg12[%c0_97, %c0_98] : memref<8x128xf32, #tpu.memory_space<vmem>>, vector<8x128xf32>
      tpu.vector_store %arg12[%c0_97, %c0_98], %173 {strides = array<i32>} : memref<8x128xf32, #tpu.memory_space<vmem>>, vector<8x128xf32>,
    } else {
    }
    %c0_73 = arith.constant 0 : index
    %c0_74 = arith.constant 0 : index
    %93 = vector.load %arg12[%c0_73, %c0_74] : memref<8x128xf32, #tpu.memory_space<vmem>>, vector<8x128xf32>
    %c7 = arith.constant 7 : index
    %c0_75 = arith.constant 0 : index
    %c0_76 = arith.constant 0 : index
    %94 = vector.load %arg11[%c7, %c0_75, %c0_76] : memref<8x8x128xf32, #tpu.memory_space<vmem>>, vector<1x8x128xf32>
    %95 = vector.shape_cast %94 : vector<1x8x128xf32> to vector<8x128xf32>
    %96 = vector.shape_cast %93 : vector<8x128xf32> to vector<1x8x128xf32>
    tpu.vector_store %arg11[%c7, %c0_75, %c0_76], %96 {strides = array<i32>} : memref<8x8x128xf32, #tpu.memory_space<vmem>>, vector<1x8x128xf32>,
    return
  }
  func.func @transform_0(%arg0: i32, %arg1: i32) -> i32 {
    %c0_i32 = arith.constant 0 : i32
    %c0_i32_0 = arith.constant 0 : i32
    return %c0_i32 : i32
  }
  func.func @transform_1(%arg0: i32, %arg1: i32) -> (i32, i32) {
    %c0_i32 = arith.constant 0 : i32
    %c0_i32_0 = arith.constant 0 : i32
    return %arg0, %c0_i32 : i32, i32
  }
  func.func @transform_2(%arg0: i32, %arg1: i32) -> (i32, i32, i32) {
    %c0_i32 = arith.constant 0 : i32
    %c0_i32_0 = arith.constant 0 : i32
    return %arg1, %arg0, %c0_i32 : i32, i32, i32
  }
  func.func @transform_3(%arg0: i32, %arg1: i32) -> (i32, i32) {
    %c0_i32 = arith.constant 0 : i32
    %c0_i32_0 = arith.constant 0 : i32
    %c0_i32_1 = arith.constant 0 : i32
    return %c0_i32, %c0_i32_0 : i32, i32
  }
  func.func @transform_4(%arg0: i32, %arg1: i32) -> (i32, i32) {
    %c0_i32 = arith.constant 0 : i32
    %c0_i32_0 = arith.constant 0 : i32
    %c0_i32_1 = arith.constant 0 : i32
    return %c0_i32, %c0_i32_0 : i32, i32
  }
  func.func @transform_5(%arg0: i32, %arg1: i32) -> (i32, i32) {
    %c0_i32 = arith.constant 0 : i32
    %c0_i32_0 = arith.constant 0 : i32
    %c0_i32_1 = arith.constant 0 : i32
    return %c0_i32, %c0_i32_0 : i32, i32
  }
  func.func @transform_6(%arg0: i32, %arg1: i32) -> (i32, i32) {
    %c0_i32 = arith.constant 0 : i32
    %c0_i32_0 = arith.constant 0 : i32
    %c0_i32_1 = arith.constant 0 : i32
    return %c0_i32, %c0_i32_0 : i32, i32
  }
  func.func @transform_7(%arg0: i32, %arg1: i32) -> (i32, i32) {
    %c0_i32 = arith.constant 0 : i32
    %c0_i32_0 = arith.constant 0 : i32
    %c0_i32_1 = arith.constant 0 : i32
    return %c0_i32, %c0_i32_0 : i32, i32
  }
  func.func @transform_8(%arg0: i32, %arg1: i32) -> (i32, i32) {
    %c0_i32 = arith.constant 0 : i32
    %c0_i32_0 = arith.constant 0 : i32
    %c0_i32_1 = arith.constant 0 : i32
    return %c0_i32, %c0_i32_0 : i32, i32
  }
  func.func @transform_9(%arg0: i32, %arg1: i32) -> (i32, i32, i32) {
    %c0_i32 = arith.constant 0 : i32
    %c0_i32_0 = arith.constant 0 : i32
    return %arg1, %arg0, %c0_i32 : i32, i32, i32
  }
}

</mosaic_0001>

<llo_original>
// kernel: neural_ode_forward.1
$region0: #{neural_ode_forward.1}
  #allocation0 [shape = 'u32[]', space=smem, size = 0x4, offset = 0x4, fixed_abs, tag = 'smem constant byte address 0x4 - core index']
  #allocation1 [shape = 'u32[144,128]{1,0:T(1,128)}', space=vmem, size = 0x12000, scoped, tag = 'internal scratch']
  #allocation2 [shape = 'f32[8,128]{1,0:T(8,128)}', space=vmem, size = 0x1000, scoped, tag = 'scratch operand']
  %s0 = inlined_call_operand.vmem [shape: f32[8], index: 0, kind: input, shape index: {}]
  %s1 = inlined_call_operand.vmem [shape: f32[8,128], index: 1, kind: input, shape index: {}]
  %s2 = inlined_call_operand.vmem [shape: f32[8,8,128], index: 2, kind: input, shape index: {}]
  %s3 = inlined_call_operand.vmem [shape: f32[128,128], index: 3, kind: input, shape index: {}]
  %s4 = inlined_call_operand.vmem [shape: f32[128,128], index: 4, kind: input, shape index: {}]
  %s5 = inlined_call_operand.vmem [shape: f32[1,128], index: 5, kind: input, shape index: {}]
  %s6 = inlined_call_operand.vmem [shape: f32[1,128], index: 6, kind: input, shape index: {}]
  %s7 = inlined_call_operand.vmem [shape: f32[128,128], index: 7, kind: input, shape index: {}]
  %s8 = inlined_call_operand.vmem [shape: f32[1,128], index: 8, kind: input, shape index: {}]
  %s9 = inlined_call_operand.hbm [shape: f32[8,8,128], index: 9, kind: output, shape index: {}]
  %s10 = sld [smem:[#allocation0]]
  $region86: #{neural_ode_forward.1} parent=0
    _
  %s12 = ssub.s32 1, %s10
  %s13 = scalar_select 0, %s12, %s10
  $region1: #{neural_ode_forward.1} parent=0
    #allocation3 [shape = 'u8[512]{0}', space=smem, size = 0x200, scoped, tag = 'input window, operand 0, single buffered']
    #allocation4 [shape = 's32[1]{0}', space=sflag, size = 0x4, scoped, tag = 'scoped memory for neural_ode_forward.1']
    #allocation5 [shape = 's32[1]{0}', space=sflag, size = 0x4, scoped, tag = 'scoped memory for neural_ode_forward.1']
    #allocation6 [shape = 'u8[32768]{0}', space=vmem, size = 0x8000, scoped, tag = 'output window, operand 0, single buffered']
    %14 = vsyncpa [#allocation5], 0
    %15 = vsyncpa [#allocation4], 0
    // Predicated region
    $region2: #{neural_ode_forward.1} parent=1 // pred_check
      _
    $region3: #{neural_ode_forward.1} parent=1 // pred_check_branch
      %17 = sbr.rel (0) target = $region5
    $region4: #{neural_ode_forward.1} parent=1 // pred_region
      %s19 = ssub.s32 16, 16
      %20 = vsyncadd [#allocation5], %s19
      %s22 = sshll.u32 %s0, 4
      %s23 = int_to_ptr.vmem [resolvable:$true] %s22
      %25 = dma.vmem_to_smem %s23, 16, [#allocation3], [#allocation5]
    $region5: #{neural_ode_forward.1} parent=1 // pred_fallthru
      _
    // Predicated region
    $region6: #{neural_ode_forward.1} parent=1 // pred_check
      _
    $region7: #{neural_ode_forward.1} parent=1 // pred_check_branch
      %27 = sbr.rel (0) target = $region9
    $region8: #{neural_ode_forward.1} parent=1 // pred_region
      _
    $region9: #{neural_ode_forward.1} parent=1 // pred_fallthru
      _
    // Predicated region
    $region10: #{neural_ode_forward.1} parent=1 // pred_check
      _
    $region11: #{neural_ode_forward.1} parent=1 // pred_check_branch
      %29 = sbr.rel (0) target = $region13
    $region12: #{neural_ode_forward.1} parent=1 // pred_region
      _
    $region13: #{neural_ode_forward.1} parent=1 // pred_fallthru
      _
    // Predicated region
    $region14: #{neural_ode_forward.1} parent=1 // pred_check
      _
    $region15: #{neural_ode_forward.1} parent=1 // pred_check_branch
      %31 = sbr.rel (0) target = $region17
    $region16: #{neural_ode_forward.1} parent=1 // pred_region
      _
    $region17: #{neural_ode_forward.1} parent=1 // pred_fallthru
      _
    // Predicated region
    $region18: #{neural_ode_forward.1} parent=1 // pred_check
      _
    $region19: #{neural_ode_forward.1} parent=1 // pred_check_branch
      %33 = sbr.rel (0) target = $region21
    $region20: #{neural_ode_forward.1} parent=1 // pred_region
      _
    $region21: #{neural_ode_forward.1} parent=1 // pred_fallthru
      _
    // Predicated region
    $region22: #{neural_ode_forward.1} parent=1 // pred_check
      _
    $region23: #{neural_ode_forward.1} parent=1 // pred_check_branch
      %35 = sbr.rel (0) target = $region25
    $region24: #{neural_ode_forward.1} parent=1 // pred_region
      _
    $region25: #{neural_ode_forward.1} parent=1 // pred_fallthru
      _
    // Predicated region
    $region26: #{neural_ode_forward.1} parent=1 // pred_check
      _
    $region27: #{neural_ode_forward.1} parent=1 // pred_check_branch
      %37 = sbr.rel (0) target = $region29
    $region28: #{neural_ode_forward.1} parent=1 // pred_region
      _
    $region29: #{neural_ode_forward.1} parent=1 // pred_fallthru
      _
    // Predicated region
    $region30: #{neural_ode_forward.1} parent=1 // pred_check
      _
    $region31: #{neural_ode_forward.1} parent=1 // pred_check_branch
      %39 = sbr.rel (0) target = $region33
    $region32: #{neural_ode_forward.1} parent=1 // pred_region
      _
    $region33: #{neural_ode_forward.1} parent=1 // pred_fallthru
      _
    // Predicated region
    $region34: #{neural_ode_forward.1} parent=1 // pred_check
      _
    $region35: #{neural_ode_forward.1} parent=1 // pred_check_branch
      %41 = sbr.rel (0) target = $region37
    $region36: #{neural_ode_forward.1} parent=1 // pred_region
      _
    $region37: #{neural_ode_forward.1} parent=1 // pred_fallthru
      _
    // Predicated region
    $region38: #{neural_ode_forward.1} parent=1 // pred_check
      _
    $region39: #{neural_ode_forward.1} parent=1 // pred_check_branch
      %43 = sbr.rel (0) target = $region41
    $region40: #{neural_ode_forward.1} parent=1 // pred_region
      %44 = dma.done [#allocation5], 16
    $region41: #{neural_ode_forward.1} parent=1 // pred_fallthru
      _
    %45 = sfence
    %p46 = scmp.eq.s32.totalorder 0, 0
    // Predicated region
    $region42: #{neural_ode_forward.1} parent=1 // pred_check
      %p47 = pneg %p46
    $region43: #{neural_ode_forward.1} parent=1 // pred_check_branch
      %49 = sbr.rel (%p47) target = $region45
    $region44: #{neural_ode_forward.1} parent=1 // pred_region
      %v50 = vld [vmem:[%s1] sm:$0xff]
      %51 = vst [vmem:[#allocation2] sm:$0xff] %v50
    $region45: #{neural_ode_forward.1} parent=1 // pred_fallthru
      _
    %v52 = vld [vmem:[%s3] sm:$0xff]
    %v53 = vld [vmem:[%s3 + $0x8] sm:$0xff]
    %v54 = vld [vmem:[%s3 + $0x10] sm:$0xff]
    %v55 = vld [vmem:[%s3 + $0x18] sm:$0xff]
    %v56 = vld [vmem:[%s3 + $0x20] sm:$0xff]
    %v57 = vld [vmem:[%s3 + $0x28] sm:$0xff]
    %v58 = vld [vmem:[%s3 + $0x30] sm:$0xff]
    %v59 = vld [vmem:[%s3 + $0x38] sm:$0xff]
    %v60 = vld [vmem:[%s3 + $0x40] sm:$0xff]
    %v61 = vld [vmem:[%s3 + $0x48] sm:$0xff]
    %v62 = vld [vmem:[%s3 + $0x50] sm:$0xff]
    %v63 = vld [vmem:[%s3 + $0x58] sm:$0xff]
    %v64 = vld [vmem:[%s3 + $0x60] sm:$0xff]
    %v65 = vld [vmem:[%s3 + $0x68] sm:$0xff]
    %v66 = vld [vmem:[%s3 + $0x70] sm:$0xff]
    %v67 = vld [vmem:[%s3 + $0x78] sm:$0xff]
    %v68 = vld [vmem:[%s4] sm:$0xff]
    %v69 = vld [vmem:[%s4 + $0x8] sm:$0xff]
    %v70 = vld [vmem:[%s4 + $0x10] sm:$0xff]
    %v71 = vld [vmem:[%s4 + $0x18] sm:$0xff]
    %v72 = vld [vmem:[%s4 + $0x20] sm:$0xff]
    %v73 = vld [vmem:[%s4 + $0x28] sm:$0xff]
    %v74 = vld [vmem:[%s4 + $0x30] sm:$0xff]
    %v75 = vld [vmem:[%s4 + $0x38] sm:$0xff]
    %v76 = vld [vmem:[%s4 + $0x40] sm:$0xff]
    %v77 = vld [vmem:[%s4 + $0x48] sm:$0xff]
    %v78 = vld [vmem:[%s4 + $0x50] sm:$0xff]
    %v79 = vld [vmem:[%s4 + $0x58] sm:$0xff]
    %v80 = vld [vmem:[%s4 + $0x60] sm:$0xff]
    %v81 = vld [vmem:[%s4 + $0x68] sm:$0xff]
    %v82 = vld [vmem:[%s4 + $0x70] sm:$0xff]
    %v83 = vld [vmem:[%s4 + $0x78] sm:$0xff]
    %v84 = vld [vmem:[%s5] sm:$0x1]
    %v85 = vld [vmem:[%s6] sm:$0x1]
    %v86 = vld [vmem:[%s7] sm:$0xff]
    %v87 = vld [vmem:[%s7 + $0x8] sm:$0xff]
    %v88 = vld [vmem:[%s7 + $0x10] sm:$0xff]
    %v89 = vld [vmem:[%s7 + $0x18] sm:$0xff]
    %v90 = vld [vmem:[%s7 + $0x20] sm:$0xff]
    %v91 = vld [vmem:[%s7 + $0x28] sm:$0xff]
    %v92 = vld [vmem:[%s7 + $0x30] sm:$0xff]
    %v93 = vld [vmem:[%s7 + $0x38] sm:$0xff]
    %v94 = vld [vmem:[%s7 + $0x40] sm:$0xff]
    %v95 = vld [vmem:[%s7 + $0x48] sm:$0xff]
    %v96 = vld [vmem:[%s7 + $0x50] sm:$0xff]
    %v97 = vld [vmem:[%s7 + $0x58] sm:$0xff]
    %v98 = vld [vmem:[%s7 + $0x60] sm:$0xff]
    %v99 = vld [vmem:[%s7 + $0x68] sm:$0xff]
    %v100 = vld [vmem:[%s7 + $0x70] sm:$0xff]
    %v101 = vld [vmem:[%s7 + $0x78] sm:$0xff]
    %v102 = vld [vmem:[%s8] sm:$0x1]
    %s103 = smul.u32 0, 8
    %p104 = scmp.gt.s32.totalorder %s103, 0
    %p105 = scmp.lt.s32.totalorder %s103, 8
    %p106 = pnand %p104, %p105
    %p107 = pneg %p106
    // Predicated region
    $region46: #{neural_ode_forward.1} parent=1 // pred_check
      _
    $region47: #{neural_ode_forward.1} parent=1 // pred_check_branch
      %109 = sbr.rel (%p106) target = $region49
    $region48: #{neural_ode_forward.1} parent=1 // pred_region
      %s110 = sadd.s32 %s103, 4294967295
      %s111 = sld [smem:[#allocation3 + %s110]]
      %s112 = sld [smem:[#allocation3 + %s103]]
      %v113 = vld [vmem:[%s2] sm:$0xff]
      %v115 = vlaneseq
      %v116 = vshrl.u32 %v115, 7
      %v117 = vsub.s32 0, %v116
      %v118 = vrot.slane %v85, %v117
      %120 = vmatprep.subr.mxu0 0.0
      %121 = vmatpush1.msra.mxu0 %v83
      %122 = vmatprep.subr.mxu0 0.0
      %123 = vmatpush1.msra.mxu0 %v82
      %124 = vmatprep.subr.mxu0 0.0
      %125 = vmatpush1.msra.mxu0 %v81
      %126 = vmatprep.subr.mxu0 0.0
      %127 = vmatpush1.msra.mxu0 %v80
      %128 = vmatprep.subr.mxu0 0.0
      %129 = vmatpush1.msra.mxu0 %v79
      %130 = vmatprep.subr.mxu0 0.0
      %131 = vmatpush1.msra.mxu0 %v78
      %132 = vmatprep.subr.mxu0 0.0
      %133 = vmatpush1.msra.mxu0 %v77
      %134 = vmatprep.subr.mxu0 0.0
      %135 = vmatpush1.msra.mxu0 %v76
      %136 = vmatprep.subr.mxu0 0.0
      %137 = vmatpush1.msra.mxu0 %v75
      %138 = vmatprep.subr.mxu0 0.0
      %139 = vmatpush1.msra.mxu0 %v74
      %140 = vmatprep.subr.mxu0 0.0
      %141 = vmatpush1.msra.mxu0 %v73
      %142 = vmatprep.subr.mxu0 0.0
      %143 = vmatpush1.msra.mxu0 %v72
      %144 = vmatprep.subr.mxu0 0.0
      %145 = vmatpush1.msra.mxu0 %v71
      %146 = vmatprep.subr.mxu0 0.0
      %147 = vmatpush1.msra.mxu0 %v70
      %148 = vmatprep.subr.mxu0 0.0
      %149 = vmatpush1.msra.mxu0 %v69
      %150 = vmatprep.subr.mxu0 0.0
      %151 = vmatpush1.msra.mxu0 %v68
      %152 = vmatprep.subr.mxu0 0.0
      %153 = vmatpush2.msra.mxu0 0.0
      %154 = vmatprep.subr.mxu0 0.0
      %155 = vmatpush2.msra.mxu0 0.0
      %156 = vmatprep.subr.mxu0 0.0
      %157 = vmatpush2.msra.mxu0 0.0
      %158 = vmatprep.subr.mxu0 0.0
      %159 = vmatpush2.msra.mxu0 0.0
      %160 = vmatprep.subr.mxu0 0.0
      %161 = vmatpush2.msra.mxu0 0.0
      %162 = vmatprep.subr.mxu0 0.0
      %163 = vmatpush2.msra.mxu0 0.0
      %164 = vmatprep.subr.mxu0 0.0
      %165 = vmatpush2.msra.mxu0 0.0
      %166 = vmatprep.subr.mxu0 0.0
      %167 = vmatpush2.msra.mxu0 0.0
      %168 = vmatprep.subr.mxu0 0.0
      %169 = vmatpush2.msra.mxu0 0.0
      %170 = vmatprep.subr.mxu0 0.0
      %171 = vmatpush2.msra.mxu0 0.0
      %172 = vmatprep.subr.mxu0 0.0
      %173 = vmatpush2.msra.mxu0 0.0
      %174 = vmatprep.subr.mxu0 0.0
      %175 = vmatpush2.msra.mxu0 0.0
      %176 = vmatprep.subr.mxu0 0.0
      %177 = vmatpush2.msra.mxu0 0.0
      %178 = vmatprep.subr.mxu0 0.0
      %179 = vmatpush2.msra.mxu0 0.0
      %180 = vmatprep.subr.mxu0 0.0
      %181 = vmatpush2.msra.mxu0 0.0
      %182 = vmatprep.subr.mxu0 0.0
      %183 = vmatpush2.msra.mxu0 0.0
      %184 = vmatprep.mubr.f32.mxu0 0.0
      %185 = vmatmul.mubr.f32.gmra.mxu0 %v113
      %v186 = vpop.f32.mrf.mxu0
      %v187 = vadd.f32 %v118, %v186
      %v188 = vpop.f32.mrf.mxu0
      %189 = vdwg.mxu0
      %s190 = ssub.f32 %s112, %s111
      %v191 = vrcp.pop 4.0
      %s192 = vtos %v191
      %s193 = smul.f32 %s190, %s192
      %v194 = vld [vmem:[#allocation2] sm:$0xff]
      %s195 = smul.f32 %s193, 0.0
      %s196 = sadd.f32 %s111, %s195
      %197 = vmatprep.subr.mxu0 0.0
      %198 = vmatpush1.msra.mxu0 %v67
      %199 = vmatprep.subr.mxu0 0.0
      %200 = vmatpush1.msra.mxu0 %v66
      %201 = vmatprep.subr.mxu0 0.0
      %202 = vmatpush1.msra.mxu0 %v65
      %203 = vmatprep.subr.mxu0 0.0
      %204 = vmatpush1.msra.mxu0 %v64
      %205 = vmatprep.subr.mxu0 0.0
      %206 = vmatpush1.msra.mxu0 %v63
      %207 = vmatprep.subr.mxu0 0.0
      %208 = vmatpush1.msra.mxu0 %v62
      %209 = vmatprep.subr.mxu0 0.0
      %210 = vmatpush1.msra.mxu0 %v61
      %211 = vmatprep.subr.mxu0 0.0
      %212 = vmatpush1.msra.mxu0 %v60
      %213 = vmatprep.subr.mxu0 0.0
      %214 = vmatpush1.msra.mxu0 %v59
      %215 = vmatprep.subr.mxu0 0.0
      %216 = vmatpush1.msra.mxu0 %v58
      %217 = vmatprep.subr.mxu0 0.0
      %218 = vmatpush1.msra.mxu0 %v57
      %219 = vmatprep.subr.mxu0 0.0
      %220 = vmatpush1.msra.mxu0 %v56
      %221 = vmatprep.subr.mxu0 0.0
      %222 = vmatpush1.msra.mxu0 %v55
      %223 = vmatprep.subr.mxu0 0.0
      %224 = vmatpush1.msra.mxu0 %v54
      %225 = vmatprep.subr.mxu0 0.0
      %226 = vmatpush1.msra.mxu0 %v53
      %227 = vmatprep.subr.mxu0 0.0
      %228 = vmatpush1.msra.mxu0 %v52
      %229 = vmatprep.subr.mxu0 0.0
      %230 = vmatpush2.msra.mxu0 0.0
      %231 = vmatprep.subr.mxu0 0.0
      %232 = vmatpush2.msra.mxu0 0.0
      %233 = vmatprep.subr.mxu0 0.0
      %234 = vmatpush2.msra.mxu0 0.0
      %235 = vmatprep.subr.mxu0 0.0
      %236 = vmatpush2.msra.mxu0 0.0
      %237 = vmatprep.subr.mxu0 0.0
      %238 = vmatpush2.msra.mxu0 0.0
      %239 = vmatprep.subr.mxu0 0.0
      %240 = vmatpush2.msra.mxu0 0.0
      %241 = vmatprep.subr.mxu0 0.0
      %242 = vmatpush2.msra.mxu0 0.0
      %243 = vmatprep.subr.mxu0 0.0
      %244 = vmatpush2.msra.mxu0 0.0
      %245 = vmatprep.subr.mxu0 0.0
      %246 = vmatpush2.msra.mxu0 0.0
      %247 = vmatprep.subr.mxu0 0.0
      %248 = vmatpush2.msra.mxu0 0.0
      %249 = vmatprep.subr.mxu0 0.0
      %250 = vmatpush2.msra.mxu0 0.0
      %251 = vmatprep.subr.mxu0 0.0
      %252 = vmatpush2.msra.mxu0 0.0
      %253 = vmatprep.subr.mxu0 0.0
      %254 = vmatpush2.msra.mxu0 0.0
      %255 = vmatprep.subr.mxu0 0.0
      %256 = vmatpush2.msra.mxu0 0.0
      %257 = vmatprep.subr.mxu0 0.0
      %258 = vmatpush2.msra.mxu0 0.0
      %259 = vmatprep.subr.mxu0 0.0
      %260 = vmatpush2.msra.mxu0 0.0
      %261 = vmatprep.mubr.f32.mxu0 0.0
      %262 = vmatmul.mubr.f32.gmra.mxu0 %v194
      %v263 = vpop.f32.mrf.mxu0
      %v264 = vadd.f32 %v187, %v263
      %v265 = vpop.f32.mrf.mxu0
      %266 = vdwg.mxu0
      %v267 = vstv %s196
      %v268 = vmul.f32 %v267, %v84
      %v270 = vlaneseq
      %v271 = vshrl.u32 %v270, 7
      %v272 = vsub.s32 0, %v271
      %v273 = vrot.slane %v268, %v272
      %v275 = vadd.f32 %v264, %v273
      %v276 = vtanh.pop %v275
      %v278 = vlaneseq
      %v279 = vshrl.u32 %v278, 7
      %v280 = vsub.s32 0, %v279
      %v281 = vrot.slane %v102, %v280
      %283 = vmatprep.subr.mxu0 0.0
      %284 = vmatpush1.msra.mxu0 %v101
      %285 = vmatprep.subr.mxu0 0.0
      %286 = vmatpush1.msra.mxu0 %v100
      %287 = vmatprep.subr.mxu0 0.0
      %288 = vmatpush1.msra.mxu0 %v99
      %289 = vmatprep.subr.mxu0 0.0
      %290 = vmatpush1.msra.mxu0 %v98
      %291 = vmatprep.subr.mxu0 0.0
      %292 = vmatpush1.msra.mxu0 %v97
      %293 = vmatprep.subr.mxu0 0.0
      %294 = vmatpush1.msra.mxu0 %v96
      %295 = vmatprep.subr.mxu0 0.0
      %296 = vmatpush1.msra.mxu0 %v95
      %297 = vmatprep.subr.mxu0 0.0
      %298 = vmatpush1.msra.mxu0 %v94
      %299 = vmatprep.subr.mxu0 0.0
      %300 = vmatpush1.msra.mxu0 %v93
      %301 = vmatprep.subr.mxu0 0.0
      %302 = vmatpush1.msra.mxu0 %v92
      %303 = vmatprep.subr.mxu0 0.0
      %304 = vmatpush1.msra.mxu0 %v91
      %305 = vmatprep.subr.mxu0 0.0
      %306 = vmatpush1.msra.mxu0 %v90
      %307 = vmatprep.subr.mxu0 0.0
      %308 = vmatpush1.msra.mxu0 %v89
      %309 = vmatprep.subr.mxu0 0.0
      %310 = vmatpush1.msra.mxu0 %v88
      %311 = vmatprep.subr.mxu0 0.0
      %312 = vmatpush1.msra.mxu0 %v87
      %313 = vmatprep.subr.mxu0 0.0
      %314 = vmatpush1.msra.mxu0 %v86
      %315 = vmatprep.subr.mxu0 0.0
      %316 = vmatpush2.msra.mxu0 0.0
      %317 = vmatprep.subr.mxu0 0.0
      %318 = vmatpush2.msra.mxu0 0.0
      %319 = vmatprep.subr.mxu0 0.0
      %320 = vmatpush2.msra.mxu0 0.0
      %321 = vmatprep.subr.mxu0 0.0
      %322 = vmatpush2.msra.mxu0 0.0
      %323 = vmatprep.subr.mxu0 0.0
      %324 = vmatpush2.msra.mxu0 0.0
      %325 = vmatprep.subr.mxu0 0.0
      %326 = vmatpush2.msra.mxu0 0.0
      %327 = vmatprep.subr.mxu0 0.0
      %328 = vmatpush2.msra.mxu0 0.0
      %329 = vmatprep.subr.mxu0 0.0
      %330 = vmatpush2.msra.mxu0 0.0
      %331 = vmatprep.subr.mxu0 0.0
      %332 = vmatpush2.msra.mxu0 0.0
      %333 = vmatprep.subr.mxu0 0.0
      %334 = vmatpush2.msra.mxu0 0.0
      %335 = vmatprep.subr.mxu0 0.0
      %336 = vmatpush2.msra.mxu0 0.0
      %337 = vmatprep.subr.mxu0 0.0
      %338 = vmatpush2.msra.mxu0 0.0
      %339 = vmatprep.subr.mxu0 0.0
      %340 = vmatpush2.msra.mxu0 0.0
      %341 = vmatprep.subr.mxu0 0.0
      %342 = vmatpush2.msra.mxu0 0.0
      %343 = vmatprep.subr.mxu0 0.0
      %344 = vmatpush2.msra.mxu0 0.0
      %345 = vmatprep.subr.mxu0 0.0
      %346 = vmatpush2.msra.mxu0 0.0
      %347 = vmatprep.mubr.f32.mxu0 0.0
      %348 = vmatmul.mubr.f32.gmra.mxu0 %v276
      %v349 = vpop.f32.mrf.mxu0
      %v350 = vadd.f32 %v281, %v349
      %v351 = vpop.f32.mrf.mxu0
      %352 = vdwg.mxu0
      %v353 = vstv %s193
      %v354 = vmul.f32 %v353, %v350
      %v355 = vadd.f32 %v194, %v354
      %s356 = sadd.f32 %s111, %s193
      %357 = vmatprep.subr.mxu0 0.0
      %358 = vmatpush1.msra.mxu0 %v67
      %359 = vmatprep.subr.mxu0 0.0
      %360 = vmatpush1.msra.mxu0 %v66
      %361 = vmatprep.subr.mxu0 0.0
      %362 = vmatpush1.msra.mxu0 %v65
      %363 = vmatprep.subr.mxu0 0.0
      %364 = vmatpush1.msra.mxu0 %v64
      %365 = vmatprep.subr.mxu0 0.0
      %366 = vmatpush1.msra.mxu0 %v63
      %367 = vmatprep.subr.mxu0 0.0
      %368 = vmatpush1.msra.mxu0 %v62
      %369 = vmatprep.subr.mxu0 0.0
      %370 = vmatpush1.msra.mxu0 %v61
      %371 = vmatprep.subr.mxu0 0.0
      %372 = vmatpush1.msra.mxu0 %v60
      %373 = vmatprep.subr.mxu0 0.0
      %374 = vmatpush1.msra.mxu0 %v59
      %375 = vmatprep.subr.mxu0 0.0
      %376 = vmatpush1.msra.mxu0 %v58
      %377 = vmatprep.subr.mxu0 0.0
      %378 = vmatpush1.msra.mxu0 %v57
      %379 = vmatprep.subr.mxu0 0.0
      %380 = vmatpush1.msra.mxu0 %v56
      %381 = vmatprep.subr.mxu0 0.0
      %382 = vmatpush1.msra.mxu0 %v55
      %383 = vmatprep.subr.mxu0 0.0
      %384 = vmatpush1.msra.mxu0 %v54
      %385 = vmatprep.subr.mxu0 0.0
      %386 = vmatpush1.msra.mxu0 %v53
      %387 = vmatprep.subr.mxu0 0.0
      %388 = vmatpush1.msra.mxu0 %v52
      %389 = vmatprep.subr.mxu0 0.0
      %390 = vmatpush2.msra.mxu0 0.0
      %391 = vmatprep.subr.mxu0 0.0
      %392 = vmatpush2.msra.mxu0 0.0
      %393 = vmatprep.subr.mxu0 0.0
      %394 = vmatpush2.msra.mxu0 0.0
      %395 = vmatprep.subr.mxu0 0.0
      %396 = vmatpush2.msra.mxu0 0.0
      %397 = vmatprep.subr.mxu0 0.0
      %398 = vmatpush2.msra.mxu0 0.0
      %399 = vmatprep.subr.mxu0 0.0
      %400 = vmatpush2.msra.mxu0 0.0
      %401 = vmatprep.subr.mxu0 0.0
      %402 = vmatpush2.msra.mxu0 0.0
      %403 = vmatprep.subr.mxu0 0.0
      %404 = vmatpush2.msra.mxu0 0.0
      %405 = vmatprep.subr.mxu0 0.0
      %406 = vmatpush2.msra.mxu0 0.0
      %407 = vmatprep.subr.mxu0 0.0
      %408 = vmatpush2.msra.mxu0 0.0
      %409 = vmatprep.subr.mxu0 0.0
      %410 = vmatpush2.msra.mxu0 0.0
      %411 = vmatprep.subr.mxu0 0.0
      %412 = vmatpush2.msra.mxu0 0.0
      %413 = vmatprep.subr.mxu0 0.0
      %414 = vmatpush2.msra.mxu0 0.0
      %415 = vmatprep.subr.mxu0 0.0
      %416 = vmatpush2.msra.mxu0 0.0
      %417 = vmatprep.subr.mxu0 0.0
      %418 = vmatpush2.msra.mxu0 0.0
      %419 = vmatprep.subr.mxu0 0.0
      %420 = vmatpush2.msra.mxu0 0.0
      %421 = vmatprep.mubr.f32.mxu0 0.0
      %422 = vmatmul.mubr.f32.gmra.mxu0 %v355
      %v423 = vpop.f32.mrf.mxu0
      %v424 = vadd.f32 %v187, %v423
      %v425 = vpop.f32.mrf.mxu0
      %426 = vdwg.mxu0
      %v427 = vstv %s356
      %v428 = vmul.f32 %v427, %v84
      %v430 = vlaneseq
      %v431 = vshrl.u32 %v430, 7
      %v432 = vsub.s32 0, %v431
      %v433 = vrot.slane %v428, %v432
      %v435 = vadd.f32 %v424, %v433
      %v436 = vtanh.pop %v435
      %437 = vmatprep.subr.mxu0 0.0
      %438 = vmatpush1.msra.mxu0 %v101
      %439 = vmatprep.subr.mxu0 0.0
      %440 = vmatpush1.msra.mxu0 %v100
      %441 = vmatprep.subr.mxu0 0.0
      %442 = vmatpush1.msra.mxu0 %v99
      %443 = vmatprep.subr.mxu0 0.0
      %444 = vmatpush1.msra.mxu0 %v98
      %445 = vmatprep.subr.mxu0 0.0
      %446 = vmatpush1.msra.mxu0 %v97
      %447 = vmatprep.subr.mxu0 0.0
      %448 = vmatpush1.msra.mxu0 %v96
      %449 = vmatprep.subr.mxu0 0.0
      %450 = vmatpush1.msra.mxu0 %v95
      %451 = vmatprep.subr.mxu0 0.0
      %452 = vmatpush1.msra.mxu0 %v94
      %453 = vmatprep.subr.mxu0 0.0
      %454 = vmatpush1.msra.mxu0 %v93
      %455 = vmatprep.subr.mxu0 0.0
      %456 = vmatpush1.msra.mxu0 %v92
      %457 = vmatprep.subr.mxu0 0.0
      %458 = vmatpush1.msra.mxu0 %v91
      %459 = vmatprep.subr.mxu0 0.0
      %460 = vmatpush1.msra.mxu0 %v90
      %461 = vmatprep.subr.mxu0 0.0
      %462 = vmatpush1.msra.mxu0 %v89
      %463 = vmatprep.subr.mxu0 0.0
      %464 = vmatpush1.msra.mxu0 %v88
      %465 = vmatprep.subr.mxu0 0.0
      %466 = vmatpush1.msra.mxu0 %v87
      %467 = vmatprep.subr.mxu0 0.0
      %468 = vmatpush1.msra.mxu0 %v86
      %469 = vmatprep.subr.mxu0 0.0
      %470 = vmatpush2.msra.mxu0 0.0
      %471 = vmatprep.subr.mxu0 0.0
      %472 = vmatpush2.msra.mxu0 0.0
      %473 = vmatprep.subr.mxu0 0.0
      %474 = vmatpush2.msra.mxu0 0.0
      %475 = vmatprep.subr.mxu0 0.0
      %476 = vmatpush2.msra.mxu0 0.0
      %477 = vmatprep.subr.mxu0 0.0
      %478 = vmatpush2.msra.mxu0 0.0
      %479 = vmatprep.subr.mxu0 0.0
      %480 = vmatpush2.msra.mxu0 0.0
      %481 = vmatprep.subr.mxu0 0.0
      %482 = vmatpush2.msra.mxu0 0.0
      %483 = vmatprep.subr.mxu0 0.0
      %484 = vmatpush2.msra.mxu0 0.0
      %485 = vmatprep.subr.mxu0 0.0
      %486 = vmatpush2.msra.mxu0 0.0
      %487 = vmatprep.subr.mxu0 0.0
      %488 = vmatpush2.msra.mxu0 0.0
      %489 = vmatprep.subr.mxu0 0.0
      %490 = vmatpush2.msra.mxu0 0.0
      %491 = vmatprep.subr.mxu0 0.0
      %492 = vmatpush2.msra.mxu0 0.0
      %493 = vmatprep.subr.mxu0 0.0
      %494 = vmatpush2.msra.mxu0 0.0
      %495 = vmatprep.subr.mxu0 0.0
      %496 = vmatpush2.msra.mxu0 0.0
      %497 = vmatprep.subr.mxu0 0.0
      %498 = vmatpush2.msra.mxu0 0.0
      %499 = vmatprep.subr.mxu0 0.0
      %500 = vmatpush2.msra.mxu0 0.0
      %501 = vmatprep.mubr.f32.mxu0 0.0
      %502 = vmatmul.mubr.f32.gmra.mxu0 %v436
      %v503 = vpop.f32.mrf.mxu0
      %v504 = vadd.f32 %v281, %v503
      %v505 = vpop.f32.mrf.mxu0
      %506 = vdwg.mxu0
      %v507 = vmul.f32 %v353, %v504
      %v508 = vadd.f32 %v355, %v507
      %s509 = smul.f32 %s193, 2.0
      %s510 = sadd.f32 %s111, %s509
      %511 = vmatprep.subr.mxu0 0.0
      %512 = vmatpush1.msra.mxu0 %v67
      %513 = vmatprep.subr.mxu0 0.0
      %514 = vmatpush1.msra.mxu0 %v66
      %515 = vmatprep.subr.mxu0 0.0
      %516 = vmatpush1.msra.mxu0 %v65
      %517 = vmatprep.subr.mxu0 0.0
      %518 = vmatpush1.msra.mxu0 %v64
      %519 = vmatprep.subr.mxu0 0.0
      %520 = vmatpush1.msra.mxu0 %v63
      %521 = vmatprep.subr.mxu0 0.0
      %522 = vmatpush1.msra.mxu0 %v62
      %523 = vmatprep.subr.mxu0 0.0
      %524 = vmatpush1.msra.mxu0 %v61
      %525 = vmatprep.subr.mxu0 0.0
      %526 = vmatpush1.msra.mxu0 %v60
      %527 = vmatprep.subr.mxu0 0.0
      %528 = vmatpush1.msra.mxu0 %v59
      %529 = vmatprep.subr.mxu0 0.0
      %530 = vmatpush1.msra.mxu0 %v58
      %531 = vmatprep.subr.mxu0 0.0
      %532 = vmatpush1.msra.mxu0 %v57
      %533 = vmatprep.subr.mxu0 0.0
      %534 = vmatpush1.msra.mxu0 %v56
      %535 = vmatprep.subr.mxu0 0.0
      %536 = vmatpush1.msra.mxu0 %v55
      %537 = vmatprep.subr.mxu0 0.0
      %538 = vmatpush1.msra.mxu0 %v54
      %539 = vmatprep.subr.mxu0 0.0
      %540 = vmatpush1.msra.mxu0 %v53
      %541 = vmatprep.subr.mxu0 0.0
      %542 = vmatpush1.msra.mxu0 %v52
      %543 = vmatprep.subr.mxu0 0.0
      %544 = vmatpush2.msra.mxu0 0.0
      %545 = vmatprep.subr.mxu0 0.0
      %546 = vmatpush2.msra.mxu0 0.0
      %547 = vmatprep.subr.mxu0 0.0
      %548 = vmatpush2.msra.mxu0 0.0
      %549 = vmatprep.subr.mxu0 0.0
      %550 = vmatpush2.msra.mxu0 0.0
      %551 = vmatprep.subr.mxu0 0.0
      %552 = vmatpush2.msra.mxu0 0.0
      %553 = vmatprep.subr.mxu0 0.0
      %554 = vmatpush2.msra.mxu0 0.0
      %555 = vmatprep.subr.mxu0 0.0
      %556 = vmatpush2.msra.mxu0 0.0
      %557 = vmatprep.subr.mxu0 0.0
      %558 = vmatpush2.msra.mxu0 0.0
      %559 = vmatprep.subr.mxu0 0.0
      %560 = vmatpush2.msra.mxu0 0.0
      %561 = vmatprep.subr.mxu0 0.0
      %562 = vmatpush2.msra.mxu0 0.0
      %563 = vmatprep.subr.mxu0 0.0
      %564 = vmatpush2.msra.mxu0 0.0
      %565 = vmatprep.subr.mxu0 0.0
      %566 = vmatpush2.msra.mxu0 0.0
      %567 = vmatprep.subr.mxu0 0.0
      %568 = vmatpush2.msra.mxu0 0.0
      %569 = vmatprep.subr.mxu0 0.0
      %570 = vmatpush2.msra.mxu0 0.0
      %571 = vmatprep.subr.mxu0 0.0
      %572 = vmatpush2.msra.mxu0 0.0
      %573 = vmatprep.subr.mxu0 0.0
      %574 = vmatpush2.msra.mxu0 0.0
      %575 = vmatprep.mubr.f32.mxu0 0.0
      %576 = vmatmul.mubr.f32.gmra.mxu0 %v508
      %v577 = vpop.f32.mrf.mxu0
      %v578 = vadd.f32 %v187, %v577
      %v579 = vpop.f32.mrf.mxu0
      %580 = vdwg.mxu0
      %v581 = vstv %s510
      %v582 = vmul.f32 %v581, %v84
      %v584 = vlaneseq
      %v585 = vshrl.u32 %v584, 7
      %v586 = vsub.s32 0, %v585
      %v587 = vrot.slane %v582, %v586
      %v589 = vadd.f32 %v578, %v587
      %v590 = vtanh.pop %v589
      %591 = vmatprep.subr.mxu0 0.0
      %592 = vmatpush1.msra.mxu0 %v101
      %593 = vmatprep.subr.mxu0 0.0
      %594 = vmatpush1.msra.mxu0 %v100
      %595 = vmatprep.subr.mxu0 0.0
      %596 = vmatpush1.msra.mxu0 %v99
      %597 = vmatprep.subr.mxu0 0.0
      %598 = vmatpush1.msra.mxu0 %v98
      %599 = vmatprep.subr.mxu0 0.0
      %600 = vmatpush1.msra.mxu0 %v97
      %601 = vmatprep.subr.mxu0 0.0
      %602 = vmatpush1.msra.mxu0 %v96
      %603 = vmatprep.subr.mxu0 0.0
      %604 = vmatpush1.msra.mxu0 %v95
      %605 = vmatprep.subr.mxu0 0.0
      %606 = vmatpush1.msra.mxu0 %v94
      %607 = vmatprep.subr.mxu0 0.0
      %608 = vmatpush1.msra.mxu0 %v93
      %609 = vmatprep.subr.mxu0 0.0
      %610 = vmatpush1.msra.mxu0 %v92
      %611 = vmatprep.subr.mxu0 0.0
      %612 = vmatpush1.msra.mxu0 %v91
      %613 = vmatprep.subr.mxu0 0.0
      %614 = vmatpush1.msra.mxu0 %v90
      %615 = vmatprep.subr.mxu0 0.0
      %616 = vmatpush1.msra.mxu0 %v89
      %617 = vmatprep.subr.mxu0 0.0
      %618 = vmatpush1.msra.mxu0 %v88
      %619 = vmatprep.subr.mxu0 0.0
      %620 = vmatpush1.msra.mxu0 %v87
      %621 = vmatprep.subr.mxu0 0.0
      %622 = vmatpush1.msra.mxu0 %v86
      %623 = vmatprep.subr.mxu0 0.0
      %624 = vmatpush2.msra.mxu0 0.0
      %625 = vmatprep.subr.mxu0 0.0
      %626 = vmatpush2.msra.mxu0 0.0
      %627 = vmatprep.subr.mxu0 0.0
      %628 = vmatpush2.msra.mxu0 0.0
      %629 = vmatprep.subr.mxu0 0.0
      %630 = vmatpush2.msra.mxu0 0.0
      %631 = vmatprep.subr.mxu0 0.0
      %632 = vmatpush2.msra.mxu0 0.0
      %633 = vmatprep.subr.mxu0 0.0
      %634 = vmatpush2.msra.mxu0 0.0
      %635 = vmatprep.subr.mxu0 0.0
      %636 = vmatpush2.msra.mxu0 0.0
      %637 = vmatprep.subr.mxu0 0.0
      %638 = vmatpush2.msra.mxu0 0.0
      %639 = vmatprep.subr.mxu0 0.0
      %640 = vmatpush2.msra.mxu0 0.0
      %641 = vmatprep.subr.mxu0 0.0
      %642 = vmatpush2.msra.mxu0 0.0
      %643 = vmatprep.subr.mxu0 0.0
      %644 = vmatpush2.msra.mxu0 0.0
      %645 = vmatprep.subr.mxu0 0.0
      %646 = vmatpush2.msra.mxu0 0.0
      %647 = vmatprep.subr.mxu0 0.0
      %648 = vmatpush2.msra.mxu0 0.0
      %649 = vmatprep.subr.mxu0 0.0
      %650 = vmatpush2.msra.mxu0 0.0
      %651 = vmatprep.subr.mxu0 0.0
      %652 = vmatpush2.msra.mxu0 0.0
      %653 = vmatprep.subr.mxu0 0.0
      %654 = vmatpush2.msra.mxu0 0.0
      %655 = vmatprep.mubr.f32.mxu0 0.0
      %656 = vmatmul.mubr.f32.gmra.mxu0 %v590
      %v657 = vpop.f32.mrf.mxu0
      %v658 = vadd.f32 %v281, %v657
      %v659 = vpop.f32.mrf.mxu0
      %660 = vdwg.mxu0
      %v661 = vmul.f32 %v353, %v658
      %v662 = vadd.f32 %v508, %v661
      %s663 = smul.f32 %s193, 3.0
      %s664 = sadd.f32 %s111, %s663
      %665 = vmatprep.subr.mxu0 0.0
      %666 = vmatpush1.msra.mxu0 %v67
      %667 = vmatprep.subr.mxu0 0.0
      %668 = vmatpush1.msra.mxu0 %v66
      %669 = vmatprep.subr.mxu0 0.0
      %670 = vmatpush1.msra.mxu0 %v65
      %671 = vmatprep.subr.mxu0 0.0
      %672 = vmatpush1.msra.mxu0 %v64
      %673 = vmatprep.subr.mxu0 0.0
      %674 = vmatpush1.msra.mxu0 %v63
      %675 = vmatprep.subr.mxu0 0.0
      %676 = vmatpush1.msra.mxu0 %v62
      %677 = vmatprep.subr.mxu0 0.0
      %678 = vmatpush1.msra.mxu0 %v61
      %679 = vmatprep.subr.mxu0 0.0
      %680 = vmatpush1.msra.mxu0 %v60
      %681 = vmatprep.subr.mxu0 0.0
      %682 = vmatpush1.msra.mxu0 %v59
      %683 = vmatprep.subr.mxu0 0.0
      %684 = vmatpush1.msra.mxu0 %v58
      %685 = vmatprep.subr.mxu0 0.0
      %686 = vmatpush1.msra.mxu0 %v57
      %687 = vmatprep.subr.mxu0 0.0
      %688 = vmatpush1.msra.mxu0 %v56
      %689 = vmatprep.subr.mxu0 0.0
      %690 = vmatpush1.msra.mxu0 %v55
      %691 = vmatprep.subr.mxu0 0.0
      %692 = vmatpush1.msra.mxu0 %v54
      %693 = vmatprep.subr.mxu0 0.0
      %694 = vmatpush1.msra.mxu0 %v53
      %695 = vmatprep.subr.mxu0 0.0
      %696 = vmatpush1.msra.mxu0 %v52
      %697 = vmatprep.subr.mxu0 0.0
      %698 = vmatpush2.msra.mxu0 0.0
      %699 = vmatprep.subr.mxu0 0.0
      %700 = vmatpush2.msra.mxu0 0.0
      %701 = vmatprep.subr.mxu0 0.0
      %702 = vmatpush2.msra.mxu0 0.0
      %703 = vmatprep.subr.mxu0 0.0
      %704 = vmatpush2.msra.mxu0 0.0
      %705 = vmatprep.subr.mxu0 0.0
      %706 = vmatpush2.msra.mxu0 0.0
      %707 = vmatprep.subr.mxu0 0.0
      %708 = vmatpush2.msra.mxu0 0.0
      %709 = vmatprep.subr.mxu0 0.0
      %710 = vmatpush2.msra.mxu0 0.0
      %711 = vmatprep.subr.mxu0 0.0
      %712 = vmatpush2.msra.mxu0 0.0
      %713 = vmatprep.subr.mxu0 0.0
      %714 = vmatpush2.msra.mxu0 0.0
      %715 = vmatprep.subr.mxu0 0.0
      %716 = vmatpush2.msra.mxu0 0.0
      %717 = vmatprep.subr.mxu0 0.0
      %718 = vmatpush2.msra.mxu0 0.0
      %719 = vmatprep.subr.mxu0 0.0
      %720 = vmatpush2.msra.mxu0 0.0
      %721 = vmatprep.subr.mxu0 0.0
      %722 = vmatpush2.msra.mxu0 0.0
      %723 = vmatprep.subr.mxu0 0.0
      %724 = vmatpush2.msra.mxu0 0.0
      %725 = vmatprep.subr.mxu0 0.0
      %726 = vmatpush2.msra.mxu0 0.0
      %727 = vmatprep.subr.mxu0 0.0
      %728 = vmatpush2.msra.mxu0 0.0
      %729 = vmatprep.mubr.f32.mxu0 0.0
      %730 = vmatmul.mubr.f32.gmra.mxu0 %v662
      %v731 = vpop.f32.mrf.mxu0
      %v732 = vadd.f32 %v187, %v731
      %v733 = vpop.f32.mrf.mxu0
      %734 = vdwg.mxu0
      %v735 = vstv %s664
      %v736 = vmul.f32 %v735, %v84
      %v738 = vlaneseq
      %v739 = vshrl.u32 %v738, 7
      %v740 = vsub.s32 0, %v739
      %v741 = vrot.slane %v736, %v740
      %v743 = vadd.f32 %v732, %v741
      %v744 = vtanh.pop %v743
      %745 = vmatprep.subr.mxu0 0.0
      %746 = vmatpush1.msra.mxu0 %v101
      %747 = vmatprep.subr.mxu0 0.0
      %748 = vmatpush1.msra.mxu0 %v100
      %749 = vmatprep.subr.mxu0 0.0
      %750 = vmatpush1.msra.mxu0 %v99
      %751 = vmatprep.subr.mxu0 0.0
      %752 = vmatpush1.msra.mxu0 %v98
      %753 = vmatprep.subr.mxu0 0.0
      %754 = vmatpush1.msra.mxu0 %v97
      %755 = vmatprep.subr.mxu0 0.0
      %756 = vmatpush1.msra.mxu0 %v96
      %757 = vmatprep.subr.mxu0 0.0
      %758 = vmatpush1.msra.mxu0 %v95
      %759 = vmatprep.subr.mxu0 0.0
      %760 = vmatpush1.msra.mxu0 %v94
      %761 = vmatprep.subr.mxu0 0.0
      %762 = vmatpush1.msra.mxu0 %v93
      %763 = vmatprep.subr.mxu0 0.0
      %764 = vmatpush1.msra.mxu0 %v92
      %765 = vmatprep.subr.mxu0 0.0
      %766 = vmatpush1.msra.mxu0 %v91
      %767 = vmatprep.subr.mxu0 0.0
      %768 = vmatpush1.msra.mxu0 %v90
      %769 = vmatprep.subr.mxu0 0.0
      %770 = vmatpush1.msra.mxu0 %v89
      %771 = vmatprep.subr.mxu0 0.0
      %772 = vmatpush1.msra.mxu0 %v88
      %773 = vmatprep.subr.mxu0 0.0
      %774 = vmatpush1.msra.mxu0 %v87
      %775 = vmatprep.subr.mxu0 0.0
      %776 = vmatpush1.msra.mxu0 %v86
      %777 = vmatprep.subr.mxu0 0.0
      %778 = vmatpush2.msra.mxu0 0.0
      %779 = vmatprep.subr.mxu0 0.0
      %780 = vmatpush2.msra.mxu0 0.0
      %781 = vmatprep.subr.mxu0 0.0
      %782 = vmatpush2.msra.mxu0 0.0
      %783 = vmatprep.subr.mxu0 0.0
      %784 = vmatpush2.msra.mxu0 0.0
      %785 = vmatprep.subr.mxu0 0.0
      %786 = vmatpush2.msra.mxu0 0.0
      %787 = vmatprep.subr.mxu0 0.0
      %788 = vmatpush2.msra.mxu0 0.0
      %789 = vmatprep.subr.mxu0 0.0
      %790 = vmatpush2.msra.mxu0 0.0
      %791 = vmatprep.subr.mxu0 0.0
      %792 = vmatpush2.msra.mxu0 0.0
      %793 = vmatprep.subr.mxu0 0.0
      %794 = vmatpush2.msra.mxu0 0.0
      %795 = vmatprep.subr.mxu0 0.0
      %796 = vmatpush2.msra.mxu0 0.0
      %797 = vmatprep.subr.mxu0 0.0
      %798 = vmatpush2.msra.mxu0 0.0
      %799 = vmatprep.subr.mxu0 0.0
      %800 = vmatpush2.msra.mxu0 0.0
      %801 = vmatprep.subr.mxu0 0.0
      %802 = vmatpush2.msra.mxu0 0.0
      %803 = vmatprep.subr.mxu0 0.0
      %804 = vmatpush2.msra.mxu0 0.0
      %805 = vmatprep.subr.mxu0 0.0
      %806 = vmatpush2.msra.mxu0 0.0
      %807 = vmatprep.subr.mxu0 0.0
      %808 = vmatpush2.msra.mxu0 0.0
      %809 = vmatprep.mubr.f32.mxu0 0.0
      %810 = vmatmul.mubr.f32.gmra.mxu0 %v744
      %v811 = vpop.f32.mrf.mxu0
      %v812 = vadd.f32 %v281, %v811
      %v813 = vpop.f32.mrf.mxu0
      %814 = vdwg.mxu0
      %v815 = vmul.f32 %v353, %v812
      %v816 = vadd.f32 %v662, %v815
      %817 = vst [vmem:[#allocation2] sm:$0xff] %v816
    $region49: #{neural_ode_forward.1} parent=1 // pred_fallthru
      _
    %v818 = vld [vmem:[#allocation2] sm:$0xff]
    %819 = vst [vmem:[#allocation6] sm:$0xff] %v818
    %s820 = sadd.s32 %s103, 1
    %p821 = scmp.gt.s32.totalorder %s820, 0
    %p822 = scmp.lt.s32.totalorder %s820, 8
    %p823 = pnand %p821, %p822
    %p824 = pneg %p823
    // Predicated region
    $region50: #{neural_ode_forward.1} parent=1 // pred_check
      _
    $region51: #{neural_ode_forward.1} parent=1 // pred_check_branch
      %826 = sbr.rel (%p823) target = $region53
    $region52: #{neural_ode_forward.1} parent=1 // pred_region
      %s827 = sld [smem:[#allocation3 + %s103]]
      %s828 = sld [smem:[#allocation3 + %s820]]
      %s829 = scalar_lea.vmem %s2, 8
      %v830 = vld [vmem:[%s829] sm:$0xff]
      %v832 = vlaneseq
      %v833 = vshrl.u32 %v832, 7
      %v834 = vsub.s32 0, %v833
      %v835 = vrot.slane %v85, %v834
      %837 = vmatprep.subr.mxu0 0.0
      %838 = vmatpush1.msra.mxu0 %v83
      %839 = vmatprep.subr.mxu0 0.0
      %840 = vmatpush1.msra.mxu0 %v82
      %841 = vmatprep.subr.mxu0 0.0
      %842 = vmatpush1.msra.mxu0 %v81
      %843 = vmatprep.subr.mxu0 0.0
      %844 = vmatpush1.msra.mxu0 %v80
      %845 = vmatprep.subr.mxu0 0.0
      %846 = vmatpush1.msra.mxu0 %v79
      %847 = vmatprep.subr.mxu0 0.0
      %848 = vmatpush1.msra.mxu0 %v78
      %849 = vmatprep.subr.mxu0 0.0
      %850 = vmatpush1.msra.mxu0 %v77
      %851 = vmatprep.subr.mxu0 0.0
      %852 = vmatpush1.msra.mxu0 %v76
      %853 = vmatprep.subr.mxu0 0.0
      %854 = vmatpush1.msra.mxu0 %v75
      %855 = vmatprep.subr.mxu0 0.0
      %856 = vmatpush1.msra.mxu0 %v74
      %857 = vmatprep.subr.mxu0 0.0
      %858 = vmatpush1.msra.mxu0 %v73
      %859 = vmatprep.subr.mxu0 0.0
      %860 = vmatpush1.msra.mxu0 %v72
      %861 = vmatprep.subr.mxu0 0.0
      %862 = vmatpush1.msra.mxu0 %v71
      %863 = vmatprep.subr.mxu0 0.0
      %864 = vmatpush1.msra.mxu0 %v70
      %865 = vmatprep.subr.mxu0 0.0
      %866 = vmatpush1.msra.mxu0 %v69
      %867 = vmatprep.subr.mxu0 0.0
      %868 = vmatpush1.msra.mxu0 %v68
      %869 = vmatprep.subr.mxu0 0.0
      %870 = vmatpush2.msra.mxu0 0.0
      %871 = vmatprep.subr.mxu0 0.0
      %872 = vmatpush2.msra.mxu0 0.0
      %873 = vmatprep.subr.mxu0 0.0
      %874 = vmatpush2.msra.mxu0 0.0
      %875 = vmatprep.subr.mxu0 0.0
      %876 = vmatpush2.msra.mxu0 0.0
      %877 = vmatprep.subr.mxu0 0.0
      %878 = vmatpush2.msra.mxu0 0.0
      %879 = vmatprep.subr.mxu0 0.0
      %880 = vmatpush2.msra.mxu0 0.0
      %881 = vmatprep.subr.mxu0 0.0
      %882 = vmatpush2.msra.mxu0 0.0
      %883 = vmatprep.subr.mxu0 0.0
      %884 = vmatpush2.msra.mxu0 0.0
      %885 = vmatprep.subr.mxu0 0.0
      %886 = vmatpush2.msra.mxu0 0.0
      %887 = vmatprep.subr.mxu0 0.0
      %888 = vmatpush2.msra.mxu0 0.0
      %889 = vmatprep.subr.mxu0 0.0
      %890 = vmatpush2.msra.mxu0 0.0
      %891 = vmatprep.subr.mxu0 0.0
      %892 = vmatpush2.msra.mxu0 0.0
      %893 = vmatprep.subr.mxu0 0.0
      %894 = vmatpush2.msra.mxu0 0.0
      %895 = vmatprep.subr.mxu0 0.0
      %896 = vmatpush2.msra.mxu0 0.0
      %897 = vmatprep.subr.mxu0 0.0
      %898 = vmatpush2.msra.mxu0 0.0
      %899 = vmatprep.subr.mxu0 0.0
      %900 = vmatpush2.msra.mxu0 0.0
      %901 = vmatprep.mubr.f32.mxu0 0.0
      %902 = vmatmul.mubr.f32.gmra.mxu0 %v830
      %v903 = vpop.f32.mrf.mxu0
      %v904 = vadd.f32 %v835, %v903
      %v905 = vpop.f32.mrf.mxu0
      %906 = vdwg.mxu0
      %s907 = ssub.f32 %s828, %s827
      %v908 = vrcp.pop 4.0
      %s909 = vtos %v908
      %s910 = smul.f32 %s907, %s909
      %v911 = vld [vmem:[#allocation2] sm:$0xff]
      %s912 = smul.f32 %s910, 0.0
      %s913 = sadd.f32 %s827, %s912
      %914 = vmatprep.subr.mxu0 0.0
      %915 = vmatpush1.msra.mxu0 %v67
      %916 = vmatprep.subr.mxu0 0.0
      %917 = vmatpush1.msra.mxu0 %v66
      %918 = vmatprep.subr.mxu0 0.0
      %919 = vmatpush1.msra.mxu0 %v65
      %920 = vmatprep.subr.mxu0 0.0
      %921 = vmatpush1.msra.mxu0 %v64
      %922 = vmatprep.subr.mxu0 0.0
      %923 = vmatpush1.msra.mxu0 %v63
      %924 = vmatprep.subr.mxu0 0.0
      %925 = vmatpush1.msra.mxu0 %v62
      %926 = vmatprep.subr.mxu0 0.0
      %927 = vmatpush1.msra.mxu0 %v61
      %928 = vmatprep.subr.mxu0 0.0
      %929 = vmatpush1.msra.mxu0 %v60
      %930 = vmatprep.subr.mxu0 0.0
      %931 = vmatpush1.msra.mxu0 %v59
      %932 = vmatprep.subr.mxu0 0.0
      %933 = vmatpush1.msra.mxu0 %v58
      %934 = vmatprep.subr.mxu0 0.0
      %935 = vmatpush1.msra.mxu0 %v57
      %936 = vmatprep.subr.mxu0 0.0
      %937 = vmatpush1.msra.mxu0 %v56
      %938 = vmatprep.subr.mxu0 0.0
      %939 = vmatpush1.msra.mxu0 %v55
      %940 = vmatprep.subr.mxu0 0.0
      %941 = vmatpush1.msra.mxu0 %v54
      %942 = vmatprep.subr.mxu0 0.0
      %943 = vmatpush1.msra.mxu0 %v53
      %944 = vmatprep.subr.mxu0 0.0
      %945 = vmatpush1.msra.mxu0 %v52
      %946 = vmatprep.subr.mxu0 0.0
      %947 = vmatpush2.msra.mxu0 0.0
      %948 = vmatprep.subr.mxu0 0.0
      %949 = vmatpush2.msra.mxu0 0.0
      %950 = vmatprep.subr.mxu0 0.0
      %951 = vmatpush2.msra.mxu0 0.0
      %952 = vmatprep.subr.mxu0 0.0
      %953 = vmatpush2.msra.mxu0 0.0
      %954 = vmatprep.subr.mxu0 0.0
      %955 = vmatpush2.msra.mxu0 0.0
      %956 = vmatprep.subr.mxu0 0.0
      %957 = vmatpush2.msra.mxu0 0.0
      %958 = vmatprep.subr.mxu0 0.0
      %959 = vmatpush2.msra.mxu0 0.0
      %960 = vmatprep.subr.mxu0 0.0
      %961 = vmatpush2.msra.mxu0 0.0
      %962 = vmatprep.subr.mxu0 0.0
      %963 = vmatpush2.msra.mxu0 0.0
      %964 = vmatprep.subr.mxu0 0.0
      %965 = vmatpush2.msra.mxu0 0.0
      %966 = vmatprep.subr.mxu0 0.0
      %967 = vmatpush2.msra.mxu0 0.0
      %968 = vmatprep.subr.mxu0 0.0
      %969 = vmatpush2.msra.mxu0 0.0
      %970 = vmatprep.subr.mxu0 0.0
      %971 = vmatpush2.msra.mxu0 0.0
      %972 = vmatprep.subr.mxu0 0.0
      %973 = vmatpush2.msra.mxu0 0.0
      %974 = vmatprep.subr.mxu0 0.0
      %975 = vmatpush2.msra.mxu0 0.0
      %976 = vmatprep.subr.mxu0 0.0
      %977 = vmatpush2.msra.mxu0 0.0
      %978 = vmatprep.mubr.f32.mxu0 0.0
      %979 = vmatmul.mubr.f32.gmra.mxu0 %v911
      %v980 = vpop.f32.mrf.mxu0
      %v981 = vadd.f32 %v904, %v980
      %v982 = vpop.f32.mrf.mxu0
      %983 = vdwg.mxu0
      %v984 = vstv %s913
      %v985 = vmul.f32 %v984, %v84
      %v987 = vlaneseq
      %v988 = vshrl.u32 %v987, 7
      %v989 = vsub.s32 0, %v988
      %v990 = vrot.slane %v985, %v989
      %v992 = vadd.f32 %v981, %v990
      %v993 = vtanh.pop %v992
      %v995 = vlaneseq
      %v996 = vshrl.u32 %v995, 7
      %v997 = vsub.s32 0, %v996
      %v998 = vrot.slane %v102, %v997
      %1000 = vmatprep.subr.mxu0 0.0
      %1001 = vmatpush1.msra.mxu0 %v101
      %1002 = vmatprep.subr.mxu0 0.0
      %1003 = vmatpush1.msra.mxu0 %v100
      %1004 = vmatprep.subr.mxu0 0.0
      %1005 = vmatpush1.msra.mxu0 %v99
      %1006 = vmatprep.subr.mxu0 0.0
      %1007 = vmatpush1.msra.mxu0 %v98
      %1008 = vmatprep.subr.mxu0 0.0
      %1009 = vmatpush1.msra.mxu0 %v97
      %1010 = vmatprep.subr.mxu0 0.0
      %1011 = vmatpush1.msra.mxu0 %v96
      %1012 = vmatprep.subr.mxu0 0.0
      %1013 = vmatpush1.msra.mxu0 %v95
      %1014 = vmatprep.subr.mxu0 0.0
      %1015 = vmatpush1.msra.mxu0 %v94
      %1016 = vmatprep.subr.mxu0 0.0
      %1017 = vmatpush1.msra.mxu0 %v93
      %1018 = vmatprep.subr.mxu0 0.0
      %1019 = vmatpush1.msra.mxu0 %v92
      %1020 = vmatprep.subr.mxu0 0.0
      %1021 = vmatpush1.msra.mxu0 %v91
      %1022 = vmatprep.subr.mxu0 0.0
      %1023 = vmatpush1.msra.mxu0 %v90
      %1024 = vmatprep.subr.mxu0 0.0
      %1025 = vmatpush1.msra.mxu0 %v89
      %1026 = vmatprep.subr.mxu0 0.0
      %1027 = vmatpush1.msra.mxu0 %v88
      %1028 = vmatprep.subr.mxu0 0.0
      %1029 = vmatpush1.msra.mxu0 %v87
      %1030 = vmatprep.subr.mxu0 0.0
      %1031 = vmatpush1.msra.mxu0 %v86
      %1032 = vmatprep.subr.mxu0 0.0
      %1033 = vmatpush2.msra.mxu0 0.0
      %1034 = vmatprep.subr.mxu0 0.0
      %1035 = vmatpush2.msra.mxu0 0.0
      %1036 = vmatprep.subr.mxu0 0.0
      %1037 = vmatpush2.msra.mxu0 0.0
      %1038 = vmatprep.subr.mxu0 0.0
      %1039 = vmatpush2.msra.mxu0 0.0
      %1040 = vmatprep.subr.mxu0 0.0
      %1041 = vmatpush2.msra.mxu0 0.0
      %1042 = vmatprep.subr.mxu0 0.0
      %1043 = vmatpush2.msra.mxu0 0.0
      %1044 = vmatprep.subr.mxu0 0.0
      %1045 = vmatpush2.msra.mxu0 0.0
      %1046 = vmatprep.subr.mxu0 0.0
      %1047 = vmatpush2.msra.mxu0 0.0
      %1048 = vmatprep.subr.mxu0 0.0
      %1049 = vmatpush2.msra.mxu0 0.0
      %1050 = vmatprep.subr.mxu0 0.0
      %1051 = vmatpush2.msra.mxu0 0.0
      %1052 = vmatprep.subr.mxu0 0.0
      %1053 = vmatpush2.msra.mxu0 0.0
      %1054 = vmatprep.subr.mxu0 0.0
      %1055 = vmatpush2.msra.mxu0 0.0
      %1056 = vmatprep.subr.mxu0 0.0
      %1057 = vmatpush2.msra.mxu0 0.0
      %1058 = vmatprep.subr.mxu0 0.0
      %1059 = vmatpush2.msra.mxu0 0.0
      %1060 = vmatprep.subr.mxu0 0.0
      %1061 = vmatpush2.msra.mxu0 0.0
      %1062 = vmatprep.subr.mxu0 0.0
      %1063 = vmatpush2.msra.mxu0 0.0
      %1064 = vmatprep.mubr.f32.mxu0 0.0
      %1065 = vmatmul.mubr.f32.gmra.mxu0 %v993
      %v1066 = vpop.f32.mrf.mxu0
      %v1067 = vadd.f32 %v998, %v1066
      %v1068 = vpop.f32.mrf.mxu0
      %1069 = vdwg.mxu0
      %v1070 = vstv %s910
      %v1071 = vmul.f32 %v1070, %v1067
      %v1072 = vadd.f32 %v911, %v1071
      %s1073 = sadd.f32 %s827, %s910
      %1074 = vmatprep.subr.mxu0 0.0
      %1075 = vmatpush1.msra.mxu0 %v67
      %1076 = vmatprep.subr.mxu0 0.0
      %1077 = vmatpush1.msra.mxu0 %v66
      %1078 = vmatprep.subr.mxu0 0.0
      %1079 = vmatpush1.msra.mxu0 %v65
      %1080 = vmatprep.subr.mxu0 0.0
      %1081 = vmatpush1.msra.mxu0 %v64
      %1082 = vmatprep.subr.mxu0 0.0
      %1083 = vmatpush1.msra.mxu0 %v63
      %1084 = vmatprep.subr.mxu0 0.0
      %1085 = vmatpush1.msra.mxu0 %v62
      %1086 = vmatprep.subr.mxu0 0.0
      %1087 = vmatpush1.msra.mxu0 %v61
      %1088 = vmatprep.subr.mxu0 0.0
      %1089 = vmatpush1.msra.mxu0 %v60
      %1090 = vmatprep.subr.mxu0 0.0
      %1091 = vmatpush1.msra.mxu0 %v59
      %1092 = vmatprep.subr.mxu0 0.0
      %1093 = vmatpush1.msra.mxu0 %v58
      %1094 = vmatprep.subr.mxu0 0.0
      %1095 = vmatpush1.msra.mxu0 %v57
      %1096 = vmatprep.subr.mxu0 0.0
      %1097 = vmatpush1.msra.mxu0 %v56
      %1098 = vmatprep.subr.mxu0 0.0
      %1099 = vmatpush1.msra.mxu0 %v55
      %1100 = vmatprep.subr.mxu0 0.0
      %1101 = vmatpush1.msra.mxu0 %v54
      %1102 = vmatprep.subr.mxu0 0.0
      %1103 = vmatpush1.msra.mxu0 %v53
      %1104 = vmatprep.subr.mxu0 0.0
      %1105 = vmatpush1.msra.mxu0 %v52
      %1106 = vmatprep.subr.mxu0 0.0
      %1107 = vmatpush2.msra.mxu0 0.0
      %1108 = vmatprep.subr.mxu0 0.0
      %1109 = vmatpush2.msra.mxu0 0.0
      %1110 = vmatprep.subr.mxu0 0.0
      %1111 = vmatpush2.msra.mxu0 0.0
      %1112 = vmatprep.subr.mxu0 0.0
      %1113 = vmatpush2.msra.mxu0 0.0
      %1114 = vmatprep.subr.mxu0 0.0
      %1115 = vmatpush2.msra.mxu0 0.0
      %1116 = vmatprep.subr.mxu0 0.0
      %1117 = vmatpush2.msra.mxu0 0.0
      %1118 = vmatprep.subr.mxu0 0.0
      %1119 = vmatpush2.msra.mxu0 0.0
      %1120 = vmatprep.subr.mxu0 0.0
      %1121 = vmatpush2.msra.mxu0 0.0
      %1122 = vmatprep.subr.mxu0 0.0
      %1123 = vmatpush2.msra.mxu0 0.0
      %1124 = vmatprep.subr.mxu0 0.0
      %1125 = vmatpush2.msra.mxu0 0.0
      %1126 = vmatprep.subr.mxu0 0.0
      %1127 = vmatpush2.msra.mxu0 0.0
      %1128 = vmatprep.subr.mxu0 0.0
      %1129 = vmatpush2.msra.mxu0 0.0
      %1130 = vmatprep.subr.mxu0 0.0
      %1131 = vmatpush2.msra.mxu0 0.0
      %1132 = vmatprep.subr.mxu0 0.0
      %1133 = vmatpush2.msra.mxu0 0.0
      %1134 = vmatprep.subr.mxu0 0.0
      %1135 = vmatpush2.msra.mxu0 0.0
      %1136 = vmatprep.subr.mxu0 0.0
      %1137 = vmatpush2.msra.mxu0 0.0
      %1138 = vmatprep.mubr.f32.mxu0 0.0
      %1139 = vmatmul.mubr.f32.gmra.mxu0 %v1072
      %v1140 = vpop.f32.mrf.mxu0
      %v1141 = vadd.f32 %v904, %v1140
      %v1142 = vpop.f32.mrf.mxu0
      %1143 = vdwg.mxu0
      %v1144 = vstv %s1073
      %v1145 = vmul.f32 %v1144, %v84
      %v1147 = vlaneseq
      %v1148 = vshrl.u32 %v1147, 7
      %v1149 = vsub.s32 0, %v1148
      %v1150 = vrot.slane %v1145, %v1149
      %v1152 = vadd.f32 %v1141, %v1150
      %v1153 = vtanh.pop %v1152
      %1154 = vmatprep.subr.mxu0 0.0
      %1155 = vmatpush1.msra.mxu0 %v101
      %1156 = vmatprep.subr.mxu0 0.0
      %1157 = vmatpush1.msra.mxu0 %v100
      %1158 = vmatprep.subr.mxu0 0.0
      %1159 = vmatpush1.msra.mxu0 %v99
      %1160 = vmatprep.subr.mxu0 0.0
      %1161 = vmatpush1.msra.mxu0 %v98
      %1162 = vmatprep.subr.mxu0 0.0
      %1163 = vmatpush1.msra.mxu0 %v97
      %1164 = vmatprep.subr.mxu0 0.0
      %1165 = vmatpush1.msra.mxu0 %v96
      %1166 = vmatprep.subr.mxu0 0.0
      %1167 = vmatpush1.msra.mxu0 %v95
      %1168 = vmatprep.subr.mxu0 0.0
      %1169 = vmatpush1.msra.mxu0 %v94
      %1170 = vmatprep.subr.mxu0 0.0
      %1171 = vmatpush1.msra.mxu0 %v93
      %1172 = vmatprep.subr.mxu0 0.0
      %1173 = vmatpush1.msra.mxu0 %v92
      %1174 = vmatprep.subr.mxu0 0.0
      %1175 = vmatpush1.msra.mxu0 %v91
      %1176 = vmatprep.subr.mxu0 0.0
      %1177 = vmatpush1.msra.mxu0 %v90
      %1178 = vmatprep.subr.mxu0 0.0
      %1179 = vmatpush1.msra.mxu0 %v89
      %1180 = vmatprep.subr.mxu0 0.0
      %1181 = vmatpush1.msra.mxu0 %v88
      %1182 = vmatprep.subr.mxu0 0.0
      %1183 = vmatpush1.msra.mxu0 %v87
      %1184 = vmatprep.subr.mxu0 0.0
      %1185 = vmatpush1.msra.mxu0 %v86
      %1186 = vmatprep.subr.mxu0 0.0
      %1187 = vmatpush2.msra.mxu0 0.0
      %1188 = vmatprep.subr.mxu0 0.0
      %1189 = vmatpush2.msra.mxu0 0.0
      %1190 = vmatprep.subr.mxu0 0.0
      %1191 = vmatpush2.msra.mxu0 0.0
      %1192 = vmatprep.subr.mxu0 0.0
      %1193 = vmatpush2.msra.mxu0 0.0
      %1194 = vmatprep.subr.mxu0 0.0
      %1195 = vmatpush2.msra.mxu0 0.0
      %1196 = vmatprep.subr.mxu0 0.0
      %1197 = vmatpush2.msra.mxu0 0.0
      %1198 = vmatprep.subr.mxu0 0.0
      %1199 = vmatpush2.msra.mxu0 0.0
      %1200 = vmatprep.subr.mxu0 0.0
      %1201 = vmatpush2.msra.mxu0 0.0
      %1202 = vmatprep.subr.mxu0 0.0
      %1203 = vmatpush2.msra.mxu0 0.0
      %1204 = vmatprep.subr.mxu0 0.0
      %1205 = vmatpush2.msra.mxu0 0.0
      %1206 = vmatprep.subr.mxu0 0.0
      %1207 = vmatpush2.msra.mxu0 0.0
      %1208 = vmatprep.subr.mxu0 0.0
      %1209 = vmatpush2.msra.mxu0 0.0
      %1210 = vmatprep.subr.mxu0 0.0
      %1211 = vmatpush2.msra.mxu0 0.0
      %1212 = vmatprep.subr.mxu0 0.0
      %1213 = vmatpush2.msra.mxu0 0.0
      %1214 = vmatprep.subr.mxu0 0.0
      %1215 = vmatpush2.msra.mxu0 0.0
      %1216 = vmatprep.subr.mxu0 0.0
      %1217 = vmatpush2.msra.mxu0 0.0
      %1218 = vmatprep.mubr.f32.mxu0 0.0
      %1219 = vmatmul.mubr.f32.gmra.mxu0 %v1153
      %v1220 = vpop.f32.mrf.mxu0
      %v1221 = vadd.f32 %v998, %v1220
      %v1222 = vpop.f32.mrf.mxu0
      %1223 = vdwg.mxu0
      %v1224 = vmul.f32 %v1070, %v1221
      %v1225 = vadd.f32 %v1072, %v1224
      %s1226 = smul.f32 %s910, 2.0
      %s1227 = sadd.f32 %s827, %s1226
      %1228 = vmatprep.subr.mxu0 0.0
      %1229 = vmatpush1.msra.mxu0 %v67
      %1230 = vmatprep.subr.mxu0 0.0
      %1231 = vmatpush1.msra.mxu0 %v66
      %1232 = vmatprep.subr.mxu0 0.0
      %1233 = vmatpush1.msra.mxu0 %v65
      %1234 = vmatprep.subr.mxu0 0.0
      %1235 = vmatpush1.msra.mxu0 %v64
      %1236 = vmatprep.subr.mxu0 0.0
      %1237 = vmatpush1.msra.mxu0 %v63
      %1238 = vmatprep.subr.mxu0 0.0
      %1239 = vmatpush1.msra.mxu0 %v62
      %1240 = vmatprep.subr.mxu0 0.0
      %1241 = vmatpush1.msra.mxu0 %v61
      %1242 = vmatprep.subr.mxu0 0.0
      %1243 = vmatpush1.msra.mxu0 %v60
      %1244 = vmatprep.subr.mxu0 0.0
      %1245 = vmatpush1.msra.mxu0 %v59
      %1246 = vmatprep.subr.mxu0 0.0
      %1247 = vmatpush1.msra.mxu0 %v58
      %1248 = vmatprep.subr.mxu0 0.0
      %1249 = vmatpush1.msra.mxu0 %v57
      %1250 = vmatprep.subr.mxu0 0.0
      %1251 = vmatpush1.msra.mxu0 %v56
      %1252 = vmatprep.subr.mxu0 0.0
      %1253 = vmatpush1.msra.mxu0 %v55
      %1254 = vmatprep.subr.mxu0 0.0
      %1255 = vmatpush1.msra.mxu0 %v54
      %1256 = vmatprep.subr.mxu0 0.0
      %1257 = vmatpush1.msra.mxu0 %v53
      %1258 = vmatprep.subr.mxu0 0.0
      %1259 = vmatpush1.msra.mxu0 %v52
      %1260 = vmatprep.subr.mxu0 0.0
      %1261 = vmatpush2.msra.mxu0 0.0
      %1262 = vmatprep.subr.mxu0 0.0
      %1263 = vmatpush2.msra.mxu0 0.0
      %1264 = vmatprep.subr.mxu0 0.0
      %1265 = vmatpush2.msra.mxu0 0.0
      %1266 = vmatprep.subr.mxu0 0.0
      %1267 = vmatpush2.msra.mxu0 0.0
      %1268 = vmatprep.subr.mxu0 0.0
      %1269 = vmatpush2.msra.mxu0 0.0
      %1270 = vmatprep.subr.mxu0 0.0
      %1271 = vmatpush2.msra.mxu0 0.0
      %1272 = vmatprep.subr.mxu0 0.0
      %1273 = vmatpush2.msra.mxu0 0.0
      %1274 = vmatprep.subr.mxu0 0.0
      %1275 = vmatpush2.msra.mxu0 0.0
      %1276 = vmatprep.subr.mxu0 0.0
      %1277 = vmatpush2.msra.mxu0 0.0
      %1278 = vmatprep.subr.mxu0 0.0
      %1279 = vmatpush2.msra.mxu0 0.0
      %1280 = vmatprep.subr.mxu0 0.0
      %1281 = vmatpush2.msra.mxu0 0.0
      %1282 = vmatprep.subr.mxu0 0.0
      %1283 = vmatpush2.msra.mxu0 0.0
      %1284 = vmatprep.subr.mxu0 0.0
      %1285 = vmatpush2.msra.mxu0 0.0
      %1286 = vmatprep.subr.mxu0 0.0
      %1287 = vmatpush2.msra.mxu0 0.0
      %1288 = vmatprep.subr.mxu0 0.0
      %1289 = vmatpush2.msra.mxu0 0.0
      %1290 = vmatprep.subr.mxu0 0.0
      %1291 = vmatpush2.msra.mxu0 0.0
      %1292 = vmatprep.mubr.f32.mxu0 0.0
      %1293 = vmatmul.mubr.f32.gmra.mxu0 %v1225
      %v1294 = vpop.f32.mrf.mxu0
      %v1295 = vadd.f32 %v904, %v1294
      %v1296 = vpop.f32.mrf.mxu0
      %1297 = vdwg.mxu0
      %v1298 = vstv %s1227
      %v1299 = vmul.f32 %v1298, %v84
      %v1301 = vlaneseq
      %v1302 = vshrl.u32 %v1301, 7
      %v1303 = vsub.s32 0, %v1302
      %v1304 = vrot.slane %v1299, %v1303
      %v1306 = vadd.f32 %v1295, %v1304
      %v1307 = vtanh.pop %v1306
      %1308 = vmatprep.subr.mxu0 0.0
      %1309 = vmatpush1.msra.mxu0 %v101
      %1310 = vmatprep.subr.mxu0 0.0
      %1311 = vmatpush1.msra.mxu0 %v100
      %1312 = vmatprep.subr.mxu0 0.0
      %1313 = vmatpush1.msra.mxu0 %v99
      %1314 = vmatprep.subr.mxu0 0.0
      %1315 = vmatpush1.msra.mxu0 %v98
      %1316 = vmatprep.subr.mxu0 0.0
      %1317 = vmatpush1.msra.mxu0 %v97
      %1318 = vmatprep.subr.mxu0 0.0
      %1319 = vmatpush1.msra.mxu0 %v96
      %1320 = vmatprep.subr.mxu0 0.0
      %1321 = vmatpush1.msra.mxu0 %v95
      %1322 = vmatprep.subr.mxu0 0.0
      %1323 = vmatpush1.msra.mxu0 %v94
      %1324 = vmatprep.subr.mxu0 0.0
      %1325 = vmatpush1.msra.mxu0 %v93
      %1326 = vmatprep.subr.mxu0 0.0
      %1327 = vmatpush1.msra.mxu0 %v92
      %1328 = vmatprep.subr.mxu0 0.0
      %1329 = vmatpush1.msra.mxu0 %v91
      %1330 = vmatprep.subr.mxu0 0.0
      %1331 = vmatpush1.msra.mxu0 %v90
      %1332 = vmatprep.subr.mxu0 0.0
      %1333 = vmatpush1.msra.mxu0 %v89
      %1334 = vmatprep.subr.mxu0 0.0
      %1335 = vmatpush1.msra.mxu0 %v88
      %1336 = vmatprep.subr.mxu0 0.0
      %1337 = vmatpush1.msra.mxu0 %v87
      %1338 = vmatprep.subr.mxu0 0.0
      %1339 = vmatpush1.msra.mxu0 %v86
      %1340 = vmatprep.subr.mxu0 0.0
      %1341 = vmatpush2.msra.mxu0 0.0
      %1342 = vmatprep.subr.mxu0 0.0
      %1343 = vmatpush2.msra.mxu0 0.0
      %1344 = vmatprep.subr.mxu0 0.0
      %1345 = vmatpush2.msra.mxu0 0.0
      %1346 = vmatprep.subr.mxu0 0.0
      %1347 = vmatpush2.msra.mxu0 0.0
      %1348 = vmatprep.subr.mxu0 0.0
      %1349 = vmatpush2.msra.mxu0 0.0
      %1350 = vmatprep.subr.mxu0 0.0
      %1351 = vmatpush2.msra.mxu0 0.0
      %1352 = vmatprep.subr.mxu0 0.0
      %1353 = vmatpush2.msra.mxu0 0.0
      %1354 = vmatprep.subr.mxu0 0.0
      %1355 = vmatpush2.msra.mxu0 0.0
      %1356 = vmatprep.subr.mxu0 0.0
      %1357 = vmatpush2.msra.mxu0 0.0
      %1358 = vmatprep.subr.mxu0 0.0
      %1359 = vmatpush2.msra.mxu0 0.0
      %1360 = vmatprep.subr.mxu0 0.0
      %1361 = vmatpush2.msra.mxu0 0.0
      %1362 = vmatprep.subr.mxu0 0.0
      %1363 = vmatpush2.msra.mxu0 0.0
      %1364 = vmatprep.subr.mxu0 0.0
      %1365 = vmatpush2.msra.mxu0 0.0
      %1366 = vmatprep.subr.mxu0 0.0
      %1367 = vmatpush2.msra.mxu0 0.0
      %1368 = vmatprep.subr.mxu0 0.0
      %1369 = vmatpush2.msra.mxu0 0.0
      %1370 = vmatprep.subr.mxu0 0.0
      %1371 = vmatpush2.msra.mxu0 0.0
      %1372 = vmatprep.mubr.f32.mxu0 0.0
      %1373 = vmatmul.mubr.f32.gmra.mxu0 %v1307
      %v1374 = vpop.f32.mrf.mxu0
      %v1375 = vadd.f32 %v998, %v1374
      %v1376 = vpop.f32.mrf.mxu0
      %1377 = vdwg.mxu0
      %v1378 = vmul.f32 %v1070, %v1375
      %v1379 = vadd.f32 %v1225, %v1378
      %s1380 = smul.f32 %s910, 3.0
      %s1381 = sadd.f32 %s827, %s1380
      %1382 = vmatprep.subr.mxu0 0.0
      %1383 = vmatpush1.msra.mxu0 %v67
      %1384 = vmatprep.subr.mxu0 0.0
      %1385 = vmatpush1.msra.mxu0 %v66
      %1386 = vmatprep.subr.mxu0 0.0
      %1387 = vmatpush1.msra.mxu0 %v65
      %1388 = vmatprep.subr.mxu0 0.0
      %1389 = vmatpush1.msra.mxu0 %v64
      %1390 = vmatprep.subr.mxu0 0.0
      %1391 = vmatpush1.msra.mxu0 %v63
      %1392 = vmatprep.subr.mxu0 0.0
      %1393 = vmatpush1.msra.mxu0 %v62
      %1394 = vmatprep.subr.mxu0 0.0
      %1395 = vmatpush1.msra.mxu0 %v61
      %1396 = vmatprep.subr.mxu0 0.0
      %1397 = vmatpush1.msra.mxu0 %v60
      %1398 = vmatprep.subr.mxu0 0.0
      %1399 = vmatpush1.msra.mxu0 %v59
      %1400 = vmatprep.subr.mxu0 0.0
      %1401 = vmatpush1.msra.mxu0 %v58
      %1402 = vmatprep.subr.mxu0 0.0
      %1403 = vmatpush1.msra.mxu0 %v57
      %1404 = vmatprep.subr.mxu0 0.0
      %1405 = vmatpush1.msra.mxu0 %v56
      %1406 = vmatprep.subr.mxu0 0.0
      %1407 = vmatpush1.msra.mxu0 %v55
      %1408 = vmatprep.subr.mxu0 0.0
      %1409 = vmatpush1.msra.mxu0 %v54
      %1410 = vmatprep.subr.mxu0 0.0
      %1411 = vmatpush1.msra.mxu0 %v53
      %1412 = vmatprep.subr.mxu0 0.0
      %1413 = vmatpush1.msra.mxu0 %v52
      %1414 = vmatprep.subr.mxu0 0.0
      %1415 = vmatpush2.msra.mxu0 0.0
      %1416 = vmatprep.subr.mxu0 0.0
      %1417 = vmatpush2.msra.mxu0 0.0
      %1418 = vmatprep.subr.mxu0 0.0
      %1419 = vmatpush2.msra.mxu0 0.0
      %1420 = vmatprep.subr.mxu0 0.0
      %1421 = vmatpush2.msra.mxu0 0.0
      %1422 = vmatprep.subr.mxu0 0.0
      %1423 = vmatpush2.msra.mxu0 0.0
      %1424 = vmatprep.subr.mxu0 0.0
      %1425 = vmatpush2.msra.mxu0 0.0
      %1426 = vmatprep.subr.mxu0 0.0
      %1427 = vmatpush2.msra.mxu0 0.0
      %1428 = vmatprep.subr.mxu0 0.0
      %1429 = vmatpush2.msra.mxu0 0.0
      %1430 = vmatprep.subr.mxu0 0.0
      %1431 = vmatpush2.msra.mxu0 0.0
      %1432 = vmatprep.subr.mxu0 0.0
      %1433 = vmatpush2.msra.mxu0 0.0
      %1434 = vmatprep.subr.mxu0 0.0
      %1435 = vmatpush2.msra.mxu0 0.0
      %1436 = vmatprep.subr.mxu0 0.0
      %1437 = vmatpush2.msra.mxu0 0.0
      %1438 = vmatprep.subr.mxu0 0.0
      %1439 = vmatpush2.msra.mxu0 0.0
      %1440 = vmatprep.subr.mxu0 0.0
      %1441 = vmatpush2.msra.mxu0 0.0
      %1442 = vmatprep.subr.mxu0 0.0
      %1443 = vmatpush2.msra.mxu0 0.0
      %1444 = vmatprep.subr.mxu0 0.0
      %1445 = vmatpush2.msra.mxu0 0.0
      %1446 = vmatprep.mubr.f32.mxu0 0.0
      %1447 = vmatmul.mubr.f32.gmra.mxu0 %v1379
      %v1448 = vpop.f32.mrf.mxu0
      %v1449 = vadd.f32 %v904, %v1448
      %v1450 = vpop.f32.mrf.mxu0
      %1451 = vdwg.mxu0
      %v1452 = vstv %s1381
      %v1453 = vmul.f32 %v1452, %v84
      %v1455 = vlaneseq
      %v1456 = vshrl.u32 %v1455, 7
      %v1457 = vsub.s32 0, %v1456
      %v1458 = vrot.slane %v1453, %v1457
      %v1460 = vadd.f32 %v1449, %v1458
      %v1461 = vtanh.pop %v1460
      %1462 = vmatprep.subr.mxu0 0.0
      %1463 = vmatpush1.msra.mxu0 %v101
      %1464 = vmatprep.subr.mxu0 0.0
      %1465 = vmatpush1.msra.mxu0 %v100
      %1466 = vmatprep.subr.mxu0 0.0
      %1467 = vmatpush1.msra.mxu0 %v99
      %1468 = vmatprep.subr.mxu0 0.0
      %1469 = vmatpush1.msra.mxu0 %v98
      %1470 = vmatprep.subr.mxu0 0.0
      %1471 = vmatpush1.msra.mxu0 %v97
      %1472 = vmatprep.subr.mxu0 0.0
      %1473 = vmatpush1.msra.mxu0 %v96
      %1474 = vmatprep.subr.mxu0 0.0
      %1475 = vmatpush1.msra.mxu0 %v95
      %1476 = vmatprep.subr.mxu0 0.0
      %1477 = vmatpush1.msra.mxu0 %v94
      %1478 = vmatprep.subr.mxu0 0.0
      %1479 = vmatpush1.msra.mxu0 %v93
      %1480 = vmatprep.subr.mxu0 0.0
      %1481 = vmatpush1.msra.mxu0 %v92
      %1482 = vmatprep.subr.mxu0 0.0
      %1483 = vmatpush1.msra.mxu0 %v91
      %1484 = vmatprep.subr.mxu0 0.0
      %1485 = vmatpush1.msra.mxu0 %v90
      %1486 = vmatprep.subr.mxu0 0.0
      %1487 = vmatpush1.msra.mxu0 %v89
      %1488 = vmatprep.subr.mxu0 0.0
      %1489 = vmatpush1.msra.mxu0 %v88
      %1490 = vmatprep.subr.mxu0 0.0
      %1491 = vmatpush1.msra.mxu0 %v87
      %1492 = vmatprep.subr.mxu0 0.0
      %1493 = vmatpush1.msra.mxu0 %v86
      %1494 = vmatprep.subr.mxu0 0.0
      %1495 = vmatpush2.msra.mxu0 0.0
      %1496 = vmatprep.subr.mxu0 0.0
      %1497 = vmatpush2.msra.mxu0 0.0
      %1498 = vmatprep.subr.mxu0 0.0
      %1499 = vmatpush2.msra.mxu0 0.0
      %1500 = vmatprep.subr.mxu0 0.0
      %1501 = vmatpush2.msra.mxu0 0.0
      %1502 = vmatprep.subr.mxu0 0.0
      %1503 = vmatpush2.msra.mxu0 0.0
      %1504 = vmatprep.subr.mxu0 0.0
      %1505 = vmatpush2.msra.mxu0 0.0
      %1506 = vmatprep.subr.mxu0 0.0
      %1507 = vmatpush2.msra.mxu0 0.0
      %1508 = vmatprep.subr.mxu0 0.0
      %1509 = vmatpush2.msra.mxu0 0.0
      %1510 = vmatprep.subr.mxu0 0.0
      %1511 = vmatpush2.msra.mxu0 0.0
      %1512 = vmatprep.subr.mxu0 0.0
      %1513 = vmatpush2.msra.mxu0 0.0
      %1514 = vmatprep.subr.mxu0 0.0
      %1515 = vmatpush2.msra.mxu0 0.0
      %1516 = vmatprep.subr.mxu0 0.0
      %1517 = vmatpush2.msra.mxu0 0.0
      %1518 = vmatprep.subr.mxu0 0.0
      %1519 = vmatpush2.msra.mxu0 0.0
      %1520 = vmatprep.subr.mxu0 0.0
      %1521 = vmatpush2.msra.mxu0 0.0
      %1522 = vmatprep.subr.mxu0 0.0
      %1523 = vmatpush2.msra.mxu0 0.0
      %1524 = vmatprep.subr.mxu0 0.0
      %1525 = vmatpush2.msra.mxu0 0.0
      %1526 = vmatprep.mubr.f32.mxu0 0.0
      %1527 = vmatmul.mubr.f32.gmra.mxu0 %v1461
      %v1528 = vpop.f32.mrf.mxu0
      %v1529 = vadd.f32 %v998, %v1528
      %v1530 = vpop.f32.mrf.mxu0
      %1531 = vdwg.mxu0
      %v1532 = vmul.f32 %v1070, %v1529
      %v1533 = vadd.f32 %v1379, %v1532
      %1534 = vst [vmem:[#allocation2] sm:$0xff] %v1533
    $region53: #{neural_ode_forward.1} parent=1 // pred_fallthru
      _
    %v1535 = vld [vmem:[#allocation2] sm:$0xff]
    %s1536 = scalar_lea.vmem [#allocation6], 8
    %1537 = vst [vmem:[%s1536] sm:$0xff] %v1535
    %s1538 = sadd.s32 %s103, 2
    %p1539 = scmp.gt.s32.totalorder %s1538, 0
    %p1540 = scmp.lt.s32.totalorder %s1538, 8
    %p1541 = pnand %p1539, %p1540
    %p1542 = pneg %p1541
    // Predicated region
    $region54: #{neural_ode_forward.1} parent=1 // pred_check
      _
    $region55: #{neural_ode_forward.1} parent=1 // pred_check_branch
      %1544 = sbr.rel (%p1541) target = $region57
    $region56: #{neural_ode_forward.1} parent=1 // pred_region
      %s1545 = sld [smem:[#allocation3 + %s820]]
      %s1546 = sld [smem:[#allocation3 + %s1538]]
      %s1547 = scalar_lea.vmem %s2, 16
      %v1548 = vld [vmem:[%s1547] sm:$0xff]
      %v1550 = vlaneseq
      %v1551 = vshrl.u32 %v1550, 7
      %v1552 = vsub.s32 0, %v1551
      %v1553 = vrot.slane %v85, %v1552
      %1555 = vmatprep.subr.mxu0 0.0
      %1556 = vmatpush1.msra.mxu0 %v83
      %1557 = vmatprep.subr.mxu0 0.0
      %1558 = vmatpush1.msra.mxu0 %v82
      %1559 = vmatprep.subr.mxu0 0.0
      %1560 = vmatpush1.msra.mxu0 %v81
      %1561 = vmatprep.subr.mxu0 0.0
      %1562 = vmatpush1.msra.mxu0 %v80
      %1563 = vmatprep.subr.mxu0 0.0
      %1564 = vmatpush1.msra.mxu0 %v79
      %1565 = vmatprep.subr.mxu0 0.0
      %1566 = vmatpush1.msra.mxu0 %v78
      %1567 = vmatprep.subr.mxu0 0.0
      %1568 = vmatpush1.msra.mxu0 %v77
      %1569 = vmatprep.subr.mxu0 0.0
      %1570 = vmatpush1.msra.mxu0 %v76
      %1571 = vmatprep.subr.mxu0 0.0
      %1572 = vmatpush1.msra.mxu0 %v75
      %1573 = vmatprep.subr.mxu0 0.0
      %1574 = vmatpush1.msra.mxu0 %v74
      %1575 = vmatprep.subr.mxu0 0.0
      %1576 = vmatpush1.msra.mxu0 %v73
      %1577 = vmatprep.subr.mxu0 0.0
      %1578 = vmatpush1.msra.mxu0 %v72
      %1579 = vmatprep.subr.mxu0 0.0
      %1580 = vmatpush1.msra.mxu0 %v71
      %1581 = vmatprep.subr.mxu0 0.0
      %1582 = vmatpush1.msra.mxu0 %v70
      %1583 = vmatprep.subr.mxu0 0.0
      %1584 = vmatpush1.msra.mxu0 %v69
      %1585 = vmatprep.subr.mxu0 0.0
      %1586 = vmatpush1.msra.mxu0 %v68
      %1587 = vmatprep.subr.mxu0 0.0
      %1588 = vmatpush2.msra.mxu0 0.0
      %1589 = vmatprep.subr.mxu0 0.0
      %1590 = vmatpush2.msra.mxu0 0.0
      %1591 = vmatprep.subr.mxu0 0.0
      %1592 = vmatpush2.msra.mxu0 0.0
      %1593 = vmatprep.subr.mxu0 0.0
      %1594 = vmatpush2.msra.mxu0 0.0
      %1595 = vmatprep.subr.mxu0 0.0
      %1596 = vmatpush2.msra.mxu0 0.0
      %1597 = vmatprep.subr.mxu0 0.0
      %1598 = vmatpush2.msra.mxu0 0.0
      %1599 = vmatprep.subr.mxu0 0.0
      %1600 = vmatpush2.msra.mxu0 0.0
      %1601 = vmatprep.subr.mxu0 0.0
      %1602 = vmatpush2.msra.mxu0 0.0
      %1603 = vmatprep.subr.mxu0 0.0
      %1604 = vmatpush2.msra.mxu0 0.0
      %1605 = vmatprep.subr.mxu0 0.0
      %1606 = vmatpush2.msra.mxu0 0.0
      %1607 = vmatprep.subr.mxu0 0.0
      %1608 = vmatpush2.msra.mxu0 0.0
      %1609 = vmatprep.subr.mxu0 0.0
      %1610 = vmatpush2.msra.mxu0 0.0
      %1611 = vmatprep.subr.mxu0 0.0
      %1612 = vmatpush2.msra.mxu0 0.0
      %1613 = vmatprep.subr.mxu0 0.0
      %1614 = vmatpush2.msra.mxu0 0.0
      %1615 = vmatprep.subr.mxu0 0.0
      %1616 = vmatpush2.msra.mxu0 0.0
      %1617 = vmatprep.subr.mxu0 0.0
      %1618 = vmatpush2.msra.mxu0 0.0
      %1619 = vmatprep.mubr.f32.mxu0 0.0
      %1620 = vmatmul.mubr.f32.gmra.mxu0 %v1548
      %v1621 = vpop.f32.mrf.mxu0
      %v1622 = vadd.f32 %v1553, %v1621
      %v1623 = vpop.f32.mrf.mxu0
      %1624 = vdwg.mxu0
      %s1625 = ssub.f32 %s1546, %s1545
      %v1626 = vrcp.pop 4.0
      %s1627 = vtos %v1626
      %s1628 = smul.f32 %s1625, %s1627
      %v1629 = vld [vmem:[#allocation2] sm:$0xff]
      %s1630 = smul.f32 %s1628, 0.0
      %s1631 = sadd.f32 %s1545, %s1630
      %1632 = vmatprep.subr.mxu0 0.0
      %1633 = vmatpush1.msra.mxu0 %v67
      %1634 = vmatprep.subr.mxu0 0.0
      %1635 = vmatpush1.msra.mxu0 %v66
      %1636 = vmatprep.subr.mxu0 0.0
      %1637 = vmatpush1.msra.mxu0 %v65
      %1638 = vmatprep.subr.mxu0 0.0
      %1639 = vmatpush1.msra.mxu0 %v64
      %1640 = vmatprep.subr.mxu0 0.0
      %1641 = vmatpush1.msra.mxu0 %v63
      %1642 = vmatprep.subr.mxu0 0.0
      %1643 = vmatpush1.msra.mxu0 %v62
      %1644 = vmatprep.subr.mxu0 0.0
      %1645 = vmatpush1.msra.mxu0 %v61
      %1646 = vmatprep.subr.mxu0 0.0
      %1647 = vmatpush1.msra.mxu0 %v60
      %1648 = vmatprep.subr.mxu0 0.0
      %1649 = vmatpush1.msra.mxu0 %v59
      %1650 = vmatprep.subr.mxu0 0.0
      %1651 = vmatpush1.msra.mxu0 %v58
      %1652 = vmatprep.subr.mxu0 0.0
      %1653 = vmatpush1.msra.mxu0 %v57
      %1654 = vmatprep.subr.mxu0 0.0
      %1655 = vmatpush1.msra.mxu0 %v56
      %1656 = vmatprep.subr.mxu0 0.0
      %1657 = vmatpush1.msra.mxu0 %v55
      %1658 = vmatprep.subr.mxu0 0.0
      %1659 = vmatpush1.msra.mxu0 %v54
      %1660 = vmatprep.subr.mxu0 0.0
      %1661 = vmatpush1.msra.mxu0 %v53
      %1662 = vmatprep.subr.mxu0 0.0
      %1663 = vmatpush1.msra.mxu0 %v52
      %1664 = vmatprep.subr.mxu0 0.0
      %1665 = vmatpush2.msra.mxu0 0.0
      %1666 = vmatprep.subr.mxu0 0.0
      %1667 = vmatpush2.msra.mxu0 0.0
      %1668 = vmatprep.subr.mxu0 0.0
      %1669 = vmatpush2.msra.mxu0 0.0
      %1670 = vmatprep.subr.mxu0 0.0
      %1671 = vmatpush2.msra.mxu0 0.0
      %1672 = vmatprep.subr.mxu0 0.0
      %1673 = vmatpush2.msra.mxu0 0.0
      %1674 = vmatprep.subr.mxu0 0.0
      %1675 = vmatpush2.msra.mxu0 0.0
      %1676 = vmatprep.subr.mxu0 0.0
      %1677 = vmatpush2.msra.mxu0 0.0
      %1678 = vmatprep.subr.mxu0 0.0
      %1679 = vmatpush2.msra.mxu0 0.0
      %1680 = vmatprep.subr.mxu0 0.0
      %1681 = vmatpush2.msra.mxu0 0.0
      %1682 = vmatprep.subr.mxu0 0.0
      %1683 = vmatpush2.msra.mxu0 0.0
      %1684 = vmatprep.subr.mxu0 0.0
      %1685 = vmatpush2.msra.mxu0 0.0
      %1686 = vmatprep.subr.mxu0 0.0
      %1687 = vmatpush2.msra.mxu0 0.0
      %1688 = vmatprep.subr.mxu0 0.0
      %1689 = vmatpush2.msra.mxu0 0.0
      %1690 = vmatprep.subr.mxu0 0.0
      %1691 = vmatpush2.msra.mxu0 0.0
      %1692 = vmatprep.subr.mxu0 0.0
      %1693 = vmatpush2.msra.mxu0 0.0
      %1694 = vmatprep.subr.mxu0 0.0
      %1695 = vmatpush2.msra.mxu0 0.0
      %1696 = vmatprep.mubr.f32.mxu0 0.0
      %1697 = vmatmul.mubr.f32.gmra.mxu0 %v1629
      %v1698 = vpop.f32.mrf.mxu0
      %v1699 = vadd.f32 %v1622, %v1698
      %v1700 = vpop.f32.mrf.mxu0
      %1701 = vdwg.mxu0
      %v1702 = vstv %s1631
      %v1703 = vmul.f32 %v1702, %v84
      %v1705 = vlaneseq
      %v1706 = vshrl.u32 %v1705, 7
      %v1707 = vsub.s32 0, %v1706
      %v1708 = vrot.slane %v1703, %v1707
      %v1710 = vadd.f32 %v1699, %v1708
      %v1711 = vtanh.pop %v1710
      %v1713 = vlaneseq
      %v1714 = vshrl.u32 %v1713, 7
      %v1715 = vsub.s32 0, %v1714
      %v1716 = vrot.slane %v102, %v1715
      %1718 = vmatprep.subr.mxu0 0.0
      %1719 = vmatpush1.msra.mxu0 %v101
      %1720 = vmatprep.subr.mxu0 0.0
      %1721 = vmatpush1.msra.mxu0 %v100
      %1722 = vmatprep.subr.mxu0 0.0
      %1723 = vmatpush1.msra.mxu0 %v99
      %1724 = vmatprep.subr.mxu0 0.0
      %1725 = vmatpush1.msra.mxu0 %v98
      %1726 = vmatprep.subr.mxu0 0.0
      %1727 = vmatpush1.msra.mxu0 %v97
      %1728 = vmatprep.subr.mxu0 0.0
      %1729 = vmatpush1.msra.mxu0 %v96
      %1730 = vmatprep.subr.mxu0 0.0
      %1731 = vmatpush1.msra.mxu0 %v95
      %1732 = vmatprep.subr.mxu0 0.0
      %1733 = vmatpush1.msra.mxu0 %v94
      %1734 = vmatprep.subr.mxu0 0.0
      %1735 = vmatpush1.msra.mxu0 %v93
      %1736 = vmatprep.subr.mxu0 0.0
      %1737 = vmatpush1.msra.mxu0 %v92
      %1738 = vmatprep.subr.mxu0 0.0
      %1739 = vmatpush1.msra.mxu0 %v91
      %1740 = vmatprep.subr.mxu0 0.0
      %1741 = vmatpush1.msra.mxu0 %v90
      %1742 = vmatprep.subr.mxu0 0.0
      %1743 = vmatpush1.msra.mxu0 %v89
      %1744 = vmatprep.subr.mxu0 0.0
      %1745 = vmatpush1.msra.mxu0 %v88
      %1746 = vmatprep.subr.mxu0 0.0
      %1747 = vmatpush1.msra.mxu0 %v87
      %1748 = vmatprep.subr.mxu0 0.0
      %1749 = vmatpush1.msra.mxu0 %v86
      %1750 = vmatprep.subr.mxu0 0.0
      %1751 = vmatpush2.msra.mxu0 0.0
      %1752 = vmatprep.subr.mxu0 0.0
      %1753 = vmatpush2.msra.mxu0 0.0
      %1754 = vmatprep.subr.mxu0 0.0
      %1755 = vmatpush2.msra.mxu0 0.0
      %1756 = vmatprep.subr.mxu0 0.0
      %1757 = vmatpush2.msra.mxu0 0.0
      %1758 = vmatprep.subr.mxu0 0.0
      %1759 = vmatpush2.msra.mxu0 0.0
      %1760 = vmatprep.subr.mxu0 0.0
      %1761 = vmatpush2.msra.mxu0 0.0
      %1762 = vmatprep.subr.mxu0 0.0
      %1763 = vmatpush2.msra.mxu0 0.0
      %1764 = vmatprep.subr.mxu0 0.0
      %1765 = vmatpush2.msra.mxu0 0.0
      %1766 = vmatprep.subr.mxu0 0.0
      %1767 = vmatpush2.msra.mxu0 0.0
      %1768 = vmatprep.subr.mxu0 0.0
      %1769 = vmatpush2.msra.mxu0 0.0
      %1770 = vmatprep.subr.mxu0 0.0
      %1771 = vmatpush2.msra.mxu0 0.0
      %1772 = vmatprep.subr.mxu0 0.0
      %1773 = vmatpush2.msra.mxu0 0.0
      %1774 = vmatprep.subr.mxu0 0.0
      %1775 = vmatpush2.msra.mxu0 0.0
      %1776 = vmatprep.subr.mxu0 0.0
      %1777 = vmatpush2.msra.mxu0 0.0
      %1778 = vmatprep.subr.mxu0 0.0
      %1779 = vmatpush2.msra.mxu0 0.0
      %1780 = vmatprep.subr.mxu0 0.0
      %1781 = vmatpush2.msra.mxu0 0.0
      %1782 = vmatprep.mubr.f32.mxu0 0.0
      %1783 = vmatmul.mubr.f32.gmra.mxu0 %v1711
      %v1784 = vpop.f32.mrf.mxu0
      %v1785 = vadd.f32 %v1716, %v1784
      %v1786 = vpop.f32.mrf.mxu0
      %1787 = vdwg.mxu0
      %v1788 = vstv %s1628
      %v1789 = vmul.f32 %v1788, %v1785
      %v1790 = vadd.f32 %v1629, %v1789
      %s1791 = sadd.f32 %s1545, %s1628
      %1792 = vmatprep.subr.mxu0 0.0
      %1793 = vmatpush1.msra.mxu0 %v67
      %1794 = vmatprep.subr.mxu0 0.0
      %1795 = vmatpush1.msra.mxu0 %v66
      %1796 = vmatprep.subr.mxu0 0.0
      %1797 = vmatpush1.msra.mxu0 %v65
      %1798 = vmatprep.subr.mxu0 0.0
      %1799 = vmatpush1.msra.mxu0 %v64
      %1800 = vmatprep.subr.mxu0 0.0
      %1801 = vmatpush1.msra.mxu0 %v63
      %1802 = vmatprep.subr.mxu0 0.0
      %1803 = vmatpush1.msra.mxu0 %v62
      %1804 = vmatprep.subr.mxu0 0.0
      %1805 = vmatpush1.msra.mxu0 %v61
      %1806 = vmatprep.subr.mxu0 0.0
      %1807 = vmatpush1.msra.mxu0 %v60
      %1808 = vmatprep.subr.mxu0 0.0
      %1809 = vmatpush1.msra.mxu0 %v59
      %1810 = vmatprep.subr.mxu0 0.0
      %1811 = vmatpush1.msra.mxu0 %v58
      %1812 = vmatprep.subr.mxu0 0.0
      %1813 = vmatpush1.msra.mxu0 %v57
      %1814 = vmatprep.subr.mxu0 0.0
      %1815 = vmatpush1.msra.mxu0 %v56
      %1816 = vmatprep.subr.mxu0 0.0
      %1817 = vmatpush1.msra.mxu0 %v55
      %1818 = vmatprep.subr.mxu0 0.0
      %1819 = vmatpush1.msra.mxu0 %v54
      %1820 = vmatprep.subr.mxu0 0.0
      %1821 = vmatpush1.msra.mxu0 %v53
      %1822 = vmatprep.subr.mxu0 0.0
      %1823 = vmatpush1.msra.mxu0 %v52
      %1824 = vmatprep.subr.mxu0 0.0
      %1825 = vmatpush2.msra.mxu0 0.0
      %1826 = vmatprep.subr.mxu0 0.0
      %1827 = vmatpush2.msra.mxu0 0.0
      %1828 = vmatprep.subr.mxu0 0.0
      %1829 = vmatpush2.msra.mxu0 0.0
      %1830 = vmatprep.subr.mxu0 0.0
      %1831 = vmatpush2.msra.mxu0 0.0
      %1832 = vmatprep.subr.mxu0 0.0
      %1833 = vmatpush2.msra.mxu0 0.0
      %1834 = vmatprep.subr.mxu0 0.0
      %1835 = vmatpush2.msra.mxu0 0.0
      %1836 = vmatprep.subr.mxu0 0.0
      %1837 = vmatpush2.msra.mxu0 0.0
      %1838 = vmatprep.subr.mxu0 0.0
      %1839 = vmatpush2.msra.mxu0 0.0
      %1840 = vmatprep.subr.mxu0 0.0
      %1841 = vmatpush2.msra.mxu0 0.0
      %1842 = vmatprep.subr.mxu0 0.0
      %1843 = vmatpush2.msra.mxu0 0.0
      %1844 = vmatprep.subr.mxu0 0.0
      %1845 = vmatpush2.msra.mxu0 0.0
      %1846 = vmatprep.subr.mxu0 0.0
      %1847 = vmatpush2.msra.mxu0 0.0
      %1848 = vmatprep.subr.mxu0 0.0
      %1849 = vmatpush2.msra.mxu0 0.0
      %1850 = vmatprep.subr.mxu0 0.0
      %1851 = vmatpush2.msra.mxu0 0.0
      %1852 = vmatprep.subr.mxu0 0.0
      %1853 = vmatpush2.msra.mxu0 0.0
      %1854 = vmatprep.subr.mxu0 0.0
      %1855 = vmatpush2.msra.mxu0 0.0
      %1856 = vmatprep.mubr.f32.mxu0 0.0
      %1857 = vmatmul.mubr.f32.gmra.mxu0 %v1790
      %v1858 = vpop.f32.mrf.mxu0
      %v1859 = vadd.f32 %v1622, %v1858
      %v1860 = vpop.f32.mrf.mxu0
      %1861 = vdwg.mxu0
      %v1862 = vstv %s1791
      %v1863 = vmul.f32 %v1862, %v84
      %v1865 = vlaneseq
      %v1866 = vshrl.u32 %v1865, 7
      %v1867 = vsub.s32 0, %v1866
      %v1868 = vrot.slane %v1863, %v1867
      %v1870 = vadd.f32 %v1859, %v1868
      %v1871 = vtanh.pop %v1870
      %1872 = vmatprep.subr.mxu0 0.0
      %1873 = vmatpush1.msra.mxu0 %v101
      %1874 = vmatprep.subr.mxu0 0.0
      %1875 = vmatpush1.msra.mxu0 %v100
      %1876 = vmatprep.subr.mxu0 0.0
      %1877 = vmatpush1.msra.mxu0 %v99
      %1878 = vmatprep.subr.mxu0 0.0
      %1879 = vmatpush1.msra.mxu0 %v98
      %1880 = vmatprep.subr.mxu0 0.0
      %1881 = vmatpush1.msra.mxu0 %v97
      %1882 = vmatprep.subr.mxu0 0.0
      %1883 = vmatpush1.msra.mxu0 %v96
      %1884 = vmatprep.subr.mxu0 0.0
      %1885 = vmatpush1.msra.mxu0 %v95
      %1886 = vmatprep.subr.mxu0 0.0
      %1887 = vmatpush1.msra.mxu0 %v94
      %1888 = vmatprep.subr.mxu0 0.0
      %1889 = vmatpush1.msra.mxu0 %v93
      %1890 = vmatprep.subr.mxu0 0.0
      %1891 = vmatpush1.msra.mxu0 %v92
      %1892 = vmatprep.subr.mxu0 0.0
      %1893 = vmatpush1.msra.mxu0 %v91
      %1894 = vmatprep.subr.mxu0 0.0
      %1895 = vmatpush1.msra.mxu0 %v90
      %1896 = vmatprep.subr.mxu0 0.0
      %1897 = vmatpush1.msra.mxu0 %v89
      %1898 = vmatprep.subr.mxu0 0.0
      %1899 = vmatpush1.msra.mxu0 %v88
      %1900 = vmatprep.subr.mxu0 0.0
      %1901 = vmatpush1.msra.mxu0 %v87
      %1902 = vmatprep.subr.mxu0 0.0
      %1903 = vmatpush1.msra.mxu0 %v86
      %1904 = vmatprep.subr.mxu0 0.0
      %1905 = vmatpush2.msra.mxu0 0.0
      %1906 = vmatprep.subr.mxu0 0.0
      %1907 = vmatpush2.msra.mxu0 0.0
      %1908 = vmatprep.subr.mxu0 0.0
      %1909 = vmatpush2.msra.mxu0 0.0
      %1910 = vmatprep.subr.mxu0 0.0
      %1911 = vmatpush2.msra.mxu0 0.0
      %1912 = vmatprep.subr.mxu0 0.0
      %1913 = vmatpush2.msra.mxu0 0.0
      %1914 = vmatprep.subr.mxu0 0.0
      %1915 = vmatpush2.msra.mxu0 0.0
      %1916 = vmatprep.subr.mxu0 0.0
      %1917 = vmatpush2.msra.mxu0 0.0
      %1918 = vmatprep.subr.mxu0 0.0
      %1919 = vmatpush2.msra.mxu0 0.0
      %1920 = vmatprep.subr.mxu0 0.0
      %1921 = vmatpush2.msra.mxu0 0.0
      %1922 = vmatprep.subr.mxu0 0.0
      %1923 = vmatpush2.msra.mxu0 0.0
      %1924 = vmatprep.subr.mxu0 0.0
      %1925 = vmatpush2.msra.mxu0 0.0
      %1926 = vmatprep.subr.mxu0 0.0
      %1927 = vmatpush2.msra.mxu0 0.0
      %1928 = vmatprep.subr.mxu0 0.0
      %1929 = vmatpush2.msra.mxu0 0.0
      %1930 = vmatprep.subr.mxu0 0.0
      %1931 = vmatpush2.msra.mxu0 0.0
      %1932 = vmatprep.subr.mxu0 0.0
      %1933 = vmatpush2.msra.mxu0 0.0
      %1934 = vmatprep.subr.mxu0 0.0
      %1935 = vmatpush2.msra.mxu0 0.0
      %1936 = vmatprep.mubr.f32.mxu0 0.0
      %1937 = vmatmul.mubr.f32.gmra.mxu0 %v1871
      %v1938 = vpop.f32.mrf.mxu0
      %v1939 = vadd.f32 %v1716, %v1938
      %v1940 = vpop.f32.mrf.mxu0
      %1941 = vdwg.mxu0
      %v1942 = vmul.f32 %v1788, %v1939
      %v1943 = vadd.f32 %v1790, %v1942
      %s1944 = smul.f32 %s1628, 2.0
      %s1945 = sadd.f32 %s1545, %s1944
      %1946 = vmatprep.subr.mxu0 0.0
      %1947 = vmatpush1.msra.mxu0 %v67
      %1948 = vmatprep.subr.mxu0 0.0
      %1949 = vmatpush1.msra.mxu0 %v66
      %1950 = vmatprep.subr.mxu0 0.0
      %1951 = vmatpush1.msra.mxu0 %v65
      %1952 = vmatprep.subr.mxu0 0.0
      %1953 = vmatpush1.msra.mxu0 %v64
      %1954 = vmatprep.subr.mxu0 0.0
      %1955 = vmatpush1.msra.mxu0 %v63
      %1956 = vmatprep.subr.mxu0 0.0
      %1957 = vmatpush1.msra.mxu0 %v62
      %1958 = vmatprep.subr.mxu0 0.0
      %1959 = vmatpush1.msra.mxu0 %v61
      %1960 = vmatprep.subr.mxu0 0.0
      %1961 = vmatpush1.msra.mxu0 %v60
      %1962 = vmatprep.subr.mxu0 0.0
      %1963 = vmatpush1.msra.mxu0 %v59
      %1964 = vmatprep.subr.mxu0 0.0
      %1965 = vmatpush1.msra.mxu0 %v58
      %1966 = vmatprep.subr.mxu0 0.0
      %1967 = vmatpush1.msra.mxu0 %v57
      %1968 = vmatprep.subr.mxu0 0.0
      %1969 = vmatpush1.msra.mxu0 %v56
      %1970 = vmatprep.subr.mxu0 0.0
      %1971 = vmatpush1.msra.mxu0 %v55
      %1972 = vmatprep.subr.mxu0 0.0
      %1973 = vmatpush1.msra.mxu0 %v54
      %1974 = vmatprep.subr.mxu0 0.0
      %1975 = vmatpush1.msra.mxu0 %v53
      %1976 = vmatprep.subr.mxu0 0.0
      %1977 = vmatpush1.msra.mxu0 %v52
      %1978 = vmatprep.subr.mxu0 0.0
      %1979 = vmatpush2.msra.mxu0 0.0
      %1980 = vmatprep.subr.mxu0 0.0
      %1981 = vmatpush2.msra.mxu0 0.0
      %1982 = vmatprep.subr.mxu0 0.0
      %1983 = vmatpush2.msra.mxu0 0.0
      %1984 = vmatprep.subr.mxu0 0.0
      %1985 = vmatpush2.msra.mxu0 0.0
      %1986 = vmatprep.subr.mxu0 0.0
      %1987 = vmatpush2.msra.mxu0 0.0
      %1988 = vmatprep.subr.mxu0 0.0
      %1989 = vmatpush2.msra.mxu0 0.0
      %1990 = vmatprep.subr.mxu0 0.0
      %1991 = vmatpush2.msra.mxu0 0.0
      %1992 = vmatprep.subr.mxu0 0.0
      %1993 = vmatpush2.msra.mxu0 0.0
      %1994 = vmatprep.subr.mxu0 0.0
      %1995 = vmatpush2.msra.mxu0 0.0
      %1996 = vmatprep.subr.mxu0 0.0
      %1997 = vmatpush2.msra.mxu0 0.0
      %1998 = vmatprep.subr.mxu0 0.0
      %1999 = vmatpush2.msra.mxu0 0.0
      %2000 = vmatprep.subr.mxu0 0.0
      %2001 = vmatpush2.msra.mxu0 0.0
      %2002 = vmatprep.subr.mxu0 0.0
      %2003 = vmatpush2.msra.mxu0 0.0
      %2004 = vmatprep.subr.mxu0 0.0
      %2005 = vmatpush2.msra.mxu0 0.0
      %2006 = vmatprep.subr.mxu0 0.0
      %2007 = vmatpush2.msra.mxu0 0.0
      %2008 = vmatprep.subr.mxu0 0.0
      %2009 = vmatpush2.msra.mxu0 0.0
      %2010 = vmatprep.mubr.f32.mxu0 0.0
      %2011 = vmatmul.mubr.f32.gmra.mxu0 %v1943
      %v2012 = vpop.f32.mrf.mxu0
      %v2013 = vadd.f32 %v1622, %v2012
      %v2014 = vpop.f32.mrf.mxu0
      %2015 = vdwg.mxu0
      %v2016 = vstv %s1945
      %v2017 = vmul.f32 %v2016, %v84
      %v2019 = vlaneseq
      %v2020 = vshrl.u32 %v2019, 7
      %v2021 = vsub.s32 0, %v2020
      %v2022 = vrot.slane %v2017, %v2021
      %v2024 = vadd.f32 %v2013, %v2022
      %v2025 = vtanh.pop %v2024
      %2026 = vmatprep.subr.mxu0 0.0
      %2027 = vmatpush1.msra.mxu0 %v101
      %2028 = vmatprep.subr.mxu0 0.0
      %2029 = vmatpush1.msra.mxu0 %v100
      %2030 = vmatprep.subr.mxu0 0.0
      %2031 = vmatpush1.msra.mxu0 %v99
      %2032 = vmatprep.subr.mxu0 0.0
      %2033 = vmatpush1.msra.mxu0 %v98
      %2034 = vmatprep.subr.mxu0 0.0
      %2035 = vmatpush1.msra.mxu0 %v97
      %2036 = vmatprep.subr.mxu0 0.0
      %2037 = vmatpush1.msra.mxu0 %v96
      %2038 = vmatprep.subr.mxu0 0.0
      %2039 = vmatpush1.msra.mxu0 %v95
      %2040 = vmatprep.subr.mxu0 0.0
      %2041 = vmatpush1.msra.mxu0 %v94
      %2042 = vmatprep.subr.mxu0 0.0
      %2043 = vmatpush1.msra.mxu0 %v93
      %2044 = vmatprep.subr.mxu0 0.0
      %2045 = vmatpush1.msra.mxu0 %v92
      %2046 = vmatprep.subr.mxu0 0.0
      %2047 = vmatpush1.msra.mxu0 %v91
      %2048 = vmatprep.subr.mxu0 0.0
      %2049 = vmatpush1.msra.mxu0 %v90
      %2050 = vmatprep.subr.mxu0 0.0
      %2051 = vmatpush1.msra.mxu0 %v89
      %2052 = vmatprep.subr.mxu0 0.0
      %2053 = vmatpush1.msra.mxu0 %v88
      %2054 = vmatprep.subr.mxu0 0.0
      %2055 = vmatpush1.msra.mxu0 %v87
      %2056 = vmatprep.subr.mxu0 0.0
      %2057 = vmatpush1.msra.mxu0 %v86
      %2058 = vmatprep.subr.mxu0 0.0
      %2059 = vmatpush2.msra.mxu0 0.0
      %2060 = vmatprep.subr.mxu0 0.0
      %2061 = vmatpush2.msra.mxu0 0.0
      %2062 = vmatprep.subr.mxu0 0.0
      %2063 = vmatpush2.msra.mxu0 0.0
      %2064 = vmatprep.subr.mxu0 0.0
      %2065 = vmatpush2.msra.mxu0 0.0
      %2066 = vmatprep.subr.mxu0 0.0
      %2067 = vmatpush2.msra.mxu0 0.0
      %2068 = vmatprep.subr.mxu0 0.0
      %2069 = vmatpush2.msra.mxu0 0.0
      %2070 = vmatprep.subr.mxu0 0.0
      %2071 = vmatpush2.msra.mxu0 0.0
      %2072 = vmatprep.subr.mxu0 0.0
      %2073 = vmatpush2.msra.mxu0 0.0
      %2074 = vmatprep.subr.mxu0 0.0
      %2075 = vmatpush2.msra.mxu0 0.0
      %2076 = vmatprep.subr.mxu0 0.0
      %2077 = vmatpush2.msra.mxu0 0.0
      %2078 = vmatprep.subr.mxu0 0.0
      %2079 = vmatpush2.msra.mxu0 0.0
      %2080 = vmatprep.subr.mxu0 0.0
      %2081 = vmatpush2.msra.mxu0 0.0
      %2082 = vmatprep.subr.mxu0 0.0
      %2083 = vmatpush2.msra.mxu0 0.0
      %2084 = vmatprep.subr.mxu0 0.0
      %2085 = vmatpush2.msra.mxu0 0.0
      %2086 = vmatprep.subr.mxu0 0.0
      %2087 = vmatpush2.msra.mxu0 0.0
      %2088 = vmatprep.subr.mxu0 0.0
      %2089 = vmatpush2.msra.mxu0 0.0
      %2090 = vmatprep.mubr.f32.mxu0 0.0
      %2091 = vmatmul.mubr.f32.gmra.mxu0 %v2025
      %v2092 = vpop.f32.mrf.mxu0
      %v2093 = vadd.f32 %v1716, %v2092
      %v2094 = vpop.f32.mrf.mxu0
      %2095 = vdwg.mxu0
      %v2096 = vmul.f32 %v1788, %v2093
      %v2097 = vadd.f32 %v1943, %v2096
      %s2098 = smul.f32 %s1628, 3.0
      %s2099 = sadd.f32 %s1545, %s2098
      %2100 = vmatprep.subr.mxu0 0.0
      %2101 = vmatpush1.msra.mxu0 %v67
      %2102 = vmatprep.subr.mxu0 0.0
      %2103 = vmatpush1.msra.mxu0 %v66
      %2104 = vmatprep.subr.mxu0 0.0
      %2105 = vmatpush1.msra.mxu0 %v65
      %2106 = vmatprep.subr.mxu0 0.0
      %2107 = vmatpush1.msra.mxu0 %v64
      %2108 = vmatprep.subr.mxu0 0.0
      %2109 = vmatpush1.msra.mxu0 %v63
      %2110 = vmatprep.subr.mxu0 0.0
      %2111 = vmatpush1.msra.mxu0 %v62
      %2112 = vmatprep.subr.mxu0 0.0
      %2113 = vmatpush1.msra.mxu0 %v61
      %2114 = vmatprep.subr.mxu0 0.0
      %2115 = vmatpush1.msra.mxu0 %v60
      %2116 = vmatprep.subr.mxu0 0.0
      %2117 = vmatpush1.msra.mxu0 %v59
      %2118 = vmatprep.subr.mxu0 0.0
      %2119 = vmatpush1.msra.mxu0 %v58
      %2120 = vmatprep.subr.mxu0 0.0
      %2121 = vmatpush1.msra.mxu0 %v57
      %2122 = vmatprep.subr.mxu0 0.0
      %2123 = vmatpush1.msra.mxu0 %v56
      %2124 = vmatprep.subr.mxu0 0.0
      %2125 = vmatpush1.msra.mxu0 %v55
      %2126 = vmatprep.subr.mxu0 0.0
      %2127 = vmatpush1.msra.mxu0 %v54
      %2128 = vmatprep.subr.mxu0 0.0
      %2129 = vmatpush1.msra.mxu0 %v53
      %2130 = vmatprep.subr.mxu0 0.0
      %2131 = vmatpush1.msra.mxu0 %v52
      %2132 = vmatprep.subr.mxu0 0.0
      %2133 = vmatpush2.msra.mxu0 0.0
      %2134 = vmatprep.subr.mxu0 0.0
      %2135 = vmatpush2.msra.mxu0 0.0
      %2136 = vmatprep.subr.mxu0 0.0
      %2137 = vmatpush2.msra.mxu0 0.0
      %2138 = vmatprep.subr.mxu0 0.0
      %2139 = vmatpush2.msra.mxu0 0.0
      %2140 = vmatprep.subr.mxu0 0.0
      %2141 = vmatpush2.msra.mxu0 0.0
      %2142 = vmatprep.subr.mxu0 0.0
      %2143 = vmatpush2.msra.mxu0 0.0
      %2144 = vmatprep.subr.mxu0 0.0
      %2145 = vmatpush2.msra.mxu0 0.0
      %2146 = vmatprep.subr.mxu0 0.0
      %2147 = vmatpush2.msra.mxu0 0.0
      %2148 = vmatprep.subr.mxu0 0.0
      %2149 = vmatpush2.msra.mxu0 0.0
      %2150 = vmatprep.subr.mxu0 0.0
      %2151 = vmatpush2.msra.mxu0 0.0
      %2152 = vmatprep.subr.mxu0 0.0
      %2153 = vmatpush2.msra.mxu0 0.0
      %2154 = vmatprep.subr.mxu0 0.0
      %2155 = vmatpush2.msra.mxu0 0.0
      %2156 = vmatprep.subr.mxu0 0.0
      %2157 = vmatpush2.msra.mxu0 0.0
      %2158 = vmatprep.subr.mxu0 0.0
      %2159 = vmatpush2.msra.mxu0 0.0
      %2160 = vmatprep.subr.mxu0 0.0
      %2161 = vmatpush2.msra.mxu0 0.0
      %2162 = vmatprep.subr.mxu0 0.0
      %2163 = vmatpush2.msra.mxu0 0.0
      %2164 = vmatprep.mubr.f32.mxu0 0.0
      %2165 = vmatmul.mubr.f32.gmra.mxu0 %v2097
      %v2166 = vpop.f32.mrf.mxu0
      %v2167 = vadd.f32 %v1622, %v2166
      %v2168 = vpop.f32.mrf.mxu0
      %2169 = vdwg.mxu0
      %v2170 = vstv %s2099
      %v2171 = vmul.f32 %v2170, %v84
      %v2173 = vlaneseq
      %v2174 = vshrl.u32 %v2173, 7
      %v2175 = vsub.s32 0, %v2174
      %v2176 = vrot.slane %v2171, %v2175
      %v2178 = vadd.f32 %v2167, %v2176
      %v2179 = vtanh.pop %v2178
      %2180 = vmatprep.subr.mxu0 0.0
      %2181 = vmatpush1.msra.mxu0 %v101
      %2182 = vmatprep.subr.mxu0 0.0
      %2183 = vmatpush1.msra.mxu0 %v100
      %2184 = vmatprep.subr.mxu0 0.0
      %2185 = vmatpush1.msra.mxu0 %v99
      %2186 = vmatprep.subr.mxu0 0.0
      %2187 = vmatpush1.msra.mxu0 %v98
      %2188 = vmatprep.subr.mxu0 0.0
      %2189 = vmatpush1.msra.mxu0 %v97
      %2190 = vmatprep.subr.mxu0 0.0
      %2191 = vmatpush1.msra.mxu0 %v96
      %2192 = vmatprep.subr.mxu0 0.0
      %2193 = vmatpush1.msra.mxu0 %v95
      %2194 = vmatprep.subr.mxu0 0.0
      %2195 = vmatpush1.msra.mxu0 %v94
      %2196 = vmatprep.subr.mxu0 0.0
      %2197 = vmatpush1.msra.mxu0 %v93
      %2198 = vmatprep.subr.mxu0 0.0
      %2199 = vmatpush1.msra.mxu0 %v92
      %2200 = vmatprep.subr.mxu0 0.0
      %2201 = vmatpush1.msra.mxu0 %v91
      %2202 = vmatprep.subr.mxu0 0.0
      %2203 = vmatpush1.msra.mxu0 %v90
      %2204 = vmatprep.subr.mxu0 0.0
      %2205 = vmatpush1.msra.mxu0 %v89
      %2206 = vmatprep.subr.mxu0 0.0
      %2207 = vmatpush1.msra.mxu0 %v88
      %2208 = vmatprep.subr.mxu0 0.0
      %2209 = vmatpush1.msra.mxu0 %v87
      %2210 = vmatprep.subr.mxu0 0.0
      %2211 = vmatpush1.msra.mxu0 %v86
      %2212 = vmatprep.subr.mxu0 0.0
      %2213 = vmatpush2.msra.mxu0 0.0
      %2214 = vmatprep.subr.mxu0 0.0
      %2215 = vmatpush2.msra.mxu0 0.0
      %2216 = vmatprep.subr.mxu0 0.0
      %2217 = vmatpush2.msra.mxu0 0.0
      %2218 = vmatprep.subr.mxu0 0.0
      %2219 = vmatpush2.msra.mxu0 0.0
      %2220 = vmatprep.subr.mxu0 0.0
      %2221 = vmatpush2.msra.mxu0 0.0
      %2222 = vmatprep.subr.mxu0 0.0
      %2223 = vmatpush2.msra.mxu0 0.0
      %2224 = vmatprep.subr.mxu0 0.0
      %2225 = vmatpush2.msra.mxu0 0.0
      %2226 = vmatprep.subr.mxu0 0.0
      %2227 = vmatpush2.msra.mxu0 0.0
      %2228 = vmatprep.subr.mxu0 0.0
      %2229 = vmatpush2.msra.mxu0 0.0
      %2230 = vmatprep.subr.mxu0 0.0
      %2231 = vmatpush2.msra.mxu0 0.0
      %2232 = vmatprep.subr.mxu0 0.0
      %2233 = vmatpush2.msra.mxu0 0.0
      %2234 = vmatprep.subr.mxu0 0.0
      %2235 = vmatpush2.msra.mxu0 0.0
      %2236 = vmatprep.subr.mxu0 0.0
      %2237 = vmatpush2.msra.mxu0 0.0
      %2238 = vmatprep.subr.mxu0 0.0
      %2239 = vmatpush2.msra.mxu0 0.0
      %2240 = vmatprep.subr.mxu0 0.0
      %2241 = vmatpush2.msra.mxu0 0.0
      %2242 = vmatprep.subr.mxu0 0.0
      %2243 = vmatpush2.msra.mxu0 0.0
      %2244 = vmatprep.mubr.f32.mxu0 0.0
      %2245 = vmatmul.mubr.f32.gmra.mxu0 %v2179
      %v2246 = vpop.f32.mrf.mxu0
      %v2247 = vadd.f32 %v1716, %v2246
      %v2248 = vpop.f32.mrf.mxu0
      %2249 = vdwg.mxu0
      %v2250 = vmul.f32 %v1788, %v2247
      %v2251 = vadd.f32 %v2097, %v2250
      %2252 = vst [vmem:[#allocation2] sm:$0xff] %v2251
    $region57: #{neural_ode_forward.1} parent=1 // pred_fallthru
      _
    %v2253 = vld [vmem:[#allocation2] sm:$0xff]
    %s2254 = scalar_lea.vmem [#allocation6], 16
    %2255 = vst [vmem:[%s2254] sm:$0xff] %v2253
    %s2256 = sadd.s32 %s103, 3
    %p2257 = scmp.gt.s32.totalorder %s2256, 0
    %p2258 = scmp.lt.s32.totalorder %s2256, 8
    %p2259 = pnand %p2257, %p2258
    %p2260 = pneg %p2259
    // Predicated region
    $region58: #{neural_ode_forward.1} parent=1 // pred_check
      _
    $region59: #{neural_ode_forward.1} parent=1 // pred_check_branch
      %2262 = sbr.rel (%p2259) target = $region61
    $region60: #{neural_ode_forward.1} parent=1 // pred_region
      %s2263 = sld [smem:[#allocation3 + %s1538]]
      %s2264 = sld [smem:[#allocation3 + %s2256]]
      %s2265 = scalar_lea.vmem %s2, 24
      %v2266 = vld [vmem:[%s2265] sm:$0xff]
      %v2268 = vlaneseq
      %v2269 = vshrl.u32 %v2268, 7
      %v2270 = vsub.s32 0, %v2269
      %v2271 = vrot.slane %v85, %v2270
      %2273 = vmatprep.subr.mxu0 0.0
      %2274 = vmatpush1.msra.mxu0 %v83
      %2275 = vmatprep.subr.mxu0 0.0
      %2276 = vmatpush1.msra.mxu0 %v82
      %2277 = vmatprep.subr.mxu0 0.0
      %2278 = vmatpush1.msra.mxu0 %v81
      %2279 = vmatprep.subr.mxu0 0.0
      %2280 = vmatpush1.msra.mxu0 %v80
      %2281 = vmatprep.subr.mxu0 0.0
      %2282 = vmatpush1.msra.mxu0 %v79
      %2283 = vmatprep.subr.mxu0 0.0
      %2284 = vmatpush1.msra.mxu0 %v78
      %2285 = vmatprep.subr.mxu0 0.0
      %2286 = vmatpush1.msra.mxu0 %v77
      %2287 = vmatprep.subr.mxu0 0.0
      %2288 = vmatpush1.msra.mxu0 %v76
      %2289 = vmatprep.subr.mxu0 0.0
      %2290 = vmatpush1.msra.mxu0 %v75
      %2291 = vmatprep.subr.mxu0 0.0
      %2292 = vmatpush1.msra.mxu0 %v74
      %2293 = vmatprep.subr.mxu0 0.0
      %2294 = vmatpush1.msra.mxu0 %v73
      %2295 = vmatprep.subr.mxu0 0.0
      %2296 = vmatpush1.msra.mxu0 %v72
      %2297 = vmatprep.subr.mxu0 0.0
      %2298 = vmatpush1.msra.mxu0 %v71
      %2299 = vmatprep.subr.mxu0 0.0
      %2300 = vmatpush1.msra.mxu0 %v70
      %2301 = vmatprep.subr.mxu0 0.0
      %2302 = vmatpush1.msra.mxu0 %v69
      %2303 = vmatprep.subr.mxu0 0.0
      %2304 = vmatpush1.msra.mxu0 %v68
      %2305 = vmatprep.subr.mxu0 0.0
      %2306 = vmatpush2.msra.mxu0 0.0
      %2307 = vmatprep.subr.mxu0 0.0
      %2308 = vmatpush2.msra.mxu0 0.0
      %2309 = vmatprep.subr.mxu0 0.0
      %2310 = vmatpush2.msra.mxu0 0.0
      %2311 = vmatprep.subr.mxu0 0.0
      %2312 = vmatpush2.msra.mxu0 0.0
      %2313 = vmatprep.subr.mxu0 0.0
      %2314 = vmatpush2.msra.mxu0 0.0
      %2315 = vmatprep.subr.mxu0 0.0
      %2316 = vmatpush2.msra.mxu0 0.0
      %2317 = vmatprep.subr.mxu0 0.0
      %2318 = vmatpush2.msra.mxu0 0.0
      %2319 = vmatprep.subr.mxu0 0.0
      %2320 = vmatpush2.msra.mxu0 0.0
      %2321 = vmatprep.subr.mxu0 0.0
      %2322 = vmatpush2.msra.mxu0 0.0
      %2323 = vmatprep.subr.mxu0 0.0
      %2324 = vmatpush2.msra.mxu0 0.0
      %2325 = vmatprep.subr.mxu0 0.0
      %2326 = vmatpush2.msra.mxu0 0.0
      %2327 = vmatprep.subr.mxu0 0.0
      %2328 = vmatpush2.msra.mxu0 0.0
      %2329 = vmatprep.subr.mxu0 0.0
      %2330 = vmatpush2.msra.mxu0 0.0
      %2331 = vmatprep.subr.mxu0 0.0
      %2332 = vmatpush2.msra.mxu0 0.0
      %2333 = vmatprep.subr.mxu0 0.0
      %2334 = vmatpush2.msra.mxu0 0.0
      %2335 = vmatprep.subr.mxu0 0.0
      %2336 = vmatpush2.msra.mxu0 0.0
      %2337 = vmatprep.mubr.f32.mxu0 0.0
      %2338 = vmatmul.mubr.f32.gmra.mxu0 %v2266
      %v2339 = vpop.f32.mrf.mxu0
      %v2340 = vadd.f32 %v2271, %v2339
      %v2341 = vpop.f32.mrf.mxu0
      %2342 = vdwg.mxu0
      %s2343 = ssub.f32 %s2264, %s2263
      %v2344 = vrcp.pop 4.0
      %s2345 = vtos %v2344
      %s2346 = smul.f32 %s2343, %s2345
      %v2347 = vld [vmem:[#allocation2] sm:$0xff]
      %s2348 = smul.f32 %s2346, 0.0
      %s2349 = sadd.f32 %s2263, %s2348
      %2350 = vmatprep.subr.mxu0 0.0
      %2351 = vmatpush1.msra.mxu0 %v67
      %2352 = vmatprep.subr.mxu0 0.0
      %2353 = vmatpush1.msra.mxu0 %v66
      %2354 = vmatprep.subr.mxu0 0.0
      %2355 = vmatpush1.msra.mxu0 %v65
      %2356 = vmatprep.subr.mxu0 0.0
      %2357 = vmatpush1.msra.mxu0 %v64
      %2358 = vmatprep.subr.mxu0 0.0
      %2359 = vmatpush1.msra.mxu0 %v63
      %2360 = vmatprep.subr.mxu0 0.0
      %2361 = vmatpush1.msra.mxu0 %v62
      %2362 = vmatprep.subr.mxu0 0.0
      %2363 = vmatpush1.msra.mxu0 %v61
      %2364 = vmatprep.subr.mxu0 0.0
      %2365 = vmatpush1.msra.mxu0 %v60
      %2366 = vmatprep.subr.mxu0 0.0
      %2367 = vmatpush1.msra.mxu0 %v59
      %2368 = vmatprep.subr.mxu0 0.0
      %2369 = vmatpush1.msra.mxu0 %v58
      %2370 = vmatprep.subr.mxu0 0.0
      %2371 = vmatpush1.msra.mxu0 %v57
      %2372 = vmatprep.subr.mxu0 0.0
      %2373 = vmatpush1.msra.mxu0 %v56
      %2374 = vmatprep.subr.mxu0 0.0
      %2375 = vmatpush1.msra.mxu0 %v55
      %2376 = vmatprep.subr.mxu0 0.0
      %2377 = vmatpush1.msra.mxu0 %v54
      %2378 = vmatprep.subr.mxu0 0.0
      %2379 = vmatpush1.msra.mxu0 %v53
      %2380 = vmatprep.subr.mxu0 0.0
      %2381 = vmatpush1.msra.mxu0 %v52
      %2382 = vmatprep.subr.mxu0 0.0
      %2383 = vmatpush2.msra.mxu0 0.0
      %2384 = vmatprep.subr.mxu0 0.0
      %2385 = vmatpush2.msra.mxu0 0.0
      %2386 = vmatprep.subr.mxu0 0.0
      %2387 = vmatpush2.msra.mxu0 0.0
      %2388 = vmatprep.subr.mxu0 0.0
      %2389 = vmatpush2.msra.mxu0 0.0
      %2390 = vmatprep.subr.mxu0 0.0
      %2391 = vmatpush2.msra.mxu0 0.0
      %2392 = vmatprep.subr.mxu0 0.0
      %2393 = vmatpush2.msra.mxu0 0.0
      %2394 = vmatprep.subr.mxu0 0.0
      %2395 = vmatpush2.msra.mxu0 0.0
      %2396 = vmatprep.subr.mxu0 0.0
      %2397 = vmatpush2.msra.mxu0 0.0
      %2398 = vmatprep.subr.mxu0 0.0
      %2399 = vmatpush2.msra.mxu0 0.0
      %2400 = vmatprep.subr.mxu0 0.0
      %2401 = vmatpush2.msra.mxu0 0.0
      %2402 = vmatprep.subr.mxu0 0.0
      %2403 = vmatpush2.msra.mxu0 0.0
      %2404 = vmatprep.subr.mxu0 0.0
      %2405 = vmatpush2.msra.mxu0 0.0
      %2406 = vmatprep.subr.mxu0 0.0
      %2407 = vmatpush2.msra.mxu0 0.0
      %2408 = vmatprep.subr.mxu0 0.0
      %2409 = vmatpush2.msra.mxu0 0.0
      %2410 = vmatprep.subr.mxu0 0.0
      %2411 = vmatpush2.msra.mxu0 0.0
      %2412 = vmatprep.subr.mxu0 0.0
      %2413 = vmatpush2.msra.mxu0 0.0
      %2414 = vmatprep.mubr.f32.mxu0 0.0
      %2415 = vmatmul.mubr.f32.gmra.mxu0 %v2347
      %v2416 = vpop.f32.mrf.mxu0
      %v2417 = vadd.f32 %v2340, %v2416
      %v2418 = vpop.f32.mrf.mxu0
      %2419 = vdwg.mxu0
      %v2420 = vstv %s2349
      %v2421 = vmul.f32 %v2420, %v84
      %v2423 = vlaneseq
      %v2424 = vshrl.u32 %v2423, 7
      %v2425 = vsub.s32 0, %v2424
      %v2426 = vrot.slane %v2421, %v2425
      %v2428 = vadd.f32 %v2417, %v2426
      %v2429 = vtanh.pop %v2428
      %v2431 = vlaneseq
      %v2432 = vshrl.u32 %v2431, 7
      %v2433 = vsub.s32 0, %v2432
      %v2434 = vrot.slane %v102, %v2433
      %2436 = vmatprep.subr.mxu0 0.0
      %2437 = vmatpush1.msra.mxu0 %v101
      %2438 = vmatprep.subr.mxu0 0.0
      %2439 = vmatpush1.msra.mxu0 %v100
      %2440 = vmatprep.subr.mxu0 0.0
      %2441 = vmatpush1.msra.mxu0 %v99
      %2442 = vmatprep.subr.mxu0 0.0
      %2443 = vmatpush1.msra.mxu0 %v98
      %2444 = vmatprep.subr.mxu0 0.0
      %2445 = vmatpush1.msra.mxu0 %v97
      %2446 = vmatprep.subr.mxu0 0.0
      %2447 = vmatpush1.msra.mxu0 %v96
      %2448 = vmatprep.subr.mxu0 0.0
      %2449 = vmatpush1.msra.mxu0 %v95
      %2450 = vmatprep.subr.mxu0 0.0
      %2451 = vmatpush1.msra.mxu0 %v94
      %2452 = vmatprep.subr.mxu0 0.0
      %2453 = vmatpush1.msra.mxu0 %v93
      %2454 = vmatprep.subr.mxu0 0.0
      %2455 = vmatpush1.msra.mxu0 %v92
      %2456 = vmatprep.subr.mxu0 0.0
      %2457 = vmatpush1.msra.mxu0 %v91
      %2458 = vmatprep.subr.mxu0 0.0
      %2459 = vmatpush1.msra.mxu0 %v90
      %2460 = vmatprep.subr.mxu0 0.0
      %2461 = vmatpush1.msra.mxu0 %v89
      %2462 = vmatprep.subr.mxu0 0.0
      %2463 = vmatpush1.msra.mxu0 %v88
      %2464 = vmatprep.subr.mxu0 0.0
      %2465 = vmatpush1.msra.mxu0 %v87
      %2466 = vmatprep.subr.mxu0 0.0
      %2467 = vmatpush1.msra.mxu0 %v86
      %2468 = vmatprep.subr.mxu0 0.0
      %2469 = vmatpush2.msra.mxu0 0.0
      %2470 = vmatprep.subr.mxu0 0.0
      %2471 = vmatpush2.msra.mxu0 0.0
      %2472 = vmatprep.subr.mxu0 0.0
      %2473 = vmatpush2.msra.mxu0 0.0
      %2474 = vmatprep.subr.mxu0 0.0
      %2475 = vmatpush2.msra.mxu0 0.0
      %2476 = vmatprep.subr.mxu0 0.0
      %2477 = vmatpush2.msra.mxu0 0.0
      %2478 = vmatprep.subr.mxu0 0.0
      %2479 = vmatpush2.msra.mxu0 0.0
      %2480 = vmatprep.subr.mxu0 0.0
      %2481 = vmatpush2.msra.mxu0 0.0
      %2482 = vmatprep.subr.mxu0 0.0
      %2483 = vmatpush2.msra.mxu0 0.0
      %2484 = vmatprep.subr.mxu0 0.0
      %2485 = vmatpush2.msra.mxu0 0.0
      %2486 = vmatprep.subr.mxu0 0.0
      %2487 = vmatpush2.msra.mxu0 0.0
      %2488 = vmatprep.subr.mxu0 0.0
      %2489 = vmatpush2.msra.mxu0 0.0
      %2490 = vmatprep.subr.mxu0 0.0
      %2491 = vmatpush2.msra.mxu0 0.0
      %2492 = vmatprep.subr.mxu0 0.0
      %2493 = vmatpush2.msra.mxu0 0.0
      %2494 = vmatprep.subr.mxu0 0.0
      %2495 = vmatpush2.msra.mxu0 0.0
      %2496 = vmatprep.subr.mxu0 0.0
      %2497 = vmatpush2.msra.mxu0 0.0
      %2498 = vmatprep.subr.mxu0 0.0
      %2499 = vmatpush2.msra.mxu0 0.0
      %2500 = vmatprep.mubr.f32.mxu0 0.0
      %2501 = vmatmul.mubr.f32.gmra.mxu0 %v2429
      %v2502 = vpop.f32.mrf.mxu0
      %v2503 = vadd.f32 %v2434, %v2502
      %v2504 = vpop.f32.mrf.mxu0
      %2505 = vdwg.mxu0
      %v2506 = vstv %s2346
      %v2507 = vmul.f32 %v2506, %v2503
      %v2508 = vadd.f32 %v2347, %v2507
      %s2509 = sadd.f32 %s2263, %s2346
      %2510 = vmatprep.subr.mxu0 0.0
      %2511 = vmatpush1.msra.mxu0 %v67
      %2512 = vmatprep.subr.mxu0 0.0
      %2513 = vmatpush1.msra.mxu0 %v66
      %2514 = vmatprep.subr.mxu0 0.0
      %2515 = vmatpush1.msra.mxu0 %v65
      %2516 = vmatprep.subr.mxu0 0.0
      %2517 = vmatpush1.msra.mxu0 %v64
      %2518 = vmatprep.subr.mxu0 0.0
      %2519 = vmatpush1.msra.mxu0 %v63
      %2520 = vmatprep.subr.mxu0 0.0
      %2521 = vmatpush1.msra.mxu0 %v62
      %2522 = vmatprep.subr.mxu0 0.0
      %2523 = vmatpush1.msra.mxu0 %v61
      %2524 = vmatprep.subr.mxu0 0.0
      %2525 = vmatpush1.msra.mxu0 %v60
      %2526 = vmatprep.subr.mxu0 0.0
      %2527 = vmatpush1.msra.mxu0 %v59
      %2528 = vmatprep.subr.mxu0 0.0
      %2529 = vmatpush1.msra.mxu0 %v58
      %2530 = vmatprep.subr.mxu0 0.0
      %2531 = vmatpush1.msra.mxu0 %v57
      %2532 = vmatprep.subr.mxu0 0.0
      %2533 = vmatpush1.msra.mxu0 %v56
      %2534 = vmatprep.subr.mxu0 0.0
      %2535 = vmatpush1.msra.mxu0 %v55
      %2536 = vmatprep.subr.mxu0 0.0
      %2537 = vmatpush1.msra.mxu0 %v54
      %2538 = vmatprep.subr.mxu0 0.0
      %2539 = vmatpush1.msra.mxu0 %v53
      %2540 = vmatprep.subr.mxu0 0.0
      %2541 = vmatpush1.msra.mxu0 %v52
      %2542 = vmatprep.subr.mxu0 0.0
      %2543 = vmatpush2.msra.mxu0 0.0
      %2544 = vmatprep.subr.mxu0 0.0
      %2545 = vmatpush2.msra.mxu0 0.0
      %2546 = vmatprep.subr.mxu0 0.0
      %2547 = vmatpush2.msra.mxu0 0.0
      %2548 = vmatprep.subr.mxu0 0.0
      %2549 = vmatpush2.msra.mxu0 0.0
      %2550 = vmatprep.subr.mxu0 0.0
      %2551 = vmatpush2.msra.mxu0 0.0
      %2552 = vmatprep.subr.mxu0 0.0
      %2553 = vmatpush2.msra.mxu0 0.0
      %2554 = vmatprep.subr.mxu0 0.0
      %2555 = vmatpush2.msra.mxu0 0.0
      %2556 = vmatprep.subr.mxu0 0.0
      %2557 = vmatpush2.msra.mxu0 0.0
      %2558 = vmatprep.subr.mxu0 0.0
      %2559 = vmatpush2.msra.mxu0 0.0
      %2560 = vmatprep.subr.mxu0 0.0
      %2561 = vmatpush2.msra.mxu0 0.0
      %2562 = vmatprep.subr.mxu0 0.0
      %2563 = vmatpush2.msra.mxu0 0.0
      %2564 = vmatprep.subr.mxu0 0.0
      %2565 = vmatpush2.msra.mxu0 0.0
      %2566 = vmatprep.subr.mxu0 0.0
      %2567 = vmatpush2.msra.mxu0 0.0
      %2568 = vmatprep.subr.mxu0 0.0
      %2569 = vmatpush2.msra.mxu0 0.0
      %2570 = vmatprep.subr.mxu0 0.0
      %2571 = vmatpush2.msra.mxu0 0.0
      %2572 = vmatprep.subr.mxu0 0.0
      %2573 = vmatpush2.msra.mxu0 0.0
      %2574 = vmatprep.mubr.f32.mxu0 0.0
      %2575 = vmatmul.mubr.f32.gmra.mxu0 %v2508
      %v2576 = vpop.f32.mrf.mxu0
      %v2577 = vadd.f32 %v2340, %v2576
      %v2578 = vpop.f32.mrf.mxu0
      %2579 = vdwg.mxu0
      %v2580 = vstv %s2509
      %v2581 = vmul.f32 %v2580, %v84
      %v2583 = vlaneseq
      %v2584 = vshrl.u32 %v2583, 7
      %v2585 = vsub.s32 0, %v2584
      %v2586 = vrot.slane %v2581, %v2585
      %v2588 = vadd.f32 %v2577, %v2586
      %v2589 = vtanh.pop %v2588
      %2590 = vmatprep.subr.mxu0 0.0
      %2591 = vmatpush1.msra.mxu0 %v101
      %2592 = vmatprep.subr.mxu0 0.0
      %2593 = vmatpush1.msra.mxu0 %v100
      %2594 = vmatprep.subr.mxu0 0.0
      %2595 = vmatpush1.msra.mxu0 %v99
      %2596 = vmatprep.subr.mxu0 0.0
      %2597 = vmatpush1.msra.mxu0 %v98
      %2598 = vmatprep.subr.mxu0 0.0
      %2599 = vmatpush1.msra.mxu0 %v97
      %2600 = vmatprep.subr.mxu0 0.0
      %2601 = vmatpush1.msra.mxu0 %v96
      %2602 = vmatprep.subr.mxu0 0.0
      %2603 = vmatpush1.msra.mxu0 %v95
      %2604 = vmatprep.subr.mxu0 0.0
      %2605 = vmatpush1.msra.mxu0 %v94
      %2606 = vmatprep.subr.mxu0 0.0
      %2607 = vmatpush1.msra.mxu0 %v93
      %2608 = vmatprep.subr.mxu0 0.0
      %2609 = vmatpush1.msra.mxu0 %v92
      %2610 = vmatprep.subr.mxu0 0.0
      %2611 = vmatpush1.msra.mxu0 %v91
      %2612 = vmatprep.subr.mxu0 0.0
      %2613 = vmatpush1.msra.mxu0 %v90
      %2614 = vmatprep.subr.mxu0 0.0
      %2615 = vmatpush1.msra.mxu0 %v89
      %2616 = vmatprep.subr.mxu0 0.0
      %2617 = vmatpush1.msra.mxu0 %v88
      %2618 = vmatprep.subr.mxu0 0.0
      %2619 = vmatpush1.msra.mxu0 %v87
      %2620 = vmatprep.subr.mxu0 0.0
      %2621 = vmatpush1.msra.mxu0 %v86
      %2622 = vmatprep.subr.mxu0 0.0
      %2623 = vmatpush2.msra.mxu0 0.0
      %2624 = vmatprep.subr.mxu0 0.0
      %2625 = vmatpush2.msra.mxu0 0.0
      %2626 = vmatprep.subr.mxu0 0.0
      %2627 = vmatpush2.msra.mxu0 0.0
      %2628 = vmatprep.subr.mxu0 0.0
      %2629 = vmatpush2.msra.mxu0 0.0
      %2630 = vmatprep.subr.mxu0 0.0
      %2631 = vmatpush2.msra.mxu0 0.0
      %2632 = vmatprep.subr.mxu0 0.0
      %2633 = vmatpush2.msra.mxu0 0.0
      %2634 = vmatprep.subr.mxu0 0.0
      %2635 = vmatpush2.msra.mxu0 0.0
      %2636 = vmatprep.subr.mxu0 0.0
      %2637 = vmatpush2.msra.mxu0 0.0
      %2638 = vmatprep.subr.mxu0 0.0
      %2639 = vmatpush2.msra.mxu0 0.0
      %2640 = vmatprep.subr.mxu0 0.0
      %2641 = vmatpush2.msra.mxu0 0.0
      %2642 = vmatprep.subr.mxu0 0.0
      %2643 = vmatpush2.msra.mxu0 0.0
      %2644 = vmatprep.subr.mxu0 0.0
      %2645 = vmatpush2.msra.mxu0 0.0
      %2646 = vmatprep.subr.mxu0 0.0
      %2647 = vmatpush2.msra.mxu0 0.0
      %2648 = vmatprep.subr.mxu0 0.0
      %2649 = vmatpush2.msra.mxu0 0.0
      %2650 = vmatprep.subr.mxu0 0.0
      %2651 = vmatpush2.msra.mxu0 0.0
      %2652 = vmatprep.subr.mxu0 0.0
      %2653 = vmatpush2.msra.mxu0 0.0
      %2654 = vmatprep.mubr.f32.mxu0 0.0
      %2655 = vmatmul.mubr.f32.gmra.mxu0 %v2589
      %v2656 = vpop.f32.mrf.mxu0
      %v2657 = vadd.f32 %v2434, %v2656
      %v2658 = vpop.f32.mrf.mxu0
      %2659 = vdwg.mxu0
      %v2660 = vmul.f32 %v2506, %v2657
      %v2661 = vadd.f32 %v2508, %v2660
      %s2662 = smul.f32 %s2346, 2.0
      %s2663 = sadd.f32 %s2263, %s2662
      %2664 = vmatprep.subr.mxu0 0.0
      %2665 = vmatpush1.msra.mxu0 %v67
      %2666 = vmatprep.subr.mxu0 0.0
      %2667 = vmatpush1.msra.mxu0 %v66
      %2668 = vmatprep.subr.mxu0 0.0
      %2669 = vmatpush1.msra.mxu0 %v65
      %2670 = vmatprep.subr.mxu0 0.0
      %2671 = vmatpush1.msra.mxu0 %v64
      %2672 = vmatprep.subr.mxu0 0.0
      %2673 = vmatpush1.msra.mxu0 %v63
      %2674 = vmatprep.subr.mxu0 0.0
      %2675 = vmatpush1.msra.mxu0 %v62
      %2676 = vmatprep.subr.mxu0 0.0
      %2677 = vmatpush1.msra.mxu0 %v61
      %2678 = vmatprep.subr.mxu0 0.0
      %2679 = vmatpush1.msra.mxu0 %v60
      %2680 = vmatprep.subr.mxu0 0.0
      %2681 = vmatpush1.msra.mxu0 %v59
      %2682 = vmatprep.subr.mxu0 0.0
      %2683 = vmatpush1.msra.mxu0 %v58
      %2684 = vmatprep.subr.mxu0 0.0
      %2685 = vmatpush1.msra.mxu0 %v57
      %2686 = vmatprep.subr.mxu0 0.0
      %2687 = vmatpush1.msra.mxu0 %v56
      %2688 = vmatprep.subr.mxu0 0.0
      %2689 = vmatpush1.msra.mxu0 %v55
      %2690 = vmatprep.subr.mxu0 0.0
      %2691 = vmatpush1.msra.mxu0 %v54
      %2692 = vmatprep.subr.mxu0 0.0
      %2693 = vmatpush1.msra.mxu0 %v53
      %2694 = vmatprep.subr.mxu0 0.0
      %2695 = vmatpush1.msra.mxu0 %v52
      %2696 = vmatprep.subr.mxu0 0.0
      %2697 = vmatpush2.msra.mxu0 0.0
      %2698 = vmatprep.subr.mxu0 0.0
      %2699 = vmatpush2.msra.mxu0 0.0
      %2700 = vmatprep.subr.mxu0 0.0
      %2701 = vmatpush2.msra.mxu0 0.0
      %2702 = vmatprep.subr.mxu0 0.0
      %2703 = vmatpush2.msra.mxu0 0.0
      %2704 = vmatprep.subr.mxu0 0.0
      %2705 = vmatpush2.msra.mxu0 0.0
      %2706 = vmatprep.subr.mxu0 0.0
      %2707 = vmatpush2.msra.mxu0 0.0
      %2708 = vmatprep.subr.mxu0 0.0
      %2709 = vmatpush2.msra.mxu0 0.0
      %2710 = vmatprep.subr.mxu0 0.0
      %2711 = vmatpush2.msra.mxu0 0.0
      %2712 = vmatprep.subr.mxu0 0.0
      %2713 = vmatpush2.msra.mxu0 0.0
      %2714 = vmatprep.subr.mxu0 0.0
      %2715 = vmatpush2.msra.mxu0 0.0
      %2716 = vmatprep.subr.mxu0 0.0
      %2717 = vmatpush2.msra.mxu0 0.0
      %2718 = vmatprep.subr.mxu0 0.0
      %2719 = vmatpush2.msra.mxu0 0.0
      %2720 = vmatprep.subr.mxu0 0.0
      %2721 = vmatpush2.msra.mxu0 0.0
      %2722 = vmatprep.subr.mxu0 0.0
      %2723 = vmatpush2.msra.mxu0 0.0
      %2724 = vmatprep.subr.mxu0 0.0
      %2725 = vmatpush2.msra.mxu0 0.0
      %2726 = vmatprep.subr.mxu0 0.0
      %2727 = vmatpush2.msra.mxu0 0.0
      %2728 = vmatprep.mubr.f32.mxu0 0.0
      %2729 = vmatmul.mubr.f32.gmra.mxu0 %v2661
      %v2730 = vpop.f32.mrf.mxu0
      %v2731 = vadd.f32 %v2340, %v2730
      %v2732 = vpop.f32.mrf.mxu0
      %2733 = vdwg.mxu0
      %v2734 = vstv %s2663
      %v2735 = vmul.f32 %v2734, %v84
      %v2737 = vlaneseq
      %v2738 = vshrl.u32 %v2737, 7
      %v2739 = vsub.s32 0, %v2738
      %v2740 = vrot.slane %v2735, %v2739
      %v2742 = vadd.f32 %v2731, %v2740
      %v2743 = vtanh.pop %v2742
      %2744 = vmatprep.subr.mxu0 0.0
      %2745 = vmatpush1.msra.mxu0 %v101
      %2746 = vmatprep.subr.mxu0 0.0
      %2747 = vmatpush1.msra.mxu0 %v100
      %2748 = vmatprep.subr.mxu0 0.0
      %2749 = vmatpush1.msra.mxu0 %v99
      %2750 = vmatprep.subr.mxu0 0.0
      %2751 = vmatpush1.msra.mxu0 %v98
      %2752 = vmatprep.subr.mxu0 0.0
      %2753 = vmatpush1.msra.mxu0 %v97
      %2754 = vmatprep.subr.mxu0 0.0
      %2755 = vmatpush1.msra.mxu0 %v96
      %2756 = vmatprep.subr.mxu0 0.0
      %2757 = vmatpush1.msra.mxu0 %v95
      %2758 = vmatprep.subr.mxu0 0.0
      %2759 = vmatpush1.msra.mxu0 %v94
      %2760 = vmatprep.subr.mxu0 0.0
      %2761 = vmatpush1.msra.mxu0 %v93
      %2762 = vmatprep.subr.mxu0 0.0
      %2763 = vmatpush1.msra.mxu0 %v92
      %2764 = vmatprep.subr.mxu0 0.0
      %2765 = vmatpush1.msra.mxu0 %v91
      %2766 = vmatprep.subr.mxu0 0.0
      %2767 = vmatpush1.msra.mxu0 %v90
      %2768 = vmatprep.subr.mxu0 0.0
      %2769 = vmatpush1.msra.mxu0 %v89
      %2770 = vmatprep.subr.mxu0 0.0
      %2771 = vmatpush1.msra.mxu0 %v88
      %2772 = vmatprep.subr.mxu0 0.0
      %2773 = vmatpush1.msra.mxu0 %v87
      %2774 = vmatprep.subr.mxu0 0.0
      %2775 = vmatpush1.msra.mxu0 %v86
      %2776 = vmatprep.subr.mxu0 0.0
      %2777 = vmatpush2.msra.mxu0 0.0
      %2778 = vmatprep.subr.mxu0 0.0
      %2779 = vmatpush2.msra.mxu0 0.0
      %2780 = vmatprep.subr.mxu0 0.0
      %2781 = vmatpush2.msra.mxu0 0.0
      %2782 = vmatprep.subr.mxu0 0.0
      %2783 = vmatpush2.msra.mxu0 0.0
      %2784 = vmatprep.subr.mxu0 0.0
      %2785 = vmatpush2.msra.mxu0 0.0
      %2786 = vmatprep.subr.mxu0 0.0
      %2787 = vmatpush2.msra.mxu0 0.0
      %2788 = vmatprep.subr.mxu0 0.0
      %2789 = vmatpush2.msra.mxu0 0.0
      %2790 = vmatprep.subr.mxu0 0.0
      %2791 = vmatpush2.msra.mxu0 0.0
      %2792 = vmatprep.subr.mxu0 0.0
      %2793 = vmatpush2.msra.mxu0 0.0
      %2794 = vmatprep.subr.mxu0 0.0
      %2795 = vmatpush2.msra.mxu0 0.0
      %2796 = vmatprep.subr.mxu0 0.0
      %2797 = vmatpush2.msra.mxu0 0.0
      %2798 = vmatprep.subr.mxu0 0.0
      %2799 = vmatpush2.msra.mxu0 0.0
      %2800 = vmatprep.subr.mxu0 0.0
      %2801 = vmatpush2.msra.mxu0 0.0
      %2802 = vmatprep.subr.mxu0 0.0
      %2803 = vmatpush2.msra.mxu0 0.0
      %2804 = vmatprep.subr.mxu0 0.0
      %2805 = vmatpush2.msra.mxu0 0.0
      %2806 = vmatprep.subr.mxu0 0.0
      %2807 = vmatpush2.msra.mxu0 0.0
      %2808 = vmatprep.mubr.f32.mxu0 0.0
      %2809 = vmatmul.mubr.f32.gmra.mxu0 %v2743
      %v2810 = vpop.f32.mrf.mxu0
      %v2811 = vadd.f32 %v2434, %v2810
      %v2812 = vpop.f32.mrf.mxu0
      %2813 = vdwg.mxu0
      %v2814 = vmul.f32 %v2506, %v2811
      %v2815 = vadd.f32 %v2661, %v2814
      %s2816 = smul.f32 %s2346, 3.0
      %s2817 = sadd.f32 %s2263, %s2816
      %2818 = vmatprep.subr.mxu0 0.0
      %2819 = vmatpush1.msra.mxu0 %v67
      %2820 = vmatprep.subr.mxu0 0.0
      %2821 = vmatpush1.msra.mxu0 %v66
      %2822 = vmatprep.subr.mxu0 0.0
      %2823 = vmatpush1.msra.mxu0 %v65
      %2824 = vmatprep.subr.mxu0 0.0
      %2825 = vmatpush1.msra.mxu0 %v64
      %2826 = vmatprep.subr.mxu0 0.0
      %2827 = vmatpush1.msra.mxu0 %v63
      %2828 = vmatprep.subr.mxu0 0.0
      %2829 = vmatpush1.msra.mxu0 %v62
      %2830 = vmatprep.subr.mxu0 0.0
      %2831 = vmatpush1.msra.mxu0 %v61
      %2832 = vmatprep.subr.mxu0 0.0
      %2833 = vmatpush1.msra.mxu0 %v60
      %2834 = vmatprep.subr.mxu0 0.0
      %2835 = vmatpush1.msra.mxu0 %v59
      %2836 = vmatprep.subr.mxu0 0.0
      %2837 = vmatpush1.msra.mxu0 %v58
      %2838 = vmatprep.subr.mxu0 0.0
      %2839 = vmatpush1.msra.mxu0 %v57
      %2840 = vmatprep.subr.mxu0 0.0
      %2841 = vmatpush1.msra.mxu0 %v56
      %2842 = vmatprep.subr.mxu0 0.0
      %2843 = vmatpush1.msra.mxu0 %v55
      %2844 = vmatprep.subr.mxu0 0.0
      %2845 = vmatpush1.msra.mxu0 %v54
      %2846 = vmatprep.subr.mxu0 0.0
      %2847 = vmatpush1.msra.mxu0 %v53
      %2848 = vmatprep.subr.mxu0 0.0
      %2849 = vmatpush1.msra.mxu0 %v52
      %2850 = vmatprep.subr.mxu0 0.0
      %2851 = vmatpush2.msra.mxu0 0.0
      %2852 = vmatprep.subr.mxu0 0.0
      %2853 = vmatpush2.msra.mxu0 0.0
      %2854 = vmatprep.subr.mxu0 0.0
      %2855 = vmatpush2.msra.mxu0 0.0
      %2856 = vmatprep.subr.mxu0 0.0
      %2857 = vmatpush2.msra.mxu0 0.0
      %2858 = vmatprep.subr.mxu0 0.0
      %2859 = vmatpush2.msra.mxu0 0.0
      %2860 = vmatprep.subr.mxu0 0.0
      %2861 = vmatpush2.msra.mxu0 0.0
      %2862 = vmatprep.subr.mxu0 0.0
      %2863 = vmatpush2.msra.mxu0 0.0
      %2864 = vmatprep.subr.mxu0 0.0
      %2865 = vmatpush2.msra.mxu0 0.0
      %2866 = vmatprep.subr.mxu0 0.0
      %2867 = vmatpush2.msra.mxu0 0.0
      %2868 = vmatprep.subr.mxu0 0.0
      %2869 = vmatpush2.msra.mxu0 0.0
      %2870 = vmatprep.subr.mxu0 0.0
      %2871 = vmatpush2.msra.mxu0 0.0
      %2872 = vmatprep.subr.mxu0 0.0
      %2873 = vmatpush2.msra.mxu0 0.0
      %2874 = vmatprep.subr.mxu0 0.0
      %2875 = vmatpush2.msra.mxu0 0.0
      %2876 = vmatprep.subr.mxu0 0.0
      %2877 = vmatpush2.msra.mxu0 0.0
      %2878 = vmatprep.subr.mxu0 0.0
      %2879 = vmatpush2.msra.mxu0 0.0
      %2880 = vmatprep.subr.mxu0 0.0
      %2881 = vmatpush2.msra.mxu0 0.0
      %2882 = vmatprep.mubr.f32.mxu0 0.0
      %2883 = vmatmul.mubr.f32.gmra.mxu0 %v2815
      %v2884 = vpop.f32.mrf.mxu0
      %v2885 = vadd.f32 %v2340, %v2884
      %v2886 = vpop.f32.mrf.mxu0
      %2887 = vdwg.mxu0
      %v2888 = vstv %s2817
      %v2889 = vmul.f32 %v2888, %v84
      %v2891 = vlaneseq
      %v2892 = vshrl.u32 %v2891, 7
      %v2893 = vsub.s32 0, %v2892
      %v2894 = vrot.slane %v2889, %v2893
      %v2896 = vadd.f32 %v2885, %v2894
      %v2897 = vtanh.pop %v2896
      %2898 = vmatprep.subr.mxu0 0.0
      %2899 = vmatpush1.msra.mxu0 %v101
      %2900 = vmatprep.subr.mxu0 0.0
      %2901 = vmatpush1.msra.mxu0 %v100
      %2902 = vmatprep.subr.mxu0 0.0
      %2903 = vmatpush1.msra.mxu0 %v99
      %2904 = vmatprep.subr.mxu0 0.0
      %2905 = vmatpush1.msra.mxu0 %v98
      %2906 = vmatprep.subr.mxu0 0.0
      %2907 = vmatpush1.msra.mxu0 %v97
      %2908 = vmatprep.subr.mxu0 0.0
      %2909 = vmatpush1.msra.mxu0 %v96
      %2910 = vmatprep.subr.mxu0 0.0
      %2911 = vmatpush1.msra.mxu0 %v95
      %2912 = vmatprep.subr.mxu0 0.0
      %2913 = vmatpush1.msra.mxu0 %v94
      %2914 = vmatprep.subr.mxu0 0.0
      %2915 = vmatpush1.msra.mxu0 %v93
      %2916 = vmatprep.subr.mxu0 0.0
      %2917 = vmatpush1.msra.mxu0 %v92
      %2918 = vmatprep.subr.mxu0 0.0
      %2919 = vmatpush1.msra.mxu0 %v91
      %2920 = vmatprep.subr.mxu0 0.0
      %2921 = vmatpush1.msra.mxu0 %v90
      %2922 = vmatprep.subr.mxu0 0.0
      %2923 = vmatpush1.msra.mxu0 %v89
      %2924 = vmatprep.subr.mxu0 0.0
      %2925 = vmatpush1.msra.mxu0 %v88
      %2926 = vmatprep.subr.mxu0 0.0
      %2927 = vmatpush1.msra.mxu0 %v87
      %2928 = vmatprep.subr.mxu0 0.0
      %2929 = vmatpush1.msra.mxu0 %v86
      %2930 = vmatprep.subr.mxu0 0.0
      %2931 = vmatpush2.msra.mxu0 0.0
      %2932 = vmatprep.subr.mxu0 0.0
      %2933 = vmatpush2.msra.mxu0 0.0
      %2934 = vmatprep.subr.mxu0 0.0
      %2935 = vmatpush2.msra.mxu0 0.0
      %2936 = vmatprep.subr.mxu0 0.0
      %2937 = vmatpush2.msra.mxu0 0.0
      %2938 = vmatprep.subr.mxu0 0.0
      %2939 = vmatpush2.msra.mxu0 0.0
      %2940 = vmatprep.subr.mxu0 0.0
      %2941 = vmatpush2.msra.mxu0 0.0
      %2942 = vmatprep.subr.mxu0 0.0
      %2943 = vmatpush2.msra.mxu0 0.0
      %2944 = vmatprep.subr.mxu0 0.0
      %2945 = vmatpush2.msra.mxu0 0.0
      %2946 = vmatprep.subr.mxu0 0.0
      %2947 = vmatpush2.msra.mxu0 0.0
      %2948 = vmatprep.subr.mxu0 0.0
      %2949 = vmatpush2.msra.mxu0 0.0
      %2950 = vmatprep.subr.mxu0 0.0
      %2951 = vmatpush2.msra.mxu0 0.0
      %2952 = vmatprep.subr.mxu0 0.0
      %2953 = vmatpush2.msra.mxu0 0.0
      %2954 = vmatprep.subr.mxu0 0.0
      %2955 = vmatpush2.msra.mxu0 0.0
      %2956 = vmatprep.subr.mxu0 0.0
      %2957 = vmatpush2.msra.mxu0 0.0
      %2958 = vmatprep.subr.mxu0 0.0
      %2959 = vmatpush2.msra.mxu0 0.0
      %2960 = vmatprep.subr.mxu0 0.0
      %2961 = vmatpush2.msra.mxu0 0.0
      %2962 = vmatprep.mubr.f32.mxu0 0.0
      %2963 = vmatmul.mubr.f32.gmra.mxu0 %v2897
      %v2964 = vpop.f32.mrf.mxu0
      %v2965 = vadd.f32 %v2434, %v2964
      %v2966 = vpop.f32.mrf.mxu0
      %2967 = vdwg.mxu0
      %v2968 = vmul.f32 %v2506, %v2965
      %v2969 = vadd.f32 %v2815, %v2968
      %2970 = vst [vmem:[#allocation2] sm:$0xff] %v2969
    $region61: #{neural_ode_forward.1} parent=1 // pred_fallthru
      _
    %v2971 = vld [vmem:[#allocation2] sm:$0xff]
    %s2972 = scalar_lea.vmem [#allocation6], 24
    %2973 = vst [vmem:[%s2972] sm:$0xff] %v2971
    %s2974 = sadd.s32 %s103, 4
    %p2975 = scmp.gt.s32.totalorder %s2974, 0
    %p2976 = scmp.lt.s32.totalorder %s2974, 8
    %p2977 = pnand %p2975, %p2976
    %p2978 = pneg %p2977
    // Predicated region
    $region62: #{neural_ode_forward.1} parent=1 // pred_check
      _
    $region63: #{neural_ode_forward.1} parent=1 // pred_check_branch
      %2980 = sbr.rel (%p2977) target = $region65
    $region64: #{neural_ode_forward.1} parent=1 // pred_region
      %s2981 = sld [smem:[#allocation3 + %s2256]]
      %s2982 = sld [smem:[#allocation3 + %s2974]]
      %s2983 = scalar_lea.vmem %s2, 32
      %v2984 = vld [vmem:[%s2983] sm:$0xff]
      %v2986 = vlaneseq
      %v2987 = vshrl.u32 %v2986, 7
      %v2988 = vsub.s32 0, %v2987
      %v2989 = vrot.slane %v85, %v2988
      %2991 = vmatprep.subr.mxu0 0.0
      %2992 = vmatpush1.msra.mxu0 %v83
      %2993 = vmatprep.subr.mxu0 0.0
      %2994 = vmatpush1.msra.mxu0 %v82
      %2995 = vmatprep.subr.mxu0 0.0
      %2996 = vmatpush1.msra.mxu0 %v81
      %2997 = vmatprep.subr.mxu0 0.0
      %2998 = vmatpush1.msra.mxu0 %v80
      %2999 = vmatprep.subr.mxu0 0.0
      %3000 = vmatpush1.msra.mxu0 %v79
      %3001 = vmatprep.subr.mxu0 0.0
      %3002 = vmatpush1.msra.mxu0 %v78
      %3003 = vmatprep.subr.mxu0 0.0
      %3004 = vmatpush1.msra.mxu0 %v77
      %3005 = vmatprep.subr.mxu0 0.0
      %3006 = vmatpush1.msra.mxu0 %v76
      %3007 = vmatprep.subr.mxu0 0.0
      %3008 = vmatpush1.msra.mxu0 %v75
      %3009 = vmatprep.subr.mxu0 0.0
      %3010 = vmatpush1.msra.mxu0 %v74
      %3011 = vmatprep.subr.mxu0 0.0
      %3012 = vmatpush1.msra.mxu0 %v73
      %3013 = vmatprep.subr.mxu0 0.0
      %3014 = vmatpush1.msra.mxu0 %v72
      %3015 = vmatprep.subr.mxu0 0.0
      %3016 = vmatpush1.msra.mxu0 %v71
      %3017 = vmatprep.subr.mxu0 0.0
      %3018 = vmatpush1.msra.mxu0 %v70
      %3019 = vmatprep.subr.mxu0 0.0
      %3020 = vmatpush1.msra.mxu0 %v69
      %3021 = vmatprep.subr.mxu0 0.0
      %3022 = vmatpush1.msra.mxu0 %v68
      %3023 = vmatprep.subr.mxu0 0.0
      %3024 = vmatpush2.msra.mxu0 0.0
      %3025 = vmatprep.subr.mxu0 0.0
      %3026 = vmatpush2.msra.mxu0 0.0
      %3027 = vmatprep.subr.mxu0 0.0
      %3028 = vmatpush2.msra.mxu0 0.0
      %3029 = vmatprep.subr.mxu0 0.0
      %3030 = vmatpush2.msra.mxu0 0.0
      %3031 = vmatprep.subr.mxu0 0.0
      %3032 = vmatpush2.msra.mxu0 0.0
      %3033 = vmatprep.subr.mxu0 0.0
      %3034 = vmatpush2.msra.mxu0 0.0
      %3035 = vmatprep.subr.mxu0 0.0
      %3036 = vmatpush2.msra.mxu0 0.0
      %3037 = vmatprep.subr.mxu0 0.0
      %3038 = vmatpush2.msra.mxu0 0.0
      %3039 = vmatprep.subr.mxu0 0.0
      %3040 = vmatpush2.msra.mxu0 0.0
      %3041 = vmatprep.subr.mxu0 0.0
      %3042 = vmatpush2.msra.mxu0 0.0
      %3043 = vmatprep.subr.mxu0 0.0
      %3044 = vmatpush2.msra.mxu0 0.0
      %3045 = vmatprep.subr.mxu0 0.0
      %3046 = vmatpush2.msra.mxu0 0.0
      %3047 = vmatprep.subr.mxu0 0.0
      %3048 = vmatpush2.msra.mxu0 0.0
      %3049 = vmatprep.subr.mxu0 0.0
      %3050 = vmatpush2.msra.mxu0 0.0
      %3051 = vmatprep.subr.mxu0 0.0
      %3052 = vmatpush2.msra.mxu0 0.0
      %3053 = vmatprep.subr.mxu0 0.0
      %3054 = vmatpush2.msra.mxu0 0.0
      %3055 = vmatprep.mubr.f32.mxu0 0.0
      %3056 = vmatmul.mubr.f32.gmra.mxu0 %v2984
      %v3057 = vpop.f32.mrf.mxu0
      %v3058 = vadd.f32 %v2989, %v3057
      %v3059 = vpop.f32.mrf.mxu0
      %3060 = vdwg.mxu0
      %s3061 = ssub.f32 %s2982, %s2981
      %v3062 = vrcp.pop 4.0
      %s3063 = vtos %v3062
      %s3064 = smul.f32 %s3061, %s3063
      %v3065 = vld [vmem:[#allocation2] sm:$0xff]
      %s3066 = smul.f32 %s3064, 0.0
      %s3067 = sadd.f32 %s2981, %s3066
      %3068 = vmatprep.subr.mxu0 0.0
      %3069 = vmatpush1.msra.mxu0 %v67
      %3070 = vmatprep.subr.mxu0 0.0
      %3071 = vmatpush1.msra.mxu0 %v66
      %3072 = vmatprep.subr.mxu0 0.0
      %3073 = vmatpush1.msra.mxu0 %v65
      %3074 = vmatprep.subr.mxu0 0.0
      %3075 = vmatpush1.msra.mxu0 %v64
      %3076 = vmatprep.subr.mxu0 0.0
      %3077 = vmatpush1.msra.mxu0 %v63
      %3078 = vmatprep.subr.mxu0 0.0
      %3079 = vmatpush1.msra.mxu0 %v62
      %3080 = vmatprep.subr.mxu0 0.0
      %3081 = vmatpush1.msra.mxu0 %v61
      %3082 = vmatprep.subr.mxu0 0.0
      %3083 = vmatpush1.msra.mxu0 %v60
      %3084 = vmatprep.subr.mxu0 0.0
      %3085 = vmatpush1.msra.mxu0 %v59
      %3086 = vmatprep.subr.mxu0 0.0
      %3087 = vmatpush1.msra.mxu0 %v58
      %3088 = vmatprep.subr.mxu0 0.0
      %3089 = vmatpush1.msra.mxu0 %v57
      %3090 = vmatprep.subr.mxu0 0.0
      %3091 = vmatpush1.msra.mxu0 %v56
      %3092 = vmatprep.subr.mxu0 0.0
      %3093 = vmatpush1.msra.mxu0 %v55
      %3094 = vmatprep.subr.mxu0 0.0
      %3095 = vmatpush1.msra.mxu0 %v54
      %3096 = vmatprep.subr.mxu0 0.0
      %3097 = vmatpush1.msra.mxu0 %v53
      %3098 = vmatprep.subr.mxu0 0.0
      %3099 = vmatpush1.msra.mxu0 %v52
      %3100 = vmatprep.subr.mxu0 0.0
      %3101 = vmatpush2.msra.mxu0 0.0
      %3102 = vmatprep.subr.mxu0 0.0
      %3103 = vmatpush2.msra.mxu0 0.0
      %3104 = vmatprep.subr.mxu0 0.0
      %3105 = vmatpush2.msra.mxu0 0.0
      %3106 = vmatprep.subr.mxu0 0.0
      %3107 = vmatpush2.msra.mxu0 0.0
      %3108 = vmatprep.subr.mxu0 0.0
      %3109 = vmatpush2.msra.mxu0 0.0
      %3110 = vmatprep.subr.mxu0 0.0
      %3111 = vmatpush2.msra.mxu0 0.0
      %3112 = vmatprep.subr.mxu0 0.0
      %3113 = vmatpush2.msra.mxu0 0.0
      %3114 = vmatprep.subr.mxu0 0.0
      %3115 = vmatpush2.msra.mxu0 0.0
      %3116 = vmatprep.subr.mxu0 0.0
      %3117 = vmatpush2.msra.mxu0 0.0
      %3118 = vmatprep.subr.mxu0 0.0
      %3119 = vmatpush2.msra.mxu0 0.0
      %3120 = vmatprep.subr.mxu0 0.0
      %3121 = vmatpush2.msra.mxu0 0.0
      %3122 = vmatprep.subr.mxu0 0.0
      %3123 = vmatpush2.msra.mxu0 0.0
      %3124 = vmatprep.subr.mxu0 0.0
      %3125 = vmatpush2.msra.mxu0 0.0
      %3126 = vmatprep.subr.mxu0 0.0
      %3127 = vmatpush2.msra.mxu0 0.0
      %3128 = vmatprep.subr.mxu0 0.0
      %3129 = vmatpush2.msra.mxu0 0.0
      %3130 = vmatprep.subr.mxu0 0.0
      %3131 = vmatpush2.msra.mxu0 0.0
      %3132 = vmatprep.mubr.f32.mxu0 0.0
      %3133 = vmatmul.mubr.f32.gmra.mxu0 %v3065
      %v3134 = vpop.f32.mrf.mxu0
      %v3135 = vadd.f32 %v3058, %v3134
      %v3136 = vpop.f32.mrf.mxu0
      %3137 = vdwg.mxu0
      %v3138 = vstv %s3067
      %v3139 = vmul.f32 %v3138, %v84
      %v3141 = vlaneseq
      %v3142 = vshrl.u32 %v3141, 7
      %v3143 = vsub.s32 0, %v3142
      %v3144 = vrot.slane %v3139, %v3143
      %v3146 = vadd.f32 %v3135, %v3144
      %v3147 = vtanh.pop %v3146
      %v3149 = vlaneseq
      %v3150 = vshrl.u32 %v3149, 7
      %v3151 = vsub.s32 0, %v3150
      %v3152 = vrot.slane %v102, %v3151
      %3154 = vmatprep.subr.mxu0 0.0
      %3155 = vmatpush1.msra.mxu0 %v101
      %3156 = vmatprep.subr.mxu0 0.0
      %3157 = vmatpush1.msra.mxu0 %v100
      %3158 = vmatprep.subr.mxu0 0.0
      %3159 = vmatpush1.msra.mxu0 %v99
      %3160 = vmatprep.subr.mxu0 0.0
      %3161 = vmatpush1.msra.mxu0 %v98
      %3162 = vmatprep.subr.mxu0 0.0
      %3163 = vmatpush1.msra.mxu0 %v97
      %3164 = vmatprep.subr.mxu0 0.0
      %3165 = vmatpush1.msra.mxu0 %v96
      %3166 = vmatprep.subr.mxu0 0.0
      %3167 = vmatpush1.msra.mxu0 %v95
      %3168 = vmatprep.subr.mxu0 0.0
      %3169 = vmatpush1.msra.mxu0 %v94
      %3170 = vmatprep.subr.mxu0 0.0
      %3171 = vmatpush1.msra.mxu0 %v93
      %3172 = vmatprep.subr.mxu0 0.0
      %3173 = vmatpush1.msra.mxu0 %v92
      %3174 = vmatprep.subr.mxu0 0.0
      %3175 = vmatpush1.msra.mxu0 %v91
      %3176 = vmatprep.subr.mxu0 0.0
      %3177 = vmatpush1.msra.mxu0 %v90
      %3178 = vmatprep.subr.mxu0 0.0
      %3179 = vmatpush1.msra.mxu0 %v89
      %3180 = vmatprep.subr.mxu0 0.0
      %3181 = vmatpush1.msra.mxu0 %v88
      %3182 = vmatprep.subr.mxu0 0.0
      %3183 = vmatpush1.msra.mxu0 %v87
      %3184 = vmatprep.subr.mxu0 0.0
      %3185 = vmatpush1.msra.mxu0 %v86
      %3186 = vmatprep.subr.mxu0 0.0
      %3187 = vmatpush2.msra.mxu0 0.0
      %3188 = vmatprep.subr.mxu0 0.0
      %3189 = vmatpush2.msra.mxu0 0.0
      %3190 = vmatprep.subr.mxu0 0.0
      %3191 = vmatpush2.msra.mxu0 0.0
      %3192 = vmatprep.subr.mxu0 0.0
      %3193 = vmatpush2.msra.mxu0 0.0
      %3194 = vmatprep.subr.mxu0 0.0
      %3195 = vmatpush2.msra.mxu0 0.0
      %3196 = vmatprep.subr.mxu0 0.0
      %3197 = vmatpush2.msra.mxu0 0.0
      %3198 = vmatprep.subr.mxu0 0.0
      %3199 = vmatpush2.msra.mxu0 0.0
      %3200 = vmatprep.subr.mxu0 0.0
      %3201 = vmatpush2.msra.mxu0 0.0
      %3202 = vmatprep.subr.mxu0 0.0
      %3203 = vmatpush2.msra.mxu0 0.0
      %3204 = vmatprep.subr.mxu0 0.0
      %3205 = vmatpush2.msra.mxu0 0.0
      %3206 = vmatprep.subr.mxu0 0.0
      %3207 = vmatpush2.msra.mxu0 0.0
      %3208 = vmatprep.subr.mxu0 0.0
      %3209 = vmatpush2.msra.mxu0 0.0
      %3210 = vmatprep.subr.mxu0 0.0
      %3211 = vmatpush2.msra.mxu0 0.0
      %3212 = vmatprep.subr.mxu0 0.0
      %3213 = vmatpush2.msra.mxu0 0.0
      %3214 = vmatprep.subr.mxu0 0.0
      %3215 = vmatpush2.msra.mxu0 0.0
      %3216 = vmatprep.subr.mxu0 0.0
      %3217 = vmatpush2.msra.mxu0 0.0
      %3218 = vmatprep.mubr.f32.mxu0 0.0
      %3219 = vmatmul.mubr.f32.gmra.mxu0 %v3147
      %v3220 = vpop.f32.mrf.mxu0
      %v3221 = vadd.f32 %v3152, %v3220
      %v3222 = vpop.f32.mrf.mxu0
      %3223 = vdwg.mxu0
      %v3224 = vstv %s3064
      %v3225 = vmul.f32 %v3224, %v3221
      %v3226 = vadd.f32 %v3065, %v3225
      %s3227 = sadd.f32 %s2981, %s3064
      %3228 = vmatprep.subr.mxu0 0.0
      %3229 = vmatpush1.msra.mxu0 %v67
      %3230 = vmatprep.subr.mxu0 0.0
      %3231 = vmatpush1.msra.mxu0 %v66
      %3232 = vmatprep.subr.mxu0 0.0
      %3233 = vmatpush1.msra.mxu0 %v65
      %3234 = vmatprep.subr.mxu0 0.0
      %3235 = vmatpush1.msra.mxu0 %v64
      %3236 = vmatprep.subr.mxu0 0.0
      %3237 = vmatpush1.msra.mxu0 %v63
      %3238 = vmatprep.subr.mxu0 0.0
      %3239 = vmatpush1.msra.mxu0 %v62
      %3240 = vmatprep.subr.mxu0 0.0
      %3241 = vmatpush1.msra.mxu0 %v61
      %3242 = vmatprep.subr.mxu0 0.0
      %3243 = vmatpush1.msra.mxu0 %v60
      %3244 = vmatprep.subr.mxu0 0.0
      %3245 = vmatpush1.msra.mxu0 %v59
      %3246 = vmatprep.subr.mxu0 0.0
      %3247 = vmatpush1.msra.mxu0 %v58
      %3248 = vmatprep.subr.mxu0 0.0
      %3249 = vmatpush1.msra.mxu0 %v57
      %3250 = vmatprep.subr.mxu0 0.0
      %3251 = vmatpush1.msra.mxu0 %v56
      %3252 = vmatprep.subr.mxu0 0.0
      %3253 = vmatpush1.msra.mxu0 %v55
      %3254 = vmatprep.subr.mxu0 0.0
      %3255 = vmatpush1.msra.mxu0 %v54
      %3256 = vmatprep.subr.mxu0 0.0
      %3257 = vmatpush1.msra.mxu0 %v53
      %3258 = vmatprep.subr.mxu0 0.0
      %3259 = vmatpush1.msra.mxu0 %v52
      %3260 = vmatprep.subr.mxu0 0.0
      %3261 = vmatpush2.msra.mxu0 0.0
      %3262 = vmatprep.subr.mxu0 0.0
      %3263 = vmatpush2.msra.mxu0 0.0
      %3264 = vmatprep.subr.mxu0 0.0
      %3265 = vmatpush2.msra.mxu0 0.0
      %3266 = vmatprep.subr.mxu0 0.0
      %3267 = vmatpush2.msra.mxu0 0.0
      %3268 = vmatprep.subr.mxu0 0.0
      %3269 = vmatpush2.msra.mxu0 0.0
      %3270 = vmatprep.subr.mxu0 0.0
      %3271 = vmatpush2.msra.mxu0 0.0
      %3272 = vmatprep.subr.mxu0 0.0
      %3273 = vmatpush2.msra.mxu0 0.0
      %3274 = vmatprep.subr.mxu0 0.0
      %3275 = vmatpush2.msra.mxu0 0.0
      %3276 = vmatprep.subr.mxu0 0.0
      %3277 = vmatpush2.msra.mxu0 0.0
      %3278 = vmatprep.subr.mxu0 0.0
      %3279 = vmatpush2.msra.mxu0 0.0
      %3280 = vmatprep.subr.mxu0 0.0
      %3281 = vmatpush2.msra.mxu0 0.0
      %3282 = vmatprep.subr.mxu0 0.0
      %3283 = vmatpush2.msra.mxu0 0.0
      %3284 = vmatprep.subr.mxu0 0.0
      %3285 = vmatpush2.msra.mxu0 0.0
      %3286 = vmatprep.subr.mxu0 0.0
      %3287 = vmatpush2.msra.mxu0 0.0
      %3288 = vmatprep.subr.mxu0 0.0
      %3289 = vmatpush2.msra.mxu0 0.0
      %3290 = vmatprep.subr.mxu0 0.0
      %3291 = vmatpush2.msra.mxu0 0.0
      %3292 = vmatprep.mubr.f32.mxu0 0.0
      %3293 = vmatmul.mubr.f32.gmra.mxu0 %v3226
      %v3294 = vpop.f32.mrf.mxu0
      %v3295 = vadd.f32 %v3058, %v3294
      %v3296 = vpop.f32.mrf.mxu0
      %3297 = vdwg.mxu0
      %v3298 = vstv %s3227
      %v3299 = vmul.f32 %v3298, %v84
      %v3301 = vlaneseq
      %v3302 = vshrl.u32 %v3301, 7
      %v3303 = vsub.s32 0, %v3302
      %v3304 = vrot.slane %v3299, %v3303
      %v3306 = vadd.f32 %v3295, %v3304
      %v3307 = vtanh.pop %v3306
      %3308 = vmatprep.subr.mxu0 0.0
      %3309 = vmatpush1.msra.mxu0 %v101
      %3310 = vmatprep.subr.mxu0 0.0
      %3311 = vmatpush1.msra.mxu0 %v100
      %3312 = vmatprep.subr.mxu0 0.0
      %3313 = vmatpush1.msra.mxu0 %v99
      %3314 = vmatprep.subr.mxu0 0.0
      %3315 = vmatpush1.msra.mxu0 %v98
      %3316 = vmatprep.subr.mxu0 0.0
      %3317 = vmatpush1.msra.mxu0 %v97
      %3318 = vmatprep.subr.mxu0 0.0
      %3319 = vmatpush1.msra.mxu0 %v96
      %3320 = vmatprep.subr.mxu0 0.0
      %3321 = vmatpush1.msra.mxu0 %v95
      %3322 = vmatprep.subr.mxu0 0.0
      %3323 = vmatpush1.msra.mxu0 %v94
      %3324 = vmatprep.subr.mxu0 0.0
      %3325 = vmatpush1.msra.mxu0 %v93
      %3326 = vmatprep.subr.mxu0 0.0
      %3327 = vmatpush1.msra.mxu0 %v92
      %3328 = vmatprep.subr.mxu0 0.0
      %3329 = vmatpush1.msra.mxu0 %v91
      %3330 = vmatprep.subr.mxu0 0.0
      %3331 = vmatpush1.msra.mxu0 %v90
      %3332 = vmatprep.subr.mxu0 0.0
      %3333 = vmatpush1.msra.mxu0 %v89
      %3334 = vmatprep.subr.mxu0 0.0
      %3335 = vmatpush1.msra.mxu0 %v88
      %3336 = vmatprep.subr.mxu0 0.0
      %3337 = vmatpush1.msra.mxu0 %v87
      %3338 = vmatprep.subr.mxu0 0.0
      %3339 = vmatpush1.msra.mxu0 %v86
      %3340 = vmatprep.subr.mxu0 0.0
      %3341 = vmatpush2.msra.mxu0 0.0
      %3342 = vmatprep.subr.mxu0 0.0
      %3343 = vmatpush2.msra.mxu0 0.0
      %3344 = vmatprep.subr.mxu0 0.0
      %3345 = vmatpush2.msra.mxu0 0.0
      %3346 = vmatprep.subr.mxu0 0.0
      %3347 = vmatpush2.msra.mxu0 0.0
      %3348 = vmatprep.subr.mxu0 0.0
      %3349 = vmatpush2.msra.mxu0 0.0
      %3350 = vmatprep.subr.mxu0 0.0
      %3351 = vmatpush2.msra.mxu0 0.0
      %3352 = vmatprep.subr.mxu0 0.0
      %3353 = vmatpush2.msra.mxu0 0.0
      %3354 = vmatprep.subr.mxu0 0.0
      %3355 = vmatpush2.msra.mxu0 0.0
      %3356 = vmatprep.subr.mxu0 0.0
      %3357 = vmatpush2.msra.mxu0 0.0
      %3358 = vmatprep.subr.mxu0 0.0
      %3359 = vmatpush2.msra.mxu0 0.0
      %3360 = vmatprep.subr.mxu0 0.0
      %3361 = vmatpush2.msra.mxu0 0.0
      %3362 = vmatprep.subr.mxu0 0.0
      %3363 = vmatpush2.msra.mxu0 0.0
      %3364 = vmatprep.subr.mxu0 0.0
      %3365 = vmatpush2.msra.mxu0 0.0
      %3366 = vmatprep.subr.mxu0 0.0
      %3367 = vmatpush2.msra.mxu0 0.0
      %3368 = vmatprep.subr.mxu0 0.0
      %3369 = vmatpush2.msra.mxu0 0.0
      %3370 = vmatprep.subr.mxu0 0.0
      %3371 = vmatpush2.msra.mxu0 0.0
      %3372 = vmatprep.mubr.f32.mxu0 0.0
      %3373 = vmatmul.mubr.f32.gmra.mxu0 %v3307
      %v3374 = vpop.f32.mrf.mxu0
      %v3375 = vadd.f32 %v3152, %v3374
      %v3376 = vpop.f32.mrf.mxu0
      %3377 = vdwg.mxu0
      %v3378 = vmul.f32 %v3224, %v3375
      %v3379 = vadd.f32 %v3226, %v3378
      %s3380 = smul.f32 %s3064, 2.0
      %s3381 = sadd.f32 %s2981, %s3380
      %3382 = vmatprep.subr.mxu0 0.0
      %3383 = vmatpush1.msra.mxu0 %v67
      %3384 = vmatprep.subr.mxu0 0.0
      %3385 = vmatpush1.msra.mxu0 %v66
      %3386 = vmatprep.subr.mxu0 0.0
      %3387 = vmatpush1.msra.mxu0 %v65
      %3388 = vmatprep.subr.mxu0 0.0
      %3389 = vmatpush1.msra.mxu0 %v64
      %3390 = vmatprep.subr.mxu0 0.0
      %3391 = vmatpush1.msra.mxu0 %v63
      %3392 = vmatprep.subr.mxu0 0.0
      %3393 = vmatpush1.msra.mxu0 %v62
      %3394 = vmatprep.subr.mxu0 0.0
      %3395 = vmatpush1.msra.mxu0 %v61
      %3396 = vmatprep.subr.mxu0 0.0
      %3397 = vmatpush1.msra.mxu0 %v60
      %3398 = vmatprep.subr.mxu0 0.0
      %3399 = vmatpush1.msra.mxu0 %v59
      %3400 = vmatprep.subr.mxu0 0.0
      %3401 = vmatpush1.msra.mxu0 %v58
      %3402 = vmatprep.subr.mxu0 0.0
      %3403 = vmatpush1.msra.mxu0 %v57
      %3404 = vmatprep.subr.mxu0 0.0
      %3405 = vmatpush1.msra.mxu0 %v56
      %3406 = vmatprep.subr.mxu0 0.0
      %3407 = vmatpush1.msra.mxu0 %v55
      %3408 = vmatprep.subr.mxu0 0.0
      %3409 = vmatpush1.msra.mxu0 %v54
      %3410 = vmatprep.subr.mxu0 0.0
      %3411 = vmatpush1.msra.mxu0 %v53
      %3412 = vmatprep.subr.mxu0 0.0
      %3413 = vmatpush1.msra.mxu0 %v52
      %3414 = vmatprep.subr.mxu0 0.0
      %3415 = vmatpush2.msra.mxu0 0.0
      %3416 = vmatprep.subr.mxu0 0.0
      %3417 = vmatpush2.msra.mxu0 0.0
      %3418 = vmatprep.subr.mxu0 0.0
      %3419 = vmatpush2.msra.mxu0 0.0
      %3420 = vmatprep.subr.mxu0 0.0
      %3421 = vmatpush2.msra.mxu0 0.0
      %3422 = vmatprep.subr.mxu0 0.0
      %3423 = vmatpush2.msra.mxu0 0.0
      %3424 = vmatprep.subr.mxu0 0.0
      %3425 = vmatpush2.msra.mxu0 0.0
      %3426 = vmatprep.subr.mxu0 0.0
      %3427 = vmatpush2.msra.mxu0 0.0
      %3428 = vmatprep.subr.mxu0 0.0
      %3429 = vmatpush2.msra.mxu0 0.0
      %3430 = vmatprep.subr.mxu0 0.0
      %3431 = vmatpush2.msra.mxu0 0.0
      %3432 = vmatprep.subr.mxu0 0.0
      %3433 = vmatpush2.msra.mxu0 0.0
      %3434 = vmatprep.subr.mxu0 0.0
      %3435 = vmatpush2.msra.mxu0 0.0
      %3436 = vmatprep.subr.mxu0 0.0
      %3437 = vmatpush2.msra.mxu0 0.0
      %3438 = vmatprep.subr.mxu0 0.0
      %3439 = vmatpush2.msra.mxu0 0.0
      %3440 = vmatprep.subr.mxu0 0.0
      %3441 = vmatpush2.msra.mxu0 0.0
      %3442 = vmatprep.subr.mxu0 0.0
      %3443 = vmatpush2.msra.mxu0 0.0
      %3444 = vmatprep.subr.mxu0 0.0
      %3445 = vmatpush2.msra.mxu0 0.0
      %3446 = vmatprep.mubr.f32.mxu0 0.0
      %3447 = vmatmul.mubr.f32.gmra.mxu0 %v3379
      %v3448 = vpop.f32.mrf.mxu0
      %v3449 = vadd.f32 %v3058, %v3448
      %v3450 = vpop.f32.mrf.mxu0
      %3451 = vdwg.mxu0
      %v3452 = vstv %s3381
      %v3453 = vmul.f32 %v3452, %v84
      %v3455 = vlaneseq
      %v3456 = vshrl.u32 %v3455, 7
      %v3457 = vsub.s32 0, %v3456
      %v3458 = vrot.slane %v3453, %v3457
      %v3460 = vadd.f32 %v3449, %v3458
      %v3461 = vtanh.pop %v3460
      %3462 = vmatprep.subr.mxu0 0.0
      %3463 = vmatpush1.msra.mxu0 %v101
      %3464 = vmatprep.subr.mxu0 0.0
      %3465 = vmatpush1.msra.mxu0 %v100
      %3466 = vmatprep.subr.mxu0 0.0
      %3467 = vmatpush1.msra.mxu0 %v99
      %3468 = vmatprep.subr.mxu0 0.0
      %3469 = vmatpush1.msra.mxu0 %v98
      %3470 = vmatprep.subr.mxu0 0.0
      %3471 = vmatpush1.msra.mxu0 %v97
      %3472 = vmatprep.subr.mxu0 0.0
      %3473 = vmatpush1.msra.mxu0 %v96
      %3474 = vmatprep.subr.mxu0 0.0
      %3475 = vmatpush1.msra.mxu0 %v95
      %3476 = vmatprep.subr.mxu0 0.0
      %3477 = vmatpush1.msra.mxu0 %v94
      %3478 = vmatprep.subr.mxu0 0.0
      %3479 = vmatpush1.msra.mxu0 %v93
      %3480 = vmatprep.subr.mxu0 0.0
      %3481 = vmatpush1.msra.mxu0 %v92
      %3482 = vmatprep.subr.mxu0 0.0
      %3483 = vmatpush1.msra.mxu0 %v91
      %3484 = vmatprep.subr.mxu0 0.0
      %3485 = vmatpush1.msra.mxu0 %v90
      %3486 = vmatprep.subr.mxu0 0.0
      %3487 = vmatpush1.msra.mxu0 %v89
      %3488 = vmatprep.subr.mxu0 0.0
      %3489 = vmatpush1.msra.mxu0 %v88
      %3490 = vmatprep.subr.mxu0 0.0
      %3491 = vmatpush1.msra.mxu0 %v87
      %3492 = vmatprep.subr.mxu0 0.0
      %3493 = vmatpush1.msra.mxu0 %v86
      %3494 = vmatprep.subr.mxu0 0.0
      %3495 = vmatpush2.msra.mxu0 0.0
      %3496 = vmatprep.subr.mxu0 0.0
      %3497 = vmatpush2.msra.mxu0 0.0
      %3498 = vmatprep.subr.mxu0 0.0
      %3499 = vmatpush2.msra.mxu0 0.0
      %3500 = vmatprep.subr.mxu0 0.0
      %3501 = vmatpush2.msra.mxu0 0.0
      %3502 = vmatprep.subr.mxu0 0.0
      %3503 = vmatpush2.msra.mxu0 0.0
      %3504 = vmatprep.subr.mxu0 0.0
      %3505 = vmatpush2.msra.mxu0 0.0
      %3506 = vmatprep.subr.mxu0 0.0
      %3507 = vmatpush2.msra.mxu0 0.0
      %3508 = vmatprep.subr.mxu0 0.0
      %3509 = vmatpush2.msra.mxu0 0.0
      %3510 = vmatprep.subr.mxu0 0.0
      %3511 = vmatpush2.msra.mxu0 0.0
      %3512 = vmatprep.subr.mxu0 0.0
      %3513 = vmatpush2.msra.mxu0 0.0
      %3514 = vmatprep.subr.mxu0 0.0
      %3515 = vmatpush2.msra.mxu0 0.0
      %3516 = vmatprep.subr.mxu0 0.0
      %3517 = vmatpush2.msra.mxu0 0.0
      %3518 = vmatprep.subr.mxu0 0.0
      %3519 = vmatpush2.msra.mxu0 0.0
      %3520 = vmatprep.subr.mxu0 0.0
      %3521 = vmatpush2.msra.mxu0 0.0
      %3522 = vmatprep.subr.mxu0 0.0
      %3523 = vmatpush2.msra.mxu0 0.0
      %3524 = vmatprep.subr.mxu0 0.0
      %3525 = vmatpush2.msra.mxu0 0.0
      %3526 = vmatprep.mubr.f32.mxu0 0.0
      %3527 = vmatmul.mubr.f32.gmra.mxu0 %v3461
      %v3528 = vpop.f32.mrf.mxu0
      %v3529 = vadd.f32 %v3152, %v3528
      %v3530 = vpop.f32.mrf.mxu0
      %3531 = vdwg.mxu0
      %v3532 = vmul.f32 %v3224, %v3529
      %v3533 = vadd.f32 %v3379, %v3532
      %s3534 = smul.f32 %s3064, 3.0
      %s3535 = sadd.f32 %s2981, %s3534
      %3536 = vmatprep.subr.mxu0 0.0
      %3537 = vmatpush1.msra.mxu0 %v67
      %3538 = vmatprep.subr.mxu0 0.0
      %3539 = vmatpush1.msra.mxu0 %v66
      %3540 = vmatprep.subr.mxu0 0.0
      %3541 = vmatpush1.msra.mxu0 %v65
      %3542 = vmatprep.subr.mxu0 0.0
      %3543 = vmatpush1.msra.mxu0 %v64
      %3544 = vmatprep.subr.mxu0 0.0
      %3545 = vmatpush1.msra.mxu0 %v63
      %3546 = vmatprep.subr.mxu0 0.0
      %3547 = vmatpush1.msra.mxu0 %v62
      %3548 = vmatprep.subr.mxu0 0.0
      %3549 = vmatpush1.msra.mxu0 %v61
      %3550 = vmatprep.subr.mxu0 0.0
      %3551 = vmatpush1.msra.mxu0 %v60
      %3552 = vmatprep.subr.mxu0 0.0
      %3553 = vmatpush1.msra.mxu0 %v59
      %3554 = vmatprep.subr.mxu0 0.0
      %3555 = vmatpush1.msra.mxu0 %v58
      %3556 = vmatprep.subr.mxu0 0.0
      %3557 = vmatpush1.msra.mxu0 %v57
      %3558 = vmatprep.subr.mxu0 0.0
      %3559 = vmatpush1.msra.mxu0 %v56
      %3560 = vmatprep.subr.mxu0 0.0
      %3561 = vmatpush1.msra.mxu0 %v55
      %3562 = vmatprep.subr.mxu0 0.0
      %3563 = vmatpush1.msra.mxu0 %v54
      %3564 = vmatprep.subr.mxu0 0.0
      %3565 = vmatpush1.msra.mxu0 %v53
      %3566 = vmatprep.subr.mxu0 0.0
      %3567 = vmatpush1.msra.mxu0 %v52
      %3568 = vmatprep.subr.mxu0 0.0
      %3569 = vmatpush2.msra.mxu0 0.0
      %3570 = vmatprep.subr.mxu0 0.0
      %3571 = vmatpush2.msra.mxu0 0.0
      %3572 = vmatprep.subr.mxu0 0.0
      %3573 = vmatpush2.msra.mxu0 0.0
      %3574 = vmatprep.subr.mxu0 0.0
      %3575 = vmatpush2.msra.mxu0 0.0
      %3576 = vmatprep.subr.mxu0 0.0
      %3577 = vmatpush2.msra.mxu0 0.0
      %3578 = vmatprep.subr.mxu0 0.0
      %3579 = vmatpush2.msra.mxu0 0.0
      %3580 = vmatprep.subr.mxu0 0.0
      %3581 = vmatpush2.msra.mxu0 0.0
      %3582 = vmatprep.subr.mxu0 0.0
      %3583 = vmatpush2.msra.mxu0 0.0
      %3584 = vmatprep.subr.mxu0 0.0
      %3585 = vmatpush2.msra.mxu0 0.0
      %3586 = vmatprep.subr.mxu0 0.0
      %3587 = vmatpush2.msra.mxu0 0.0
      %3588 = vmatprep.subr.mxu0 0.0
      %3589 = vmatpush2.msra.mxu0 0.0
      %3590 = vmatprep.subr.mxu0 0.0
      %3591 = vmatpush2.msra.mxu0 0.0
      %3592 = vmatprep.subr.mxu0 0.0
      %3593 = vmatpush2.msra.mxu0 0.0
      %3594 = vmatprep.subr.mxu0 0.0
      %3595 = vmatpush2.msra.mxu0 0.0
      %3596 = vmatprep.subr.mxu0 0.0
      %3597 = vmatpush2.msra.mxu0 0.0
      %3598 = vmatprep.subr.mxu0 0.0
      %3599 = vmatpush2.msra.mxu0 0.0
      %3600 = vmatprep.mubr.f32.mxu0 0.0
      %3601 = vmatmul.mubr.f32.gmra.mxu0 %v3533
      %v3602 = vpop.f32.mrf.mxu0
      %v3603 = vadd.f32 %v3058, %v3602
      %v3604 = vpop.f32.mrf.mxu0
      %3605 = vdwg.mxu0
      %v3606 = vstv %s3535
      %v3607 = vmul.f32 %v3606, %v84
      %v3609 = vlaneseq
      %v3610 = vshrl.u32 %v3609, 7
      %v3611 = vsub.s32 0, %v3610
      %v3612 = vrot.slane %v3607, %v3611
      %v3614 = vadd.f32 %v3603, %v3612
      %v3615 = vtanh.pop %v3614
      %3616 = vmatprep.subr.mxu0 0.0
      %3617 = vmatpush1.msra.mxu0 %v101
      %3618 = vmatprep.subr.mxu0 0.0
      %3619 = vmatpush1.msra.mxu0 %v100
      %3620 = vmatprep.subr.mxu0 0.0
      %3621 = vmatpush1.msra.mxu0 %v99
      %3622 = vmatprep.subr.mxu0 0.0
      %3623 = vmatpush1.msra.mxu0 %v98
      %3624 = vmatprep.subr.mxu0 0.0
      %3625 = vmatpush1.msra.mxu0 %v97
      %3626 = vmatprep.subr.mxu0 0.0
      %3627 = vmatpush1.msra.mxu0 %v96
      %3628 = vmatprep.subr.mxu0 0.0
      %3629 = vmatpush1.msra.mxu0 %v95
      %3630 = vmatprep.subr.mxu0 0.0
      %3631 = vmatpush1.msra.mxu0 %v94
      %3632 = vmatprep.subr.mxu0 0.0
      %3633 = vmatpush1.msra.mxu0 %v93
      %3634 = vmatprep.subr.mxu0 0.0
      %3635 = vmatpush1.msra.mxu0 %v92
      %3636 = vmatprep.subr.mxu0 0.0
      %3637 = vmatpush1.msra.mxu0 %v91
      %3638 = vmatprep.subr.mxu0 0.0
      %3639 = vmatpush1.msra.mxu0 %v90
      %3640 = vmatprep.subr.mxu0 0.0
      %3641 = vmatpush1.msra.mxu0 %v89
      %3642 = vmatprep.subr.mxu0 0.0
      %3643 = vmatpush1.msra.mxu0 %v88
      %3644 = vmatprep.subr.mxu0 0.0
      %3645 = vmatpush1.msra.mxu0 %v87
      %3646 = vmatprep.subr.mxu0 0.0
      %3647 = vmatpush1.msra.mxu0 %v86
      %3648 = vmatprep.subr.mxu0 0.0
      %3649 = vmatpush2.msra.mxu0 0.0
      %3650 = vmatprep.subr.mxu0 0.0
      %3651 = vmatpush2.msra.mxu0 0.0
      %3652 = vmatprep.subr.mxu0 0.0
      %3653 = vmatpush2.msra.mxu0 0.0
      %3654 = vmatprep.subr.mxu0 0.0
      %3655 = vmatpush2.msra.mxu0 0.0
      %3656 = vmatprep.subr.mxu0 0.0
      %3657 = vmatpush2.msra.mxu0 0.0
      %3658 = vmatprep.subr.mxu0 0.0
      %3659 = vmatpush2.msra.mxu0 0.0
      %3660 = vmatprep.subr.mxu0 0.0
      %3661 = vmatpush2.msra.mxu0 0.0
      %3662 = vmatprep.subr.mxu0 0.0
      %3663 = vmatpush2.msra.mxu0 0.0
      %3664 = vmatprep.subr.mxu0 0.0
      %3665 = vmatpush2.msra.mxu0 0.0
      %3666 = vmatprep.subr.mxu0 0.0
      %3667 = vmatpush2.msra.mxu0 0.0
      %3668 = vmatprep.subr.mxu0 0.0
      %3669 = vmatpush2.msra.mxu0 0.0
      %3670 = vmatprep.subr.mxu0 0.0
      %3671 = vmatpush2.msra.mxu0 0.0
      %3672 = vmatprep.subr.mxu0 0.0
      %3673 = vmatpush2.msra.mxu0 0.0
      %3674 = vmatprep.subr.mxu0 0.0
      %3675 = vmatpush2.msra.mxu0 0.0
      %3676 = vmatprep.subr.mxu0 0.0
      %3677 = vmatpush2.msra.mxu0 0.0
      %3678 = vmatprep.subr.mxu0 0.0
      %3679 = vmatpush2.msra.mxu0 0.0
      %3680 = vmatprep.mubr.f32.mxu0 0.0
      %3681 = vmatmul.mubr.f32.gmra.mxu0 %v3615
      %v3682 = vpop.f32.mrf.mxu0
      %v3683 = vadd.f32 %v3152, %v3682
      %v3684 = vpop.f32.mrf.mxu0
      %3685 = vdwg.mxu0
      %v3686 = vmul.f32 %v3224, %v3683
      %v3687 = vadd.f32 %v3533, %v3686
      %3688 = vst [vmem:[#allocation2] sm:$0xff] %v3687
    $region65: #{neural_ode_forward.1} parent=1 // pred_fallthru
      _
    %v3689 = vld [vmem:[#allocation2] sm:$0xff]
    %s3690 = scalar_lea.vmem [#allocation6], 32
    %3691 = vst [vmem:[%s3690] sm:$0xff] %v3689
    %s3692 = sadd.s32 %s103, 5
    %p3693 = scmp.gt.s32.totalorder %s3692, 0
    %p3694 = scmp.lt.s32.totalorder %s3692, 8
    %p3695 = pnand %p3693, %p3694
    %p3696 = pneg %p3695
    // Predicated region
    $region66: #{neural_ode_forward.1} parent=1 // pred_check
      _
    $region67: #{neural_ode_forward.1} parent=1 // pred_check_branch
      %3698 = sbr.rel (%p3695) target = $region69
    $region68: #{neural_ode_forward.1} parent=1 // pred_region
      %s3699 = sld [smem:[#allocation3 + %s2974]]
      %s3700 = sld [smem:[#allocation3 + %s3692]]
      %s3701 = scalar_lea.vmem %s2, 40
      %v3702 = vld [vmem:[%s3701] sm:$0xff]
      %v3704 = vlaneseq
      %v3705 = vshrl.u32 %v3704, 7
      %v3706 = vsub.s32 0, %v3705
      %v3707 = vrot.slane %v85, %v3706
      %3709 = vmatprep.subr.mxu0 0.0
      %3710 = vmatpush1.msra.mxu0 %v83
      %3711 = vmatprep.subr.mxu0 0.0
      %3712 = vmatpush1.msra.mxu0 %v82
      %3713 = vmatprep.subr.mxu0 0.0
      %3714 = vmatpush1.msra.mxu0 %v81
      %3715 = vmatprep.subr.mxu0 0.0
      %3716 = vmatpush1.msra.mxu0 %v80
      %3717 = vmatprep.subr.mxu0 0.0
      %3718 = vmatpush1.msra.mxu0 %v79
      %3719 = vmatprep.subr.mxu0 0.0
      %3720 = vmatpush1.msra.mxu0 %v78
      %3721 = vmatprep.subr.mxu0 0.0
      %3722 = vmatpush1.msra.mxu0 %v77
      %3723 = vmatprep.subr.mxu0 0.0
      %3724 = vmatpush1.msra.mxu0 %v76
      %3725 = vmatprep.subr.mxu0 0.0
      %3726 = vmatpush1.msra.mxu0 %v75
      %3727 = vmatprep.subr.mxu0 0.0
      %3728 = vmatpush1.msra.mxu0 %v74
      %3729 = vmatprep.subr.mxu0 0.0
      %3730 = vmatpush1.msra.mxu0 %v73
      %3731 = vmatprep.subr.mxu0 0.0
      %3732 = vmatpush1.msra.mxu0 %v72
      %3733 = vmatprep.subr.mxu0 0.0
      %3734 = vmatpush1.msra.mxu0 %v71
      %3735 = vmatprep.subr.mxu0 0.0
      %3736 = vmatpush1.msra.mxu0 %v70
      %3737 = vmatprep.subr.mxu0 0.0
      %3738 = vmatpush1.msra.mxu0 %v69
      %3739 = vmatprep.subr.mxu0 0.0
      %3740 = vmatpush1.msra.mxu0 %v68
      %3741 = vmatprep.subr.mxu0 0.0
      %3742 = vmatpush2.msra.mxu0 0.0
      %3743 = vmatprep.subr.mxu0 0.0
      %3744 = vmatpush2.msra.mxu0 0.0
      %3745 = vmatprep.subr.mxu0 0.0
      %3746 = vmatpush2.msra.mxu0 0.0
      %3747 = vmatprep.subr.mxu0 0.0
      %3748 = vmatpush2.msra.mxu0 0.0
      %3749 = vmatprep.subr.mxu0 0.0
      %3750 = vmatpush2.msra.mxu0 0.0
      %3751 = vmatprep.subr.mxu0 0.0
      %3752 = vmatpush2.msra.mxu0 0.0
      %3753 = vmatprep.subr.mxu0 0.0
      %3754 = vmatpush2.msra.mxu0 0.0
      %3755 = vmatprep.subr.mxu0 0.0
      %3756 = vmatpush2.msra.mxu0 0.0
      %3757 = vmatprep.subr.mxu0 0.0
      %3758 = vmatpush2.msra.mxu0 0.0
      %3759 = vmatprep.subr.mxu0 0.0
      %3760 = vmatpush2.msra.mxu0 0.0
      %3761 = vmatprep.subr.mxu0 0.0
      %3762 = vmatpush2.msra.mxu0 0.0
      %3763 = vmatprep.subr.mxu0 0.0
      %3764 = vmatpush2.msra.mxu0 0.0
      %3765 = vmatprep.subr.mxu0 0.0
      %3766 = vmatpush2.msra.mxu0 0.0
      %3767 = vmatprep.subr.mxu0 0.0
      %3768 = vmatpush2.msra.mxu0 0.0
      %3769 = vmatprep.subr.mxu0 0.0
      %3770 = vmatpush2.msra.mxu0 0.0
      %3771 = vmatprep.subr.mxu0 0.0
      %3772 = vmatpush2.msra.mxu0 0.0
      %3773 = vmatprep.mubr.f32.mxu0 0.0
      %3774 = vmatmul.mubr.f32.gmra.mxu0 %v3702
      %v3775 = vpop.f32.mrf.mxu0
      %v3776 = vadd.f32 %v3707, %v3775
      %v3777 = vpop.f32.mrf.mxu0
      %3778 = vdwg.mxu0
      %s3779 = ssub.f32 %s3700, %s3699
      %v3780 = vrcp.pop 4.0
      %s3781 = vtos %v3780
      %s3782 = smul.f32 %s3779, %s3781
      %v3783 = vld [vmem:[#allocation2] sm:$0xff]
      %s3784 = smul.f32 %s3782, 0.0
      %s3785 = sadd.f32 %s3699, %s3784
      %3786 = vmatprep.subr.mxu0 0.0
      %3787 = vmatpush1.msra.mxu0 %v67
      %3788 = vmatprep.subr.mxu0 0.0
      %3789 = vmatpush1.msra.mxu0 %v66
      %3790 = vmatprep.subr.mxu0 0.0
      %3791 = vmatpush1.msra.mxu0 %v65
      %3792 = vmatprep.subr.mxu0 0.0
      %3793 = vmatpush1.msra.mxu0 %v64
      %3794 = vmatprep.subr.mxu0 0.0
      %3795 = vmatpush1.msra.mxu0 %v63
      %3796 = vmatprep.subr.mxu0 0.0
      %3797 = vmatpush1.msra.mxu0 %v62
      %3798 = vmatprep.subr.mxu0 0.0
      %3799 = vmatpush1.msra.mxu0 %v61
      %3800 = vmatprep.subr.mxu0 0.0
      %3801 = vmatpush1.msra.mxu0 %v60
      %3802 = vmatprep.subr.mxu0 0.0
      %3803 = vmatpush1.msra.mxu0 %v59
      %3804 = vmatprep.subr.mxu0 0.0
      %3805 = vmatpush1.msra.mxu0 %v58
      %3806 = vmatprep.subr.mxu0 0.0
      %3807 = vmatpush1.msra.mxu0 %v57
      %3808 = vmatprep.subr.mxu0 0.0
      %3809 = vmatpush1.msra.mxu0 %v56
      %3810 = vmatprep.subr.mxu0 0.0
      %3811 = vmatpush1.msra.mxu0 %v55
      %3812 = vmatprep.subr.mxu0 0.0
      %3813 = vmatpush1.msra.mxu0 %v54
      %3814 = vmatprep.subr.mxu0 0.0
      %3815 = vmatpush1.msra.mxu0 %v53
      %3816 = vmatprep.subr.mxu0 0.0
      %3817 = vmatpush1.msra.mxu0 %v52
      %3818 = vmatprep.subr.mxu0 0.0
      %3819 = vmatpush2.msra.mxu0 0.0
      %3820 = vmatprep.subr.mxu0 0.0
      %3821 = vmatpush2.msra.mxu0 0.0
      %3822 = vmatprep.subr.mxu0 0.0
      %3823 = vmatpush2.msra.mxu0 0.0
      %3824 = vmatprep.subr.mxu0 0.0
      %3825 = vmatpush2.msra.mxu0 0.0
      %3826 = vmatprep.subr.mxu0 0.0
      %3827 = vmatpush2.msra.mxu0 0.0
      %3828 = vmatprep.subr.mxu0 0.0
      %3829 = vmatpush2.msra.mxu0 0.0
      %3830 = vmatprep.subr.mxu0 0.0
      %3831 = vmatpush2.msra.mxu0 0.0
      %3832 = vmatprep.subr.mxu0 0.0
      %3833 = vmatpush2.msra.mxu0 0.0
      %3834 = vmatprep.subr.mxu0 0.0
      %3835 = vmatpush2.msra.mxu0 0.0
      %3836 = vmatprep.subr.mxu0 0.0
      %3837 = vmatpush2.msra.mxu0 0.0
      %3838 = vmatprep.subr.mxu0 0.0
      %3839 = vmatpush2.msra.mxu0 0.0
      %3840 = vmatprep.subr.mxu0 0.0
      %3841 = vmatpush2.msra.mxu0 0.0
      %3842 = vmatprep.subr.mxu0 0.0
      %3843 = vmatpush2.msra.mxu0 0.0
      %3844 = vmatprep.subr.mxu0 0.0
      %3845 = vmatpush2.msra.mxu0 0.0
      %3846 = vmatprep.subr.mxu0 0.0
      %3847 = vmatpush2.msra.mxu0 0.0
      %3848 = vmatprep.subr.mxu0 0.0
      %3849 = vmatpush2.msra.mxu0 0.0
      %3850 = vmatprep.mubr.f32.mxu0 0.0
      %3851 = vmatmul.mubr.f32.gmra.mxu0 %v3783
      %v3852 = vpop.f32.mrf.mxu0
      %v3853 = vadd.f32 %v3776, %v3852
      %v3854 = vpop.f32.mrf.mxu0
      %3855 = vdwg.mxu0
      %v3856 = vstv %s3785
      %v3857 = vmul.f32 %v3856, %v84
      %v3859 = vlaneseq
      %v3860 = vshrl.u32 %v3859, 7
      %v3861 = vsub.s32 0, %v3860
      %v3862 = vrot.slane %v3857, %v3861
      %v3864 = vadd.f32 %v3853, %v3862
      %v3865 = vtanh.pop %v3864
      %v3867 = vlaneseq
      %v3868 = vshrl.u32 %v3867, 7
      %v3869 = vsub.s32 0, %v3868
      %v3870 = vrot.slane %v102, %v3869
      %3872 = vmatprep.subr.mxu0 0.0
      %3873 = vmatpush1.msra.mxu0 %v101
      %3874 = vmatprep.subr.mxu0 0.0
      %3875 = vmatpush1.msra.mxu0 %v100
      %3876 = vmatprep.subr.mxu0 0.0
      %3877 = vmatpush1.msra.mxu0 %v99
      %3878 = vmatprep.subr.mxu0 0.0
      %3879 = vmatpush1.msra.mxu0 %v98
      %3880 = vmatprep.subr.mxu0 0.0
      %3881 = vmatpush1.msra.mxu0 %v97
      %3882 = vmatprep.subr.mxu0 0.0
      %3883 = vmatpush1.msra.mxu0 %v96
      %3884 = vmatprep.subr.mxu0 0.0
      %3885 = vmatpush1.msra.mxu0 %v95
      %3886 = vmatprep.subr.mxu0 0.0
      %3887 = vmatpush1.msra.mxu0 %v94
      %3888 = vmatprep.subr.mxu0 0.0
      %3889 = vmatpush1.msra.mxu0 %v93
      %3890 = vmatprep.subr.mxu0 0.0
      %3891 = vmatpush1.msra.mxu0 %v92
      %3892 = vmatprep.subr.mxu0 0.0
      %3893 = vmatpush1.msra.mxu0 %v91
      %3894 = vmatprep.subr.mxu0 0.0
      %3895 = vmatpush1.msra.mxu0 %v90
      %3896 = vmatprep.subr.mxu0 0.0
      %3897 = vmatpush1.msra.mxu0 %v89
      %3898 = vmatprep.subr.mxu0 0.0
      %3899 = vmatpush1.msra.mxu0 %v88
      %3900 = vmatprep.subr.mxu0 0.0
      %3901 = vmatpush1.msra.mxu0 %v87
      %3902 = vmatprep.subr.mxu0 0.0
      %3903 = vmatpush1.msra.mxu0 %v86
      %3904 = vmatprep.subr.mxu0 0.0
      %3905 = vmatpush2.msra.mxu0 0.0
      %3906 = vmatprep.subr.mxu0 0.0
      %3907 = vmatpush2.msra.mxu0 0.0
      %3908 = vmatprep.subr.mxu0 0.0
      %3909 = vmatpush2.msra.mxu0 0.0
      %3910 = vmatprep.subr.mxu0 0.0
      %3911 = vmatpush2.msra.mxu0 0.0
      %3912 = vmatprep.subr.mxu0 0.0
      %3913 = vmatpush2.msra.mxu0 0.0
      %3914 = vmatprep.subr.mxu0 0.0
      %3915 = vmatpush2.msra.mxu0 0.0
      %3916 = vmatprep.subr.mxu0 0.0
      %3917 = vmatpush2.msra.mxu0 0.0
      %3918 = vmatprep.subr.mxu0 0.0
      %3919 = vmatpush2.msra.mxu0 0.0
      %3920 = vmatprep.subr.mxu0 0.0
      %3921 = vmatpush2.msra.mxu0 0.0
      %3922 = vmatprep.subr.mxu0 0.0
      %3923 = vmatpush2.msra.mxu0 0.0
      %3924 = vmatprep.subr.mxu0 0.0
      %3925 = vmatpush2.msra.mxu0 0.0
      %3926 = vmatprep.subr.mxu0 0.0
      %3927 = vmatpush2.msra.mxu0 0.0
      %3928 = vmatprep.subr.mxu0 0.0
      %3929 = vmatpush2.msra.mxu0 0.0
      %3930 = vmatprep.subr.mxu0 0.0
      %3931 = vmatpush2.msra.mxu0 0.0
      %3932 = vmatprep.subr.mxu0 0.0
      %3933 = vmatpush2.msra.mxu0 0.0
      %3934 = vmatprep.subr.mxu0 0.0
      %3935 = vmatpush2.msra.mxu0 0.0
      %3936 = vmatprep.mubr.f32.mxu0 0.0
      %3937 = vmatmul.mubr.f32.gmra.mxu0 %v3865
      %v3938 = vpop.f32.mrf.mxu0
      %v3939 = vadd.f32 %v3870, %v3938
      %v3940 = vpop.f32.mrf.mxu0
      %3941 = vdwg.mxu0
      %v3942 = vstv %s3782
      %v3943 = vmul.f32 %v3942, %v3939
      %v3944 = vadd.f32 %v3783, %v3943
      %s3945 = sadd.f32 %s3699, %s3782
      %3946 = vmatprep.subr.mxu0 0.0
      %3947 = vmatpush1.msra.mxu0 %v67
      %3948 = vmatprep.subr.mxu0 0.0
      %3949 = vmatpush1.msra.mxu0 %v66
      %3950 = vmatprep.subr.mxu0 0.0
      %3951 = vmatpush1.msra.mxu0 %v65
      %3952 = vmatprep.subr.mxu0 0.0
      %3953 = vmatpush1.msra.mxu0 %v64
      %3954 = vmatprep.subr.mxu0 0.0
      %3955 = vmatpush1.msra.mxu0 %v63
      %3956 = vmatprep.subr.mxu0 0.0
      %3957 = vmatpush1.msra.mxu0 %v62
      %3958 = vmatprep.subr.mxu0 0.0
      %3959 = vmatpush1.msra.mxu0 %v61
      %3960 = vmatprep.subr.mxu0 0.0
      %3961 = vmatpush1.msra.mxu0 %v60
      %3962 = vmatprep.subr.mxu0 0.0
      %3963 = vmatpush1.msra.mxu0 %v59
      %3964 = vmatprep.subr.mxu0 0.0
      %3965 = vmatpush1.msra.mxu0 %v58
      %3966 = vmatprep.subr.mxu0 0.0
      %3967 = vmatpush1.msra.mxu0 %v57
      %3968 = vmatprep.subr.mxu0 0.0
      %3969 = vmatpush1.msra.mxu0 %v56
      %3970 = vmatprep.subr.mxu0 0.0
      %3971 = vmatpush1.msra.mxu0 %v55
      %3972 = vmatprep.subr.mxu0 0.0
      %3973 = vmatpush1.msra.mxu0 %v54
      %3974 = vmatprep.subr.mxu0 0.0
      %3975 = vmatpush1.msra.mxu0 %v53
      %3976 = vmatprep.subr.mxu0 0.0
      %3977 = vmatpush1.msra.mxu0 %v52
      %3978 = vmatprep.subr.mxu0 0.0
      %3979 = vmatpush2.msra.mxu0 0.0
      %3980 = vmatprep.subr.mxu0 0.0
      %3981 = vmatpush2.msra.mxu0 0.0
      %3982 = vmatprep.subr.mxu0 0.0
      %3983 = vmatpush2.msra.mxu0 0.0
      %3984 = vmatprep.subr.mxu0 0.0
      %3985 = vmatpush2.msra.mxu0 0.0
      %3986 = vmatprep.subr.mxu0 0.0
      %3987 = vmatpush2.msra.mxu0 0.0
      %3988 = vmatprep.subr.mxu0 0.0
      %3989 = vmatpush2.msra.mxu0 0.0
      %3990 = vmatprep.subr.mxu0 0.0
      %3991 = vmatpush2.msra.mxu0 0.0
      %3992 = vmatprep.subr.mxu0 0.0
      %3993 = vmatpush2.msra.mxu0 0.0
      %3994 = vmatprep.subr.mxu0 0.0
      %3995 = vmatpush2.msra.mxu0 0.0
      %3996 = vmatprep.subr.mxu0 0.0
      %3997 = vmatpush2.msra.mxu0 0.0
      %3998 = vmatprep.subr.mxu0 0.0
      %3999 = vmatpush2.msra.mxu0 0.0
      %4000 = vmatprep.subr.mxu0 0.0
      %4001 = vmatpush2.msra.mxu0 0.0
      %4002 = vmatprep.subr.mxu0 0.0
      %4003 = vmatpush2.msra.mxu0 0.0
      %4004 = vmatprep.subr.mxu0 0.0
      %4005 = vmatpush2.msra.mxu0 0.0
      %4006 = vmatprep.subr.mxu0 0.0
      %4007 = vmatpush2.msra.mxu0 0.0
      %4008 = vmatprep.subr.mxu0 0.0
      %4009 = vmatpush2.msra.mxu0 0.0
      %4010 = vmatprep.mubr.f32.mxu0 0.0
      %4011 = vmatmul.mubr.f32.gmra.mxu0 %v3944
      %v4012 = vpop.f32.mrf.mxu0
      %v4013 = vadd.f32 %v3776, %v4012
      %v4014 = vpop.f32.mrf.mxu0
      %4015 = vdwg.mxu0
      %v4016 = vstv %s3945
      %v4017 = vmul.f32 %v4016, %v84
      %v4019 = vlaneseq
      %v4020 = vshrl.u32 %v4019, 7
      %v4021 = vsub.s32 0, %v4020
      %v4022 = vrot.slane %v4017, %v4021
      %v4024 = vadd.f32 %v4013, %v4022
      %v4025 = vtanh.pop %v4024
      %4026 = vmatprep.subr.mxu0 0.0
      %4027 = vmatpush1.msra.mxu0 %v101
      %4028 = vmatprep.subr.mxu0 0.0
      %4029 = vmatpush1.msra.mxu0 %v100
      %4030 = vmatprep.subr.mxu0 0.0
      %4031 = vmatpush1.msra.mxu0 %v99
      %4032 = vmatprep.subr.mxu0 0.0
      %4033 = vmatpush1.msra.mxu0 %v98
      %4034 = vmatprep.subr.mxu0 0.0
      %4035 = vmatpush1.msra.mxu0 %v97
      %4036 = vmatprep.subr.mxu0 0.0
      %4037 = vmatpush1.msra.mxu0 %v96
      %4038 = vmatprep.subr.mxu0 0.0
      %4039 = vmatpush1.msra.mxu0 %v95
      %4040 = vmatprep.subr.mxu0 0.0
      %4041 = vmatpush1.msra.mxu0 %v94
      %4042 = vmatprep.subr.mxu0 0.0
      %4043 = vmatpush1.msra.mxu0 %v93
      %4044 = vmatprep.subr.mxu0 0.0
      %4045 = vmatpush1.msra.mxu0 %v92
      %4046 = vmatprep.subr.mxu0 0.0
      %4047 = vmatpush1.msra.mxu0 %v91
      %4048 = vmatprep.subr.mxu0 0.0
      %4049 = vmatpush1.msra.mxu0 %v90
      %4050 = vmatprep.subr.mxu0 0.0
      %4051 = vmatpush1.msra.mxu0 %v89
      %4052 = vmatprep.subr.mxu0 0.0
      %4053 = vmatpush1.msra.mxu0 %v88
      %4054 = vmatprep.subr.mxu0 0.0
      %4055 = vmatpush1.msra.mxu0 %v87
      %4056 = vmatprep.subr.mxu0 0.0
      %4057 = vmatpush1.msra.mxu0 %v86
      %4058 = vmatprep.subr.mxu0 0.0
      %4059 = vmatpush2.msra.mxu0 0.0
      %4060 = vmatprep.subr.mxu0 0.0
      %4061 = vmatpush2.msra.mxu0 0.0
      %4062 = vmatprep.subr.mxu0 0.0
      %4063 = vmatpush2.msra.mxu0 0.0
      %4064 = vmatprep.subr.mxu0 0.0
      %4065 = vmatpush2.msra.mxu0 0.0
      %4066 = vmatprep.subr.mxu0 0.0
      %4067 = vmatpush2.msra.mxu0 0.0
      %4068 = vmatprep.subr.mxu0 0.0
      %4069 = vmatpush2.msra.mxu0 0.0
      %4070 = vmatprep.subr.mxu0 0.0
      %4071 = vmatpush2.msra.mxu0 0.0
      %4072 = vmatprep.subr.mxu0 0.0
      %4073 = vmatpush2.msra.mxu0 0.0
      %4074 = vmatprep.subr.mxu0 0.0
      %4075 = vmatpush2.msra.mxu0 0.0
      %4076 = vmatprep.subr.mxu0 0.0
      %4077 = vmatpush2.msra.mxu0 0.0
      %4078 = vmatprep.subr.mxu0 0.0
      %4079 = vmatpush2.msra.mxu0 0.0
      %4080 = vmatprep.subr.mxu0 0.0
      %4081 = vmatpush2.msra.mxu0 0.0
      %4082 = vmatprep.subr.mxu0 0.0
      %4083 = vmatpush2.msra.mxu0 0.0
      %4084 = vmatprep.subr.mxu0 0.0
      %4085 = vmatpush2.msra.mxu0 0.0
      %4086 = vmatprep.subr.mxu0 0.0
      %4087 = vmatpush2.msra.mxu0 0.0
      %4088 = vmatprep.subr.mxu0 0.0
      %4089 = vmatpush2.msra.mxu0 0.0
      %4090 = vmatprep.mubr.f32.mxu0 0.0
      %4091 = vmatmul.mubr.f32.gmra.mxu0 %v4025
      %v4092 = vpop.f32.mrf.mxu0
      %v4093 = vadd.f32 %v3870, %v4092
      %v4094 = vpop.f32.mrf.mxu0
      %4095 = vdwg.mxu0
      %v4096 = vmul.f32 %v3942, %v4093
      %v4097 = vadd.f32 %v3944, %v4096
      %s4098 = smul.f32 %s3782, 2.0
      %s4099 = sadd.f32 %s3699, %s4098
      %4100 = vmatprep.subr.mxu0 0.0
      %4101 = vmatpush1.msra.mxu0 %v67
      %4102 = vmatprep.subr.mxu0 0.0
      %4103 = vmatpush1.msra.mxu0 %v66
      %4104 = vmatprep.subr.mxu0 0.0
      %4105 = vmatpush1.msra.mxu0 %v65
      %4106 = vmatprep.subr.mxu0 0.0
      %4107 = vmatpush1.msra.mxu0 %v64
      %4108 = vmatprep.subr.mxu0 0.0
      %4109 = vmatpush1.msra.mxu0 %v63
      %4110 = vmatprep.subr.mxu0 0.0
      %4111 = vmatpush1.msra.mxu0 %v62
      %4112 = vmatprep.subr.mxu0 0.0
      %4113 = vmatpush1.msra.mxu0 %v61
      %4114 = vmatprep.subr.mxu0 0.0
      %4115 = vmatpush1.msra.mxu0 %v60
      %4116 = vmatprep.subr.mxu0 0.0
      %4117 = vmatpush1.msra.mxu0 %v59
      %4118 = vmatprep.subr.mxu0 0.0
      %4119 = vmatpush1.msra.mxu0 %v58
      %4120 = vmatprep.subr.mxu0 0.0
      %4121 = vmatpush1.msra.mxu0 %v57
      %4122 = vmatprep.subr.mxu0 0.0
      %4123 = vmatpush1.msra.mxu0 %v56
      %4124 = vmatprep.subr.mxu0 0.0
      %4125 = vmatpush1.msra.mxu0 %v55
      %4126 = vmatprep.subr.mxu0 0.0
      %4127 = vmatpush1.msra.mxu0 %v54
      %4128 = vmatprep.subr.mxu0 0.0
      %4129 = vmatpush1.msra.mxu0 %v53
      %4130 = vmatprep.subr.mxu0 0.0
      %4131 = vmatpush1.msra.mxu0 %v52
      %4132 = vmatprep.subr.mxu0 0.0
      %4133 = vmatpush2.msra.mxu0 0.0
      %4134 = vmatprep.subr.mxu0 0.0
      %4135 = vmatpush2.msra.mxu0 0.0
      %4136 = vmatprep.subr.mxu0 0.0
      %4137 = vmatpush2.msra.mxu0 0.0
      %4138 = vmatprep.subr.mxu0 0.0
      %4139 = vmatpush2.msra.mxu0 0.0
      %4140 = vmatprep.subr.mxu0 0.0
      %4141 = vmatpush2.msra.mxu0 0.0
      %4142 = vmatprep.subr.mxu0 0.0
      %4143 = vmatpush2.msra.mxu0 0.0
      %4144 = vmatprep.subr.mxu0 0.0
      %4145 = vmatpush2.msra.mxu0 0.0
      %4146 = vmatprep.subr.mxu0 0.0
      %4147 = vmatpush2.msra.mxu0 0.0
      %4148 = vmatprep.subr.mxu0 0.0
      %4149 = vmatpush2.msra.mxu0 0.0
      %4150 = vmatprep.subr.mxu0 0.0
      %4151 = vmatpush2.msra.mxu0 0.0
      %4152 = vmatprep.subr.mxu0 0.0
      %4153 = vmatpush2.msra.mxu0 0.0
      %4154 = vmatprep.subr.mxu0 0.0
      %4155 = vmatpush2.msra.mxu0 0.0
      %4156 = vmatprep.subr.mxu0 0.0
      %4157 = vmatpush2.msra.mxu0 0.0
      %4158 = vmatprep.subr.mxu0 0.0
      %4159 = vmatpush2.msra.mxu0 0.0
      %4160 = vmatprep.subr.mxu0 0.0
      %4161 = vmatpush2.msra.mxu0 0.0
      %4162 = vmatprep.subr.mxu0 0.0
      %4163 = vmatpush2.msra.mxu0 0.0
      %4164 = vmatprep.mubr.f32.mxu0 0.0
      %4165 = vmatmul.mubr.f32.gmra.mxu0 %v4097
      %v4166 = vpop.f32.mrf.mxu0
      %v4167 = vadd.f32 %v3776, %v4166
      %v4168 = vpop.f32.mrf.mxu0
      %4169 = vdwg.mxu0
      %v4170 = vstv %s4099
      %v4171 = vmul.f32 %v4170, %v84
      %v4173 = vlaneseq
      %v4174 = vshrl.u32 %v4173, 7
      %v4175 = vsub.s32 0, %v4174
      %v4176 = vrot.slane %v4171, %v4175
      %v4178 = vadd.f32 %v4167, %v4176
      %v4179 = vtanh.pop %v4178
      %4180 = vmatprep.subr.mxu0 0.0
      %4181 = vmatpush1.msra.mxu0 %v101
      %4182 = vmatprep.subr.mxu0 0.0
      %4183 = vmatpush1.msra.mxu0 %v100
      %4184 = vmatprep.subr.mxu0 0.0
      %4185 = vmatpush1.msra.mxu0 %v99
      %4186 = vmatprep.subr.mxu0 0.0
      %4187 = vmatpush1.msra.mxu0 %v98
      %4188 = vmatprep.subr.mxu0 0.0
      %4189 = vmatpush1.msra.mxu0 %v97
      %4190 = vmatprep.subr.mxu0 0.0
      %4191 = vmatpush1.msra.mxu0 %v96
      %4192 = vmatprep.subr.mxu0 0.0
      %4193 = vmatpush1.msra.mxu0 %v95
      %4194 = vmatprep.subr.mxu0 0.0
      %4195 = vmatpush1.msra.mxu0 %v94
      %4196 = vmatprep.subr.mxu0 0.0
      %4197 = vmatpush1.msra.mxu0 %v93
      %4198 = vmatprep.subr.mxu0 0.0
      %4199 = vmatpush1.msra.mxu0 %v92
      %4200 = vmatprep.subr.mxu0 0.0
      %4201 = vmatpush1.msra.mxu0 %v91
      %4202 = vmatprep.subr.mxu0 0.0
      %4203 = vmatpush1.msra.mxu0 %v90
      %4204 = vmatprep.subr.mxu0 0.0
      %4205 = vmatpush1.msra.mxu0 %v89
      %4206 = vmatprep.subr.mxu0 0.0
      %4207 = vmatpush1.msra.mxu0 %v88
      %4208 = vmatprep.subr.mxu0 0.0
      %4209 = vmatpush1.msra.mxu0 %v87
      %4210 = vmatprep.subr.mxu0 0.0
      %4211 = vmatpush1.msra.mxu0 %v86
      %4212 = vmatprep.subr.mxu0 0.0
      %4213 = vmatpush2.msra.mxu0 0.0
      %4214 = vmatprep.subr.mxu0 0.0
      %4215 = vmatpush2.msra.mxu0 0.0
      %4216 = vmatprep.subr.mxu0 0.0
      %4217 = vmatpush2.msra.mxu0 0.0
      %4218 = vmatprep.subr.mxu0 0.0
      %4219 = vmatpush2.msra.mxu0 0.0
      %4220 = vmatprep.subr.mxu0 0.0
      %4221 = vmatpush2.msra.mxu0 0.0
      %4222 = vmatprep.subr.mxu0 0.0
      %4223 = vmatpush2.msra.mxu0 0.0
      %4224 = vmatprep.subr.mxu0 0.0
      %4225 = vmatpush2.msra.mxu0 0.0
      %4226 = vmatprep.subr.mxu0 0.0
      %4227 = vmatpush2.msra.mxu0 0.0
      %4228 = vmatprep.subr.mxu0 0.0
      %4229 = vmatpush2.msra.mxu0 0.0
      %4230 = vmatprep.subr.mxu0 0.0
      %4231 = vmatpush2.msra.mxu0 0.0
      %4232 = vmatprep.subr.mxu0 0.0
      %4233 = vmatpush2.msra.mxu0 0.0
      %4234 = vmatprep.subr.mxu0 0.0
      %4235 = vmatpush2.msra.mxu0 0.0
      %4236 = vmatprep.subr.mxu0 0.0
      %4237 = vmatpush2.msra.mxu0 0.0
      %4238 = vmatprep.subr.mxu0 0.0
      %4239 = vmatpush2.msra.mxu0 0.0
      %4240 = vmatprep.subr.mxu0 0.0
      %4241 = vmatpush2.msra.mxu0 0.0
      %4242 = vmatprep.subr.mxu0 0.0
      %4243 = vmatpush2.msra.mxu0 0.0
      %4244 = vmatprep.mubr.f32.mxu0 0.0
      %4245 = vmatmul.mubr.f32.gmra.mxu0 %v4179
      %v4246 = vpop.f32.mrf.mxu0
      %v4247 = vadd.f32 %v3870, %v4246
      %v4248 = vpop.f32.mrf.mxu0
      %4249 = vdwg.mxu0
      %v4250 = vmul.f32 %v3942, %v4247
      %v4251 = vadd.f32 %v4097, %v4250
      %s4252 = smul.f32 %s3782, 3.0
      %s4253 = sadd.f32 %s3699, %s4252
      %4254 = vmatprep.subr.mxu0 0.0
      %4255 = vmatpush1.msra.mxu0 %v67
      %4256 = vmatprep.subr.mxu0 0.0
      %4257 = vmatpush1.msra.mxu0 %v66
      %4258 = vmatprep.subr.mxu0 0.0
      %4259 = vmatpush1.msra.mxu0 %v65
      %4260 = vmatprep.subr.mxu0 0.0
      %4261 = vmatpush1.msra.mxu0 %v64
      %4262 = vmatprep.subr.mxu0 0.0
      %4263 = vmatpush1.msra.mxu0 %v63
      %4264 = vmatprep.subr.mxu0 0.0
      %4265 = vmatpush1.msra.mxu0 %v62
      %4266 = vmatprep.subr.mxu0 0.0
      %4267 = vmatpush1.msra.mxu0 %v61
      %4268 = vmatprep.subr.mxu0 0.0
      %4269 = vmatpush1.msra.mxu0 %v60
      %4270 = vmatprep.subr.mxu0 0.0
      %4271 = vmatpush1.msra.mxu0 %v59
      %4272 = vmatprep.subr.mxu0 0.0
      %4273 = vmatpush1.msra.mxu0 %v58
      %4274 = vmatprep.subr.mxu0 0.0
      %4275 = vmatpush1.msra.mxu0 %v57
      %4276 = vmatprep.subr.mxu0 0.0
      %4277 = vmatpush1.msra.mxu0 %v56
      %4278 = vmatprep.subr.mxu0 0.0
      %4279 = vmatpush1.msra.mxu0 %v55
      %4280 = vmatprep.subr.mxu0 0.0
      %4281 = vmatpush1.msra.mxu0 %v54
      %4282 = vmatprep.subr.mxu0 0.0
      %4283 = vmatpush1.msra.mxu0 %v53
      %4284 = vmatprep.subr.mxu0 0.0
      %4285 = vmatpush1.msra.mxu0 %v52
      %4286 = vmatprep.subr.mxu0 0.0
      %4287 = vmatpush2.msra.mxu0 0.0
      %4288 = vmatprep.subr.mxu0 0.0
      %4289 = vmatpush2.msra.mxu0 0.0
      %4290 = vmatprep.subr.mxu0 0.0
      %4291 = vmatpush2.msra.mxu0 0.0
      %4292 = vmatprep.subr.mxu0 0.0
      %4293 = vmatpush2.msra.mxu0 0.0
      %4294 = vmatprep.subr.mxu0 0.0
      %4295 = vmatpush2.msra.mxu0 0.0
      %4296 = vmatprep.subr.mxu0 0.0
      %4297 = vmatpush2.msra.mxu0 0.0
      %4298 = vmatprep.subr.mxu0 0.0
      %4299 = vmatpush2.msra.mxu0 0.0
      %4300 = vmatprep.subr.mxu0 0.0
      %4301 = vmatpush2.msra.mxu0 0.0
      %4302 = vmatprep.subr.mxu0 0.0
      %4303 = vmatpush2.msra.mxu0 0.0
      %4304 = vmatprep.subr.mxu0 0.0
      %4305 = vmatpush2.msra.mxu0 0.0
      %4306 = vmatprep.subr.mxu0 0.0
      %4307 = vmatpush2.msra.mxu0 0.0
      %4308 = vmatprep.subr.mxu0 0.0
      %4309 = vmatpush2.msra.mxu0 0.0
      %4310 = vmatprep.subr.mxu0 0.0
      %4311 = vmatpush2.msra.mxu0 0.0
      %4312 = vmatprep.subr.mxu0 0.0
      %4313 = vmatpush2.msra.mxu0 0.0
      %4314 = vmatprep.subr.mxu0 0.0
      %4315 = vmatpush2.msra.mxu0 0.0
      %4316 = vmatprep.subr.mxu0 0.0
      %4317 = vmatpush2.msra.mxu0 0.0
      %4318 = vmatprep.mubr.f32.mxu0 0.0
      %4319 = vmatmul.mubr.f32.gmra.mxu0 %v4251
      %v4320 = vpop.f32.mrf.mxu0
      %v4321 = vadd.f32 %v3776, %v4320
      %v4322 = vpop.f32.mrf.mxu0
      %4323 = vdwg.mxu0
      %v4324 = vstv %s4253
      %v4325 = vmul.f32 %v4324, %v84
      %v4327 = vlaneseq
      %v4328 = vshrl.u32 %v4327, 7
      %v4329 = vsub.s32 0, %v4328
      %v4330 = vrot.slane %v4325, %v4329
      %v4332 = vadd.f32 %v4321, %v4330
      %v4333 = vtanh.pop %v4332
      %4334 = vmatprep.subr.mxu0 0.0
      %4335 = vmatpush1.msra.mxu0 %v101
      %4336 = vmatprep.subr.mxu0 0.0
      %4337 = vmatpush1.msra.mxu0 %v100
      %4338 = vmatprep.subr.mxu0 0.0
      %4339 = vmatpush1.msra.mxu0 %v99
      %4340 = vmatprep.subr.mxu0 0.0
      %4341 = vmatpush1.msra.mxu0 %v98
      %4342 = vmatprep.subr.mxu0 0.0
      %4343 = vmatpush1.msra.mxu0 %v97
      %4344 = vmatprep.subr.mxu0 0.0
      %4345 = vmatpush1.msra.mxu0 %v96
      %4346 = vmatprep.subr.mxu0 0.0
      %4347 = vmatpush1.msra.mxu0 %v95
      %4348 = vmatprep.subr.mxu0 0.0
      %4349 = vmatpush1.msra.mxu0 %v94
      %4350 = vmatprep.subr.mxu0 0.0
      %4351 = vmatpush1.msra.mxu0 %v93
      %4352 = vmatprep.subr.mxu0 0.0
      %4353 = vmatpush1.msra.mxu0 %v92
      %4354 = vmatprep.subr.mxu0 0.0
      %4355 = vmatpush1.msra.mxu0 %v91
      %4356 = vmatprep.subr.mxu0 0.0
      %4357 = vmatpush1.msra.mxu0 %v90
      %4358 = vmatprep.subr.mxu0 0.0
      %4359 = vmatpush1.msra.mxu0 %v89
      %4360 = vmatprep.subr.mxu0 0.0
      %4361 = vmatpush1.msra.mxu0 %v88
      %4362 = vmatprep.subr.mxu0 0.0
      %4363 = vmatpush1.msra.mxu0 %v87
      %4364 = vmatprep.subr.mxu0 0.0
      %4365 = vmatpush1.msra.mxu0 %v86
      %4366 = vmatprep.subr.mxu0 0.0
      %4367 = vmatpush2.msra.mxu0 0.0
      %4368 = vmatprep.subr.mxu0 0.0
      %4369 = vmatpush2.msra.mxu0 0.0
      %4370 = vmatprep.subr.mxu0 0.0
      %4371 = vmatpush2.msra.mxu0 0.0
      %4372 = vmatprep.subr.mxu0 0.0
      %4373 = vmatpush2.msra.mxu0 0.0
      %4374 = vmatprep.subr.mxu0 0.0
      %4375 = vmatpush2.msra.mxu0 0.0
      %4376 = vmatprep.subr.mxu0 0.0
      %4377 = vmatpush2.msra.mxu0 0.0
      %4378 = vmatprep.subr.mxu0 0.0
      %4379 = vmatpush2.msra.mxu0 0.0
      %4380 = vmatprep.subr.mxu0 0.0
      %4381 = vmatpush2.msra.mxu0 0.0
      %4382 = vmatprep.subr.mxu0 0.0
      %4383 = vmatpush2.msra.mxu0 0.0
      %4384 = vmatprep.subr.mxu0 0.0
      %4385 = vmatpush2.msra.mxu0 0.0
      %4386 = vmatprep.subr.mxu0 0.0
      %4387 = vmatpush2.msra.mxu0 0.0
      %4388 = vmatprep.subr.mxu0 0.0
      %4389 = vmatpush2.msra.mxu0 0.0
      %4390 = vmatprep.subr.mxu0 0.0
      %4391 = vmatpush2.msra.mxu0 0.0
      %4392 = vmatprep.subr.mxu0 0.0
      %4393 = vmatpush2.msra.mxu0 0.0
      %4394 = vmatprep.subr.mxu0 0.0
      %4395 = vmatpush2.msra.mxu0 0.0
      %4396 = vmatprep.subr.mxu0 0.0
      %4397 = vmatpush2.msra.mxu0 0.0
      %4398 = vmatprep.mubr.f32.mxu0 0.0
      %4399 = vmatmul.mubr.f32.gmra.mxu0 %v4333
      %v4400 = vpop.f32.mrf.mxu0
      %v4401 = vadd.f32 %v3870, %v4400
      %v4402 = vpop.f32.mrf.mxu0
      %4403 = vdwg.mxu0
      %v4404 = vmul.f32 %v3942, %v4401
      %v4405 = vadd.f32 %v4251, %v4404
      %4406 = vst [vmem:[#allocation2] sm:$0xff] %v4405
    $region69: #{neural_ode_forward.1} parent=1 // pred_fallthru
      _
    %v4407 = vld [vmem:[#allocation2] sm:$0xff]
    %s4408 = scalar_lea.vmem [#allocation6], 40
    %4409 = vst [vmem:[%s4408] sm:$0xff] %v4407
    %s4410 = sadd.s32 %s103, 6
    %p4411 = scmp.gt.s32.totalorder %s4410, 0
    %p4412 = scmp.lt.s32.totalorder %s4410, 8
    %p4413 = pnand %p4411, %p4412
    %p4414 = pneg %p4413
    // Predicated region
    $region70: #{neural_ode_forward.1} parent=1 // pred_check
      _
    $region71: #{neural_ode_forward.1} parent=1 // pred_check_branch
      %4416 = sbr.rel (%p4413) target = $region73
    $region72: #{neural_ode_forward.1} parent=1 // pred_region
      %s4417 = sld [smem:[#allocation3 + %s3692]]
      %s4418 = sld [smem:[#allocation3 + %s4410]]
      %s4419 = scalar_lea.vmem %s2, 48
      %v4420 = vld [vmem:[%s4419] sm:$0xff]
      %v4422 = vlaneseq
      %v4423 = vshrl.u32 %v4422, 7
      %v4424 = vsub.s32 0, %v4423
      %v4425 = vrot.slane %v85, %v4424
      %4427 = vmatprep.subr.mxu0 0.0
      %4428 = vmatpush1.msra.mxu0 %v83
      %4429 = vmatprep.subr.mxu0 0.0
      %4430 = vmatpush1.msra.mxu0 %v82
      %4431 = vmatprep.subr.mxu0 0.0
      %4432 = vmatpush1.msra.mxu0 %v81
      %4433 = vmatprep.subr.mxu0 0.0
      %4434 = vmatpush1.msra.mxu0 %v80
      %4435 = vmatprep.subr.mxu0 0.0
      %4436 = vmatpush1.msra.mxu0 %v79
      %4437 = vmatprep.subr.mxu0 0.0
      %4438 = vmatpush1.msra.mxu0 %v78
      %4439 = vmatprep.subr.mxu0 0.0
      %4440 = vmatpush1.msra.mxu0 %v77
      %4441 = vmatprep.subr.mxu0 0.0
      %4442 = vmatpush1.msra.mxu0 %v76
      %4443 = vmatprep.subr.mxu0 0.0
      %4444 = vmatpush1.msra.mxu0 %v75
      %4445 = vmatprep.subr.mxu0 0.0
      %4446 = vmatpush1.msra.mxu0 %v74
      %4447 = vmatprep.subr.mxu0 0.0
      %4448 = vmatpush1.msra.mxu0 %v73
      %4449 = vmatprep.subr.mxu0 0.0
      %4450 = vmatpush1.msra.mxu0 %v72
      %4451 = vmatprep.subr.mxu0 0.0
      %4452 = vmatpush1.msra.mxu0 %v71
      %4453 = vmatprep.subr.mxu0 0.0
      %4454 = vmatpush1.msra.mxu0 %v70
      %4455 = vmatprep.subr.mxu0 0.0
      %4456 = vmatpush1.msra.mxu0 %v69
      %4457 = vmatprep.subr.mxu0 0.0
      %4458 = vmatpush1.msra.mxu0 %v68
      %4459 = vmatprep.subr.mxu0 0.0
      %4460 = vmatpush2.msra.mxu0 0.0
      %4461 = vmatprep.subr.mxu0 0.0
      %4462 = vmatpush2.msra.mxu0 0.0
      %4463 = vmatprep.subr.mxu0 0.0
      %4464 = vmatpush2.msra.mxu0 0.0
      %4465 = vmatprep.subr.mxu0 0.0
      %4466 = vmatpush2.msra.mxu0 0.0
      %4467 = vmatprep.subr.mxu0 0.0
      %4468 = vmatpush2.msra.mxu0 0.0
      %4469 = vmatprep.subr.mxu0 0.0
      %4470 = vmatpush2.msra.mxu0 0.0
      %4471 = vmatprep.subr.mxu0 0.0
      %4472 = vmatpush2.msra.mxu0 0.0
      %4473 = vmatprep.subr.mxu0 0.0
      %4474 = vmatpush2.msra.mxu0 0.0
      %4475 = vmatprep.subr.mxu0 0.0
      %4476 = vmatpush2.msra.mxu0 0.0
      %4477 = vmatprep.subr.mxu0 0.0
      %4478 = vmatpush2.msra.mxu0 0.0
      %4479 = vmatprep.subr.mxu0 0.0
      %4480 = vmatpush2.msra.mxu0 0.0
      %4481 = vmatprep.subr.mxu0 0.0
      %4482 = vmatpush2.msra.mxu0 0.0
      %4483 = vmatprep.subr.mxu0 0.0
      %4484 = vmatpush2.msra.mxu0 0.0
      %4485 = vmatprep.subr.mxu0 0.0
      %4486 = vmatpush2.msra.mxu0 0.0
      %4487 = vmatprep.subr.mxu0 0.0
      %4488 = vmatpush2.msra.mxu0 0.0
      %4489 = vmatprep.subr.mxu0 0.0
      %4490 = vmatpush2.msra.mxu0 0.0
      %4491 = vmatprep.mubr.f32.mxu0 0.0
      %4492 = vmatmul.mubr.f32.gmra.mxu0 %v4420
      %v4493 = vpop.f32.mrf.mxu0
      %v4494 = vadd.f32 %v4425, %v4493
      %v4495 = vpop.f32.mrf.mxu0
      %4496 = vdwg.mxu0
      %s4497 = ssub.f32 %s4418, %s4417
      %v4498 = vrcp.pop 4.0
      %s4499 = vtos %v4498
      %s4500 = smul.f32 %s4497, %s4499
      %v4501 = vld [vmem:[#allocation2] sm:$0xff]
      %s4502 = smul.f32 %s4500, 0.0
      %s4503 = sadd.f32 %s4417, %s4502
      %4504 = vmatprep.subr.mxu0 0.0
      %4505 = vmatpush1.msra.mxu0 %v67
      %4506 = vmatprep.subr.mxu0 0.0
      %4507 = vmatpush1.msra.mxu0 %v66
      %4508 = vmatprep.subr.mxu0 0.0
      %4509 = vmatpush1.msra.mxu0 %v65
      %4510 = vmatprep.subr.mxu0 0.0
      %4511 = vmatpush1.msra.mxu0 %v64
      %4512 = vmatprep.subr.mxu0 0.0
      %4513 = vmatpush1.msra.mxu0 %v63
      %4514 = vmatprep.subr.mxu0 0.0
      %4515 = vmatpush1.msra.mxu0 %v62
      %4516 = vmatprep.subr.mxu0 0.0
      %4517 = vmatpush1.msra.mxu0 %v61
      %4518 = vmatprep.subr.mxu0 0.0
      %4519 = vmatpush1.msra.mxu0 %v60
      %4520 = vmatprep.subr.mxu0 0.0
      %4521 = vmatpush1.msra.mxu0 %v59
      %4522 = vmatprep.subr.mxu0 0.0
      %4523 = vmatpush1.msra.mxu0 %v58
      %4524 = vmatprep.subr.mxu0 0.0
      %4525 = vmatpush1.msra.mxu0 %v57
      %4526 = vmatprep.subr.mxu0 0.0
      %4527 = vmatpush1.msra.mxu0 %v56
      %4528 = vmatprep.subr.mxu0 0.0
      %4529 = vmatpush1.msra.mxu0 %v55
      %4530 = vmatprep.subr.mxu0 0.0
      %4531 = vmatpush1.msra.mxu0 %v54
      %4532 = vmatprep.subr.mxu0 0.0
      %4533 = vmatpush1.msra.mxu0 %v53
      %4534 = vmatprep.subr.mxu0 0.0
      %4535 = vmatpush1.msra.mxu0 %v52
      %4536 = vmatprep.subr.mxu0 0.0
      %4537 = vmatpush2.msra.mxu0 0.0
      %4538 = vmatprep.subr.mxu0 0.0
      %4539 = vmatpush2.msra.mxu0 0.0
      %4540 = vmatprep.subr.mxu0 0.0
      %4541 = vmatpush2.msra.mxu0 0.0
      %4542 = vmatprep.subr.mxu0 0.0
      %4543 = vmatpush2.msra.mxu0 0.0
      %4544 = vmatprep.subr.mxu0 0.0
      %4545 = vmatpush2.msra.mxu0 0.0
      %4546 = vmatprep.subr.mxu0 0.0
      %4547 = vmatpush2.msra.mxu0 0.0
      %4548 = vmatprep.subr.mxu0 0.0
      %4549 = vmatpush2.msra.mxu0 0.0
      %4550 = vmatprep.subr.mxu0 0.0
      %4551 = vmatpush2.msra.mxu0 0.0
      %4552 = vmatprep.subr.mxu0 0.0
      %4553 = vmatpush2.msra.mxu0 0.0
      %4554 = vmatprep.subr.mxu0 0.0
      %4555 = vmatpush2.msra.mxu0 0.0
      %4556 = vmatprep.subr.mxu0 0.0
      %4557 = vmatpush2.msra.mxu0 0.0
      %4558 = vmatprep.subr.mxu0 0.0
      %4559 = vmatpush2.msra.mxu0 0.0
      %4560 = vmatprep.subr.mxu0 0.0
      %4561 = vmatpush2.msra.mxu0 0.0
      %4562 = vmatprep.subr.mxu0 0.0
      %4563 = vmatpush2.msra.mxu0 0.0
      %4564 = vmatprep.subr.mxu0 0.0
      %4565 = vmatpush2.msra.mxu0 0.0
      %4566 = vmatprep.subr.mxu0 0.0
      %4567 = vmatpush2.msra.mxu0 0.0
      %4568 = vmatprep.mubr.f32.mxu0 0.0
      %4569 = vmatmul.mubr.f32.gmra.mxu0 %v4501
      %v4570 = vpop.f32.mrf.mxu0
      %v4571 = vadd.f32 %v4494, %v4570
      %v4572 = vpop.f32.mrf.mxu0
      %4573 = vdwg.mxu0
      %v4574 = vstv %s4503
      %v4575 = vmul.f32 %v4574, %v84
      %v4577 = vlaneseq
      %v4578 = vshrl.u32 %v4577, 7
      %v4579 = vsub.s32 0, %v4578
      %v4580 = vrot.slane %v4575, %v4579
      %v4582 = vadd.f32 %v4571, %v4580
      %v4583 = vtanh.pop %v4582
      %v4585 = vlaneseq
      %v4586 = vshrl.u32 %v4585, 7
      %v4587 = vsub.s32 0, %v4586
      %v4588 = vrot.slane %v102, %v4587
      %4590 = vmatprep.subr.mxu0 0.0
      %4591 = vmatpush1.msra.mxu0 %v101
      %4592 = vmatprep.subr.mxu0 0.0
      %4593 = vmatpush1.msra.mxu0 %v100
      %4594 = vmatprep.subr.mxu0 0.0
      %4595 = vmatpush1.msra.mxu0 %v99
      %4596 = vmatprep.subr.mxu0 0.0
      %4597 = vmatpush1.msra.mxu0 %v98
      %4598 = vmatprep.subr.mxu0 0.0
      %4599 = vmatpush1.msra.mxu0 %v97
      %4600 = vmatprep.subr.mxu0 0.0
      %4601 = vmatpush1.msra.mxu0 %v96
      %4602 = vmatprep.subr.mxu0 0.0
      %4603 = vmatpush1.msra.mxu0 %v95
      %4604 = vmatprep.subr.mxu0 0.0
      %4605 = vmatpush1.msra.mxu0 %v94
      %4606 = vmatprep.subr.mxu0 0.0
      %4607 = vmatpush1.msra.mxu0 %v93
      %4608 = vmatprep.subr.mxu0 0.0
      %4609 = vmatpush1.msra.mxu0 %v92
      %4610 = vmatprep.subr.mxu0 0.0
      %4611 = vmatpush1.msra.mxu0 %v91
      %4612 = vmatprep.subr.mxu0 0.0
      %4613 = vmatpush1.msra.mxu0 %v90
      %4614 = vmatprep.subr.mxu0 0.0
      %4615 = vmatpush1.msra.mxu0 %v89
      %4616 = vmatprep.subr.mxu0 0.0
      %4617 = vmatpush1.msra.mxu0 %v88
      %4618 = vmatprep.subr.mxu0 0.0
      %4619 = vmatpush1.msra.mxu0 %v87
      %4620 = vmatprep.subr.mxu0 0.0
      %4621 = vmatpush1.msra.mxu0 %v86
      %4622 = vmatprep.subr.mxu0 0.0
      %4623 = vmatpush2.msra.mxu0 0.0
      %4624 = vmatprep.subr.mxu0 0.0
      %4625 = vmatpush2.msra.mxu0 0.0
      %4626 = vmatprep.subr.mxu0 0.0
      %4627 = vmatpush2.msra.mxu0 0.0
      %4628 = vmatprep.subr.mxu0 0.0
      %4629 = vmatpush2.msra.mxu0 0.0
      %4630 = vmatprep.subr.mxu0 0.0
      %4631 = vmatpush2.msra.mxu0 0.0
      %4632 = vmatprep.subr.mxu0 0.0
      %4633 = vmatpush2.msra.mxu0 0.0
      %4634 = vmatprep.subr.mxu0 0.0
      %4635 = vmatpush2.msra.mxu0 0.0
      %4636 = vmatprep.subr.mxu0 0.0
      %4637 = vmatpush2.msra.mxu0 0.0
      %4638 = vmatprep.subr.mxu0 0.0
      %4639 = vmatpush2.msra.mxu0 0.0
      %4640 = vmatprep.subr.mxu0 0.0
      %4641 = vmatpush2.msra.mxu0 0.0
      %4642 = vmatprep.subr.mxu0 0.0
      %4643 = vmatpush2.msra.mxu0 0.0
      %4644 = vmatprep.subr.mxu0 0.0
      %4645 = vmatpush2.msra.mxu0 0.0
      %4646 = vmatprep.subr.mxu0 0.0
      %4647 = vmatpush2.msra.mxu0 0.0
      %4648 = vmatprep.subr.mxu0 0.0
      %4649 = vmatpush2.msra.mxu0 0.0
      %4650 = vmatprep.subr.mxu0 0.0
      %4651 = vmatpush2.msra.mxu0 0.0
      %4652 = vmatprep.subr.mxu0 0.0
      %4653 = vmatpush2.msra.mxu0 0.0
      %4654 = vmatprep.mubr.f32.mxu0 0.0
      %4655 = vmatmul.mubr.f32.gmra.mxu0 %v4583
      %v4656 = vpop.f32.mrf.mxu0
      %v4657 = vadd.f32 %v4588, %v4656
      %v4658 = vpop.f32.mrf.mxu0
      %4659 = vdwg.mxu0
      %v4660 = vstv %s4500
      %v4661 = vmul.f32 %v4660, %v4657
      %v4662 = vadd.f32 %v4501, %v4661
      %s4663 = sadd.f32 %s4417, %s4500
      %4664 = vmatprep.subr.mxu0 0.0
      %4665 = vmatpush1.msra.mxu0 %v67
      %4666 = vmatprep.subr.mxu0 0.0
      %4667 = vmatpush1.msra.mxu0 %v66
      %4668 = vmatprep.subr.mxu0 0.0
      %4669 = vmatpush1.msra.mxu0 %v65
      %4670 = vmatprep.subr.mxu0 0.0
      %4671 = vmatpush1.msra.mxu0 %v64
      %4672 = vmatprep.subr.mxu0 0.0
      %4673 = vmatpush1.msra.mxu0 %v63
      %4674 = vmatprep.subr.mxu0 0.0
      %4675 = vmatpush1.msra.mxu0 %v62
      %4676 = vmatprep.subr.mxu0 0.0
      %4677 = vmatpush1.msra.mxu0 %v61
      %4678 = vmatprep.subr.mxu0 0.0
      %4679 = vmatpush1.msra.mxu0 %v60
      %4680 = vmatprep.subr.mxu0 0.0
      %4681 = vmatpush1.msra.mxu0 %v59
      %4682 = vmatprep.subr.mxu0 0.0
      %4683 = vmatpush1.msra.mxu0 %v58
      %4684 = vmatprep.subr.mxu0 0.0
      %4685 = vmatpush1.msra.mxu0 %v57
      %4686 = vmatprep.subr.mxu0 0.0
      %4687 = vmatpush1.msra.mxu0 %v56
      %4688 = vmatprep.subr.mxu0 0.0
      %4689 = vmatpush1.msra.mxu0 %v55
      %4690 = vmatprep.subr.mxu0 0.0
      %4691 = vmatpush1.msra.mxu0 %v54
      %4692 = vmatprep.subr.mxu0 0.0
      %4693 = vmatpush1.msra.mxu0 %v53
      %4694 = vmatprep.subr.mxu0 0.0
      %4695 = vmatpush1.msra.mxu0 %v52
      %4696 = vmatprep.subr.mxu0 0.0
      %4697 = vmatpush2.msra.mxu0 0.0
      %4698 = vmatprep.subr.mxu0 0.0
      %4699 = vmatpush2.msra.mxu0 0.0
      %4700 = vmatprep.subr.mxu0 0.0
      %4701 = vmatpush2.msra.mxu0 0.0
      %4702 = vmatprep.subr.mxu0 0.0
      %4703 = vmatpush2.msra.mxu0 0.0
      %4704 = vmatprep.subr.mxu0 0.0
      %4705 = vmatpush2.msra.mxu0 0.0
      %4706 = vmatprep.subr.mxu0 0.0
      %4707 = vmatpush2.msra.mxu0 0.0
      %4708 = vmatprep.subr.mxu0 0.0
      %4709 = vmatpush2.msra.mxu0 0.0
      %4710 = vmatprep.subr.mxu0 0.0
      %4711 = vmatpush2.msra.mxu0 0.0
      %4712 = vmatprep.subr.mxu0 0.0
      %4713 = vmatpush2.msra.mxu0 0.0
      %4714 = vmatprep.subr.mxu0 0.0
      %4715 = vmatpush2.msra.mxu0 0.0
      %4716 = vmatprep.subr.mxu0 0.0
      %4717 = vmatpush2.msra.mxu0 0.0
      %4718 = vmatprep.subr.mxu0 0.0
      %4719 = vmatpush2.msra.mxu0 0.0
      %4720 = vmatprep.subr.mxu0 0.0
      %4721 = vmatpush2.msra.mxu0 0.0
      %4722 = vmatprep.subr.mxu0 0.0
      %4723 = vmatpush2.msra.mxu0 0.0
      %4724 = vmatprep.subr.mxu0 0.0
      %4725 = vmatpush2.msra.mxu0 0.0
      %4726 = vmatprep.subr.mxu0 0.0
      %4727 = vmatpush2.msra.mxu0 0.0
      %4728 = vmatprep.mubr.f32.mxu0 0.0
      %4729 = vmatmul.mubr.f32.gmra.mxu0 %v4662
      %v4730 = vpop.f32.mrf.mxu0
      %v4731 = vadd.f32 %v4494, %v4730
      %v4732 = vpop.f32.mrf.mxu0
      %4733 = vdwg.mxu0
      %v4734 = vstv %s4663
      %v4735 = vmul.f32 %v4734, %v84
      %v4737 = vlaneseq
      %v4738 = vshrl.u32 %v4737, 7
      %v4739 = vsub.s32 0, %v4738
      %v4740 = vrot.slane %v4735, %v4739
      %v4742 = vadd.f32 %v4731, %v4740
      %v4743 = vtanh.pop %v4742
      %4744 = vmatprep.subr.mxu0 0.0
      %4745 = vmatpush1.msra.mxu0 %v101
      %4746 = vmatprep.subr.mxu0 0.0
      %4747 = vmatpush1.msra.mxu0 %v100
      %4748 = vmatprep.subr.mxu0 0.0
      %4749 = vmatpush1.msra.mxu0 %v99
      %4750 = vmatprep.subr.mxu0 0.0
      %4751 = vmatpush1.msra.mxu0 %v98
      %4752 = vmatprep.subr.mxu0 0.0
      %4753 = vmatpush1.msra.mxu0 %v97
      %4754 = vmatprep.subr.mxu0 0.0
      %4755 = vmatpush1.msra.mxu0 %v96
      %4756 = vmatprep.subr.mxu0 0.0
      %4757 = vmatpush1.msra.mxu0 %v95
      %4758 = vmatprep.subr.mxu0 0.0
      %4759 = vmatpush1.msra.mxu0 %v94
      %4760 = vmatprep.subr.mxu0 0.0
      %4761 = vmatpush1.msra.mxu0 %v93
      %4762 = vmatprep.subr.mxu0 0.0
      %4763 = vmatpush1.msra.mxu0 %v92
      %4764 = vmatprep.subr.mxu0 0.0
      %4765 = vmatpush1.msra.mxu0 %v91
      %4766 = vmatprep.subr.mxu0 0.0
      %4767 = vmatpush1.msra.mxu0 %v90
      %4768 = vmatprep.subr.mxu0 0.0
      %4769 = vmatpush1.msra.mxu0 %v89
      %4770 = vmatprep.subr.mxu0 0.0
      %4771 = vmatpush1.msra.mxu0 %v88
      %4772 = vmatprep.subr.mxu0 0.0
      %4773 = vmatpush1.msra.mxu0 %v87
      %4774 = vmatprep.subr.mxu0 0.0
      %4775 = vmatpush1.msra.mxu0 %v86
      %4776 = vmatprep.subr.mxu0 0.0
      %4777 = vmatpush2.msra.mxu0 0.0
      %4778 = vmatprep.subr.mxu0 0.0
      %4779 = vmatpush2.msra.mxu0 0.0
      %4780 = vmatprep.subr.mxu0 0.0
      %4781 = vmatpush2.msra.mxu0 0.0
      %4782 = vmatprep.subr.mxu0 0.0
      %4783 = vmatpush2.msra.mxu0 0.0
      %4784 = vmatprep.subr.mxu0 0.0
      %4785 = vmatpush2.msra.mxu0 0.0
      %4786 = vmatprep.subr.mxu0 0.0
      %4787 = vmatpush2.msra.mxu0 0.0
      %4788 = vmatprep.subr.mxu0 0.0
      %4789 = vmatpush2.msra.mxu0 0.0
      %4790 = vmatprep.subr.mxu0 0.0
      %4791 = vmatpush2.msra.mxu0 0.0
      %4792 = vmatprep.subr.mxu0 0.0
      %4793 = vmatpush2.msra.mxu0 0.0
      %4794 = vmatprep.subr.mxu0 0.0
      %4795 = vmatpush2.msra.mxu0 0.0
      %4796 = vmatprep.subr.mxu0 0.0
      %4797 = vmatpush2.msra.mxu0 0.0
      %4798 = vmatprep.subr.mxu0 0.0
      %4799 = vmatpush2.msra.mxu0 0.0
      %4800 = vmatprep.subr.mxu0 0.0
      %4801 = vmatpush2.msra.mxu0 0.0
      %4802 = vmatprep.subr.mxu0 0.0
      %4803 = vmatpush2.msra.mxu0 0.0
      %4804 = vmatprep.subr.mxu0 0.0
      %4805 = vmatpush2.msra.mxu0 0.0
      %4806 = vmatprep.subr.mxu0 0.0
      %4807 = vmatpush2.msra.mxu0 0.0
      %4808 = vmatprep.mubr.f32.mxu0 0.0
      %4809 = vmatmul.mubr.f32.gmra.mxu0 %v4743
      %v4810 = vpop.f32.mrf.mxu0
      %v4811 = vadd.f32 %v4588, %v4810
      %v4812 = vpop.f32.mrf.mxu0
      %4813 = vdwg.mxu0
      %v4814 = vmul.f32 %v4660, %v4811
      %v4815 = vadd.f32 %v4662, %v4814
      %s4816 = smul.f32 %s4500, 2.0
      %s4817 = sadd.f32 %s4417, %s4816
      %4818 = vmatprep.subr.mxu0 0.0
      %4819 = vmatpush1.msra.mxu0 %v67
      %4820 = vmatprep.subr.mxu0 0.0
      %4821 = vmatpush1.msra.mxu0 %v66
      %4822 = vmatprep.subr.mxu0 0.0
      %4823 = vmatpush1.msra.mxu0 %v65
      %4824 = vmatprep.subr.mxu0 0.0
      %4825 = vmatpush1.msra.mxu0 %v64
      %4826 = vmatprep.subr.mxu0 0.0
      %4827 = vmatpush1.msra.mxu0 %v63
      %4828 = vmatprep.subr.mxu0 0.0
      %4829 = vmatpush1.msra.mxu0 %v62
      %4830 = vmatprep.subr.mxu0 0.0
      %4831 = vmatpush1.msra.mxu0 %v61
      %4832 = vmatprep.subr.mxu0 0.0
      %4833 = vmatpush1.msra.mxu0 %v60
      %4834 = vmatprep.subr.mxu0 0.0
      %4835 = vmatpush1.msra.mxu0 %v59
      %4836 = vmatprep.subr.mxu0 0.0
      %4837 = vmatpush1.msra.mxu0 %v58
      %4838 = vmatprep.subr.mxu0 0.0
      %4839 = vmatpush1.msra.mxu0 %v57
      %4840 = vmatprep.subr.mxu0 0.0
      %4841 = vmatpush1.msra.mxu0 %v56
      %4842 = vmatprep.subr.mxu0 0.0
      %4843 = vmatpush1.msra.mxu0 %v55
      %4844 = vmatprep.subr.mxu0 0.0
      %4845 = vmatpush1.msra.mxu0 %v54
      %4846 = vmatprep.subr.mxu0 0.0
      %4847 = vmatpush1.msra.mxu0 %v53
      %4848 = vmatprep.subr.mxu0 0.0
      %4849 = vmatpush1.msra.mxu0 %v52
      %4850 = vmatprep.subr.mxu0 0.0
      %4851 = vmatpush2.msra.mxu0 0.0
      %4852 = vmatprep.subr.mxu0 0.0
      %4853 = vmatpush2.msra.mxu0 0.0
      %4854 = vmatprep.subr.mxu0 0.0
      %4855 = vmatpush2.msra.mxu0 0.0
      %4856 = vmatprep.subr.mxu0 0.0
      %4857 = vmatpush2.msra.mxu0 0.0
      %4858 = vmatprep.subr.mxu0 0.0
      %4859 = vmatpush2.msra.mxu0 0.0
      %4860 = vmatprep.subr.mxu0 0.0
      %4861 = vmatpush2.msra.mxu0 0.0
      %4862 = vmatprep.subr.mxu0 0.0
      %4863 = vmatpush2.msra.mxu0 0.0
      %4864 = vmatprep.subr.mxu0 0.0
      %4865 = vmatpush2.msra.mxu0 0.0
      %4866 = vmatprep.subr.mxu0 0.0
      %4867 = vmatpush2.msra.mxu0 0.0
      %4868 = vmatprep.subr.mxu0 0.0
      %4869 = vmatpush2.msra.mxu0 0.0
      %4870 = vmatprep.subr.mxu0 0.0
      %4871 = vmatpush2.msra.mxu0 0.0
      %4872 = vmatprep.subr.mxu0 0.0
      %4873 = vmatpush2.msra.mxu0 0.0
      %4874 = vmatprep.subr.mxu0 0.0
      %4875 = vmatpush2.msra.mxu0 0.0
      %4876 = vmatprep.subr.mxu0 0.0
      %4877 = vmatpush2.msra.mxu0 0.0
      %4878 = vmatprep.subr.mxu0 0.0
      %4879 = vmatpush2.msra.mxu0 0.0
      %4880 = vmatprep.subr.mxu0 0.0
      %4881 = vmatpush2.msra.mxu0 0.0
      %4882 = vmatprep.mubr.f32.mxu0 0.0
      %4883 = vmatmul.mubr.f32.gmra.mxu0 %v4815
      %v4884 = vpop.f32.mrf.mxu0
      %v4885 = vadd.f32 %v4494, %v4884
      %v4886 = vpop.f32.mrf.mxu0
      %4887 = vdwg.mxu0
      %v4888 = vstv %s4817
      %v4889 = vmul.f32 %v4888, %v84
      %v4891 = vlaneseq
      %v4892 = vshrl.u32 %v4891, 7
      %v4893 = vsub.s32 0, %v4892
      %v4894 = vrot.slane %v4889, %v4893
      %v4896 = vadd.f32 %v4885, %v4894
      %v4897 = vtanh.pop %v4896
      %4898 = vmatprep.subr.mxu0 0.0
      %4899 = vmatpush1.msra.mxu0 %v101
      %4900 = vmatprep.subr.mxu0 0.0
      %4901 = vmatpush1.msra.mxu0 %v100
      %4902 = vmatprep.subr.mxu0 0.0
      %4903 = vmatpush1.msra.mxu0 %v99
      %4904 = vmatprep.subr.mxu0 0.0
      %4905 = vmatpush1.msra.mxu0 %v98
      %4906 = vmatprep.subr.mxu0 0.0
      %4907 = vmatpush1.msra.mxu0 %v97
      %4908 = vmatprep.subr.mxu0 0.0
      %4909 = vmatpush1.msra.mxu0 %v96
      %4910 = vmatprep.subr.mxu0 0.0
      %4911 = vmatpush1.msra.mxu0 %v95
      %4912 = vmatprep.subr.mxu0 0.0
      %4913 = vmatpush1.msra.mxu0 %v94
      %4914 = vmatprep.subr.mxu0 0.0
      %4915 = vmatpush1.msra.mxu0 %v93
      %4916 = vmatprep.subr.mxu0 0.0
      %4917 = vmatpush1.msra.mxu0 %v92
      %4918 = vmatprep.subr.mxu0 0.0
      %4919 = vmatpush1.msra.mxu0 %v91
      %4920 = vmatprep.subr.mxu0 0.0
      %4921 = vmatpush1.msra.mxu0 %v90
      %4922 = vmatprep.subr.mxu0 0.0
      %4923 = vmatpush1.msra.mxu0 %v89
      %4924 = vmatprep.subr.mxu0 0.0
      %4925 = vmatpush1.msra.mxu0 %v88
      %4926 = vmatprep.subr.mxu0 0.0
      %4927 = vmatpush1.msra.mxu0 %v87
      %4928 = vmatprep.subr.mxu0 0.0
      %4929 = vmatpush1.msra.mxu0 %v86
      %4930 = vmatprep.subr.mxu0 0.0
      %4931 = vmatpush2.msra.mxu0 0.0
      %4932 = vmatprep.subr.mxu0 0.0
      %4933 = vmatpush2.msra.mxu0 0.0
      %4934 = vmatprep.subr.mxu0 0.0
      %4935 = vmatpush2.msra.mxu0 0.0
      %4936 = vmatprep.subr.mxu0 0.0
      %4937 = vmatpush2.msra.mxu0 0.0
      %4938 = vmatprep.subr.mxu0 0.0
      %4939 = vmatpush2.msra.mxu0 0.0
      %4940 = vmatprep.subr.mxu0 0.0
      %4941 = vmatpush2.msra.mxu0 0.0
      %4942 = vmatprep.subr.mxu0 0.0
      %4943 = vmatpush2.msra.mxu0 0.0
      %4944 = vmatprep.subr.mxu0 0.0
      %4945 = vmatpush2.msra.mxu0 0.0
      %4946 = vmatprep.subr.mxu0 0.0
      %4947 = vmatpush2.msra.mxu0 0.0
      %4948 = vmatprep.subr.mxu0 0.0
      %4949 = vmatpush2.msra.mxu0 0.0
      %4950 = vmatprep.subr.mxu0 0.0
      %4951 = vmatpush2.msra.mxu0 0.0
      %4952 = vmatprep.subr.mxu0 0.0
      %4953 = vmatpush2.msra.mxu0 0.0
      %4954 = vmatprep.subr.mxu0 0.0
      %4955 = vmatpush2.msra.mxu0 0.0
      %4956 = vmatprep.subr.mxu0 0.0
      %4957 = vmatpush2.msra.mxu0 0.0
      %4958 = vmatprep.subr.mxu0 0.0
      %4959 = vmatpush2.msra.mxu0 0.0
      %4960 = vmatprep.subr.mxu0 0.0
      %4961 = vmatpush2.msra.mxu0 0.0
      %4962 = vmatprep.mubr.f32.mxu0 0.0
      %4963 = vmatmul.mubr.f32.gmra.mxu0 %v4897
      %v4964 = vpop.f32.mrf.mxu0
      %v4965 = vadd.f32 %v4588, %v4964
      %v4966 = vpop.f32.mrf.mxu0
      %4967 = vdwg.mxu0
      %v4968 = vmul.f32 %v4660, %v4965
      %v4969 = vadd.f32 %v4815, %v4968
      %s4970 = smul.f32 %s4500, 3.0
      %s4971 = sadd.f32 %s4417, %s4970
      %4972 = vmatprep.subr.mxu0 0.0
      %4973 = vmatpush1.msra.mxu0 %v67
      %4974 = vmatprep.subr.mxu0 0.0
      %4975 = vmatpush1.msra.mxu0 %v66
      %4976 = vmatprep.subr.mxu0 0.0
      %4977 = vmatpush1.msra.mxu0 %v65
      %4978 = vmatprep.subr.mxu0 0.0
      %4979 = vmatpush1.msra.mxu0 %v64
      %4980 = vmatprep.subr.mxu0 0.0
      %4981 = vmatpush1.msra.mxu0 %v63
      %4982 = vmatprep.subr.mxu0 0.0
      %4983 = vmatpush1.msra.mxu0 %v62
      %4984 = vmatprep.subr.mxu0 0.0
      %4985 = vmatpush1.msra.mxu0 %v61
      %4986 = vmatprep.subr.mxu0 0.0
      %4987 = vmatpush1.msra.mxu0 %v60
      %4988 = vmatprep.subr.mxu0 0.0
      %4989 = vmatpush1.msra.mxu0 %v59
      %4990 = vmatprep.subr.mxu0 0.0
      %4991 = vmatpush1.msra.mxu0 %v58
      %4992 = vmatprep.subr.mxu0 0.0
      %4993 = vmatpush1.msra.mxu0 %v57
      %4994 = vmatprep.subr.mxu0 0.0
      %4995 = vmatpush1.msra.mxu0 %v56
      %4996 = vmatprep.subr.mxu0 0.0
      %4997 = vmatpush1.msra.mxu0 %v55
      %4998 = vmatprep.subr.mxu0 0.0
      %4999 = vmatpush1.msra.mxu0 %v54
      %5000 = vmatprep.subr.mxu0 0.0
      %5001 = vmatpush1.msra.mxu0 %v53
      %5002 = vmatprep.subr.mxu0 0.0
      %5003 = vmatpush1.msra.mxu0 %v52
      %5004 = vmatprep.subr.mxu0 0.0
      %5005 = vmatpush2.msra.mxu0 0.0
      %5006 = vmatprep.subr.mxu0 0.0
      %5007 = vmatpush2.msra.mxu0 0.0
      %5008 = vmatprep.subr.mxu0 0.0
      %5009 = vmatpush2.msra.mxu0 0.0
      %5010 = vmatprep.subr.mxu0 0.0
      %5011 = vmatpush2.msra.mxu0 0.0
      %5012 = vmatprep.subr.mxu0 0.0
      %5013 = vmatpush2.msra.mxu0 0.0
      %5014 = vmatprep.subr.mxu0 0.0
      %5015 = vmatpush2.msra.mxu0 0.0
      %5016 = vmatprep.subr.mxu0 0.0
      %5017 = vmatpush2.msra.mxu0 0.0
      %5018 = vmatprep.subr.mxu0 0.0
      %5019 = vmatpush2.msra.mxu0 0.0
      %5020 = vmatprep.subr.mxu0 0.0
      %5021 = vmatpush2.msra.mxu0 0.0
      %5022 = vmatprep.subr.mxu0 0.0
      %5023 = vmatpush2.msra.mxu0 0.0
      %5024 = vmatprep.subr.mxu0 0.0
      %5025 = vmatpush2.msra.mxu0 0.0
      %5026 = vmatprep.subr.mxu0 0.0
      %5027 = vmatpush2.msra.mxu0 0.0
      %5028 = vmatprep.subr.mxu0 0.0
      %5029 = vmatpush2.msra.mxu0 0.0
      %5030 = vmatprep.subr.mxu0 0.0
      %5031 = vmatpush2.msra.mxu0 0.0
      %5032 = vmatprep.subr.mxu0 0.0
      %5033 = vmatpush2.msra.mxu0 0.0
      %5034 = vmatprep.subr.mxu0 0.0
      %5035 = vmatpush2.msra.mxu0 0.0
      %5036 = vmatprep.mubr.f32.mxu0 0.0
      %5037 = vmatmul.mubr.f32.gmra.mxu0 %v4969
      %v5038 = vpop.f32.mrf.mxu0
      %v5039 = vadd.f32 %v4494, %v5038
      %v5040 = vpop.f32.mrf.mxu0
      %5041 = vdwg.mxu0
      %v5042 = vstv %s4971
      %v5043 = vmul.f32 %v5042, %v84
      %v5045 = vlaneseq
      %v5046 = vshrl.u32 %v5045, 7
      %v5047 = vsub.s32 0, %v5046
      %v5048 = vrot.slane %v5043, %v5047
      %v5050 = vadd.f32 %v5039, %v5048
      %v5051 = vtanh.pop %v5050
      %5052 = vmatprep.subr.mxu0 0.0
      %5053 = vmatpush1.msra.mxu0 %v101
      %5054 = vmatprep.subr.mxu0 0.0
      %5055 = vmatpush1.msra.mxu0 %v100
      %5056 = vmatprep.subr.mxu0 0.0
      %5057 = vmatpush1.msra.mxu0 %v99
      %5058 = vmatprep.subr.mxu0 0.0
      %5059 = vmatpush1.msra.mxu0 %v98
      %5060 = vmatprep.subr.mxu0 0.0
      %5061 = vmatpush1.msra.mxu0 %v97
      %5062 = vmatprep.subr.mxu0 0.0
      %5063 = vmatpush1.msra.mxu0 %v96
      %5064 = vmatprep.subr.mxu0 0.0
      %5065 = vmatpush1.msra.mxu0 %v95
      %5066 = vmatprep.subr.mxu0 0.0
      %5067 = vmatpush1.msra.mxu0 %v94
      %5068 = vmatprep.subr.mxu0 0.0
      %5069 = vmatpush1.msra.mxu0 %v93
      %5070 = vmatprep.subr.mxu0 0.0
      %5071 = vmatpush1.msra.mxu0 %v92
      %5072 = vmatprep.subr.mxu0 0.0
      %5073 = vmatpush1.msra.mxu0 %v91
      %5074 = vmatprep.subr.mxu0 0.0
      %5075 = vmatpush1.msra.mxu0 %v90
      %5076 = vmatprep.subr.mxu0 0.0
      %5077 = vmatpush1.msra.mxu0 %v89
      %5078 = vmatprep.subr.mxu0 0.0
      %5079 = vmatpush1.msra.mxu0 %v88
      %5080 = vmatprep.subr.mxu0 0.0
      %5081 = vmatpush1.msra.mxu0 %v87
      %5082 = vmatprep.subr.mxu0 0.0
      %5083 = vmatpush1.msra.mxu0 %v86
      %5084 = vmatprep.subr.mxu0 0.0
      %5085 = vmatpush2.msra.mxu0 0.0
      %5086 = vmatprep.subr.mxu0 0.0
      %5087 = vmatpush2.msra.mxu0 0.0
      %5088 = vmatprep.subr.mxu0 0.0
      %5089 = vmatpush2.msra.mxu0 0.0
      %5090 = vmatprep.subr.mxu0 0.0
      %5091 = vmatpush2.msra.mxu0 0.0
      %5092 = vmatprep.subr.mxu0 0.0
      %5093 = vmatpush2.msra.mxu0 0.0
      %5094 = vmatprep.subr.mxu0 0.0
      %5095 = vmatpush2.msra.mxu0 0.0
      %5096 = vmatprep.subr.mxu0 0.0
      %5097 = vmatpush2.msra.mxu0 0.0
      %5098 = vmatprep.subr.mxu0 0.0
      %5099 = vmatpush2.msra.mxu0 0.0
      %5100 = vmatprep.subr.mxu0 0.0
      %5101 = vmatpush2.msra.mxu0 0.0
      %5102 = vmatprep.subr.mxu0 0.0
      %5103 = vmatpush2.msra.mxu0 0.0
      %5104 = vmatprep.subr.mxu0 0.0
      %5105 = vmatpush2.msra.mxu0 0.0
      %5106 = vmatprep.subr.mxu0 0.0
      %5107 = vmatpush2.msra.mxu0 0.0
      %5108 = vmatprep.subr.mxu0 0.0
      %5109 = vmatpush2.msra.mxu0 0.0
      %5110 = vmatprep.subr.mxu0 0.0
      %5111 = vmatpush2.msra.mxu0 0.0
      %5112 = vmatprep.subr.mxu0 0.0
      %5113 = vmatpush2.msra.mxu0 0.0
      %5114 = vmatprep.subr.mxu0 0.0
      %5115 = vmatpush2.msra.mxu0 0.0
      %5116 = vmatprep.mubr.f32.mxu0 0.0
      %5117 = vmatmul.mubr.f32.gmra.mxu0 %v5051
      %v5118 = vpop.f32.mrf.mxu0
      %v5119 = vadd.f32 %v4588, %v5118
      %v5120 = vpop.f32.mrf.mxu0
      %5121 = vdwg.mxu0
      %v5122 = vmul.f32 %v4660, %v5119
      %v5123 = vadd.f32 %v4969, %v5122
      %5124 = vst [vmem:[#allocation2] sm:$0xff] %v5123
    $region73: #{neural_ode_forward.1} parent=1 // pred_fallthru
      _
    %v5125 = vld [vmem:[#allocation2] sm:$0xff]
    %s5126 = scalar_lea.vmem [#allocation6], 48
    %5127 = vst [vmem:[%s5126] sm:$0xff] %v5125
    %s5128 = sadd.s32 %s103, 7
    %p5129 = scmp.gt.s32.totalorder %s5128, 0
    %p5130 = scmp.lt.s32.totalorder %s5128, 8
    %p5131 = pnand %p5129, %p5130
    %p5132 = pneg %p5131
    // Predicated region
    $region74: #{neural_ode_forward.1} parent=1 // pred_check
      _
    $region75: #{neural_ode_forward.1} parent=1 // pred_check_branch
      %5134 = sbr.rel (%p5131) target = $region77
    $region76: #{neural_ode_forward.1} parent=1 // pred_region
      %s5135 = sld [smem:[#allocation3 + %s4410]]
      %s5136 = sld [smem:[#allocation3 + %s5128]]
      %s5137 = scalar_lea.vmem %s2, 56
      %v5138 = vld [vmem:[%s5137] sm:$0xff]
      %v5140 = vlaneseq
      %v5141 = vshrl.u32 %v5140, 7
      %v5142 = vsub.s32 0, %v5141
      %v5143 = vrot.slane %v85, %v5142
      %5145 = vmatprep.subr.mxu0 0.0
      %5146 = vmatpush1.msra.mxu0 %v83
      %5147 = vmatprep.subr.mxu0 0.0
      %5148 = vmatpush1.msra.mxu0 %v82
      %5149 = vmatprep.subr.mxu0 0.0
      %5150 = vmatpush1.msra.mxu0 %v81
      %5151 = vmatprep.subr.mxu0 0.0
      %5152 = vmatpush1.msra.mxu0 %v80
      %5153 = vmatprep.subr.mxu0 0.0
      %5154 = vmatpush1.msra.mxu0 %v79
      %5155 = vmatprep.subr.mxu0 0.0
      %5156 = vmatpush1.msra.mxu0 %v78
      %5157 = vmatprep.subr.mxu0 0.0
      %5158 = vmatpush1.msra.mxu0 %v77
      %5159 = vmatprep.subr.mxu0 0.0
      %5160 = vmatpush1.msra.mxu0 %v76
      %5161 = vmatprep.subr.mxu0 0.0
      %5162 = vmatpush1.msra.mxu0 %v75
      %5163 = vmatprep.subr.mxu0 0.0
      %5164 = vmatpush1.msra.mxu0 %v74
      %5165 = vmatprep.subr.mxu0 0.0
      %5166 = vmatpush1.msra.mxu0 %v73
      %5167 = vmatprep.subr.mxu0 0.0
      %5168 = vmatpush1.msra.mxu0 %v72
      %5169 = vmatprep.subr.mxu0 0.0
      %5170 = vmatpush1.msra.mxu0 %v71
      %5171 = vmatprep.subr.mxu0 0.0
      %5172 = vmatpush1.msra.mxu0 %v70
      %5173 = vmatprep.subr.mxu0 0.0
      %5174 = vmatpush1.msra.mxu0 %v69
      %5175 = vmatprep.subr.mxu0 0.0
      %5176 = vmatpush1.msra.mxu0 %v68
      %5177 = vmatprep.subr.mxu0 0.0
      %5178 = vmatpush2.msra.mxu0 0.0
      %5179 = vmatprep.subr.mxu0 0.0
      %5180 = vmatpush2.msra.mxu0 0.0
      %5181 = vmatprep.subr.mxu0 0.0
      %5182 = vmatpush2.msra.mxu0 0.0
      %5183 = vmatprep.subr.mxu0 0.0
      %5184 = vmatpush2.msra.mxu0 0.0
      %5185 = vmatprep.subr.mxu0 0.0
      %5186 = vmatpush2.msra.mxu0 0.0
      %5187 = vmatprep.subr.mxu0 0.0
      %5188 = vmatpush2.msra.mxu0 0.0
      %5189 = vmatprep.subr.mxu0 0.0
      %5190 = vmatpush2.msra.mxu0 0.0
      %5191 = vmatprep.subr.mxu0 0.0
      %5192 = vmatpush2.msra.mxu0 0.0
      %5193 = vmatprep.subr.mxu0 0.0
      %5194 = vmatpush2.msra.mxu0 0.0
      %5195 = vmatprep.subr.mxu0 0.0
      %5196 = vmatpush2.msra.mxu0 0.0
      %5197 = vmatprep.subr.mxu0 0.0
      %5198 = vmatpush2.msra.mxu0 0.0
      %5199 = vmatprep.subr.mxu0 0.0
      %5200 = vmatpush2.msra.mxu0 0.0
      %5201 = vmatprep.subr.mxu0 0.0
      %5202 = vmatpush2.msra.mxu0 0.0
      %5203 = vmatprep.subr.mxu0 0.0
      %5204 = vmatpush2.msra.mxu0 0.0
      %5205 = vmatprep.subr.mxu0 0.0
      %5206 = vmatpush2.msra.mxu0 0.0
      %5207 = vmatprep.subr.mxu0 0.0
      %5208 = vmatpush2.msra.mxu0 0.0
      %5209 = vmatprep.mubr.f32.mxu0 0.0
      %5210 = vmatmul.mubr.f32.gmra.mxu0 %v5138
      %v5211 = vpop.f32.mrf.mxu0
      %v5212 = vadd.f32 %v5143, %v5211
      %v5213 = vpop.f32.mrf.mxu0
      %5214 = vdwg.mxu0
      %s5215 = ssub.f32 %s5136, %s5135
      %v5216 = vrcp.pop 4.0
      %s5217 = vtos %v5216
      %s5218 = smul.f32 %s5215, %s5217
      %v5219 = vld [vmem:[#allocation2] sm:$0xff]
      %s5220 = smul.f32 %s5218, 0.0
      %s5221 = sadd.f32 %s5135, %s5220
      %5222 = vmatprep.subr.mxu0 0.0
      %5223 = vmatpush1.msra.mxu0 %v67
      %5224 = vmatprep.subr.mxu0 0.0
      %5225 = vmatpush1.msra.mxu0 %v66
      %5226 = vmatprep.subr.mxu0 0.0
      %5227 = vmatpush1.msra.mxu0 %v65
      %5228 = vmatprep.subr.mxu0 0.0
      %5229 = vmatpush1.msra.mxu0 %v64
      %5230 = vmatprep.subr.mxu0 0.0
      %5231 = vmatpush1.msra.mxu0 %v63
      %5232 = vmatprep.subr.mxu0 0.0
      %5233 = vmatpush1.msra.mxu0 %v62
      %5234 = vmatprep.subr.mxu0 0.0
      %5235 = vmatpush1.msra.mxu0 %v61
      %5236 = vmatprep.subr.mxu0 0.0
      %5237 = vmatpush1.msra.mxu0 %v60
      %5238 = vmatprep.subr.mxu0 0.0
      %5239 = vmatpush1.msra.mxu0 %v59
      %5240 = vmatprep.subr.mxu0 0.0
      %5241 = vmatpush1.msra.mxu0 %v58
      %5242 = vmatprep.subr.mxu0 0.0
      %5243 = vmatpush1.msra.mxu0 %v57
      %5244 = vmatprep.subr.mxu0 0.0
      %5245 = vmatpush1.msra.mxu0 %v56
      %5246 = vmatprep.subr.mxu0 0.0
      %5247 = vmatpush1.msra.mxu0 %v55
      %5248 = vmatprep.subr.mxu0 0.0
      %5249 = vmatpush1.msra.mxu0 %v54
      %5250 = vmatprep.subr.mxu0 0.0
      %5251 = vmatpush1.msra.mxu0 %v53
      %5252 = vmatprep.subr.mxu0 0.0
      %5253 = vmatpush1.msra.mxu0 %v52
      %5254 = vmatprep.subr.mxu0 0.0
      %5255 = vmatpush2.msra.mxu0 0.0
      %5256 = vmatprep.subr.mxu0 0.0
      %5257 = vmatpush2.msra.mxu0 0.0
      %5258 = vmatprep.subr.mxu0 0.0
      %5259 = vmatpush2.msra.mxu0 0.0
      %5260 = vmatprep.subr.mxu0 0.0
      %5261 = vmatpush2.msra.mxu0 0.0
      %5262 = vmatprep.subr.mxu0 0.0
      %5263 = vmatpush2.msra.mxu0 0.0
      %5264 = vmatprep.subr.mxu0 0.0
      %5265 = vmatpush2.msra.mxu0 0.0
      %5266 = vmatprep.subr.mxu0 0.0
      %5267 = vmatpush2.msra.mxu0 0.0
      %5268 = vmatprep.subr.mxu0 0.0
      %5269 = vmatpush2.msra.mxu0 0.0
      %5270 = vmatprep.subr.mxu0 0.0
      %5271 = vmatpush2.msra.mxu0 0.0
      %5272 = vmatprep.subr.mxu0 0.0
      %5273 = vmatpush2.msra.mxu0 0.0
      %5274 = vmatprep.subr.mxu0 0.0
      %5275 = vmatpush2.msra.mxu0 0.0
      %5276 = vmatprep.subr.mxu0 0.0
      %5277 = vmatpush2.msra.mxu0 0.0
      %5278 = vmatprep.subr.mxu0 0.0
      %5279 = vmatpush2.msra.mxu0 0.0
      %5280 = vmatprep.subr.mxu0 0.0
      %5281 = vmatpush2.msra.mxu0 0.0
      %5282 = vmatprep.subr.mxu0 0.0
      %5283 = vmatpush2.msra.mxu0 0.0
      %5284 = vmatprep.subr.mxu0 0.0
      %5285 = vmatpush2.msra.mxu0 0.0
      %5286 = vmatprep.mubr.f32.mxu0 0.0
      %5287 = vmatmul.mubr.f32.gmra.mxu0 %v5219
      %v5288 = vpop.f32.mrf.mxu0
      %v5289 = vadd.f32 %v5212, %v5288
      %v5290 = vpop.f32.mrf.mxu0
      %5291 = vdwg.mxu0
      %v5292 = vstv %s5221
      %v5293 = vmul.f32 %v5292, %v84
      %v5295 = vlaneseq
      %v5296 = vshrl.u32 %v5295, 7
      %v5297 = vsub.s32 0, %v5296
      %v5298 = vrot.slane %v5293, %v5297
      %v5300 = vadd.f32 %v5289, %v5298
      %v5301 = vtanh.pop %v5300
      %v5303 = vlaneseq
      %v5304 = vshrl.u32 %v5303, 7
      %v5305 = vsub.s32 0, %v5304
      %v5306 = vrot.slane %v102, %v5305
      %5308 = vmatprep.subr.mxu0 0.0
      %5309 = vmatpush1.msra.mxu0 %v101
      %5310 = vmatprep.subr.mxu0 0.0
      %5311 = vmatpush1.msra.mxu0 %v100
      %5312 = vmatprep.subr.mxu0 0.0
      %5313 = vmatpush1.msra.mxu0 %v99
      %5314 = vmatprep.subr.mxu0 0.0
      %5315 = vmatpush1.msra.mxu0 %v98
      %5316 = vmatprep.subr.mxu0 0.0
      %5317 = vmatpush1.msra.mxu0 %v97
      %5318 = vmatprep.subr.mxu0 0.0
      %5319 = vmatpush1.msra.mxu0 %v96
      %5320 = vmatprep.subr.mxu0 0.0
      %5321 = vmatpush1.msra.mxu0 %v95
      %5322 = vmatprep.subr.mxu0 0.0
      %5323 = vmatpush1.msra.mxu0 %v94
      %5324 = vmatprep.subr.mxu0 0.0
      %5325 = vmatpush1.msra.mxu0 %v93
      %5326 = vmatprep.subr.mxu0 0.0
      %5327 = vmatpush1.msra.mxu0 %v92
      %5328 = vmatprep.subr.mxu0 0.0
      %5329 = vmatpush1.msra.mxu0 %v91
      %5330 = vmatprep.subr.mxu0 0.0
      %5331 = vmatpush1.msra.mxu0 %v90
      %5332 = vmatprep.subr.mxu0 0.0
      %5333 = vmatpush1.msra.mxu0 %v89
      %5334 = vmatprep.subr.mxu0 0.0
      %5335 = vmatpush1.msra.mxu0 %v88
      %5336 = vmatprep.subr.mxu0 0.0
      %5337 = vmatpush1.msra.mxu0 %v87
      %5338 = vmatprep.subr.mxu0 0.0
      %5339 = vmatpush1.msra.mxu0 %v86
      %5340 = vmatprep.subr.mxu0 0.0
      %5341 = vmatpush2.msra.mxu0 0.0
      %5342 = vmatprep.subr.mxu0 0.0
      %5343 = vmatpush2.msra.mxu0 0.0
      %5344 = vmatprep.subr.mxu0 0.0
      %5345 = vmatpush2.msra.mxu0 0.0
      %5346 = vmatprep.subr.mxu0 0.0
      %5347 = vmatpush2.msra.mxu0 0.0
      %5348 = vmatprep.subr.mxu0 0.0
      %5349 = vmatpush2.msra.mxu0 0.0
      %5350 = vmatprep.subr.mxu0 0.0
      %5351 = vmatpush2.msra.mxu0 0.0
      %5352 = vmatprep.subr.mxu0 0.0
      %5353 = vmatpush2.msra.mxu0 0.0
      %5354 = vmatprep.subr.mxu0 0.0
      %5355 = vmatpush2.msra.mxu0 0.0
      %5356 = vmatprep.subr.mxu0 0.0
      %5357 = vmatpush2.msra.mxu0 0.0
      %5358 = vmatprep.subr.mxu0 0.0
      %5359 = vmatpush2.msra.mxu0 0.0
      %5360 = vmatprep.subr.mxu0 0.0
      %5361 = vmatpush2.msra.mxu0 0.0
      %5362 = vmatprep.subr.mxu0 0.0
      %5363 = vmatpush2.msra.mxu0 0.0
      %5364 = vmatprep.subr.mxu0 0.0
      %5365 = vmatpush2.msra.mxu0 0.0
      %5366 = vmatprep.subr.mxu0 0.0
      %5367 = vmatpush2.msra.mxu0 0.0
      %5368 = vmatprep.subr.mxu0 0.0
      %5369 = vmatpush2.msra.mxu0 0.0
      %5370 = vmatprep.subr.mxu0 0.0
      %5371 = vmatpush2.msra.mxu0 0.0
      %5372 = vmatprep.mubr.f32.mxu0 0.0
      %5373 = vmatmul.mubr.f32.gmra.mxu0 %v5301
      %v5374 = vpop.f32.mrf.mxu0
      %v5375 = vadd.f32 %v5306, %v5374
      %v5376 = vpop.f32.mrf.mxu0
      %5377 = vdwg.mxu0
      %v5378 = vstv %s5218
      %v5379 = vmul.f32 %v5378, %v5375
      %v5380 = vadd.f32 %v5219, %v5379
      %s5381 = sadd.f32 %s5135, %s5218
      %5382 = vmatprep.subr.mxu0 0.0
      %5383 = vmatpush1.msra.mxu0 %v67
      %5384 = vmatprep.subr.mxu0 0.0
      %5385 = vmatpush1.msra.mxu0 %v66
      %5386 = vmatprep.subr.mxu0 0.0
      %5387 = vmatpush1.msra.mxu0 %v65
      %5388 = vmatprep.subr.mxu0 0.0
      %5389 = vmatpush1.msra.mxu0 %v64
      %5390 = vmatprep.subr.mxu0 0.0
      %5391 = vmatpush1.msra.mxu0 %v63
      %5392 = vmatprep.subr.mxu0 0.0
      %5393 = vmatpush1.msra.mxu0 %v62
      %5394 = vmatprep.subr.mxu0 0.0
      %5395 = vmatpush1.msra.mxu0 %v61
      %5396 = vmatprep.subr.mxu0 0.0
      %5397 = vmatpush1.msra.mxu0 %v60
      %5398 = vmatprep.subr.mxu0 0.0
      %5399 = vmatpush1.msra.mxu0 %v59
      %5400 = vmatprep.subr.mxu0 0.0
      %5401 = vmatpush1.msra.mxu0 %v58
      %5402 = vmatprep.subr.mxu0 0.0
      %5403 = vmatpush1.msra.mxu0 %v57
      %5404 = vmatprep.subr.mxu0 0.0
      %5405 = vmatpush1.msra.mxu0 %v56
      %5406 = vmatprep.subr.mxu0 0.0
      %5407 = vmatpush1.msra.mxu0 %v55
      %5408 = vmatprep.subr.mxu0 0.0
      %5409 = vmatpush1.msra.mxu0 %v54
      %5410 = vmatprep.subr.mxu0 0.0
      %5411 = vmatpush1.msra.mxu0 %v53
      %5412 = vmatprep.subr.mxu0 0.0
      %5413 = vmatpush1.msra.mxu0 %v52
      %5414 = vmatprep.subr.mxu0 0.0
      %5415 = vmatpush2.msra.mxu0 0.0
      %5416 = vmatprep.subr.mxu0 0.0
      %5417 = vmatpush2.msra.mxu0 0.0
      %5418 = vmatprep.subr.mxu0 0.0
      %5419 = vmatpush2.msra.mxu0 0.0
      %5420 = vmatprep.subr.mxu0 0.0
      %5421 = vmatpush2.msra.mxu0 0.0
      %5422 = vmatprep.subr.mxu0 0.0
      %5423 = vmatpush2.msra.mxu0 0.0
      %5424 = vmatprep.subr.mxu0 0.0
      %5425 = vmatpush2.msra.mxu0 0.0
      %5426 = vmatprep.subr.mxu0 0.0
      %5427 = vmatpush2.msra.mxu0 0.0
      %5428 = vmatprep.subr.mxu0 0.0
      %5429 = vmatpush2.msra.mxu0 0.0
      %5430 = vmatprep.subr.mxu0 0.0
      %5431 = vmatpush2.msra.mxu0 0.0
      %5432 = vmatprep.subr.mxu0 0.0
      %5433 = vmatpush2.msra.mxu0 0.0
      %5434 = vmatprep.subr.mxu0 0.0
      %5435 = vmatpush2.msra.mxu0 0.0
      %5436 = vmatprep.subr.mxu0 0.0
      %5437 = vmatpush2.msra.mxu0 0.0
      %5438 = vmatprep.subr.mxu0 0.0
      %5439 = vmatpush2.msra.mxu0 0.0
      %5440 = vmatprep.subr.mxu0 0.0
      %5441 = vmatpush2.msra.mxu0 0.0
      %5442 = vmatprep.subr.mxu0 0.0
      %5443 = vmatpush2.msra.mxu0 0.0
      %5444 = vmatprep.subr.mxu0 0.0
      %5445 = vmatpush2.msra.mxu0 0.0
      %5446 = vmatprep.mubr.f32.mxu0 0.0
      %5447 = vmatmul.mubr.f32.gmra.mxu0 %v5380
      %v5448 = vpop.f32.mrf.mxu0
      %v5449 = vadd.f32 %v5212, %v5448
      %v5450 = vpop.f32.mrf.mxu0
      %5451 = vdwg.mxu0
      %v5452 = vstv %s5381
      %v5453 = vmul.f32 %v5452, %v84
      %v5455 = vlaneseq
      %v5456 = vshrl.u32 %v5455, 7
      %v5457 = vsub.s32 0, %v5456
      %v5458 = vrot.slane %v5453, %v5457
      %v5460 = vadd.f32 %v5449, %v5458
      %v5461 = vtanh.pop %v5460
      %5462 = vmatprep.subr.mxu0 0.0
      %5463 = vmatpush1.msra.mxu0 %v101
      %5464 = vmatprep.subr.mxu0 0.0
      %5465 = vmatpush1.msra.mxu0 %v100
      %5466 = vmatprep.subr.mxu0 0.0
      %5467 = vmatpush1.msra.mxu0 %v99
      %5468 = vmatprep.subr.mxu0 0.0
      %5469 = vmatpush1.msra.mxu0 %v98
      %5470 = vmatprep.subr.mxu0 0.0
      %5471 = vmatpush1.msra.mxu0 %v97
      %5472 = vmatprep.subr.mxu0 0.0
      %5473 = vmatpush1.msra.mxu0 %v96
      %5474 = vmatprep.subr.mxu0 0.0
      %5475 = vmatpush1.msra.mxu0 %v95
      %5476 = vmatprep.subr.mxu0 0.0
      %5477 = vmatpush1.msra.mxu0 %v94
      %5478 = vmatprep.subr.mxu0 0.0
      %5479 = vmatpush1.msra.mxu0 %v93
      %5480 = vmatprep.subr.mxu0 0.0
      %5481 = vmatpush1.msra.mxu0 %v92
      %5482 = vmatprep.subr.mxu0 0.0
      %5483 = vmatpush1.msra.mxu0 %v91
      %5484 = vmatprep.subr.mxu0 0.0
      %5485 = vmatpush1.msra.mxu0 %v90
      %5486 = vmatprep.subr.mxu0 0.0
      %5487 = vmatpush1.msra.mxu0 %v89
      %5488 = vmatprep.subr.mxu0 0.0
      %5489 = vmatpush1.msra.mxu0 %v88
      %5490 = vmatprep.subr.mxu0 0.0
      %5491 = vmatpush1.msra.mxu0 %v87
      %5492 = vmatprep.subr.mxu0 0.0
      %5493 = vmatpush1.msra.mxu0 %v86
      %5494 = vmatprep.subr.mxu0 0.0
      %5495 = vmatpush2.msra.mxu0 0.0
      %5496 = vmatprep.subr.mxu0 0.0
      %5497 = vmatpush2.msra.mxu0 0.0
      %5498 = vmatprep.subr.mxu0 0.0
      %5499 = vmatpush2.msra.mxu0 0.0
      %5500 = vmatprep.subr.mxu0 0.0
      %5501 = vmatpush2.msra.mxu0 0.0
      %5502 = vmatprep.subr.mxu0 0.0
      %5503 = vmatpush2.msra.mxu0 0.0
      %5504 = vmatprep.subr.mxu0 0.0
      %5505 = vmatpush2.msra.mxu0 0.0
      %5506 = vmatprep.subr.mxu0 0.0
      %5507 = vmatpush2.msra.mxu0 0.0
      %5508 = vmatprep.subr.mxu0 0.0
      %5509 = vmatpush2.msra.mxu0 0.0
      %5510 = vmatprep.subr.mxu0 0.0
      %5511 = vmatpush2.msra.mxu0 0.0
      %5512 = vmatprep.subr.mxu0 0.0
      %5513 = vmatpush2.msra.mxu0 0.0
      %5514 = vmatprep.subr.mxu0 0.0
      %5515 = vmatpush2.msra.mxu0 0.0
      %5516 = vmatprep.subr.mxu0 0.0
      %5517 = vmatpush2.msra.mxu0 0.0
      %5518 = vmatprep.subr.mxu0 0.0
      %5519 = vmatpush2.msra.mxu0 0.0
      %5520 = vmatprep.subr.mxu0 0.0
      %5521 = vmatpush2.msra.mxu0 0.0
      %5522 = vmatprep.subr.mxu0 0.0
      %5523 = vmatpush2.msra.mxu0 0.0
      %5524 = vmatprep.subr.mxu0 0.0
      %5525 = vmatpush2.msra.mxu0 0.0
      %5526 = vmatprep.mubr.f32.mxu0 0.0
      %5527 = vmatmul.mubr.f32.gmra.mxu0 %v5461
      %v5528 = vpop.f32.mrf.mxu0
      %v5529 = vadd.f32 %v5306, %v5528
      %v5530 = vpop.f32.mrf.mxu0
      %5531 = vdwg.mxu0
      %v5532 = vmul.f32 %v5378, %v5529
      %v5533 = vadd.f32 %v5380, %v5532
      %s5534 = smul.f32 %s5218, 2.0
      %s5535 = sadd.f32 %s5135, %s5534
      %5536 = vmatprep.subr.mxu0 0.0
      %5537 = vmatpush1.msra.mxu0 %v67
      %5538 = vmatprep.subr.mxu0 0.0
      %5539 = vmatpush1.msra.mxu0 %v66
      %5540 = vmatprep.subr.mxu0 0.0
      %5541 = vmatpush1.msra.mxu0 %v65
      %5542 = vmatprep.subr.mxu0 0.0
      %5543 = vmatpush1.msra.mxu0 %v64
      %5544 = vmatprep.subr.mxu0 0.0
      %5545 = vmatpush1.msra.mxu0 %v63
      %5546 = vmatprep.subr.mxu0 0.0
      %5547 = vmatpush1.msra.mxu0 %v62
      %5548 = vmatprep.subr.mxu0 0.0
      %5549 = vmatpush1.msra.mxu0 %v61
      %5550 = vmatprep.subr.mxu0 0.0
      %5551 = vmatpush1.msra.mxu0 %v60
      %5552 = vmatprep.subr.mxu0 0.0
      %5553 = vmatpush1.msra.mxu0 %v59
      %5554 = vmatprep.subr.mxu0 0.0
      %5555 = vmatpush1.msra.mxu0 %v58
      %5556 = vmatprep.subr.mxu0 0.0
      %5557 = vmatpush1.msra.mxu0 %v57
      %5558 = vmatprep.subr.mxu0 0.0
      %5559 = vmatpush1.msra.mxu0 %v56
      %5560 = vmatprep.subr.mxu0 0.0
      %5561 = vmatpush1.msra.mxu0 %v55
      %5562 = vmatprep.subr.mxu0 0.0
      %5563 = vmatpush1.msra.mxu0 %v54
      %5564 = vmatprep.subr.mxu0 0.0
      %5565 = vmatpush1.msra.mxu0 %v53
      %5566 = vmatprep.subr.mxu0 0.0
      %5567 = vmatpush1.msra.mxu0 %v52
      %5568 = vmatprep.subr.mxu0 0.0
      %5569 = vmatpush2.msra.mxu0 0.0
      %5570 = vmatprep.subr.mxu0 0.0
      %5571 = vmatpush2.msra.mxu0 0.0
      %5572 = vmatprep.subr.mxu0 0.0
      %5573 = vmatpush2.msra.mxu0 0.0
      %5574 = vmatprep.subr.mxu0 0.0
      %5575 = vmatpush2.msra.mxu0 0.0
      %5576 = vmatprep.subr.mxu0 0.0
      %5577 = vmatpush2.msra.mxu0 0.0
      %5578 = vmatprep.subr.mxu0 0.0
      %5579 = vmatpush2.msra.mxu0 0.0
      %5580 = vmatprep.subr.mxu0 0.0
      %5581 = vmatpush2.msra.mxu0 0.0
      %5582 = vmatprep.subr.mxu0 0.0
      %5583 = vmatpush2.msra.mxu0 0.0
      %5584 = vmatprep.subr.mxu0 0.0
      %5585 = vmatpush2.msra.mxu0 0.0
      %5586 = vmatprep.subr.mxu0 0.0
      %5587 = vmatpush2.msra.mxu0 0.0
      %5588 = vmatprep.subr.mxu0 0.0
      %5589 = vmatpush2.msra.mxu0 0.0
      %5590 = vmatprep.subr.mxu0 0.0
      %5591 = vmatpush2.msra.mxu0 0.0
      %5592 = vmatprep.subr.mxu0 0.0
      %5593 = vmatpush2.msra.mxu0 0.0
      %5594 = vmatprep.subr.mxu0 0.0
      %5595 = vmatpush2.msra.mxu0 0.0
      %5596 = vmatprep.subr.mxu0 0.0
      %5597 = vmatpush2.msra.mxu0 0.0
      %5598 = vmatprep.subr.mxu0 0.0
      %5599 = vmatpush2.msra.mxu0 0.0
      %5600 = vmatprep.mubr.f32.mxu0 0.0
      %5601 = vmatmul.mubr.f32.gmra.mxu0 %v5533
      %v5602 = vpop.f32.mrf.mxu0
      %v5603 = vadd.f32 %v5212, %v5602
      %v5604 = vpop.f32.mrf.mxu0
      %5605 = vdwg.mxu0
      %v5606 = vstv %s5535
      %v5607 = vmul.f32 %v5606, %v84
      %v5609 = vlaneseq
      %v5610 = vshrl.u32 %v5609, 7
      %v5611 = vsub.s32 0, %v5610
      %v5612 = vrot.slane %v5607, %v5611
      %v5614 = vadd.f32 %v5603, %v5612
      %v5615 = vtanh.pop %v5614
      %5616 = vmatprep.subr.mxu0 0.0
      %5617 = vmatpush1.msra.mxu0 %v101
      %5618 = vmatprep.subr.mxu0 0.0
      %5619 = vmatpush1.msra.mxu0 %v100
      %5620 = vmatprep.subr.mxu0 0.0
      %5621 = vmatpush1.msra.mxu0 %v99
      %5622 = vmatprep.subr.mxu0 0.0
      %5623 = vmatpush1.msra.mxu0 %v98
      %5624 = vmatprep.subr.mxu0 0.0
      %5625 = vmatpush1.msra.mxu0 %v97
      %5626 = vmatprep.subr.mxu0 0.0
      %5627 = vmatpush1.msra.mxu0 %v96
      %5628 = vmatprep.subr.mxu0 0.0
      %5629 = vmatpush1.msra.mxu0 %v95
      %5630 = vmatprep.subr.mxu0 0.0
      %5631 = vmatpush1.msra.mxu0 %v94
      %5632 = vmatprep.subr.mxu0 0.0
      %5633 = vmatpush1.msra.mxu0 %v93
      %5634 = vmatprep.subr.mxu0 0.0
      %5635 = vmatpush1.msra.mxu0 %v92
      %5636 = vmatprep.subr.mxu0 0.0
      %5637 = vmatpush1.msra.mxu0 %v91
      %5638 = vmatprep.subr.mxu0 0.0
      %5639 = vmatpush1.msra.mxu0 %v90
      %5640 = vmatprep.subr.mxu0 0.0
      %5641 = vmatpush1.msra.mxu0 %v89
      %5642 = vmatprep.subr.mxu0 0.0
      %5643 = vmatpush1.msra.mxu0 %v88
      %5644 = vmatprep.subr.mxu0 0.0
      %5645 = vmatpush1.msra.mxu0 %v87
      %5646 = vmatprep.subr.mxu0 0.0
      %5647 = vmatpush1.msra.mxu0 %v86
      %5648 = vmatprep.subr.mxu0 0.0
      %5649 = vmatpush2.msra.mxu0 0.0
      %5650 = vmatprep.subr.mxu0 0.0
      %5651 = vmatpush2.msra.mxu0 0.0
      %5652 = vmatprep.subr.mxu0 0.0
      %5653 = vmatpush2.msra.mxu0 0.0
      %5654 = vmatprep.subr.mxu0 0.0
      %5655 = vmatpush2.msra.mxu0 0.0
      %5656 = vmatprep.subr.mxu0 0.0
      %5657 = vmatpush2.msra.mxu0 0.0
      %5658 = vmatprep.subr.mxu0 0.0
      %5659 = vmatpush2.msra.mxu0 0.0
      %5660 = vmatprep.subr.mxu0 0.0
      %5661 = vmatpush2.msra.mxu0 0.0
      %5662 = vmatprep.subr.mxu0 0.0
      %5663 = vmatpush2.msra.mxu0 0.0
      %5664 = vmatprep.subr.mxu0 0.0
      %5665 = vmatpush2.msra.mxu0 0.0
      %5666 = vmatprep.subr.mxu0 0.0
      %5667 = vmatpush2.msra.mxu0 0.0
      %5668 = vmatprep.subr.mxu0 0.0
      %5669 = vmatpush2.msra.mxu0 0.0
      %5670 = vmatprep.subr.mxu0 0.0
      %5671 = vmatpush2.msra.mxu0 0.0
      %5672 = vmatprep.subr.mxu0 0.0
      %5673 = vmatpush2.msra.mxu0 0.0
      %5674 = vmatprep.subr.mxu0 0.0
      %5675 = vmatpush2.msra.mxu0 0.0
      %5676 = vmatprep.subr.mxu0 0.0
      %5677 = vmatpush2.msra.mxu0 0.0
      %5678 = vmatprep.subr.mxu0 0.0
      %5679 = vmatpush2.msra.mxu0 0.0
      %5680 = vmatprep.mubr.f32.mxu0 0.0
      %5681 = vmatmul.mubr.f32.gmra.mxu0 %v5615
      %v5682 = vpop.f32.mrf.mxu0
      %v5683 = vadd.f32 %v5306, %v5682
      %v5684 = vpop.f32.mrf.mxu0
      %5685 = vdwg.mxu0
      %v5686 = vmul.f32 %v5378, %v5683
      %v5687 = vadd.f32 %v5533, %v5686
      %s5688 = smul.f32 %s5218, 3.0
      %s5689 = sadd.f32 %s5135, %s5688
      %5690 = vmatprep.subr.mxu0 0.0
      %5691 = vmatpush1.msra.mxu0 %v67
      %5692 = vmatprep.subr.mxu0 0.0
      %5693 = vmatpush1.msra.mxu0 %v66
      %5694 = vmatprep.subr.mxu0 0.0
      %5695 = vmatpush1.msra.mxu0 %v65
      %5696 = vmatprep.subr.mxu0 0.0
      %5697 = vmatpush1.msra.mxu0 %v64
      %5698 = vmatprep.subr.mxu0 0.0
      %5699 = vmatpush1.msra.mxu0 %v63
      %5700 = vmatprep.subr.mxu0 0.0
      %5701 = vmatpush1.msra.mxu0 %v62
      %5702 = vmatprep.subr.mxu0 0.0
      %5703 = vmatpush1.msra.mxu0 %v61
      %5704 = vmatprep.subr.mxu0 0.0
      %5705 = vmatpush1.msra.mxu0 %v60
      %5706 = vmatprep.subr.mxu0 0.0
      %5707 = vmatpush1.msra.mxu0 %v59
      %5708 = vmatprep.subr.mxu0 0.0
      %5709 = vmatpush1.msra.mxu0 %v58
      %5710 = vmatprep.subr.mxu0 0.0
      %5711 = vmatpush1.msra.mxu0 %v57
      %5712 = vmatprep.subr.mxu0 0.0
      %5713 = vmatpush1.msra.mxu0 %v56
      %5714 = vmatprep.subr.mxu0 0.0
      %5715 = vmatpush1.msra.mxu0 %v55
      %5716 = vmatprep.subr.mxu0 0.0
      %5717 = vmatpush1.msra.mxu0 %v54
      %5718 = vmatprep.subr.mxu0 0.0
      %5719 = vmatpush1.msra.mxu0 %v53
      %5720 = vmatprep.subr.mxu0 0.0
      %5721 = vmatpush1.msra.mxu0 %v52
      %5722 = vmatprep.subr.mxu0 0.0
      %5723 = vmatpush2.msra.mxu0 0.0
      %5724 = vmatprep.subr.mxu0 0.0
      %5725 = vmatpush2.msra.mxu0 0.0
      %5726 = vmatprep.subr.mxu0 0.0
      %5727 = vmatpush2.msra.mxu0 0.0
      %5728 = vmatprep.subr.mxu0 0.0
      %5729 = vmatpush2.msra.mxu0 0.0
      %5730 = vmatprep.subr.mxu0 0.0
      %5731 = vmatpush2.msra.mxu0 0.0
      %5732 = vmatprep.subr.mxu0 0.0
      %5733 = vmatpush2.msra.mxu0 0.0
      %5734 = vmatprep.subr.mxu0 0.0
      %5735 = vmatpush2.msra.mxu0 0.0
      %5736 = vmatprep.subr.mxu0 0.0
      %5737 = vmatpush2.msra.mxu0 0.0
      %5738 = vmatprep.subr.mxu0 0.0
      %5739 = vmatpush2.msra.mxu0 0.0
      %5740 = vmatprep.subr.mxu0 0.0
      %5741 = vmatpush2.msra.mxu0 0.0
      %5742 = vmatprep.subr.mxu0 0.0
      %5743 = vmatpush2.msra.mxu0 0.0
      %5744 = vmatprep.subr.mxu0 0.0
      %5745 = vmatpush2.msra.mxu0 0.0
      %5746 = vmatprep.subr.mxu0 0.0
      %5747 = vmatpush2.msra.mxu0 0.0
      %5748 = vmatprep.subr.mxu0 0.0
      %5749 = vmatpush2.msra.mxu0 0.0
      %5750 = vmatprep.subr.mxu0 0.0
      %5751 = vmatpush2.msra.mxu0 0.0
      %5752 = vmatprep.subr.mxu0 0.0
      %5753 = vmatpush2.msra.mxu0 0.0
      %5754 = vmatprep.mubr.f32.mxu0 0.0
      %5755 = vmatmul.mubr.f32.gmra.mxu0 %v5687
      %v5756 = vpop.f32.mrf.mxu0
      %v5757 = vadd.f32 %v5212, %v5756
      %v5758 = vpop.f32.mrf.mxu0
      %5759 = vdwg.mxu0
      %v5760 = vstv %s5689
      %v5761 = vmul.f32 %v5760, %v84
      %v5763 = vlaneseq
      %v5764 = vshrl.u32 %v5763, 7
      %v5765 = vsub.s32 0, %v5764
      %v5766 = vrot.slane %v5761, %v5765
      %v5768 = vadd.f32 %v5757, %v5766
      %v5769 = vtanh.pop %v5768
      %5770 = vmatprep.subr.mxu0 0.0
      %5771 = vmatpush1.msra.mxu0 %v101
      %5772 = vmatprep.subr.mxu0 0.0
      %5773 = vmatpush1.msra.mxu0 %v100
      %5774 = vmatprep.subr.mxu0 0.0
      %5775 = vmatpush1.msra.mxu0 %v99
      %5776 = vmatprep.subr.mxu0 0.0
      %5777 = vmatpush1.msra.mxu0 %v98
      %5778 = vmatprep.subr.mxu0 0.0
      %5779 = vmatpush1.msra.mxu0 %v97
      %5780 = vmatprep.subr.mxu0 0.0
      %5781 = vmatpush1.msra.mxu0 %v96
      %5782 = vmatprep.subr.mxu0 0.0
      %5783 = vmatpush1.msra.mxu0 %v95
      %5784 = vmatprep.subr.mxu0 0.0
      %5785 = vmatpush1.msra.mxu0 %v94
      %5786 = vmatprep.subr.mxu0 0.0
      %5787 = vmatpush1.msra.mxu0 %v93
      %5788 = vmatprep.subr.mxu0 0.0
      %5789 = vmatpush1.msra.mxu0 %v92
      %5790 = vmatprep.subr.mxu0 0.0
      %5791 = vmatpush1.msra.mxu0 %v91
      %5792 = vmatprep.subr.mxu0 0.0
      %5793 = vmatpush1.msra.mxu0 %v90
      %5794 = vmatprep.subr.mxu0 0.0
      %5795 = vmatpush1.msra.mxu0 %v89
      %5796 = vmatprep.subr.mxu0 0.0
      %5797 = vmatpush1.msra.mxu0 %v88
      %5798 = vmatprep.subr.mxu0 0.0
      %5799 = vmatpush1.msra.mxu0 %v87
      %5800 = vmatprep.subr.mxu0 0.0
      %5801 = vmatpush1.msra.mxu0 %v86
      %5802 = vmatprep.subr.mxu0 0.0
      %5803 = vmatpush2.msra.mxu0 0.0
      %5804 = vmatprep.subr.mxu0 0.0
      %5805 = vmatpush2.msra.mxu0 0.0
      %5806 = vmatprep.subr.mxu0 0.0
      %5807 = vmatpush2.msra.mxu0 0.0
      %5808 = vmatprep.subr.mxu0 0.0
      %5809 = vmatpush2.msra.mxu0 0.0
      %5810 = vmatprep.subr.mxu0 0.0
      %5811 = vmatpush2.msra.mxu0 0.0
      %5812 = vmatprep.subr.mxu0 0.0
      %5813 = vmatpush2.msra.mxu0 0.0
      %5814 = vmatprep.subr.mxu0 0.0
      %5815 = vmatpush2.msra.mxu0 0.0
      %5816 = vmatprep.subr.mxu0 0.0
      %5817 = vmatpush2.msra.mxu0 0.0
      %5818 = vmatprep.subr.mxu0 0.0
      %5819 = vmatpush2.msra.mxu0 0.0
      %5820 = vmatprep.subr.mxu0 0.0
      %5821 = vmatpush2.msra.mxu0 0.0
      %5822 = vmatprep.subr.mxu0 0.0
      %5823 = vmatpush2.msra.mxu0 0.0
      %5824 = vmatprep.subr.mxu0 0.0
      %5825 = vmatpush2.msra.mxu0 0.0
      %5826 = vmatprep.subr.mxu0 0.0
      %5827 = vmatpush2.msra.mxu0 0.0
      %5828 = vmatprep.subr.mxu0 0.0
      %5829 = vmatpush2.msra.mxu0 0.0
      %5830 = vmatprep.subr.mxu0 0.0
      %5831 = vmatpush2.msra.mxu0 0.0
      %5832 = vmatprep.subr.mxu0 0.0
      %5833 = vmatpush2.msra.mxu0 0.0
      %5834 = vmatprep.mubr.f32.mxu0 0.0
      %5835 = vmatmul.mubr.f32.gmra.mxu0 %v5769
      %v5836 = vpop.f32.mrf.mxu0
      %v5837 = vadd.f32 %v5306, %v5836
      %v5838 = vpop.f32.mrf.mxu0
      %5839 = vdwg.mxu0
      %v5840 = vmul.f32 %v5378, %v5837
      %v5841 = vadd.f32 %v5687, %v5840
      %5842 = vst [vmem:[#allocation2] sm:$0xff] %v5841
    $region77: #{neural_ode_forward.1} parent=1 // pred_fallthru
      _
    %v5843 = vld [vmem:[#allocation2] sm:$0xff]
    %s5844 = scalar_lea.vmem [#allocation6], 56
    %5845 = vst [vmem:[%s5844] sm:$0xff] %v5843
    // Predicated region
    $region78: #{neural_ode_forward.1} parent=1 // pred_check
      _
    $region79: #{neural_ode_forward.1} parent=1 // pred_check_branch
      %5847 = sbr.rel (0) target = $region81
    $region80: #{neural_ode_forward.1} parent=1 // pred_region
      %s5849 = ssub.s32 1024, 1024
      %5850 = vsyncadd [#allocation4], %s5849
      %s5851 = sshll.u32 [#allocation6], 4
      %s5852 = int_to_ptr.vmem [resolvable:$true] %s5851
      %5857 = dma.vmem_to_hbm [thread:$0]  %s5852, 1024, %s9, [#allocation4], 128, 128, 8
    $region81: #{neural_ode_forward.1} parent=1 // pred_fallthru
      _
    // Predicated region
    $region82: #{neural_ode_forward.1} parent=1 // pred_check
      _
    $region83: #{neural_ode_forward.1} parent=1 // pred_check_branch
      %5859 = sbr.rel (0) target = $region85
    $region84: #{neural_ode_forward.1} parent=1 // pred_region
      %5860 = dma.done [#allocation4], 1024
    $region85: #{neural_ode_forward.1} parent=1 // pred_fallthru
      _
    %5861 = vsyncpa [#allocation4], 1
    %5862 = vsyncpa [#allocation5], 1

</llo_original>
